<compile_context>
chip_gen: v7x
topology: tpu7x:2x2x1
jax: 0.10.0
libtpu: 0.0.40
codegen_flags: <defaults>
</compile_context>

<pallas_src>
import jax
import jax.numpy as jnp
from jax.experimental import pallas as pl
from jax.experimental.pallas import tpu as pltpu

# ---- module hyper-parameters (fixed by the PyTorch module) ----
D_MODEL = 64          # d_model (divisible by NUM_HEADS)
LATENT_DIM = 64
SSL_DIM = 768
DSTEP_DIM = 512
FFN_DIM = 1024
NUM_HEADS = 8
HEAD_DIM = D_MODEL // NUM_HEADS
KERNEL_SIZE = 5       # depthwise_conv_kernel_size
EPS = 1e-5            # LayerNorm / GroupNorm eps (torch default)
TOKEN_BUDGET = 2048   # tokens (BT*L) processed per grid step


def _layer_norm(x, g, b):
    mu = jnp.mean(x, axis=-1, keepdims=True)
    var = jnp.mean(jnp.square(x - mu), axis=-1, keepdims=True)
    return (x - mu) * jax.lax.rsqrt(var + EPS) * g + b


def _silu(x):
    return x * jax.nn.sigmoid(x)


def _kernel(
    latent_ref, ssl_ref, dbias_ref, abias_ref,     # (BT,L,64)bf16 (BT,L,768)bf16 (BT,1,64)f32 (BT,1,L)f32
    w_lat, w_ssl,
    ffn1_ln_g, ffn1_ln_b, ffn1_w1, ffn1_b1, ffn1_w2, ffn1_b2,
    attn_ln_g, attn_ln_b, wqkv, bqkv, wo, bo,
    conv_ln_g, conv_ln_b, pw1_w, pw1_b, dw_w, dw_b, gn_g, gn_b, pw2_w, pw2_b,
    ffn2_ln_g, ffn2_ln_b, ffn2_w1, ffn2_b1, ffn2_w2, ffn2_b2,
    fin_ln_g, fin_ln_b,
    out_ref,                                       # (BT, L, D) f32
):
    BT, L, _ = latent_ref.shape
    D = D_MODEL
    M = BT * L
    f32, bf16 = jnp.float32, jnp.bfloat16

    def mm3(a3, w_r, b_r=None):
        """(BT, L, K) @ (K, N): fold the whole block into the sublane axis."""
        k = a3.shape[-1]
        r = jnp.dot(a3.reshape(M, k).astype(bf16), w_r[...],
                    preferred_element_type=f32)
        if b_r is not None:
            r = r + b_r[...]
        return r.reshape(BT, L, w_r.shape[-1])

    def ffn(y, ln_g, ln_b, w1, b1, w2, b2):
        h = _layer_norm(y, ln_g[...], ln_b[...])
        h = _silu(mm3(h, w1, b1))
        return mm3(h, w2, b2)

    # ---- input projections (Conv1d k=1): single (M, C) MXU matmuls ----------
    x = jnp.dot(ssl_ref[...].reshape(M, SSL_DIM), w_ssl[...],
                preferred_element_type=f32)
    x = x + jnp.dot(latent_ref[...].reshape(M, LATENT_DIM), w_lat[...],
                    preferred_element_type=f32)
    # per-sample additive term = diffusion_step @ W_dstep + fused conv biases
    x = x.reshape(BT, L, D) + dbias_ref[...]

    # ---- FFN1, half-step residual -------------------------------------------
    x = 0.5 * ffn(x, ffn1_ln_g, ffn1_ln_b, ffn1_w1, ffn1_b1,
                  ffn1_w2, ffn1_b2) + x

    # ---- MHSA with key-padding mask -----------------------------------------
    residual = x
    xa = _layer_norm(x, attn_ln_g[...], attn_ln_b[...])
    qkv = mm3(xa, wqkv, bqkv).astype(bf16)            # fused QKV: (BT, L, 3D)
    abias = abias_ref[...]                            # (BT, 1, L), 0 / -1e30
    scale = 1.0 / (HEAD_DIM ** 0.5)
    ctx_parts = []
    for hh in range(NUM_HEADS):                       # static 8-iter loop, batched over BT
        q = qkv[:, :, hh * HEAD_DIM:(hh + 1) * HEAD_DIM]
        k = qkv[:, :, D + hh * HEAD_DIM:D + (hh + 1) * HEAD_DIM]
        v = qkv[:, :, 2 * D + hh * HEAD_DIM:2 * D + (hh + 1) * HEAD_DIM]
        s = jnp.einsum("bld,bmd->blm", q, k,
                       preferred_element_type=f32) * scale        # (BT, L, L)
        s = s + abias
        s = s - jnp.max(s, axis=-1, keepdims=True)
        p = jnp.exp(s)
        p = p * pl.reciprocal(jnp.sum(p, axis=-1, keepdims=True), approx=True)
        ctx_parts.append(jnp.einsum("blm,bmd->bld", p.astype(bf16), v,
                                    preferred_element_type=f32))  # (BT, L, dh)
    attn = jnp.concatenate(ctx_parts, axis=-1)                    # (BT, L, D)
    x = mm3(attn, wo, bo) + residual

    # ---- Convolution module --------------------------------------------------
    residual = x
    hc = _layer_norm(x, conv_ln_g[...], conv_ln_b[...])
    hc = mm3(hc, pw1_w, pw1_b)                                    # (BT, L, 2D)
    hc = hc[..., :D] * jax.nn.sigmoid(hc[..., D:])                # GLU
    hc2 = hc.reshape(M, D)
    pad = (KERNEL_SIZE - 1) // 2
    # position of each row within its own sample (mask rolled-in neighbours)
    t_in = jax.lax.broadcasted_iota(jnp.int32, (M, 1), 0) % L
    dww = dw_w[...]                                               # (K, D)
    acc = jnp.zeros((M, D), f32)
    for kk in range(KERNEL_SIZE):                                 # 5 taps total (no BT unroll)
        o = kk - pad
        if o == 0:
            sh = hc2
        else:
            sh = pltpu.roll(hc2, shift=(-o) % M, axis=0)
            sh = jnp.where((t_in + o >= 0) & (t_in + o < L), sh, 0.0)
        acc = acc + sh * dww[kk:kk + 1]
    acc = acc + dw_b[...]
    # GroupNorm(num_groups=1): normalize over (time, channels) per sample
    acc3 = acc.reshape(BT, L, D)
    mu = jnp.mean(jnp.mean(acc3, axis=2, keepdims=True), axis=1, keepdims=True)
    dlt = acc3 - mu
    var = jnp.mean(jnp.mean(dlt * dlt, axis=2, keepdims=True),
                   axis=1, keepdims=True)
    g = dlt * jax.lax.rsqrt(var + EPS) * gn_g[...] + gn_b[...]
    x = residual + mm3(_silu(g), pw2_w, pw2_b)

    # ---- FFN2, half-step residual, final LayerNorm ---------------------------
    x = 0.5 * ffn(x, ffn2_ln_g, ffn2_ln_b, ffn2_w1, ffn2_b1,
                  ffn2_w2, ffn2_b2) + x
    # NOTE: trailing dim 64 (< 128 lanes) means masked vst stores; widening to
    # (BT, L*D) would need a sublane->lane relayout that costs more than it
    # saves here (output is a small fraction of the HBM traffic vs. ssl).
    out_ref[...] = _layer_norm(x, fin_ln_g[...], fin_ln_b[...])


def init_params(key):
    keys = jax.random.split(key, 16)
    it = iter(keys)

    def w(shape, scale=0.05):
        return jax.random.normal(next(it), shape, jnp.float32) * scale

    def z(*s):
        return jnp.zeros(s, jnp.float32)

    def o(*s):
        return jnp.ones(s, jnp.float32)

    D, F = D_MODEL, FFN_DIM
    # All matmul weights are stored (in, out) for row-major (tokens, in) @ (in, out).
    return {
        "latent_w": w((LATENT_DIM, D)), "latent_b": z(1, D),
        "ssl_w": w((SSL_DIM, D)), "ssl_b": z(1, D),
        "dstep_w": w((DSTEP_DIM, D)), "dstep_b": z(1, D),
        "ffn1_ln_g": o(1, D), "ffn1_ln_b": z(1, D),
        "ffn1_w1": w((D, F)), "ffn1_b1": z(1, F),
        "ffn1_w2": w((F, D)), "ffn1_b2": z(1, D),
        "attn_ln_g": o(1, D), "attn_ln_b": z(1, D),
        "wq": w((D, D)), "bq": z(1, D),
        "wk": w((D, D)), "bk": z(1, D),
        "wv": w((D, D)), "bv": z(1, D),
        "wo": w((D, D)), "bo": z(1, D),
        "conv_ln_g": o(1, D), "conv_ln_b": z(1, D),
        "pw1_w": w((D, 2 * D)), "pw1_b": z(1, 2 * D),
        "dw_w": w((KERNEL_SIZE, D)), "dw_b": z(1, D),
        "gn_g": o(1, D), "gn_b": z(1, D),
        "pw2_w": w((D, D)), "pw2_b": z(1, D),
        "ffn2_ln_g": o(1, D), "ffn2_ln_b": z(1, D),
        "ffn2_w1": w((D, F)), "ffn2_b1": z(1, F),
        "ffn2_w2": w((F, D)), "ffn2_b2": z(1, D),
        "fin_ln_g": o(1, D), "fin_ln_b": z(1, D),
    }


def _prepare_operands(p):
    """Cast MXU weights to bf16 once; fuse Wq/Wk/Wv into a single (64,192)."""
    bf = lambda a: a.astype(jnp.bfloat16)
    wqkv = bf(jnp.concatenate([p["wq"], p["wk"], p["wv"]], axis=1))   # (64, 192)
    bqkv = jnp.concatenate([p["bq"], p["bk"], p["bv"]], axis=1)       # (1, 192)
    return [
        bf(p["latent_w"]), bf(p["ssl_w"]),
        p["ffn1_ln_g"], p["ffn1_ln_b"], bf(p["ffn1_w1"]), p["ffn1_b1"],
        bf(p["ffn1_w2"]), p["ffn1_b2"],
        p["attn_ln_g"], p["attn_ln_b"], wqkv, bqkv, bf(p["wo"]), p["bo"],
        p["conv_ln_g"], p["conv_ln_b"], bf(p["pw1_w"]), p["pw1_b"],
        p["dw_w"], p["dw_b"], p["gn_g"], p["gn_b"], bf(p["pw2_w"]), p["pw2_b"],
        p["ffn2_ln_g"], p["ffn2_ln_b"], bf(p["ffn2_w1"]), p["ffn2_b1"],
        bf(p["ffn2_w2"]), p["ffn2_b2"],
        p["fin_ln_g"], p["fin_ln_b"],
    ]


def _choose_batching(B, L):
    """Samples per grid step: fill the MXU / amortize per-step overhead, but
    keep >= 2 grid steps when B >= 2 so both v7x TensorCores get work (costs
    only ~0.35us/step extra on single-core v5e/v6e)."""
    bt = max(1, min(B, TOKEN_BUDGET // max(L, 1)))
    if B >= 2:
        bt = min(bt, -(-B // 2))
    b_pad = -(-B // bt) * bt        # pad batch so bt always divides it
    return bt, b_pad


def conditional_conformer(latent, ssl, diffusion_step, lengths, params):
    B, _, L = latent.shape
    BT, B_pad = _choose_batching(B, L)
    bf16 = jnp.bfloat16

    # Time-major bf16 conditioning inputs (one fused transpose+cast XLA pass):
    # halves the dominant ssl DMA bytes into the kernel and its VMEM block.
    latent_t = jnp.transpose(latent, (0, 2, 1)).astype(bf16)       # (B, L, 64)
    ssl_t = jnp.transpose(ssl, (0, 2, 1)).astype(bf16)             # (B, L, 768)
    lengths_i = lengths.astype(jnp.int32)

    # Per-sample additive term: diffusion-step Linear + fused projection biases
    # (tiny (B,512)@(512,64) matmul; cheaper to ship 64 f32/sample than 512).
    dbias = (diffusion_step.astype(jnp.float32) @ params["dstep_w"]
             + params["latent_b"] + params["ssl_b"] + params["dstep_b"]
             ).reshape(B, 1, D_MODEL)

    # Additive key-padding bias (0 for valid keys, -1e30 for t >= length).
    abias = jnp.where(
        jnp.arange(L, dtype=jnp.int32)[None, :] < lengths_i[:, None],
        0.0, -1e30).astype(jnp.float32).reshape(B, 1, L)

    if B_pad != B:
        padn = B_pad - B
        latent_t = jnp.pad(latent_t, ((0, padn), (0, 0), (0, 0)))
        ssl_t = jnp.pad(ssl_t, ((0, padn), (0, 0), (0, 0)))
        dbias = jnp.pad(dbias, ((0, padn), (0, 0), (0, 0)))
        abias = jnp.pad(abias, ((0, padn), (0, 0), (0, 0)))

    ops = _prepare_operands(params)

    data_specs = [
        pl.BlockSpec((BT, L, LATENT_DIM), lambda g: (g, 0, 0)),
        pl.BlockSpec((BT, L, SSL_DIM), lambda g: (g, 0, 0)),
        pl.BlockSpec((BT, 1, D_MODEL), lambda g: (g, 0, 0)),
        pl.BlockSpec((BT, 1, L), lambda g: (g, 0, 0)),
    ]
    param_specs = [
        pl.BlockSpec(p.shape, lambda g, nd=p.ndim: (0,) * nd) for p in ops
    ]

    grid_spec = pltpu.PrefetchScalarGridSpec(
        num_scalar_prefetch=0,
        grid=(B_pad // BT,),
        in_specs=data_specs + param_specs,
        out_specs=pl.BlockSpec((BT, L, D_MODEL), lambda g: (g, 0, 0)),
    )

    out = pl.pallas_call(
        _kernel,
        out_shape=jax.ShapeDtypeStruct((B_pad, L, D_MODEL), jnp.float32),
        grid_spec=grid_spec,
        compiler_params=pltpu.CompilerParams(
            dimension_semantics=("parallel",),
            vmem_limit_bytes=32 * 1024 * 1024,   # valid on v5e/v6e/v7x
        ),
    )(latent_t, ssl_t, dbias, abias, *ops)

    # back to the PyTorch convention (B, D, L); output is small, transpose cheap
    return jnp.transpose(out[:B], (0, 2, 1)), lengths


if __name__ == "__main__":
    key = jax.random.PRNGKey(0)
    kp, k1, k2, k3 = jax.random.split(key, 4)
    params = init_params(kp)

    B, L = 4, 16
    latent = jax.random.normal(k1, (B, LATENT_DIM, L), jnp.float32)
    ssl = jax.random.normal(k2, (B, SSL_DIM, L), jnp.float32)
    dstep = jax.random.normal(k3, (B, DSTEP_DIM), jnp.float32)
    lengths = jnp.array([L, L - 5, L - 9, L], dtype=jnp.int32)

    x, out_lengths = conditional_conformer(latent, ssl, dstep, lengths, params)
    jax.block_until_ready(x)
    assert x.shape == (B, D_MODEL, L) and out_lengths.shape == (B,)
    assert bool(jnp.all(jnp.isfinite(x)))
    print("KERNEL_OK")
</pallas_src>

<mosaic_0001>
module attributes {stable_mosaic.version = 11 : i64} {
  func.func @_kernel(%arg0: i32, %arg1: memref<2x16x64xbf16, #tpu.memory_space<vmem>>, %arg2: memref<2x16x768xbf16, #tpu.memory_space<vmem>>, %arg3: memref<2x1x64xf32, #tpu.memory_space<vmem>>, %arg4: memref<2x1x16xf32, #tpu.memory_space<vmem>>, %arg5: memref<64x64xbf16, #tpu.memory_space<vmem>>, %arg6: memref<768x64xbf16, #tpu.memory_space<vmem>>, %arg7: memref<1x64xf32, #tpu.memory_space<vmem>>, %arg8: memref<1x64xf32, #tpu.memory_space<vmem>>, %arg9: memref<64x1024xbf16, #tpu.memory_space<vmem>>, %arg10: memref<1x1024xf32, #tpu.memory_space<vmem>>, %arg11: memref<1024x64xbf16, #tpu.memory_space<vmem>>, %arg12: memref<1x64xf32, #tpu.memory_space<vmem>>, %arg13: memref<1x64xf32, #tpu.memory_space<vmem>>, %arg14: memref<1x64xf32, #tpu.memory_space<vmem>>, %arg15: memref<64x192xbf16, #tpu.memory_space<vmem>>, %arg16: memref<1x192xf32, #tpu.memory_space<vmem>>, %arg17: memref<64x64xbf16, #tpu.memory_space<vmem>>, %arg18: memref<1x64xf32, #tpu.memory_space<vmem>>, %arg19: memref<1x64xf32, #tpu.memory_space<vmem>>, %arg20: memref<1x64xf32, #tpu.memory_space<vmem>>, %arg21: memref<64x128xbf16, #tpu.memory_space<vmem>>, %arg22: memref<1x128xf32, #tpu.memory_space<vmem>>, %arg23: memref<5x64xf32, #tpu.memory_space<vmem>>, %arg24: memref<1x64xf32, #tpu.memory_space<vmem>>, %arg25: memref<1x64xf32, #tpu.memory_space<vmem>>, %arg26: memref<1x64xf32, #tpu.memory_space<vmem>>, %arg27: memref<64x64xbf16, #tpu.memory_space<vmem>>, %arg28: memref<1x64xf32, #tpu.memory_space<vmem>>, %arg29: memref<1x64xf32, #tpu.memory_space<vmem>>, %arg30: memref<1x64xf32, #tpu.memory_space<vmem>>, %arg31: memref<64x1024xbf16, #tpu.memory_space<vmem>>, %arg32: memref<1x1024xf32, #tpu.memory_space<vmem>>, %arg33: memref<1024x64xbf16, #tpu.memory_space<vmem>>, %arg34: memref<1x64xf32, #tpu.memory_space<vmem>>, %arg35: memref<1x64xf32, #tpu.memory_space<vmem>>, %arg36: memref<1x64xf32, #tpu.memory_space<vmem>>, %arg37: memref<2x16x64xf32, #tpu.memory_space<vmem>>) attributes {dimension_semantics = [#tpu.dimension_semantics<parallel>], iteration_bounds = array<i64: 2>, scalar_prefetch = 0 : i64, scratch_operands = 0 : i64, tpu.core_type = #tpu.core_type<tc>, window_params = [{transform_indices = @transform_0, window_bounds = array<i64: 2, 16, 64>}, {transform_indices = @transform_1, window_bounds = array<i64: 2, 16, 768>}, {transform_indices = @transform_2, window_bounds = array<i64: 2, 1, 64>}, {transform_indices = @transform_3, window_bounds = array<i64: 2, 1, 16>}, {pipeline_mode = #tpu.pipeline_mode<synchronous>, transform_indices = @transform_4, window_bounds = array<i64: 64, 64>}, {pipeline_mode = #tpu.pipeline_mode<synchronous>, transform_indices = @transform_5, window_bounds = array<i64: 768, 64>}, {pipeline_mode = #tpu.pipeline_mode<synchronous>, transform_indices = @transform_6, window_bounds = array<i64: 1, 64>}, {pipeline_mode = #tpu.pipeline_mode<synchronous>, transform_indices = @transform_7, window_bounds = array<i64: 1, 64>}, {pipeline_mode = #tpu.pipeline_mode<synchronous>, transform_indices = @transform_8, window_bounds = array<i64: 64, 1024>}, {pipeline_mode = #tpu.pipeline_mode<synchronous>, transform_indices = @transform_9, window_bounds = array<i64: 1, 1024>}, {pipeline_mode = #tpu.pipeline_mode<synchronous>, transform_indices = @transform_10, window_bounds = array<i64: 1024, 64>}, {pipeline_mode = #tpu.pipeline_mode<synchronous>, transform_indices = @transform_11, window_bounds = array<i64: 1, 64>}, {pipeline_mode = #tpu.pipeline_mode<synchronous>, transform_indices = @transform_12, window_bounds = array<i64: 1, 64>}, {pipeline_mode = #tpu.pipeline_mode<synchronous>, transform_indices = @transform_13, window_bounds = array<i64: 1, 64>}, {pipeline_mode = #tpu.pipeline_mode<synchronous>, transform_indices = @transform_14, window_bounds = array<i64: 64, 192>}, {pipeline_mode = #tpu.pipeline_mode<synchronous>, transform_indices = @transform_15, window_bounds = array<i64: 1, 192>}, {pipeline_mode = #tpu.pipeline_mode<synchronous>, transform_indices = @transform_16, window_bounds = array<i64: 64, 64>}, {pipeline_mode = #tpu.pipeline_mode<synchronous>, transform_indices = @transform_17, window_bounds = array<i64: 1, 64>}, {pipeline_mode = #tpu.pipeline_mode<synchronous>, transform_indices = @transform_18, window_bounds = array<i64: 1, 64>}, {pipeline_mode = #tpu.pipeline_mode<synchronous>, transform_indices = @transform_19, window_bounds = array<i64: 1, 64>}, {pipeline_mode = #tpu.pipeline_mode<synchronous>, transform_indices = @transform_20, window_bounds = array<i64: 64, 128>}, {pipeline_mode = #tpu.pipeline_mode<synchronous>, transform_indices = @transform_21, window_bounds = array<i64: 1, 128>}, {pipeline_mode = #tpu.pipeline_mode<synchronous>, transform_indices = @transform_22, window_bounds = array<i64: 5, 64>}, {pipeline_mode = #tpu.pipeline_mode<synchronous>, transform_indices = @transform_23, window_bounds = array<i64: 1, 64>}, {pipeline_mode = #tpu.pipeline_mode<synchronous>, transform_indices = @transform_24, window_bounds = array<i64: 1, 64>}, {pipeline_mode = #tpu.pipeline_mode<synchronous>, transform_indices = @transform_25, window_bounds = array<i64: 1, 64>}, {pipeline_mode = #tpu.pipeline_mode<synchronous>, transform_indices = @transform_26, window_bounds = array<i64: 64, 64>}, {pipeline_mode = #tpu.pipeline_mode<synchronous>, transform_indices = @transform_27, window_bounds = array<i64: 1, 64>}, {pipeline_mode = #tpu.pipeline_mode<synchronous>, transform_indices = @transform_28, window_bounds = array<i64: 1, 64>}, {pipeline_mode = #tpu.pipeline_mode<synchronous>, transform_indices = @transform_29, window_bounds = array<i64: 1, 64>}, {pipeline_mode = #tpu.pipeline_mode<synchronous>, transform_indices = @transform_30, window_bounds = array<i64: 64, 1024>}, {pipeline_mode = #tpu.pipeline_mode<synchronous>, transform_indices = @transform_31, window_bounds = array<i64: 1, 1024>}, {pipeline_mode = #tpu.pipeline_mode<synchronous>, transform_indices = @transform_32, window_bounds = array<i64: 1024, 64>}, {pipeline_mode = #tpu.pipeline_mode<synchronous>, transform_indices = @transform_33, window_bounds = array<i64: 1, 64>}, {pipeline_mode = #tpu.pipeline_mode<synchronous>, transform_indices = @transform_34, window_bounds = array<i64: 1, 64>}, {pipeline_mode = #tpu.pipeline_mode<synchronous>, transform_indices = @transform_35, window_bounds = array<i64: 1, 64>}, {transform_indices = @transform_36, window_bounds = array<i64: 2, 16, 64>}]} {
    %c0 = arith.constant 0 : index
    %c0_0 = arith.constant 0 : index
    %c0_1 = arith.constant 0 : index
    %0 = vector.load %arg2[%c0, %c0_0, %c0_1] : memref<2x16x768xbf16, #tpu.memory_space<vmem>>, vector<2x16x768xbf16>
    %1 = vector.shape_cast %0 : vector<2x16x768xbf16> to vector<32x768xbf16>
    %c0_2 = arith.constant 0 : index
    %c0_3 = arith.constant 0 : index
    %2 = vector.load %arg6[%c0_2, %c0_3] : memref<768x64xbf16, #tpu.memory_space<vmem>>, vector<768x64xbf16>
    %cst = arith.constant dense<0.000000e+00> : vector<32x64xf32>
    %3 = tpu.matmul %1, %2, %cst {dimension_numbers = #tpu.dot_dimension_numbers<[1], [0], [0], [1], [0, 0, 1, 1], [], []>} : vector<32x768xbf16>, vector<768x64xbf16>, vector<32x64xf32> -> vector<32x64xf32>
    %c0_4 = arith.constant 0 : index
    %c0_5 = arith.constant 0 : index
    %c0_6 = arith.constant 0 : index
    %4 = vector.load %arg1[%c0_4, %c0_5, %c0_6] : memref<2x16x64xbf16, #tpu.memory_space<vmem>>, vector<2x16x64xbf16>
    %5 = vector.shape_cast %4 : vector<2x16x64xbf16> to vector<32x64xbf16>
    %c0_7 = arith.constant 0 : index
    %c0_8 = arith.constant 0 : index
    %6 = vector.load %arg5[%c0_7, %c0_8] : memref<64x64xbf16, #tpu.memory_space<vmem>>, vector<64x64xbf16>
    %cst_9 = arith.constant dense<0.000000e+00> : vector<32x64xf32>
    %7 = tpu.matmul %5, %6, %cst_9 {dimension_numbers = #tpu.dot_dimension_numbers<[1], [0], [0], [1], [0, 0, 1, 1], [], []>} : vector<32x64xbf16>, vector<64x64xbf16>, vector<32x64xf32> -> vector<32x64xf32>
    %8 = arith.addf %3, %7 : vector<32x64xf32>
    %9 = vector.shape_cast %8 : vector<32x64xf32> to vector<2x16x64xf32>
    %c0_10 = arith.constant 0 : index
    %c0_11 = arith.constant 0 : index
    %c0_12 = arith.constant 0 : index
    %10 = vector.load %arg3[%c0_10, %c0_11, %c0_12] : memref<2x1x64xf32, #tpu.memory_space<vmem>>, vector<2x1x64xf32>
    %11 = vector.broadcast %10 : vector<2x1x64xf32> to vector<2x16x64xf32>
    %12 = arith.addf %9, %11 : vector<2x16x64xf32>
    %c0_13 = arith.constant 0 : index
    %c0_14 = arith.constant 0 : index
    %13 = vector.load %arg7[%c0_13, %c0_14] : memref<1x64xf32, #tpu.memory_space<vmem>>, vector<1x64xf32>
    %c0_15 = arith.constant 0 : index
    %c0_16 = arith.constant 0 : index
    %14 = vector.load %arg8[%c0_15, %c0_16] : memref<1x64xf32, #tpu.memory_space<vmem>>, vector<1x64xf32>
    %cst_17 = arith.constant dense<0.000000e+00> : vector<2x16xf32>
    %15 = vector.multi_reduction <add>, %12, %cst_17 [2] : vector<2x16x64xf32> to vector<2x16xf32>
    %16 = vector.shape_cast %15 : vector<2x16xf32> to vector<2x16x1xf32>
    %cst_18 = arith.constant 6.400000e+01 : f32
    %17 = vector.broadcast %cst_18 : f32 to vector<2x16x1xf32>
    %18 = arith.divf %16, %17 : vector<2x16x1xf32>
    %19 = vector.broadcast %18 : vector<2x16x1xf32> to vector<2x16x64xf32>
    %20 = arith.subf %12, %19 : vector<2x16x64xf32>
    %21 = arith.mulf %20, %20 : vector<2x16x64xf32>
    %cst_19 = arith.constant dense<0.000000e+00> : vector<2x16xf32>
    %22 = vector.multi_reduction <add>, %21, %cst_19 [2] : vector<2x16x64xf32> to vector<2x16xf32>
    %23 = vector.shape_cast %22 : vector<2x16xf32> to vector<2x16x1xf32>
    %cst_20 = arith.constant 6.400000e+01 : f32
    %24 = vector.broadcast %cst_20 : f32 to vector<2x16x1xf32>
    %25 = arith.divf %23, %24 : vector<2x16x1xf32>
    %26 = vector.broadcast %18 : vector<2x16x1xf32> to vector<2x16x64xf32>
    %27 = arith.subf %12, %26 : vector<2x16x64xf32>
    %cst_21 = arith.constant 9.99999974E-6 : f32
    %28 = vector.broadcast %cst_21 : f32 to vector<2x16x1xf32>
    %29 = arith.addf %25, %28 : vector<2x16x1xf32>
    %30 = math.rsqrt %29 : vector<2x16x1xf32>
    %31 = vector.broadcast %30 : vector<2x16x1xf32> to vector<2x16x64xf32>
    %32 = arith.mulf %27, %31 : vector<2x16x64xf32>
    %33 = vector.shape_cast %13 : vector<1x64xf32> to vector<1x1x64xf32>
    %34 = vector.broadcast %33 : vector<1x1x64xf32> to vector<2x16x64xf32>
    %35 = arith.mulf %32, %34 : vector<2x16x64xf32>
    %36 = vector.shape_cast %14 : vector<1x64xf32> to vector<1x1x64xf32>
    %37 = vector.broadcast %36 : vector<1x1x64xf32> to vector<2x16x64xf32>
    %38 = arith.addf %35, %37 : vector<2x16x64xf32>
    %39 = vector.shape_cast %38 : vector<2x16x64xf32> to vector<32x64xf32>
    %40 = arith.truncf %39 : vector<32x64xf32> to vector<32x64xbf16>
    %c0_22 = arith.constant 0 : index
    %c0_23 = arith.constant 0 : index
    %41 = vector.load %arg9[%c0_22, %c0_23] : memref<64x1024xbf16, #tpu.memory_space<vmem>>, vector<64x1024xbf16>
    %cst_24 = arith.constant dense<0.000000e+00> : vector<32x1024xf32>
    %42 = tpu.matmul %40, %41, %cst_24 {dimension_numbers = #tpu.dot_dimension_numbers<[1], [0], [0], [1], [0, 0, 1, 1], [], []>} : vector<32x64xbf16>, vector<64x1024xbf16>, vector<32x1024xf32> -> vector<32x1024xf32>
    %c0_25 = arith.constant 0 : index
    %c0_26 = arith.constant 0 : index
    %43 = vector.load %arg10[%c0_25, %c0_26] : memref<1x1024xf32, #tpu.memory_space<vmem>>, vector<1x1024xf32>
    %44 = vector.broadcast %43 : vector<1x1024xf32> to vector<32x1024xf32>
    %45 = arith.addf %42, %44 : vector<32x1024xf32>
    %46 = vector.shape_cast %45 : vector<32x1024xf32> to vector<2x16x1024xf32>
    %47 = arith.negf %46 : vector<2x16x1024xf32>
    %48 = math.exp %47 : vector<2x16x1024xf32>
    %cst_27 = arith.constant 1.000000e+00 : f32
    %49 = vector.broadcast %cst_27 : f32 to vector<2x16x1024xf32>
    %50 = arith.addf %49, %48 : vector<2x16x1024xf32>
    %51 = arith.divf %49, %50 : vector<2x16x1024xf32>
    %52 = arith.mulf %46, %51 : vector<2x16x1024xf32>
    %53 = vector.shape_cast %52 : vector<2x16x1024xf32> to vector<32x1024xf32>
    %54 = arith.truncf %53 : vector<32x1024xf32> to vector<32x1024xbf16>
    %c0_28 = arith.constant 0 : index
    %c0_29 = arith.constant 0 : index
    %55 = vector.load %arg11[%c0_28, %c0_29] : memref<1024x64xbf16, #tpu.memory_space<vmem>>, vector<1024x64xbf16>
    %cst_30 = arith.constant dense<0.000000e+00> : vector<32x64xf32>
    %56 = tpu.matmul %54, %55, %cst_30 {dimension_numbers = #tpu.dot_dimension_numbers<[1], [0], [0], [1], [0, 0, 1, 1], [], []>} : vector<32x1024xbf16>, vector<1024x64xbf16>, vector<32x64xf32> -> vector<32x64xf32>
    %c0_31 = arith.constant 0 : index
    %c0_32 = arith.constant 0 : index
    %57 = vector.load %arg12[%c0_31, %c0_32] : memref<1x64xf32, #tpu.memory_space<vmem>>, vector<1x64xf32>
    %58 = vector.broadcast %57 : vector<1x64xf32> to vector<32x64xf32>
    %59 = arith.addf %56, %58 : vector<32x64xf32>
    %60 = vector.shape_cast %59 : vector<32x64xf32> to vector<2x16x64xf32>
    %cst_33 = arith.constant 5.000000e-01 : f32
    %61 = vector.broadcast %cst_33 : f32 to vector<2x16x64xf32>
    %62 = arith.mulf %61, %60 : vector<2x16x64xf32>
    %63 = arith.addf %62, %12 : vector<2x16x64xf32>
    %c0_34 = arith.constant 0 : index
    %c0_35 = arith.constant 0 : index
    %64 = vector.load %arg13[%c0_34, %c0_35] : memref<1x64xf32, #tpu.memory_space<vmem>>, vector<1x64xf32>
    %c0_36 = arith.constant 0 : index
    %c0_37 = arith.constant 0 : index
    %65 = vector.load %arg14[%c0_36, %c0_37] : memref<1x64xf32, #tpu.memory_space<vmem>>, vector<1x64xf32>
    %cst_38 = arith.constant dense<0.000000e+00> : vector<2x16xf32>
    %66 = vector.multi_reduction <add>, %63, %cst_38 [2] : vector<2x16x64xf32> to vector<2x16xf32>
    %67 = vector.shape_cast %66 : vector<2x16xf32> to vector<2x16x1xf32>
    %cst_39 = arith.constant 6.400000e+01 : f32
    %68 = vector.broadcast %cst_39 : f32 to vector<2x16x1xf32>
    %69 = arith.divf %67, %68 : vector<2x16x1xf32>
    %70 = vector.broadcast %69 : vector<2x16x1xf32> to vector<2x16x64xf32>
    %71 = arith.subf %63, %70 : vector<2x16x64xf32>
    %72 = arith.mulf %71, %71 : vector<2x16x64xf32>
    %cst_40 = arith.constant dense<0.000000e+00> : vector<2x16xf32>
    %73 = vector.multi_reduction <add>, %72, %cst_40 [2] : vector<2x16x64xf32> to vector<2x16xf32>
    %74 = vector.shape_cast %73 : vector<2x16xf32> to vector<2x16x1xf32>
    %cst_41 = arith.constant 6.400000e+01 : f32
    %75 = vector.broadcast %cst_41 : f32 to vector<2x16x1xf32>
    %76 = arith.divf %74, %75 : vector<2x16x1xf32>
    %77 = vector.broadcast %69 : vector<2x16x1xf32> to vector<2x16x64xf32>
    %78 = arith.subf %63, %77 : vector<2x16x64xf32>
    %cst_42 = arith.constant 9.99999974E-6 : f32
    %79 = vector.broadcast %cst_42 : f32 to vector<2x16x1xf32>
    %80 = arith.addf %76, %79 : vector<2x16x1xf32>
    %81 = math.rsqrt %80 : vector<2x16x1xf32>
    %82 = vector.broadcast %81 : vector<2x16x1xf32> to vector<2x16x64xf32>
    %83 = arith.mulf %78, %82 : vector<2x16x64xf32>
    %84 = vector.shape_cast %64 : vector<1x64xf32> to vector<1x1x64xf32>
    %85 = vector.broadcast %84 : vector<1x1x64xf32> to vector<2x16x64xf32>
    %86 = arith.mulf %83, %85 : vector<2x16x64xf32>
    %87 = vector.shape_cast %65 : vector<1x64xf32> to vector<1x1x64xf32>
    %88 = vector.broadcast %87 : vector<1x1x64xf32> to vector<2x16x64xf32>
    %89 = arith.addf %86, %88 : vector<2x16x64xf32>
    %90 = vector.shape_cast %89 : vector<2x16x64xf32> to vector<32x64xf32>
    %91 = arith.truncf %90 : vector<32x64xf32> to vector<32x64xbf16>
    %c0_43 = arith.constant 0 : index
    %c0_44 = arith.constant 0 : index
    %92 = vector.load %arg15[%c0_43, %c0_44] : memref<64x192xbf16, #tpu.memory_space<vmem>>, vector<64x192xbf16>
    %cst_45 = arith.constant dense<0.000000e+00> : vector<32x192xf32>
    %93 = tpu.matmul %91, %92, %cst_45 {dimension_numbers = #tpu.dot_dimension_numbers<[1], [0], [0], [1], [0, 0, 1, 1], [], []>} : vector<32x64xbf16>, vector<64x192xbf16>, vector<32x192xf32> -> vector<32x192xf32>
    %c0_46 = arith.constant 0 : index
    %c0_47 = arith.constant 0 : index
    %94 = vector.load %arg16[%c0_46, %c0_47] : memref<1x192xf32, #tpu.memory_space<vmem>>, vector<1x192xf32>
    %95 = vector.broadcast %94 : vector<1x192xf32> to vector<32x192xf32>
    %96 = arith.addf %93, %95 : vector<32x192xf32>
    %97 = vector.shape_cast %96 : vector<32x192xf32> to vector<2x16x192xf32>
    %98 = arith.truncf %97 : vector<2x16x192xf32> to vector<2x16x192xbf16>
    %c0_48 = arith.constant 0 : index
    %c0_49 = arith.constant 0 : index
    %c0_50 = arith.constant 0 : index
    %99 = vector.load %arg4[%c0_48, %c0_49, %c0_50] : memref<2x1x16xf32, #tpu.memory_space<vmem>>, vector<2x1x16xf32>
    %100 = vector.extract_strided_slice %98 {offsets = [0, 0, 0], sizes = [2, 16, 8], strides = [1, 1, 1]} : vector<2x16x192xbf16> to vector<2x16x8xbf16>
    %101 = vector.extract_strided_slice %98 {offsets = [0, 0, 64], sizes = [2, 16, 8], strides = [1, 1, 1]} : vector<2x16x192xbf16> to vector<2x16x8xbf16>
    %102 = vector.extract_strided_slice %98 {offsets = [0, 0, 128], sizes = [2, 16, 8], strides = [1, 1, 1]} : vector<2x16x192xbf16> to vector<2x16x8xbf16>
    "tpu.trace_start"() <{level = 10 : i32, message = "bld,bmd->blm"}> : () -> ()
    %cst_51 = arith.constant dense<0.000000e+00> : vector<2x16x16xf32>
    %103 = tpu.matmul %100, %101, %cst_51 {dimension_numbers = #tpu.dot_dimension_numbers<[2], [2], [1], [1], [0, 0, 0, 1, 1, 1], [0], [0]>} : vector<2x16x8xbf16>, vector<2x16x8xbf16>, vector<2x16x16xf32> -> vector<2x16x16xf32>
    "tpu.trace_stop"() : () -> ()
    %cst_52 = arith.constant 0.353553385 : f32
    %104 = vector.broadcast %cst_52 : f32 to vector<2x16x16xf32>
    %105 = arith.mulf %103, %104 : vector<2x16x16xf32>
    %106 = vector.broadcast %99 : vector<2x1x16xf32> to vector<2x16x16xf32>
    %107 = arith.addf %105, %106 : vector<2x16x16xf32>
    %cst_53 = arith.constant dense<0xFF800000> : vector<2x16xf32>
    %108 = vector.multi_reduction <maximumf>, %107, %cst_53 [2] : vector<2x16x16xf32> to vector<2x16xf32>
    %109 = vector.shape_cast %108 : vector<2x16xf32> to vector<2x16x1xf32>
    %110 = vector.broadcast %109 : vector<2x16x1xf32> to vector<2x16x16xf32>
    %111 = arith.subf %107, %110 : vector<2x16x16xf32>
    %112 = math.exp %111 : vector<2x16x16xf32>
    %cst_54 = arith.constant dense<0.000000e+00> : vector<2x16xf32>
    %113 = vector.multi_reduction <add>, %112, %cst_54 [2] : vector<2x16x16xf32> to vector<2x16xf32>
    %114 = vector.shape_cast %113 : vector<2x16xf32> to vector<2x16x1xf32>
    %115 = tpu.reciprocal %114 {approx = true} : vector<2x16x1xf32> -> vector<2x16x1xf32>
    %116 = vector.broadcast %115 : vector<2x16x1xf32> to vector<2x16x16xf32>
    %117 = arith.mulf %112, %116 : vector<2x16x16xf32>
    %118 = arith.truncf %117 : vector<2x16x16xf32> to vector<2x16x16xbf16>
    "tpu.trace_start"() <{level = 10 : i32, message = "blm,bmd->bld"}> : () -> ()
    %cst_55 = arith.constant dense<0.000000e+00> : vector<2x16x8xf32>
    %119 = tpu.matmul %118, %102, %cst_55 {dimension_numbers = #tpu.dot_dimension_numbers<[2], [1], [1], [2], [0, 0, 0, 1, 1, 2], [0], [0]>} : vector<2x16x16xbf16>, vector<2x16x8xbf16>, vector<2x16x8xf32> -> vector<2x16x8xf32>
    "tpu.trace_stop"() : () -> ()
    %120 = vector.extract_strided_slice %98 {offsets = [0, 0, 8], sizes = [2, 16, 8], strides = [1, 1, 1]} : vector<2x16x192xbf16> to vector<2x16x8xbf16>
    %121 = vector.extract_strided_slice %98 {offsets = [0, 0, 72], sizes = [2, 16, 8], strides = [1, 1, 1]} : vector<2x16x192xbf16> to vector<2x16x8xbf16>
    %122 = vector.extract_strided_slice %98 {offsets = [0, 0, 136], sizes = [2, 16, 8], strides = [1, 1, 1]} : vector<2x16x192xbf16> to vector<2x16x8xbf16>
    "tpu.trace_start"() <{level = 10 : i32, message = "bld,bmd->blm"}> : () -> ()
    %cst_56 = arith.constant dense<0.000000e+00> : vector<2x16x16xf32>
    %123 = tpu.matmul %120, %121, %cst_56 {dimension_numbers = #tpu.dot_dimension_numbers<[2], [2], [1], [1], [0, 0, 0, 1, 1, 1], [0], [0]>} : vector<2x16x8xbf16>, vector<2x16x8xbf16>, vector<2x16x16xf32> -> vector<2x16x16xf32>
    "tpu.trace_stop"() : () -> ()
    %cst_57 = arith.constant 0.353553385 : f32
    %124 = vector.broadcast %cst_57 : f32 to vector<2x16x16xf32>
    %125 = arith.mulf %123, %124 : vector<2x16x16xf32>
    %126 = vector.broadcast %99 : vector<2x1x16xf32> to vector<2x16x16xf32>
    %127 = arith.addf %125, %126 : vector<2x16x16xf32>
    %cst_58 = arith.constant dense<0xFF800000> : vector<2x16xf32>
    %128 = vector.multi_reduction <maximumf>, %127, %cst_58 [2] : vector<2x16x16xf32> to vector<2x16xf32>
    %129 = vector.shape_cast %128 : vector<2x16xf32> to vector<2x16x1xf32>
    %130 = vector.broadcast %129 : vector<2x16x1xf32> to vector<2x16x16xf32>
    %131 = arith.subf %127, %130 : vector<2x16x16xf32>
    %132 = math.exp %131 : vector<2x16x16xf32>
    %cst_59 = arith.constant dense<0.000000e+00> : vector<2x16xf32>
    %133 = vector.multi_reduction <add>, %132, %cst_59 [2] : vector<2x16x16xf32> to vector<2x16xf32>
    %134 = vector.shape_cast %133 : vector<2x16xf32> to vector<2x16x1xf32>
    %135 = tpu.reciprocal %134 {approx = true} : vector<2x16x1xf32> -> vector<2x16x1xf32>
    %136 = vector.broadcast %135 : vector<2x16x1xf32> to vector<2x16x16xf32>
    %137 = arith.mulf %132, %136 : vector<2x16x16xf32>
    %138 = arith.truncf %137 : vector<2x16x16xf32> to vector<2x16x16xbf16>
    "tpu.trace_start"() <{level = 10 : i32, message = "blm,bmd->bld"}> : () -> ()
    %cst_60 = arith.constant dense<0.000000e+00> : vector<2x16x8xf32>
    %139 = tpu.matmul %138, %122, %cst_60 {dimension_numbers = #tpu.dot_dimension_numbers<[2], [1], [1], [2], [0, 0, 0, 1, 1, 2], [0], [0]>} : vector<2x16x16xbf16>, vector<2x16x8xbf16>, vector<2x16x8xf32> -> vector<2x16x8xf32>
    "tpu.trace_stop"() : () -> ()
    %140 = vector.extract_strided_slice %98 {offsets = [0, 0, 16], sizes = [2, 16, 8], strides = [1, 1, 1]} : vector<2x16x192xbf16> to vector<2x16x8xbf16>
    %141 = vector.extract_strided_slice %98 {offsets = [0, 0, 80], sizes = [2, 16, 8], strides = [1, 1, 1]} : vector<2x16x192xbf16> to vector<2x16x8xbf16>
    %142 = vector.extract_strided_slice %98 {offsets = [0, 0, 144], sizes = [2, 16, 8], strides = [1, 1, 1]} : vector<2x16x192xbf16> to vector<2x16x8xbf16>
    "tpu.trace_start"() <{level = 10 : i32, message = "bld,bmd->blm"}> : () -> ()
    %cst_61 = arith.constant dense<0.000000e+00> : vector<2x16x16xf32>
    %143 = tpu.matmul %140, %141, %cst_61 {dimension_numbers = #tpu.dot_dimension_numbers<[2], [2], [1], [1], [0, 0, 0, 1, 1, 1], [0], [0]>} : vector<2x16x8xbf16>, vector<2x16x8xbf16>, vector<2x16x16xf32> -> vector<2x16x16xf32>
    "tpu.trace_stop"() : () -> ()
    %cst_62 = arith.constant 0.353553385 : f32
    %144 = vector.broadcast %cst_62 : f32 to vector<2x16x16xf32>
    %145 = arith.mulf %143, %144 : vector<2x16x16xf32>
    %146 = vector.broadcast %99 : vector<2x1x16xf32> to vector<2x16x16xf32>
    %147 = arith.addf %145, %146 : vector<2x16x16xf32>
    %cst_63 = arith.constant dense<0xFF800000> : vector<2x16xf32>
    %148 = vector.multi_reduction <maximumf>, %147, %cst_63 [2] : vector<2x16x16xf32> to vector<2x16xf32>
    %149 = vector.shape_cast %148 : vector<2x16xf32> to vector<2x16x1xf32>
    %150 = vector.broadcast %149 : vector<2x16x1xf32> to vector<2x16x16xf32>
    %151 = arith.subf %147, %150 : vector<2x16x16xf32>
    %152 = math.exp %151 : vector<2x16x16xf32>
    %cst_64 = arith.constant dense<0.000000e+00> : vector<2x16xf32>
    %153 = vector.multi_reduction <add>, %152, %cst_64 [2] : vector<2x16x16xf32> to vector<2x16xf32>
    %154 = vector.shape_cast %153 : vector<2x16xf32> to vector<2x16x1xf32>
    %155 = tpu.reciprocal %154 {approx = true} : vector<2x16x1xf32> -> vector<2x16x1xf32>
    %156 = vector.broadcast %155 : vector<2x16x1xf32> to vector<2x16x16xf32>
    %157 = arith.mulf %152, %156 : vector<2x16x16xf32>
    %158 = arith.truncf %157 : vector<2x16x16xf32> to vector<2x16x16xbf16>
    "tpu.trace_start"() <{level = 10 : i32, message = "blm,bmd->bld"}> : () -> ()
    %cst_65 = arith.constant dense<0.000000e+00> : vector<2x16x8xf32>
    %159 = tpu.matmul %158, %142, %cst_65 {dimension_numbers = #tpu.dot_dimension_numbers<[2], [1], [1], [2], [0, 0, 0, 1, 1, 2], [0], [0]>} : vector<2x16x16xbf16>, vector<2x16x8xbf16>, vector<2x16x8xf32> -> vector<2x16x8xf32>
    "tpu.trace_stop"() : () -> ()
    %160 = vector.extract_strided_slice %98 {offsets = [0, 0, 24], sizes = [2, 16, 8], strides = [1, 1, 1]} : vector<2x16x192xbf16> to vector<2x16x8xbf16>
    %161 = vector.extract_strided_slice %98 {offsets = [0, 0, 88], sizes = [2, 16, 8], strides = [1, 1, 1]} : vector<2x16x192xbf16> to vector<2x16x8xbf16>
    %162 = vector.extract_strided_slice %98 {offsets = [0, 0, 152], sizes = [2, 16, 8], strides = [1, 1, 1]} : vector<2x16x192xbf16> to vector<2x16x8xbf16>
    "tpu.trace_start"() <{level = 10 : i32, message = "bld,bmd->blm"}> : () -> ()
    %cst_66 = arith.constant dense<0.000000e+00> : vector<2x16x16xf32>
    %163 = tpu.matmul %160, %161, %cst_66 {dimension_numbers = #tpu.dot_dimension_numbers<[2], [2], [1], [1], [0, 0, 0, 1, 1, 1], [0], [0]>} : vector<2x16x8xbf16>, vector<2x16x8xbf16>, vector<2x16x16xf32> -> vector<2x16x16xf32>
    "tpu.trace_stop"() : () -> ()
    %cst_67 = arith.constant 0.353553385 : f32
    %164 = vector.broadcast %cst_67 : f32 to vector<2x16x16xf32>
    %165 = arith.mulf %163, %164 : vector<2x16x16xf32>
    %166 = vector.broadcast %99 : vector<2x1x16xf32> to vector<2x16x16xf32>
    %167 = arith.addf %165, %166 : vector<2x16x16xf32>
    %cst_68 = arith.constant dense<0xFF800000> : vector<2x16xf32>
    %168 = vector.multi_reduction <maximumf>, %167, %cst_68 [2] : vector<2x16x16xf32> to vector<2x16xf32>
    %169 = vector.shape_cast %168 : vector<2x16xf32> to vector<2x16x1xf32>
    %170 = vector.broadcast %169 : vector<2x16x1xf32> to vector<2x16x16xf32>
    %171 = arith.subf %167, %170 : vector<2x16x16xf32>
    %172 = math.exp %171 : vector<2x16x16xf32>
    %cst_69 = arith.constant dense<0.000000e+00> : vector<2x16xf32>
    %173 = vector.multi_reduction <add>, %172, %cst_69 [2] : vector<2x16x16xf32> to vector<2x16xf32>
    %174 = vector.shape_cast %173 : vector<2x16xf32> to vector<2x16x1xf32>
    %175 = tpu.reciprocal %174 {approx = true} : vector<2x16x1xf32> -> vector<2x16x1xf32>
    %176 = vector.broadcast %175 : vector<2x16x1xf32> to vector<2x16x16xf32>
    %177 = arith.mulf %172, %176 : vector<2x16x16xf32>
    %178 = arith.truncf %177 : vector<2x16x16xf32> to vector<2x16x16xbf16>
    "tpu.trace_start"() <{level = 10 : i32, message = "blm,bmd->bld"}> : () -> ()
    %cst_70 = arith.constant dense<0.000000e+00> : vector<2x16x8xf32>
    %179 = tpu.matmul %178, %162, %cst_70 {dimension_numbers = #tpu.dot_dimension_numbers<[2], [1], [1], [2], [0, 0, 0, 1, 1, 2], [0], [0]>} : vector<2x16x16xbf16>, vector<2x16x8xbf16>, vector<2x16x8xf32> -> vector<2x16x8xf32>
    "tpu.trace_stop"() : () -> ()
    %180 = vector.extract_strided_slice %98 {offsets = [0, 0, 32], sizes = [2, 16, 8], strides = [1, 1, 1]} : vector<2x16x192xbf16> to vector<2x16x8xbf16>
    %181 = vector.extract_strided_slice %98 {offsets = [0, 0, 96], sizes = [2, 16, 8], strides = [1, 1, 1]} : vector<2x16x192xbf16> to vector<2x16x8xbf16>
    %182 = vector.extract_strided_slice %98 {offsets = [0, 0, 160], sizes = [2, 16, 8], strides = [1, 1, 1]} : vector<2x16x192xbf16> to vector<2x16x8xbf16>
    "tpu.trace_start"() <{level = 10 : i32, message = "bld,bmd->blm"}> : () -> ()
    %cst_71 = arith.constant dense<0.000000e+00> : vector<2x16x16xf32>
    %183 = tpu.matmul %180, %181, %cst_71 {dimension_numbers = #tpu.dot_dimension_numbers<[2], [2], [1], [1], [0, 0, 0, 1, 1, 1], [0], [0]>} : vector<2x16x8xbf16>, vector<2x16x8xbf16>, vector<2x16x16xf32> -> vector<2x16x16xf32>
    "tpu.trace_stop"() : () -> ()
    %cst_72 = arith.constant 0.353553385 : f32
    %184 = vector.broadcast %cst_72 : f32 to vector<2x16x16xf32>
    %185 = arith.mulf %183, %184 : vector<2x16x16xf32>
    %186 = vector.broadcast %99 : vector<2x1x16xf32> to vector<2x16x16xf32>
    %187 = arith.addf %185, %186 : vector<2x16x16xf32>
    %cst_73 = arith.constant dense<0xFF800000> : vector<2x16xf32>
    %188 = vector.multi_reduction <maximumf>, %187, %cst_73 [2] : vector<2x16x16xf32> to vector<2x16xf32>
    %189 = vector.shape_cast %188 : vector<2x16xf32> to vector<2x16x1xf32>
    %190 = vector.broadcast %189 : vector<2x16x1xf32> to vector<2x16x16xf32>
    %191 = arith.subf %187, %190 : vector<2x16x16xf32>
    %192 = math.exp %191 : vector<2x16x16xf32>
    %cst_74 = arith.constant dense<0.000000e+00> : vector<2x16xf32>
    %193 = vector.multi_reduction <add>, %192, %cst_74 [2] : vector<2x16x16xf32> to vector<2x16xf32>
    %194 = vector.shape_cast %193 : vector<2x16xf32> to vector<2x16x1xf32>
    %195 = tpu.reciprocal %194 {approx = true} : vector<2x16x1xf32> -> vector<2x16x1xf32>
    %196 = vector.broadcast %195 : vector<2x16x1xf32> to vector<2x16x16xf32>
    %197 = arith.mulf %192, %196 : vector<2x16x16xf32>
    %198 = arith.truncf %197 : vector<2x16x16xf32> to vector<2x16x16xbf16>
    "tpu.trace_start"() <{level = 10 : i32, message = "blm,bmd->bld"}> : () -> ()
    %cst_75 = arith.constant dense<0.000000e+00> : vector<2x16x8xf32>
    %199 = tpu.matmul %198, %182, %cst_75 {dimension_numbers = #tpu.dot_dimension_numbers<[2], [1], [1], [2], [0, 0, 0, 1, 1, 2], [0], [0]>} : vector<2x16x16xbf16>, vector<2x16x8xbf16>, vector<2x16x8xf32> -> vector<2x16x8xf32>
    "tpu.trace_stop"() : () -> ()
    %200 = vector.extract_strided_slice %98 {offsets = [0, 0, 40], sizes = [2, 16, 8], strides = [1, 1, 1]} : vector<2x16x192xbf16> to vector<2x16x8xbf16>
    %201 = vector.extract_strided_slice %98 {offsets = [0, 0, 104], sizes = [2, 16, 8], strides = [1, 1, 1]} : vector<2x16x192xbf16> to vector<2x16x8xbf16>
    %202 = vector.extract_strided_slice %98 {offsets = [0, 0, 168], sizes = [2, 16, 8], strides = [1, 1, 1]} : vector<2x16x192xbf16> to vector<2x16x8xbf16>
    "tpu.trace_start"() <{level = 10 : i32, message = "bld,bmd->blm"}> : () -> ()
    %cst_76 = arith.constant dense<0.000000e+00> : vector<2x16x16xf32>
    %203 = tpu.matmul %200, %201, %cst_76 {dimension_numbers = #tpu.dot_dimension_numbers<[2], [2], [1], [1], [0, 0, 0, 1, 1, 1], [0], [0]>} : vector<2x16x8xbf16>, vector<2x16x8xbf16>, vector<2x16x16xf32> -> vector<2x16x16xf32>
    "tpu.trace_stop"() : () -> ()
    %cst_77 = arith.constant 0.353553385 : f32
    %204 = vector.broadcast %cst_77 : f32 to vector<2x16x16xf32>
    %205 = arith.mulf %203, %204 : vector<2x16x16xf32>
    %206 = vector.broadcast %99 : vector<2x1x16xf32> to vector<2x16x16xf32>
    %207 = arith.addf %205, %206 : vector<2x16x16xf32>
    %cst_78 = arith.constant dense<0xFF800000> : vector<2x16xf32>
    %208 = vector.multi_reduction <maximumf>, %207, %cst_78 [2] : vector<2x16x16xf32> to vector<2x16xf32>
    %209 = vector.shape_cast %208 : vector<2x16xf32> to vector<2x16x1xf32>
    %210 = vector.broadcast %209 : vector<2x16x1xf32> to vector<2x16x16xf32>
    %211 = arith.subf %207, %210 : vector<2x16x16xf32>
    %212 = math.exp %211 : vector<2x16x16xf32>
    %cst_79 = arith.constant dense<0.000000e+00> : vector<2x16xf32>
    %213 = vector.multi_reduction <add>, %212, %cst_79 [2] : vector<2x16x16xf32> to vector<2x16xf32>
    %214 = vector.shape_cast %213 : vector<2x16xf32> to vector<2x16x1xf32>
    %215 = tpu.reciprocal %214 {approx = true} : vector<2x16x1xf32> -> vector<2x16x1xf32>
    %216 = vector.broadcast %215 : vector<2x16x1xf32> to vector<2x16x16xf32>
    %217 = arith.mulf %212, %216 : vector<2x16x16xf32>
    %218 = arith.truncf %217 : vector<2x16x16xf32> to vector<2x16x16xbf16>
    "tpu.trace_start"() <{level = 10 : i32, message = "blm,bmd->bld"}> : () -> ()
    %cst_80 = arith.constant dense<0.000000e+00> : vector<2x16x8xf32>
    %219 = tpu.matmul %218, %202, %cst_80 {dimension_numbers = #tpu.dot_dimension_numbers<[2], [1], [1], [2], [0, 0, 0, 1, 1, 2], [0], [0]>} : vector<2x16x16xbf16>, vector<2x16x8xbf16>, vector<2x16x8xf32> -> vector<2x16x8xf32>
    "tpu.trace_stop"() : () -> ()
    %220 = vector.extract_strided_slice %98 {offsets = [0, 0, 48], sizes = [2, 16, 8], strides = [1, 1, 1]} : vector<2x16x192xbf16> to vector<2x16x8xbf16>
    %221 = vector.extract_strided_slice %98 {offsets = [0, 0, 112], sizes = [2, 16, 8], strides = [1, 1, 1]} : vector<2x16x192xbf16> to vector<2x16x8xbf16>
    %222 = vector.extract_strided_slice %98 {offsets = [0, 0, 176], sizes = [2, 16, 8], strides = [1, 1, 1]} : vector<2x16x192xbf16> to vector<2x16x8xbf16>
    "tpu.trace_start"() <{level = 10 : i32, message = "bld,bmd->blm"}> : () -> ()
    %cst_81 = arith.constant dense<0.000000e+00> : vector<2x16x16xf32>
    %223 = tpu.matmul %220, %221, %cst_81 {dimension_numbers = #tpu.dot_dimension_numbers<[2], [2], [1], [1], [0, 0, 0, 1, 1, 1], [0], [0]>} : vector<2x16x8xbf16>, vector<2x16x8xbf16>, vector<2x16x16xf32> -> vector<2x16x16xf32>
    "tpu.trace_stop"() : () -> ()
    %cst_82 = arith.constant 0.353553385 : f32
    %224 = vector.broadcast %cst_82 : f32 to vector<2x16x16xf32>
    %225 = arith.mulf %223, %224 : vector<2x16x16xf32>
    %226 = vector.broadcast %99 : vector<2x1x16xf32> to vector<2x16x16xf32>
    %227 = arith.addf %225, %226 : vector<2x16x16xf32>
    %cst_83 = arith.constant dense<0xFF800000> : vector<2x16xf32>
    %228 = vector.multi_reduction <maximumf>, %227, %cst_83 [2] : vector<2x16x16xf32> to vector<2x16xf32>
    %229 = vector.shape_cast %228 : vector<2x16xf32> to vector<2x16x1xf32>
    %230 = vector.broadcast %229 : vector<2x16x1xf32> to vector<2x16x16xf32>
    %231 = arith.subf %227, %230 : vector<2x16x16xf32>
    %232 = math.exp %231 : vector<2x16x16xf32>
    %cst_84 = arith.constant dense<0.000000e+00> : vector<2x16xf32>
    %233 = vector.multi_reduction <add>, %232, %cst_84 [2] : vector<2x16x16xf32> to vector<2x16xf32>
    %234 = vector.shape_cast %233 : vector<2x16xf32> to vector<2x16x1xf32>
    %235 = tpu.reciprocal %234 {approx = true} : vector<2x16x1xf32> -> vector<2x16x1xf32>
    %236 = vector.broadcast %235 : vector<2x16x1xf32> to vector<2x16x16xf32>
    %237 = arith.mulf %232, %236 : vector<2x16x16xf32>
    %238 = arith.truncf %237 : vector<2x16x16xf32> to vector<2x16x16xbf16>
    "tpu.trace_start"() <{level = 10 : i32, message = "blm,bmd->bld"}> : () -> ()
    %cst_85 = arith.constant dense<0.000000e+00> : vector<2x16x8xf32>
    %239 = tpu.matmul %238, %222, %cst_85 {dimension_numbers = #tpu.dot_dimension_numbers<[2], [1], [1], [2], [0, 0, 0, 1, 1, 2], [0], [0]>} : vector<2x16x16xbf16>, vector<2x16x8xbf16>, vector<2x16x8xf32> -> vector<2x16x8xf32>
    "tpu.trace_stop"() : () -> ()
    %240 = vector.extract_strided_slice %98 {offsets = [0, 0, 56], sizes = [2, 16, 8], strides = [1, 1, 1]} : vector<2x16x192xbf16> to vector<2x16x8xbf16>
    %241 = vector.extract_strided_slice %98 {offsets = [0, 0, 120], sizes = [2, 16, 8], strides = [1, 1, 1]} : vector<2x16x192xbf16> to vector<2x16x8xbf16>
    %242 = vector.extract_strided_slice %98 {offsets = [0, 0, 184], sizes = [2, 16, 8], strides = [1, 1, 1]} : vector<2x16x192xbf16> to vector<2x16x8xbf16>
    "tpu.trace_start"() <{level = 10 : i32, message = "bld,bmd->blm"}> : () -> ()
    %cst_86 = arith.constant dense<0.000000e+00> : vector<2x16x16xf32>
    %243 = tpu.matmul %240, %241, %cst_86 {dimension_numbers = #tpu.dot_dimension_numbers<[2], [2], [1], [1], [0, 0, 0, 1, 1, 1], [0], [0]>} : vector<2x16x8xbf16>, vector<2x16x8xbf16>, vector<2x16x16xf32> -> vector<2x16x16xf32>
    "tpu.trace_stop"() : () -> ()
    %cst_87 = arith.constant 0.353553385 : f32
    %244 = vector.broadcast %cst_87 : f32 to vector<2x16x16xf32>
    %245 = arith.mulf %243, %244 : vector<2x16x16xf32>
    %246 = vector.broadcast %99 : vector<2x1x16xf32> to vector<2x16x16xf32>
    %247 = arith.addf %245, %246 : vector<2x16x16xf32>
    %cst_88 = arith.constant dense<0xFF800000> : vector<2x16xf32>
    %248 = vector.multi_reduction <maximumf>, %247, %cst_88 [2] : vector<2x16x16xf32> to vector<2x16xf32>
    %249 = vector.shape_cast %248 : vector<2x16xf32> to vector<2x16x1xf32>
    %250 = vector.broadcast %249 : vector<2x16x1xf32> to vector<2x16x16xf32>
    %251 = arith.subf %247, %250 : vector<2x16x16xf32>
    %252 = math.exp %251 : vector<2x16x16xf32>
    %cst_89 = arith.constant dense<0.000000e+00> : vector<2x16xf32>
    %253 = vector.multi_reduction <add>, %252, %cst_89 [2] : vector<2x16x16xf32> to vector<2x16xf32>
    %254 = vector.shape_cast %253 : vector<2x16xf32> to vector<2x16x1xf32>
    %255 = tpu.reciprocal %254 {approx = true} : vector<2x16x1xf32> -> vector<2x16x1xf32>
    %256 = vector.broadcast %255 : vector<2x16x1xf32> to vector<2x16x16xf32>
    %257 = arith.mulf %252, %256 : vector<2x16x16xf32>
    %258 = arith.truncf %257 : vector<2x16x16xf32> to vector<2x16x16xbf16>
    "tpu.trace_start"() <{level = 10 : i32, message = "blm,bmd->bld"}> : () -> ()
    %cst_90 = arith.constant dense<0.000000e+00> : vector<2x16x8xf32>
    %259 = tpu.matmul %258, %242, %cst_90 {dimension_numbers = #tpu.dot_dimension_numbers<[2], [1], [1], [2], [0, 0, 0, 1, 1, 2], [0], [0]>} : vector<2x16x16xbf16>, vector<2x16x8xbf16>, vector<2x16x8xf32> -> vector<2x16x8xf32>
    "tpu.trace_stop"() : () -> ()
    %260 = tpu.concatenate %119, %139, %159, %179, %199, %219, %239, %259 in 2 : vector<2x16x8xf32>, vector<2x16x8xf32>, vector<2x16x8xf32>, vector<2x16x8xf32>, vector<2x16x8xf32>, vector<2x16x8xf32>, vector<2x16x8xf32>, vector<2x16x8xf32> -> vector<2x16x64xf32>
    %261 = vector.shape_cast %260 : vector<2x16x64xf32> to vector<32x64xf32>
    %262 = arith.truncf %261 : vector<32x64xf32> to vector<32x64xbf16>
    %c0_91 = arith.constant 0 : index
    %c0_92 = arith.constant 0 : index
    %263 = vector.load %arg17[%c0_91, %c0_92] : memref<64x64xbf16, #tpu.memory_space<vmem>>, vector<64x64xbf16>
    %cst_93 = arith.constant dense<0.000000e+00> : vector<32x64xf32>
    %264 = tpu.matmul %262, %263, %cst_93 {dimension_numbers = #tpu.dot_dimension_numbers<[1], [0], [0], [1], [0, 0, 1, 1], [], []>} : vector<32x64xbf16>, vector<64x64xbf16>, vector<32x64xf32> -> vector<32x64xf32>
    %c0_94 = arith.constant 0 : index
    %c0_95 = arith.constant 0 : index
    %265 = vector.load %arg18[%c0_94, %c0_95] : memref<1x64xf32, #tpu.memory_space<vmem>>, vector<1x64xf32>
    %266 = vector.broadcast %265 : vector<1x64xf32> to vector<32x64xf32>
    %267 = arith.addf %264, %266 : vector<32x64xf32>
    %268 = vector.shape_cast %267 : vector<32x64xf32> to vector<2x16x64xf32>
    %269 = arith.addf %268, %63 : vector<2x16x64xf32>
    %c0_96 = arith.constant 0 : index
    %c0_97 = arith.constant 0 : index
    %270 = vector.load %arg19[%c0_96, %c0_97] : memref<1x64xf32, #tpu.memory_space<vmem>>, vector<1x64xf32>
    %c0_98 = arith.constant 0 : index
    %c0_99 = arith.constant 0 : index
    %271 = vector.load %arg20[%c0_98, %c0_99] : memref<1x64xf32, #tpu.memory_space<vmem>>, vector<1x64xf32>
    %cst_100 = arith.constant dense<0.000000e+00> : vector<2x16xf32>
    %272 = vector.multi_reduction <add>, %269, %cst_100 [2] : vector<2x16x64xf32> to vector<2x16xf32>
    %273 = vector.shape_cast %272 : vector<2x16xf32> to vector<2x16x1xf32>
    %cst_101 = arith.constant 6.400000e+01 : f32
    %274 = vector.broadcast %cst_101 : f32 to vector<2x16x1xf32>
    %275 = arith.divf %273, %274 : vector<2x16x1xf32>
    %276 = vector.broadcast %275 : vector<2x16x1xf32> to vector<2x16x64xf32>
    %277 = arith.subf %269, %276 : vector<2x16x64xf32>
    %278 = arith.mulf %277, %277 : vector<2x16x64xf32>
    %cst_102 = arith.constant dense<0.000000e+00> : vector<2x16xf32>
    %279 = vector.multi_reduction <add>, %278, %cst_102 [2] : vector<2x16x64xf32> to vector<2x16xf32>
    %280 = vector.shape_cast %279 : vector<2x16xf32> to vector<2x16x1xf32>
    %cst_103 = arith.constant 6.400000e+01 : f32
    %281 = vector.broadcast %cst_103 : f32 to vector<2x16x1xf32>
    %282 = arith.divf %280, %281 : vector<2x16x1xf32>
    %283 = vector.broadcast %275 : vector<2x16x1xf32> to vector<2x16x64xf32>
    %284 = arith.subf %269, %283 : vector<2x16x64xf32>
    %cst_104 = arith.constant 9.99999974E-6 : f32
    %285 = vector.broadcast %cst_104 : f32 to vector<2x16x1xf32>
    %286 = arith.addf %282, %285 : vector<2x16x1xf32>
    %287 = math.rsqrt %286 : vector<2x16x1xf32>
    %288 = vector.broadcast %287 : vector<2x16x1xf32> to vector<2x16x64xf32>
    %289 = arith.mulf %284, %288 : vector<2x16x64xf32>
    %290 = vector.shape_cast %270 : vector<1x64xf32> to vector<1x1x64xf32>
    %291 = vector.broadcast %290 : vector<1x1x64xf32> to vector<2x16x64xf32>
    %292 = arith.mulf %289, %291 : vector<2x16x64xf32>
    %293 = vector.shape_cast %271 : vector<1x64xf32> to vector<1x1x64xf32>
    %294 = vector.broadcast %293 : vector<1x1x64xf32> to vector<2x16x64xf32>
    %295 = arith.addf %292, %294 : vector<2x16x64xf32>
    %296 = vector.shape_cast %295 : vector<2x16x64xf32> to vector<32x64xf32>
    %297 = arith.truncf %296 : vector<32x64xf32> to vector<32x64xbf16>
    %c0_105 = arith.constant 0 : index
    %c0_106 = arith.constant 0 : index
    %298 = vector.load %arg21[%c0_105, %c0_106] : memref<64x128xbf16, #tpu.memory_space<vmem>>, vector<64x128xbf16>
    %cst_107 = arith.constant dense<0.000000e+00> : vector<32x128xf32>
    %299 = tpu.matmul %297, %298, %cst_107 {dimension_numbers = #tpu.dot_dimension_numbers<[1], [0], [0], [1], [0, 0, 1, 1], [], []>} : vector<32x64xbf16>, vector<64x128xbf16>, vector<32x128xf32> -> vector<32x128xf32>
    %c0_108 = arith.constant 0 : index
    %c0_109 = arith.constant 0 : index
    %300 = vector.load %arg22[%c0_108, %c0_109] : memref<1x128xf32, #tpu.memory_space<vmem>>, vector<1x128xf32>
    %301 = vector.broadcast %300 : vector<1x128xf32> to vector<32x128xf32>
    %302 = arith.addf %299, %301 : vector<32x128xf32>
    %303 = vector.shape_cast %302 : vector<32x128xf32> to vector<2x16x128xf32>
    %304 = vector.extract_strided_slice %303 {offsets = [0, 0, 0], sizes = [2, 16, 64], strides = [1, 1, 1]} : vector<2x16x128xf32> to vector<2x16x64xf32>
    %305 = vector.extract_strided_slice %303 {offsets = [0, 0, 64], sizes = [2, 16, 64], strides = [1, 1, 1]} : vector<2x16x128xf32> to vector<2x16x64xf32>
    %306 = arith.negf %305 : vector<2x16x64xf32>
    %307 = math.exp %306 : vector<2x16x64xf32>
    %cst_110 = arith.constant 1.000000e+00 : f32
    %308 = vector.broadcast %cst_110 : f32 to vector<2x16x64xf32>
    %309 = arith.addf %308, %307 : vector<2x16x64xf32>
    %310 = arith.divf %308, %309 : vector<2x16x64xf32>
    %311 = arith.mulf %304, %310 : vector<2x16x64xf32>
    %312 = vector.shape_cast %311 : vector<2x16x64xf32> to vector<32x64xf32>
    %313 = tpu.iota {dimensions = array<i32: 0>} : vector<32x1xi32>
    %c16_i32 = arith.constant 16 : i32
    %c0_i32 = arith.constant 0 : i32
    %314 = arith.cmpi eq, %c16_i32, %c0_i32 : i32
    %c1_i32 = arith.constant 1 : i32
    %315 = arith.select %314, %c1_i32, %c16_i32 : i32
    %316 = vector.broadcast %315 : i32 to vector<32x1xi32>
    %317 = arith.remsi %313, %316 : vector<32x1xi32>
    %c0_i32_111 = arith.constant 0 : i32
    %318 = vector.broadcast %c0_i32_111 : i32 to vector<32x1xi32>
    %319 = arith.cmpi ne, %317, %318 : vector<32x1xi32>
    %c0_i32_112 = arith.constant 0 : i32
    %320 = vector.broadcast %c0_i32_112 : i32 to vector<32x1xi32>
    %321 = arith.cmpi slt, %317, %320 : vector<32x1xi32>
    %c0_i32_113 = arith.constant 0 : i32
    %322 = arith.cmpi slt, %315, %c0_i32_113 : i32
    %323 = vector.broadcast %322 : i1 to vector<32x1xi1>
    %324 = vector.broadcast %323 : vector<32x1xi1> to vector<32x1xi1>
    %325 = arith.xori %321, %324 : vector<32x1xi1>
    %326 = arith.andi %325, %319 : vector<32x1xi1>
    %327 = vector.broadcast %315 : i32 to vector<32x1xi32>
    %328 = arith.addi %317, %327 : vector<32x1xi32>
    %329 = arith.select %326, %328, %317 : vector<32x1xi1>, vector<32x1xi32>
    %c0_114 = arith.constant 0 : index
    %c0_115 = arith.constant 0 : index
    %330 = vector.load %arg23[%c0_114, %c0_115] : memref<5x64xf32, #tpu.memory_space<vmem>>, vector<5x64xf32>
    %cst_116 = arith.constant 0.000000e+00 : f32
    %331 = vector.broadcast %cst_116 : f32 to vector<32x64xf32>
    %c2_i32 = arith.constant 2 : i32
    %332 = tpu.dynamic_rotate %312 by %c2_i32 dim 0 : vector<32x64xf32>, i32 -> vector<32x64xf32>
    %c-2_i32 = arith.constant -2 : i32
    %333 = vector.broadcast %c-2_i32 : i32 to vector<32x1xi32>
    %334 = arith.addi %329, %333 : vector<32x1xi32>
    %c0_i32_117 = arith.constant 0 : i32
    %335 = vector.broadcast %c0_i32_117 : i32 to vector<32x1xi32>
    %336 = arith.cmpi sge, %334, %335 : vector<32x1xi32>
    %c-2_i32_118 = arith.constant -2 : i32
    %337 = vector.broadcast %c-2_i32_118 : i32 to vector<32x1xi32>
    %338 = arith.addi %329, %337 : vector<32x1xi32>
    %c16_i32_119 = arith.constant 16 : i32
    %339 = vector.broadcast %c16_i32_119 : i32 to vector<32x1xi32>
    %340 = arith.cmpi slt, %338, %339 : vector<32x1xi32>
    %341 = arith.andi %336, %340 : vector<32x1xi1>
    %cst_120 = arith.constant 0.000000e+00 : f32
    %342 = vector.shape_cast %341 : vector<32x1xi1> to vector<32x1xi1>
    %343 = vector.broadcast %342 : vector<32x1xi1> to vector<32x64xi1>
    %344 = vector.broadcast %cst_120 : f32 to vector<32x64xf32>
    %345 = arith.select %343, %332, %344 : vector<32x64xi1>, vector<32x64xf32>
    %346 = vector.extract_strided_slice %330 {offsets = [0, 0], sizes = [1, 64], strides = [1, 1]} : vector<5x64xf32> to vector<1x64xf32>
    %347 = vector.broadcast %346 : vector<1x64xf32> to vector<32x64xf32>
    %348 = arith.mulf %345, %347 : vector<32x64xf32>
    %349 = arith.addf %331, %348 : vector<32x64xf32>
    %c1_i32_121 = arith.constant 1 : i32
    %350 = tpu.dynamic_rotate %312 by %c1_i32_121 dim 0 : vector<32x64xf32>, i32 -> vector<32x64xf32>
    %c-1_i32 = arith.constant -1 : i32
    %351 = vector.broadcast %c-1_i32 : i32 to vector<32x1xi32>
    %352 = arith.addi %329, %351 : vector<32x1xi32>
    %c0_i32_122 = arith.constant 0 : i32
    %353 = vector.broadcast %c0_i32_122 : i32 to vector<32x1xi32>
    %354 = arith.cmpi sge, %352, %353 : vector<32x1xi32>
    %c-1_i32_123 = arith.constant -1 : i32
    %355 = vector.broadcast %c-1_i32_123 : i32 to vector<32x1xi32>
    %356 = arith.addi %329, %355 : vector<32x1xi32>
    %c16_i32_124 = arith.constant 16 : i32
    %357 = vector.broadcast %c16_i32_124 : i32 to vector<32x1xi32>
    %358 = arith.cmpi slt, %356, %357 : vector<32x1xi32>
    %359 = arith.andi %354, %358 : vector<32x1xi1>
    %cst_125 = arith.constant 0.000000e+00 : f32
    %360 = vector.shape_cast %359 : vector<32x1xi1> to vector<32x1xi1>
    %361 = vector.broadcast %360 : vector<32x1xi1> to vector<32x64xi1>
    %362 = vector.broadcast %cst_125 : f32 to vector<32x64xf32>
    %363 = arith.select %361, %350, %362 : vector<32x64xi1>, vector<32x64xf32>
    %364 = vector.extract_strided_slice %330 {offsets = [1, 0], sizes = [1, 64], strides = [1, 1]} : vector<5x64xf32> to vector<1x64xf32>
    %365 = vector.broadcast %364 : vector<1x64xf32> to vector<32x64xf32>
    %366 = arith.mulf %363, %365 : vector<32x64xf32>
    %367 = arith.addf %349, %366 : vector<32x64xf32>
    %368 = vector.extract_strided_slice %330 {offsets = [2, 0], sizes = [1, 64], strides = [1, 1]} : vector<5x64xf32> to vector<1x64xf32>
    %369 = vector.broadcast %368 : vector<1x64xf32> to vector<32x64xf32>
    %370 = arith.mulf %312, %369 : vector<32x64xf32>
    %371 = arith.addf %367, %370 : vector<32x64xf32>
    %c31_i32 = arith.constant 31 : i32
    %372 = tpu.dynamic_rotate %312 by %c31_i32 dim 0 : vector<32x64xf32>, i32 -> vector<32x64xf32>
    %c1_i32_126 = arith.constant 1 : i32
    %373 = vector.broadcast %c1_i32_126 : i32 to vector<32x1xi32>
    %374 = arith.addi %329, %373 : vector<32x1xi32>
    %c0_i32_127 = arith.constant 0 : i32
    %375 = vector.broadcast %c0_i32_127 : i32 to vector<32x1xi32>
    %376 = arith.cmpi sge, %374, %375 : vector<32x1xi32>
    %c1_i32_128 = arith.constant 1 : i32
    %377 = vector.broadcast %c1_i32_128 : i32 to vector<32x1xi32>
    %378 = arith.addi %329, %377 : vector<32x1xi32>
    %c16_i32_129 = arith.constant 16 : i32
    %379 = vector.broadcast %c16_i32_129 : i32 to vector<32x1xi32>
    %380 = arith.cmpi slt, %378, %379 : vector<32x1xi32>
    %381 = arith.andi %376, %380 : vector<32x1xi1>
    %cst_130 = arith.constant 0.000000e+00 : f32
    %382 = vector.shape_cast %381 : vector<32x1xi1> to vector<32x1xi1>
    %383 = vector.broadcast %382 : vector<32x1xi1> to vector<32x64xi1>
    %384 = vector.broadcast %cst_130 : f32 to vector<32x64xf32>
    %385 = arith.select %383, %372, %384 : vector<32x64xi1>, vector<32x64xf32>
    %386 = vector.extract_strided_slice %330 {offsets = [3, 0], sizes = [1, 64], strides = [1, 1]} : vector<5x64xf32> to vector<1x64xf32>
    %387 = vector.broadcast %386 : vector<1x64xf32> to vector<32x64xf32>
    %388 = arith.mulf %385, %387 : vector<32x64xf32>
    %389 = arith.addf %371, %388 : vector<32x64xf32>
    %c30_i32 = arith.constant 30 : i32
    %390 = tpu.dynamic_rotate %312 by %c30_i32 dim 0 : vector<32x64xf32>, i32 -> vector<32x64xf32>
    %c2_i32_131 = arith.constant 2 : i32
    %391 = vector.broadcast %c2_i32_131 : i32 to vector<32x1xi32>
    %392 = arith.addi %329, %391 : vector<32x1xi32>
    %c0_i32_132 = arith.constant 0 : i32
    %393 = vector.broadcast %c0_i32_132 : i32 to vector<32x1xi32>
    %394 = arith.cmpi sge, %392, %393 : vector<32x1xi32>
    %c2_i32_133 = arith.constant 2 : i32
    %395 = vector.broadcast %c2_i32_133 : i32 to vector<32x1xi32>
    %396 = arith.addi %329, %395 : vector<32x1xi32>
    %c16_i32_134 = arith.constant 16 : i32
    %397 = vector.broadcast %c16_i32_134 : i32 to vector<32x1xi32>
    %398 = arith.cmpi slt, %396, %397 : vector<32x1xi32>
    %399 = arith.andi %394, %398 : vector<32x1xi1>
    %cst_135 = arith.constant 0.000000e+00 : f32
    %400 = vector.shape_cast %399 : vector<32x1xi1> to vector<32x1xi1>
    %401 = vector.broadcast %400 : vector<32x1xi1> to vector<32x64xi1>
    %402 = vector.broadcast %cst_135 : f32 to vector<32x64xf32>
    %403 = arith.select %401, %390, %402 : vector<32x64xi1>, vector<32x64xf32>
    %404 = vector.extract_strided_slice %330 {offsets = [4, 0], sizes = [1, 64], strides = [1, 1]} : vector<5x64xf32> to vector<1x64xf32>
    %405 = vector.broadcast %404 : vector<1x64xf32> to vector<32x64xf32>
    %406 = arith.mulf %403, %405 : vector<32x64xf32>
    %407 = arith.addf %389, %406 : vector<32x64xf32>
    %c0_136 = arith.constant 0 : index
    %c0_137 = arith.constant 0 : index
    %408 = vector.load %arg24[%c0_136, %c0_137] : memref<1x64xf32, #tpu.memory_space<vmem>>, vector<1x64xf32>
    %409 = vector.broadcast %408 : vector<1x64xf32> to vector<32x64xf32>
    %410 = arith.addf %407, %409 : vector<32x64xf32>
    %411 = vector.shape_cast %410 : vector<32x64xf32> to vector<2x16x64xf32>
    %cst_138 = arith.constant dense<0.000000e+00> : vector<2x16xf32>
    %412 = vector.multi_reduction <add>, %411, %cst_138 [2] : vector<2x16x64xf32> to vector<2x16xf32>
    %413 = vector.shape_cast %412 : vector<2x16xf32> to vector<2x16x1xf32>
    %cst_139 = arith.constant 6.400000e+01 : f32
    %414 = vector.broadcast %cst_139 : f32 to vector<2x16x1xf32>
    %415 = arith.divf %413, %414 : vector<2x16x1xf32>
    %cst_140 = arith.constant dense<0.000000e+00> : vector<2x1xf32>
    %416 = vector.multi_reduction <add>, %415, %cst_140 [1] : vector<2x16x1xf32> to vector<2x1xf32>
    %417 = vector.shape_cast %416 : vector<2x1xf32> to vector<2x1x1xf32>
    %cst_141 = arith.constant 1.600000e+01 : f32
    %418 = vector.broadcast %cst_141 : f32 to vector<2x1x1xf32>
    %419 = arith.divf %417, %418 : vector<2x1x1xf32>
    %420 = vector.broadcast %419 : vector<2x1x1xf32> to vector<2x16x64xf32>
    %421 = arith.subf %411, %420 : vector<2x16x64xf32>
    %422 = arith.mulf %421, %421 : vector<2x16x64xf32>
    %cst_142 = arith.constant dense<0.000000e+00> : vector<2x16xf32>
    %423 = vector.multi_reduction <add>, %422, %cst_142 [2] : vector<2x16x64xf32> to vector<2x16xf32>
    %424 = vector.shape_cast %423 : vector<2x16xf32> to vector<2x16x1xf32>
    %cst_143 = arith.constant 6.400000e+01 : f32
    %425 = vector.broadcast %cst_143 : f32 to vector<2x16x1xf32>
    %426 = arith.divf %424, %425 : vector<2x16x1xf32>
    %cst_144 = arith.constant dense<0.000000e+00> : vector<2x1xf32>
    %427 = vector.multi_reduction <add>, %426, %cst_144 [1] : vector<2x16x1xf32> to vector<2x1xf32>
    %428 = vector.shape_cast %427 : vector<2x1xf32> to vector<2x1x1xf32>
    %cst_145 = arith.constant 1.600000e+01 : f32
    %429 = vector.broadcast %cst_145 : f32 to vector<2x1x1xf32>
    %430 = arith.divf %428, %429 : vector<2x1x1xf32>
    %cst_146 = arith.constant 9.99999974E-6 : f32
    %431 = vector.broadcast %cst_146 : f32 to vector<2x1x1xf32>
    %432 = arith.addf %430, %431 : vector<2x1x1xf32>
    %433 = math.rsqrt %432 : vector<2x1x1xf32>
    %434 = vector.broadcast %433 : vector<2x1x1xf32> to vector<2x16x64xf32>
    %435 = arith.mulf %421, %434 : vector<2x16x64xf32>
    %c0_147 = arith.constant 0 : index
    %c0_148 = arith.constant 0 : index
    %436 = vector.load %arg25[%c0_147, %c0_148] : memref<1x64xf32, #tpu.memory_space<vmem>>, vector<1x64xf32>
    %437 = vector.shape_cast %436 : vector<1x64xf32> to vector<1x1x64xf32>
    %438 = vector.broadcast %437 : vector<1x1x64xf32> to vector<2x16x64xf32>
    %439 = arith.mulf %435, %438 : vector<2x16x64xf32>
    %c0_149 = arith.constant 0 : index
    %c0_150 = arith.constant 0 : index
    %440 = vector.load %arg26[%c0_149, %c0_150] : memref<1x64xf32, #tpu.memory_space<vmem>>, vector<1x64xf32>
    %441 = vector.shape_cast %440 : vector<1x64xf32> to vector<1x1x64xf32>
    %442 = vector.broadcast %441 : vector<1x1x64xf32> to vector<2x16x64xf32>
    %443 = arith.addf %439, %442 : vector<2x16x64xf32>
    %444 = arith.negf %443 : vector<2x16x64xf32>
    %445 = math.exp %444 : vector<2x16x64xf32>
    %cst_151 = arith.constant 1.000000e+00 : f32
    %446 = vector.broadcast %cst_151 : f32 to vector<2x16x64xf32>
    %447 = arith.addf %446, %445 : vector<2x16x64xf32>
    %448 = arith.divf %446, %447 : vector<2x16x64xf32>
    %449 = arith.mulf %443, %448 : vector<2x16x64xf32>
    %450 = vector.shape_cast %449 : vector<2x16x64xf32> to vector<32x64xf32>
    %451 = arith.truncf %450 : vector<32x64xf32> to vector<32x64xbf16>
    %c0_152 = arith.constant 0 : index
    %c0_153 = arith.constant 0 : index
    %452 = vector.load %arg27[%c0_152, %c0_153] : memref<64x64xbf16, #tpu.memory_space<vmem>>, vector<64x64xbf16>
    %cst_154 = arith.constant dense<0.000000e+00> : vector<32x64xf32>
    %453 = tpu.matmul %451, %452, %cst_154 {dimension_numbers = #tpu.dot_dimension_numbers<[1], [0], [0], [1], [0, 0, 1, 1], [], []>} : vector<32x64xbf16>, vector<64x64xbf16>, vector<32x64xf32> -> vector<32x64xf32>
    %c0_155 = arith.constant 0 : index
    %c0_156 = arith.constant 0 : index
    %454 = vector.load %arg28[%c0_155, %c0_156] : memref<1x64xf32, #tpu.memory_space<vmem>>, vector<1x64xf32>
    %455 = vector.broadcast %454 : vector<1x64xf32> to vector<32x64xf32>
    %456 = arith.addf %453, %455 : vector<32x64xf32>
    %457 = vector.shape_cast %456 : vector<32x64xf32> to vector<2x16x64xf32>
    %458 = arith.addf %269, %457 : vector<2x16x64xf32>
    %c0_157 = arith.constant 0 : index
    %c0_158 = arith.constant 0 : index
    %459 = vector.load %arg29[%c0_157, %c0_158] : memref<1x64xf32, #tpu.memory_space<vmem>>, vector<1x64xf32>
    %c0_159 = arith.constant 0 : index
    %c0_160 = arith.constant 0 : index
    %460 = vector.load %arg30[%c0_159, %c0_160] : memref<1x64xf32, #tpu.memory_space<vmem>>, vector<1x64xf32>
    %cst_161 = arith.constant dense<0.000000e+00> : vector<2x16xf32>
    %461 = vector.multi_reduction <add>, %458, %cst_161 [2] : vector<2x16x64xf32> to vector<2x16xf32>
    %462 = vector.shape_cast %461 : vector<2x16xf32> to vector<2x16x1xf32>
    %cst_162 = arith.constant 6.400000e+01 : f32
    %463 = vector.broadcast %cst_162 : f32 to vector<2x16x1xf32>
    %464 = arith.divf %462, %463 : vector<2x16x1xf32>
    %465 = vector.broadcast %464 : vector<2x16x1xf32> to vector<2x16x64xf32>
    %466 = arith.subf %458, %465 : vector<2x16x64xf32>
    %467 = arith.mulf %466, %466 : vector<2x16x64xf32>
    %cst_163 = arith.constant dense<0.000000e+00> : vector<2x16xf32>
    %468 = vector.multi_reduction <add>, %467, %cst_163 [2] : vector<2x16x64xf32> to vector<2x16xf32>
    %469 = vector.shape_cast %468 : vector<2x16xf32> to vector<2x16x1xf32>
    %cst_164 = arith.constant 6.400000e+01 : f32
    %470 = vector.broadcast %cst_164 : f32 to vector<2x16x1xf32>
    %471 = arith.divf %469, %470 : vector<2x16x1xf32>
    %472 = vector.broadcast %464 : vector<2x16x1xf32> to vector<2x16x64xf32>
    %473 = arith.subf %458, %472 : vector<2x16x64xf32>
    %cst_165 = arith.constant 9.99999974E-6 : f32
    %474 = vector.broadcast %cst_165 : f32 to vector<2x16x1xf32>
    %475 = arith.addf %471, %474 : vector<2x16x1xf32>
    %476 = math.rsqrt %475 : vector<2x16x1xf32>
    %477 = vector.broadcast %476 : vector<2x16x1xf32> to vector<2x16x64xf32>
    %478 = arith.mulf %473, %477 : vector<2x16x64xf32>
    %479 = vector.shape_cast %459 : vector<1x64xf32> to vector<1x1x64xf32>
    %480 = vector.broadcast %479 : vector<1x1x64xf32> to vector<2x16x64xf32>
    %481 = arith.mulf %478, %480 : vector<2x16x64xf32>
    %482 = vector.shape_cast %460 : vector<1x64xf32> to vector<1x1x64xf32>
    %483 = vector.broadcast %482 : vector<1x1x64xf32> to vector<2x16x64xf32>
    %484 = arith.addf %481, %483 : vector<2x16x64xf32>
    %485 = vector.shape_cast %484 : vector<2x16x64xf32> to vector<32x64xf32>
    %486 = arith.truncf %485 : vector<32x64xf32> to vector<32x64xbf16>
    %c0_166 = arith.constant 0 : index
    %c0_167 = arith.constant 0 : index
    %487 = vector.load %arg31[%c0_166, %c0_167] : memref<64x1024xbf16, #tpu.memory_space<vmem>>, vector<64x1024xbf16>
    %cst_168 = arith.constant dense<0.000000e+00> : vector<32x1024xf32>
    %488 = tpu.matmul %486, %487, %cst_168 {dimension_numbers = #tpu.dot_dimension_numbers<[1], [0], [0], [1], [0, 0, 1, 1], [], []>} : vector<32x64xbf16>, vector<64x1024xbf16>, vector<32x1024xf32> -> vector<32x1024xf32>
    %c0_169 = arith.constant 0 : index
    %c0_170 = arith.constant 0 : index
    %489 = vector.load %arg32[%c0_169, %c0_170] : memref<1x1024xf32, #tpu.memory_space<vmem>>, vector<1x1024xf32>
    %490 = vector.broadcast %489 : vector<1x1024xf32> to vector<32x1024xf32>
    %491 = arith.addf %488, %490 : vector<32x1024xf32>
    %492 = vector.shape_cast %491 : vector<32x1024xf32> to vector<2x16x1024xf32>
    %493 = arith.negf %492 : vector<2x16x1024xf32>
    %494 = math.exp %493 : vector<2x16x1024xf32>
    %cst_171 = arith.constant 1.000000e+00 : f32
    %495 = vector.broadcast %cst_171 : f32 to vector<2x16x1024xf32>
    %496 = arith.addf %495, %494 : vector<2x16x1024xf32>
    %497 = arith.divf %495, %496 : vector<2x16x1024xf32>
    %498 = arith.mulf %492, %497 : vector<2x16x1024xf32>
    %499 = vector.shape_cast %498 : vector<2x16x1024xf32> to vector<32x1024xf32>
    %500 = arith.truncf %499 : vector<32x1024xf32> to vector<32x1024xbf16>
    %c0_172 = arith.constant 0 : index
    %c0_173 = arith.constant 0 : index
    %501 = vector.load %arg33[%c0_172, %c0_173] : memref<1024x64xbf16, #tpu.memory_space<vmem>>, vector<1024x64xbf16>
    %cst_174 = arith.constant dense<0.000000e+00> : vector<32x64xf32>
    %502 = tpu.matmul %500, %501, %cst_174 {dimension_numbers = #tpu.dot_dimension_numbers<[1], [0], [0], [1], [0, 0, 1, 1], [], []>} : vector<32x1024xbf16>, vector<1024x64xbf16>, vector<32x64xf32> -> vector<32x64xf32>
    %c0_175 = arith.constant 0 : index
    %c0_176 = arith.constant 0 : index
    %503 = vector.load %arg34[%c0_175, %c0_176] : memref<1x64xf32, #tpu.memory_space<vmem>>, vector<1x64xf32>
    %504 = vector.broadcast %503 : vector<1x64xf32> to vector<32x64xf32>
    %505 = arith.addf %502, %504 : vector<32x64xf32>
    %506 = vector.shape_cast %505 : vector<32x64xf32> to vector<2x16x64xf32>
    %cst_177 = arith.constant 5.000000e-01 : f32
    %507 = vector.broadcast %cst_177 : f32 to vector<2x16x64xf32>
    %508 = arith.mulf %507, %506 : vector<2x16x64xf32>
    %509 = arith.addf %508, %458 : vector<2x16x64xf32>
    %c0_178 = arith.constant 0 : index
    %c0_179 = arith.constant 0 : index
    %510 = vector.load %arg35[%c0_178, %c0_179] : memref<1x64xf32, #tpu.memory_space<vmem>>, vector<1x64xf32>
    %c0_180 = arith.constant 0 : index
    %c0_181 = arith.constant 0 : index
    %511 = vector.load %arg36[%c0_180, %c0_181] : memref<1x64xf32, #tpu.memory_space<vmem>>, vector<1x64xf32>
    %cst_182 = arith.constant dense<0.000000e+00> : vector<2x16xf32>
    %512 = vector.multi_reduction <add>, %509, %cst_182 [2] : vector<2x16x64xf32> to vector<2x16xf32>
    %513 = vector.shape_cast %512 : vector<2x16xf32> to vector<2x16x1xf32>
    %cst_183 = arith.constant 6.400000e+01 : f32
    %514 = vector.broadcast %cst_183 : f32 to vector<2x16x1xf32>
    %515 = arith.divf %513, %514 : vector<2x16x1xf32>
    %516 = vector.broadcast %515 : vector<2x16x1xf32> to vector<2x16x64xf32>
    %517 = arith.subf %509, %516 : vector<2x16x64xf32>
    %518 = arith.mulf %517, %517 : vector<2x16x64xf32>
    %cst_184 = arith.constant dense<0.000000e+00> : vector<2x16xf32>
    %519 = vector.multi_reduction <add>, %518, %cst_184 [2] : vector<2x16x64xf32> to vector<2x16xf32>
    %520 = vector.shape_cast %519 : vector<2x16xf32> to vector<2x16x1xf32>
    %cst_185 = arith.constant 6.400000e+01 : f32
    %521 = vector.broadcast %cst_185 : f32 to vector<2x16x1xf32>
    %522 = arith.divf %520, %521 : vector<2x16x1xf32>
    %523 = vector.broadcast %515 : vector<2x16x1xf32> to vector<2x16x64xf32>
    %524 = arith.subf %509, %523 : vector<2x16x64xf32>
    %cst_186 = arith.constant 9.99999974E-6 : f32
    %525 = vector.broadcast %cst_186 : f32 to vector<2x16x1xf32>
    %526 = arith.addf %522, %525 : vector<2x16x1xf32>
    %527 = math.rsqrt %526 : vector<2x16x1xf32>
    %528 = vector.broadcast %527 : vector<2x16x1xf32> to vector<2x16x64xf32>
    %529 = arith.mulf %524, %528 : vector<2x16x64xf32>
    %530 = vector.shape_cast %510 : vector<1x64xf32> to vector<1x1x64xf32>
    %531 = vector.broadcast %530 : vector<1x1x64xf32> to vector<2x16x64xf32>
    %532 = arith.mulf %529, %531 : vector<2x16x64xf32>
    %533 = vector.shape_cast %511 : vector<1x64xf32> to vector<1x1x64xf32>
    %534 = vector.broadcast %533 : vector<1x1x64xf32> to vector<2x16x64xf32>
    %535 = arith.addf %532, %534 : vector<2x16x64xf32>
    %c0_187 = arith.constant 0 : index
    %c0_188 = arith.constant 0 : index
    %c0_189 = arith.constant 0 : index
    %536 = vector.load %arg37[%c0_187, %c0_188, %c0_189] : memref<2x16x64xf32, #tpu.memory_space<vmem>>, vector<2x16x64xf32>
    tpu.vector_store %arg37[%c0_187, %c0_188, %c0_189], %535 {strides = array<i32>} : memref<2x16x64xf32, #tpu.memory_space<vmem>>, vector<2x16x64xf32>,
    return
  }
  func.func @transform_0(%arg0: i32) -> (i32, i32, i32) {
    %c0_i32 = arith.constant 0 : i32
    %c0_i32_0 = arith.constant 0 : i32
    %c0_i32_1 = arith.constant 0 : i32
    return %arg0, %c0_i32, %c0_i32_0 : i32, i32, i32
  }
  func.func @transform_1(%arg0: i32) -> (i32, i32, i32) {
    %c0_i32 = arith.constant 0 : i32
    %c0_i32_0 = arith.constant 0 : i32
    %c0_i32_1 = arith.constant 0 : i32
    return %arg0, %c0_i32, %c0_i32_0 : i32, i32, i32
  }
  func.func @transform_2(%arg0: i32) -> (i32, i32, i32) {
    %c0_i32 = arith.constant 0 : i32
    %c0_i32_0 = arith.constant 0 : i32
    %c0_i32_1 = arith.constant 0 : i32
    return %arg0, %c0_i32, %c0_i32_0 : i32, i32, i32
  }
  func.func @transform_3(%arg0: i32) -> (i32, i32, i32) {
    %c0_i32 = arith.constant 0 : i32
    %c0_i32_0 = arith.constant 0 : i32
    %c0_i32_1 = arith.constant 0 : i32
    return %arg0, %c0_i32, %c0_i32_0 : i32, i32, i32
  }
  func.func @transform_4(%arg0: i32) -> (i32, i32) {
    %c0_i32 = arith.constant 0 : i32
    %c0_i32_0 = arith.constant 0 : i32
    %c0_i32_1 = arith.constant 0 : i32
    return %c0_i32, %c0_i32_0 : i32, i32
  }
  func.func @transform_5(%arg0: i32) -> (i32, i32) {
    %c0_i32 = arith.constant 0 : i32
    %c0_i32_0 = arith.constant 0 : i32
    %c0_i32_1 = arith.constant 0 : i32
    return %c0_i32, %c0_i32_0 : i32, i32
  }
  func.func @transform_6(%arg0: i32) -> (i32, i32) {
    %c0_i32 = arith.constant 0 : i32
    %c0_i32_0 = arith.constant 0 : i32
    %c0_i32_1 = arith.constant 0 : i32
    return %c0_i32, %c0_i32_0 : i32, i32
  }
  func.func @transform_7(%arg0: i32) -> (i32, i32) {
    %c0_i32 = arith.constant 0 : i32
    %c0_i32_0 = arith.constant 0 : i32
    %c0_i32_1 = arith.constant 0 : i32
    return %c0_i32, %c0_i32_0 : i32, i32
  }
  func.func @transform_8(%arg0: i32) -> (i32, i32) {
    %c0_i32 = arith.constant 0 : i32
    %c0_i32_0 = arith.constant 0 : i32
    %c0_i32_1 = arith.constant 0 : i32
    return %c0_i32, %c0_i32_0 : i32, i32
  }
  func.func @transform_9(%arg0: i32) -> (i32, i32) {
    %c0_i32 = arith.constant 0 : i32
    %c0_i32_0 = arith.constant 0 : i32
    %c0_i32_1 = arith.constant 0 : i32
    return %c0_i32, %c0_i32_0 : i32, i32
  }
  func.func @transform_10(%arg0: i32) -> (i32, i32) {
    %c0_i32 = arith.constant 0 : i32
    %c0_i32_0 = arith.constant 0 : i32
    %c0_i32_1 = arith.constant 0 : i32
    return %c0_i32, %c0_i32_0 : i32, i32
  }
  func.func @transform_11(%arg0: i32) -> (i32, i32) {
    %c0_i32 = arith.constant 0 : i32
    %c0_i32_0 = arith.constant 0 : i32
    %c0_i32_1 = arith.constant 0 : i32
    return %c0_i32, %c0_i32_0 : i32, i32
  }
  func.func @transform_12(%arg0: i32) -> (i32, i32) {
    %c0_i32 = arith.constant 0 : i32
    %c0_i32_0 = arith.constant 0 : i32
    %c0_i32_1 = arith.constant 0 : i32
    return %c0_i32, %c0_i32_0 : i32, i32
  }
  func.func @transform_13(%arg0: i32) -> (i32, i32) {
    %c0_i32 = arith.constant 0 : i32
    %c0_i32_0 = arith.constant 0 : i32
    %c0_i32_1 = arith.constant 0 : i32
    return %c0_i32, %c0_i32_0 : i32, i32
  }
  func.func @transform_14(%arg0: i32) -> (i32, i32) {
    %c0_i32 = arith.constant 0 : i32
    %c0_i32_0 = arith.constant 0 : i32
    %c0_i32_1 = arith.constant 0 : i32
    return %c0_i32, %c0_i32_0 : i32, i32
  }
  func.func @transform_15(%arg0: i32) -> (i32, i32) {
    %c0_i32 = arith.constant 0 : i32
    %c0_i32_0 = arith.constant 0 : i32
    %c0_i32_1 = arith.constant 0 : i32
    return %c0_i32, %c0_i32_0 : i32, i32
  }
  func.func @transform_16(%arg0: i32) -> (i32, i32) {
    %c0_i32 = arith.constant 0 : i32
    %c0_i32_0 = arith.constant 0 : i32
    %c0_i32_1 = arith.constant 0 : i32
    return %c0_i32, %c0_i32_0 : i32, i32
  }
  func.func @transform_17(%arg0: i32) -> (i32, i32) {
    %c0_i32 = arith.constant 0 : i32
    %c0_i32_0 = arith.constant 0 : i32
    %c0_i32_1 = arith.constant 0 : i32
    return %c0_i32, %c0_i32_0 : i32, i32
  }
  func.func @transform_18(%arg0: i32) -> (i32, i32) {
    %c0_i32 = arith.constant 0 : i32
    %c0_i32_0 = arith.constant 0 : i32
    %c0_i32_1 = arith.constant 0 : i32
    return %c0_i32, %c0_i32_0 : i32, i32
  }
  func.func @transform_19(%arg0: i32) -> (i32, i32) {
    %c0_i32 = arith.constant 0 : i32
    %c0_i32_0 = arith.constant 0 : i32
    %c0_i32_1 = arith.constant 0 : i32
    return %c0_i32, %c0_i32_0 : i32, i32
  }
  func.func @transform_20(%arg0: i32) -> (i32, i32) {
    %c0_i32 = arith.constant 0 : i32
    %c0_i32_0 = arith.constant 0 : i32
    %c0_i32_1 = arith.constant 0 : i32
    return %c0_i32, %c0_i32_0 : i32, i32
  }
  func.func @transform_21(%arg0: i32) -> (i32, i32) {
    %c0_i32 = arith.constant 0 : i32
    %c0_i32_0 = arith.constant 0 : i32
    %c0_i32_1 = arith.constant 0 : i32
    return %c0_i32, %c0_i32_0 : i32, i32
  }
  func.func @transform_22(%arg0: i32) -> (i32, i32) {
    %c0_i32 = arith.constant 0 : i32
    %c0_i32_0 = arith.constant 0 : i32
    %c0_i32_1 = arith.constant 0 : i32
    return %c0_i32, %c0_i32_0 : i32, i32
  }
  func.func @transform_23(%arg0: i32) -> (i32, i32) {
    %c0_i32 = arith.constant 0 : i32
    %c0_i32_0 = arith.constant 0 : i32
    %c0_i32_1 = arith.constant 0 : i32
    return %c0_i32, %c0_i32_0 : i32, i32
  }
  func.func @transform_24(%arg0: i32) -> (i32, i32) {
    %c0_i32 = arith.constant 0 : i32
    %c0_i32_0 = arith.constant 0 : i32
    %c0_i32_1 = arith.constant 0 : i32
    return %c0_i32, %c0_i32_0 : i32, i32
  }
  func.func @transform_25(%arg0: i32) -> (i32, i32) {
    %c0_i32 = arith.constant 0 : i32
    %c0_i32_0 = arith.constant 0 : i32
    %c0_i32_1 = arith.constant 0 : i32
    return %c0_i32, %c0_i32_0 : i32, i32
  }
  func.func @transform_26(%arg0: i32) -> (i32, i32) {
    %c0_i32 = arith.constant 0 : i32
    %c0_i32_0 = arith.constant 0 : i32
    %c0_i32_1 = arith.constant 0 : i32
    return %c0_i32, %c0_i32_0 : i32, i32
  }
  func.func @transform_27(%arg0: i32) -> (i32, i32) {
    %c0_i32 = arith.constant 0 : i32
    %c0_i32_0 = arith.constant 0 : i32
    %c0_i32_1 = arith.constant 0 : i32
    return %c0_i32, %c0_i32_0 : i32, i32
  }
  func.func @transform_28(%arg0: i32) -> (i32, i32) {
    %c0_i32 = arith.constant 0 : i32
    %c0_i32_0 = arith.constant 0 : i32
    %c0_i32_1 = arith.constant 0 : i32
    return %c0_i32, %c0_i32_0 : i32, i32
  }
  func.func @transform_29(%arg0: i32) -> (i32, i32) {
    %c0_i32 = arith.constant 0 : i32
    %c0_i32_0 = arith.constant 0 : i32
    %c0_i32_1 = arith.constant 0 : i32
    return %c0_i32, %c0_i32_0 : i32, i32
  }
  func.func @transform_30(%arg0: i32) -> (i32, i32) {
    %c0_i32 = arith.constant 0 : i32
    %c0_i32_0 = arith.constant 0 : i32
    %c0_i32_1 = arith.constant 0 : i32
    return %c0_i32, %c0_i32_0 : i32, i32
  }
  func.func @transform_31(%arg0: i32) -> (i32, i32) {
    %c0_i32 = arith.constant 0 : i32
    %c0_i32_0 = arith.constant 0 : i32
    %c0_i32_1 = arith.constant 0 : i32
    return %c0_i32, %c0_i32_0 : i32, i32
  }
  func.func @transform_32(%arg0: i32) -> (i32, i32) {
    %c0_i32 = arith.constant 0 : i32
    %c0_i32_0 = arith.constant 0 : i32
    %c0_i32_1 = arith.constant 0 : i32
    return %c0_i32, %c0_i32_0 : i32, i32
  }
  func.func @transform_33(%arg0: i32) -> (i32, i32) {
    %c0_i32 = arith.constant 0 : i32
    %c0_i32_0 = arith.constant 0 : i32
    %c0_i32_1 = arith.constant 0 : i32
    return %c0_i32, %c0_i32_0 : i32, i32
  }
  func.func @transform_34(%arg0: i32) -> (i32, i32) {
    %c0_i32 = arith.constant 0 : i32
    %c0_i32_0 = arith.constant 0 : i32
    %c0_i32_1 = arith.constant 0 : i32
    return %c0_i32, %c0_i32_0 : i32, i32
  }
  func.func @transform_35(%arg0: i32) -> (i32, i32) {
    %c0_i32 = arith.constant 0 : i32
    %c0_i32_0 = arith.constant 0 : i32
    %c0_i32_1 = arith.constant 0 : i32
    return %c0_i32, %c0_i32_0 : i32, i32
  }
  func.func @transform_36(%arg0: i32) -> (i32, i32, i32) {
    %c0_i32 = arith.constant 0 : i32
    %c0_i32_0 = arith.constant 0 : i32
    %c0_i32_1 = arith.constant 0 : i32
    return %arg0, %c0_i32, %c0_i32_0 : i32, i32, i32
  }
}

</mosaic_0001>

<llo_original>
// kernel: tpu_custom_call.1
$region0: #{tpu_custom_call.1}
  #allocation0 [shape = 'u32[]', space=smem, size = 0x4, offset = 0x4, fixed_abs, tag = 'smem constant byte address 0x4 - core index']
  #allocation1 [shape = 'u32[144,128]{1,0:T(1,128)}', space=vmem, size = 0x12000, scoped, tag = 'internal scratch']
  %s0 = inlined_call_operand.smem [shape: u32[37], index: -1, kind: input, shape index: {}]
  %s1 = sld [smem:[%s0]]
  %s2 = scalar_lea.smem %s0, 1
  %s3 = sld [smem:[%s2]]
  %s4 = scalar_lea.smem %s0, 2
  %s5 = sld [smem:[%s4]]
  %s6 = scalar_lea.smem %s0, 3
  %s7 = sld [smem:[%s6]]
  %s8 = scalar_lea.smem %s0, 4
  %s9 = sld [smem:[%s8]]
  %s10 = scalar_lea.smem %s0, 5
  %s11 = sld [smem:[%s10]]
  %s12 = scalar_lea.smem %s0, 6
  %s13 = sld [smem:[%s12]]
  %s14 = scalar_lea.smem %s0, 7
  %s15 = sld [smem:[%s14]]
  %s16 = scalar_lea.smem %s0, 8
  %s17 = sld [smem:[%s16]]
  %s18 = scalar_lea.smem %s0, 9
  %s19 = sld [smem:[%s18]]
  %s20 = scalar_lea.smem %s0, 10
  %s21 = sld [smem:[%s20]]
  %s22 = scalar_lea.smem %s0, 11
  %s23 = sld [smem:[%s22]]
  %s24 = scalar_lea.smem %s0, 12
  %s25 = sld [smem:[%s24]]
  %s26 = scalar_lea.smem %s0, 13
  %s27 = sld [smem:[%s26]]
  %s28 = scalar_lea.smem %s0, 14
  %s29 = sld [smem:[%s28]]
  %s30 = scalar_lea.smem %s0, 15
  %s31 = sld [smem:[%s30]]
  %s32 = scalar_lea.smem %s0, 16
  %s33 = sld [smem:[%s32]]
  %s34 = scalar_lea.smem %s0, 17
  %s35 = sld [smem:[%s34]]
  %s36 = scalar_lea.smem %s0, 18
  %s37 = sld [smem:[%s36]]
  %s38 = scalar_lea.smem %s0, 19
  %s39 = sld [smem:[%s38]]
  %s40 = scalar_lea.smem %s0, 20
  %s41 = sld [smem:[%s40]]
  %s42 = scalar_lea.smem %s0, 21
  %s43 = sld [smem:[%s42]]
  %s44 = scalar_lea.smem %s0, 22
  %s45 = sld [smem:[%s44]]
  %s46 = scalar_lea.smem %s0, 23
  %s47 = sld [smem:[%s46]]
  %s48 = scalar_lea.smem %s0, 24
  %s49 = sld [smem:[%s48]]
  %s50 = scalar_lea.smem %s0, 25
  %s51 = sld [smem:[%s50]]
  %s52 = scalar_lea.smem %s0, 26
  %s53 = sld [smem:[%s52]]
  %s54 = scalar_lea.smem %s0, 27
  %s55 = sld [smem:[%s54]]
  %s56 = scalar_lea.smem %s0, 28
  %s57 = sld [smem:[%s56]]
  %s58 = scalar_lea.smem %s0, 29
  %s59 = sld [smem:[%s58]]
  %s60 = scalar_lea.smem %s0, 30
  %s61 = sld [smem:[%s60]]
  %s62 = scalar_lea.smem %s0, 31
  %s63 = sld [smem:[%s62]]
  %s64 = scalar_lea.smem %s0, 32
  %s65 = sld [smem:[%s64]]
  %s66 = scalar_lea.smem %s0, 33
  %s67 = sld [smem:[%s66]]
  %s68 = scalar_lea.smem %s0, 34
  %s69 = sld [smem:[%s68]]
  %s70 = scalar_lea.smem %s0, 35
  %s71 = sld [smem:[%s70]]
  %s72 = scalar_lea.smem %s0, 36
  %s73 = sld [smem:[%s72]]
  %s74 = sld [smem:[#allocation0]]
  $region177: #{tpu_custom_call.1} parent=0
    _
  %s76 = ssub.s32 1, %s74
  %s77 = scalar_select 0, %s76, %s74
  $region1: #{tpu_custom_call.1} parent=0
    #allocation2 [shape = 'u8[32768]{0}', space=vmem, size = 0x8000, scoped, tag = 'output window, operand 0']
    #allocation3 [shape = 's32[2]{0}', space=sflag, size = 0x8, scoped, tag = 'scoped memory for tpu_custom_call.1']
    %78 = vsyncpa [#allocation3], 0
    %s79 = scalar_lea.sflag [#allocation3], 1
    %80 = vsyncpa %s79, 0
    loop: start=0, step=1, limit=4
    $region2: #{tpu_custom_call.1} parent=1 // loop_pre_header
      _
    $region3: #{tpu_custom_call.1} parent=1 // loop_header
      %s82 = sphi 0, %s86
      %p83 = scmp.ge.s32.totalorder %s82, 4
      %s92 = sphi 0, %s94
      %s95 = sphi 0, %s92
      %s96 = sphi 0, %s95
      %s112 = sphi 0, %s96
      %s118 = sphi 0, %s120
      %s121 = sphi 0, %s118
      %s122 = sphi 0, %s121
      %s138 = sphi 0, %s122
      %s144 = sphi 0, %s146
      %s147 = sphi 0, %s144
      %s148 = sphi 0, %s147
      %s164 = sphi 0, %s148
      %s170 = sphi 0, %s172
      %s173 = sphi 0, %s170
      %s174 = sphi 0, %s173
      %s190 = sphi 0, %s174
      %s194 = sphi 0, %s194
      %s196 = sphi 0, %s194
      %s197 = sphi 0, %s196
      %s211 = sphi 0, %s197
      %s215 = sphi 0, %s215
      %s217 = sphi 0, %s215
      %s218 = sphi 0, %s217
      %s232 = sphi 0, %s218
      %s236 = sphi 0, %s236
      %s238 = sphi 0, %s236
      %s239 = sphi 0, %s238
      %s253 = sphi 0, %s239
      %s257 = sphi 0, %s257
      %s259 = sphi 0, %s257
      %s260 = sphi 0, %s259
      %s274 = sphi 0, %s260
      %s278 = sphi 0, %s278
      %s280 = sphi 0, %s278
      %s281 = sphi 0, %s280
      %s295 = sphi 0, %s281
      %s299 = sphi 0, %s299
      %s301 = sphi 0, %s299
      %s302 = sphi 0, %s301
      %s316 = sphi 0, %s302
      %s320 = sphi 0, %s320
      %s322 = sphi 0, %s320
      %s323 = sphi 0, %s322
      %s337 = sphi 0, %s323
      %s341 = sphi 0, %s341
      %s343 = sphi 0, %s341
      %s344 = sphi 0, %s343
      %s358 = sphi 0, %s344
      %s362 = sphi 0, %s362
      %s364 = sphi 0, %s362
      %s365 = sphi 0, %s364
      %s379 = sphi 0, %s365
      %s383 = sphi 0, %s383
      %s385 = sphi 0, %s383
      %s386 = sphi 0, %s385
      %s400 = sphi 0, %s386
      %s404 = sphi 0, %s404
      %s406 = sphi 0, %s404
      %s407 = sphi 0, %s406
      %s421 = sphi 0, %s407
      %s425 = sphi 0, %s425
      %s427 = sphi 0, %s425
      %s428 = sphi 0, %s427
      %s442 = sphi 0, %s428
      %s446 = sphi 0, %s446
      %s448 = sphi 0, %s446
      %s449 = sphi 0, %s448
      %s463 = sphi 0, %s449
      %s467 = sphi 0, %s467
      %s469 = sphi 0, %s467
      %s470 = sphi 0, %s469
      %s484 = sphi 0, %s470
      %s488 = sphi 0, %s488
      %s490 = sphi 0, %s488
      %s491 = sphi 0, %s490
      %s505 = sphi 0, %s491
      %s509 = sphi 0, %s509
      %s511 = sphi 0, %s509
      %s512 = sphi 0, %s511
      %s526 = sphi 0, %s512
      %s530 = sphi 0, %s530
      %s532 = sphi 0, %s530
      %s533 = sphi 0, %s532
      %s547 = sphi 0, %s533
      %s551 = sphi 0, %s551
      %s553 = sphi 0, %s551
      %s554 = sphi 0, %s553
      %s568 = sphi 0, %s554
      %s572 = sphi 0, %s572
      %s574 = sphi 0, %s572
      %s575 = sphi 0, %s574
      %s589 = sphi 0, %s575
      %s593 = sphi 0, %s593
      %s595 = sphi 0, %s593
      %s596 = sphi 0, %s595
      %s610 = sphi 0, %s596
      %s614 = sphi 0, %s614
      %s616 = sphi 0, %s614
      %s617 = sphi 0, %s616
      %s631 = sphi 0, %s617
      %s635 = sphi 0, %s635
      %s637 = sphi 0, %s635
      %s638 = sphi 0, %s637
      %s652 = sphi 0, %s638
      %s656 = sphi 0, %s656
      %s658 = sphi 0, %s656
      %s659 = sphi 0, %s658
      %s673 = sphi 0, %s659
      %s677 = sphi 0, %s677
      %s679 = sphi 0, %s677
      %s680 = sphi 0, %s679
      %s694 = sphi 0, %s680
      %s698 = sphi 0, %s698
      %s700 = sphi 0, %s698
      %s701 = sphi 0, %s700
      %s715 = sphi 0, %s701
      %s719 = sphi 0, %s719
      %s721 = sphi 0, %s719
      %s722 = sphi 0, %s721
      %s736 = sphi 0, %s722
      %s740 = sphi 0, %s740
      %s742 = sphi 0, %s740
      %s743 = sphi 0, %s742
      %s757 = sphi 0, %s743
      %s761 = sphi 0, %s761
      %s763 = sphi 0, %s761
      %s764 = sphi 0, %s763
      %s778 = sphi 0, %s764
      %s782 = sphi 0, %s782
      %s784 = sphi 0, %s782
      %s785 = sphi 0, %s784
      %s799 = sphi 0, %s785
      %s803 = sphi 0, %s803
      %s805 = sphi 0, %s803
      %s806 = sphi 0, %s805
      %s820 = sphi 0, %s806
      %s824 = sphi 0, %s824
      %s826 = sphi 0, %s824
      %s827 = sphi 0, %s826
      %s841 = sphi 0, %s827
      %s845 = sphi 0, %s845
      %s847 = sphi 0, %s845
      %s848 = sphi 0, %s847
      %s862 = sphi 0, %s848
      %s868 = sphi 0, %s870
      %s871 = sphi 0, %s868
      %s872 = sphi 0, %s871
      %s888 = sphi 0, %s872
    $region4: #{tpu_custom_call.1} parent=1 // loop_header_branch
      %85 = sbr.rel (%p83) target = $region8
    $region5: #{tpu_custom_call.1} parent=1 // loop_body
      %s87 = ssub.s32 %s82, 1
      %s88 = ssub.s32 %s82, 2
      %s89 = sadd.s32 %s82, 1
      %s90 = ssub.s32 %s82, %s89
      %p91 = scmp.eq.s32.totalorder %s90, 0
      %s93 = sadd.s32 %s92, 1
      %s94 = scalar_select %p91, %s92, %s93
      %p97 = pneg %p91
      %p98 = scmp.eq.s32.totalorder %s82, 1
      %p99 = por %p97, %p98
      %p100 = scmp.ne.s32.totalorder %s92, %s95
      %p101 = scmp.eq.s32.totalorder %s82, 0
      %p102 = por %p100, %p101
      %p103 = scmp.ne.s32.totalorder %s92, %s95
      %p104 = scmp.eq.s32.totalorder %s87, 1
      %p105 = por %p103, %p104
      %p106 = scmp.ne.s32.totalorder %s95, %s96
      %p107 = scmp.eq.s32.totalorder %s87, 0
      %p108 = por %p106, %p107
      %p109 = scmp.ne.s32.totalorder %s95, %s96
      %p110 = scmp.eq.s32.totalorder %s88, 1
      %p111 = por %p109, %p110
      %p113 = scmp.ne.s32.totalorder %s96, %s112
      %p114 = scmp.eq.s32.totalorder %s88, 0
      %p115 = por %p113, %p114
      %s116 = ssub.s32 %s82, %s89
      %p117 = scmp.eq.s32.totalorder %s116, 0
      %s119 = sadd.s32 %s118, 1
      %s120 = scalar_select %p117, %s118, %s119
      %p123 = pneg %p117
      %p124 = scmp.eq.s32.totalorder %s82, 1
      %p125 = por %p123, %p124
      %p126 = scmp.ne.s32.totalorder %s118, %s121
      %p127 = scmp.eq.s32.totalorder %s82, 0
      %p128 = por %p126, %p127
      %p129 = scmp.ne.s32.totalorder %s118, %s121
      %p130 = scmp.eq.s32.totalorder %s87, 1
      %p131 = por %p129, %p130
      %p132 = scmp.ne.s32.totalorder %s121, %s122
      %p133 = scmp.eq.s32.totalorder %s87, 0
      %p134 = por %p132, %p133
      %p135 = scmp.ne.s32.totalorder %s121, %s122
      %p136 = scmp.eq.s32.totalorder %s88, 1
      %p137 = por %p135, %p136
      %p139 = scmp.ne.s32.totalorder %s122, %s138
      %p140 = scmp.eq.s32.totalorder %s88, 0
      %p141 = por %p139, %p140
      %s142 = ssub.s32 %s82, %s89
      %p143 = scmp.eq.s32.totalorder %s142, 0
      %s145 = sadd.s32 %s144, 1
      %s146 = scalar_select %p143, %s144, %s145
      %p149 = pneg %p143
      %p150 = scmp.eq.s32.totalorder %s82, 1
      %p151 = por %p149, %p150
      %p152 = scmp.ne.s32.totalorder %s144, %s147
      %p153 = scmp.eq.s32.totalorder %s82, 0
      %p154 = por %p152, %p153
      %p155 = scmp.ne.s32.totalorder %s144, %s147
      %p156 = scmp.eq.s32.totalorder %s87, 1
      %p157 = por %p155, %p156
      %p158 = scmp.ne.s32.totalorder %s147, %s148
      %p159 = scmp.eq.s32.totalorder %s87, 0
      %p160 = por %p158, %p159
      %p161 = scmp.ne.s32.totalorder %s147, %s148
      %p162 = scmp.eq.s32.totalorder %s88, 1
      %p163 = por %p161, %p162
      %p165 = scmp.ne.s32.totalorder %s148, %s164
      %p166 = scmp.eq.s32.totalorder %s88, 0
      %p167 = por %p165, %p166
      %s168 = ssub.s32 %s82, %s89
      %p169 = scmp.eq.s32.totalorder %s168, 0
      %s171 = sadd.s32 %s170, 1
      %s172 = scalar_select %p169, %s170, %s171
      %p175 = pneg %p169
      %p176 = scmp.eq.s32.totalorder %s82, 1
      %p177 = por %p175, %p176
      %p178 = scmp.ne.s32.totalorder %s170, %s173
      %p179 = scmp.eq.s32.totalorder %s82, 0
      %p180 = por %p178, %p179
      %p181 = scmp.ne.s32.totalorder %s170, %s173
      %p182 = scmp.eq.s32.totalorder %s87, 1
      %p183 = por %p181, %p182
      %p184 = scmp.ne.s32.totalorder %s173, %s174
      %p185 = scmp.eq.s32.totalorder %s87, 0
      %p186 = por %p184, %p185
      %p187 = scmp.ne.s32.totalorder %s173, %s174
      %p188 = scmp.eq.s32.totalorder %s88, 1
      %p189 = por %p187, %p188
      %p191 = scmp.ne.s32.totalorder %s174, %s190
      %p192 = scmp.eq.s32.totalorder %s88, 0
      %p193 = por %p191, %p192
      %s195 = sadd.s32 %s194, 1
      %p198 = scmp.eq.s32.totalorder %s82, 1
      %p199 = scmp.ne.s32.totalorder %s194, %s196
      %p200 = scmp.eq.s32.totalorder %s82, 0
      %p201 = por %p199, %p200
      %p202 = scmp.ne.s32.totalorder %s194, %s196
      %p203 = scmp.eq.s32.totalorder %s87, 1
      %p204 = por %p202, %p203
      %p205 = scmp.ne.s32.totalorder %s196, %s197
      %p206 = scmp.eq.s32.totalorder %s87, 0
      %p207 = por %p205, %p206
      %p208 = scmp.ne.s32.totalorder %s196, %s197
      %p209 = scmp.eq.s32.totalorder %s88, 1
      %p210 = por %p208, %p209
      %p212 = scmp.ne.s32.totalorder %s197, %s211
      %p213 = scmp.eq.s32.totalorder %s88, 0
      %p214 = por %p212, %p213
      %s216 = sadd.s32 %s215, 1
      %p219 = scmp.eq.s32.totalorder %s82, 1
      %p220 = scmp.ne.s32.totalorder %s215, %s217
      %p221 = scmp.eq.s32.totalorder %s82, 0
      %p222 = por %p220, %p221
      %p223 = scmp.ne.s32.totalorder %s215, %s217
      %p224 = scmp.eq.s32.totalorder %s87, 1
      %p225 = por %p223, %p224
      %p226 = scmp.ne.s32.totalorder %s217, %s218
      %p227 = scmp.eq.s32.totalorder %s87, 0
      %p228 = por %p226, %p227
      %p229 = scmp.ne.s32.totalorder %s217, %s218
      %p230 = scmp.eq.s32.totalorder %s88, 1
      %p231 = por %p229, %p230
      %p233 = scmp.ne.s32.totalorder %s218, %s232
      %p234 = scmp.eq.s32.totalorder %s88, 0
      %p235 = por %p233, %p234
      %s237 = sadd.s32 %s236, 1
      %p240 = scmp.eq.s32.totalorder %s82, 1
      %p241 = scmp.ne.s32.totalorder %s236, %s238
      %p242 = scmp.eq.s32.totalorder %s82, 0
      %p243 = por %p241, %p242
      %p244 = scmp.ne.s32.totalorder %s236, %s238
      %p245 = scmp.eq.s32.totalorder %s87, 1
      %p246 = por %p244, %p245
      %p247 = scmp.ne.s32.totalorder %s238, %s239
      %p248 = scmp.eq.s32.totalorder %s87, 0
      %p249 = por %p247, %p248
      %p250 = scmp.ne.s32.totalorder %s238, %s239
      %p251 = scmp.eq.s32.totalorder %s88, 1
      %p252 = por %p250, %p251
      %p254 = scmp.ne.s32.totalorder %s239, %s253
      %p255 = scmp.eq.s32.totalorder %s88, 0
      %p256 = por %p254, %p255
      %s258 = sadd.s32 %s257, 1
      %p261 = scmp.eq.s32.totalorder %s82, 1
      %p262 = scmp.ne.s32.totalorder %s257, %s259
      %p263 = scmp.eq.s32.totalorder %s82, 0
      %p264 = por %p262, %p263
      %p265 = scmp.ne.s32.totalorder %s257, %s259
      %p266 = scmp.eq.s32.totalorder %s87, 1
      %p267 = por %p265, %p266
      %p268 = scmp.ne.s32.totalorder %s259, %s260
      %p269 = scmp.eq.s32.totalorder %s87, 0
      %p270 = por %p268, %p269
      %p271 = scmp.ne.s32.totalorder %s259, %s260
      %p272 = scmp.eq.s32.totalorder %s88, 1
      %p273 = por %p271, %p272
      %p275 = scmp.ne.s32.totalorder %s260, %s274
      %p276 = scmp.eq.s32.totalorder %s88, 0
      %p277 = por %p275, %p276
      %s279 = sadd.s32 %s278, 1
      %p282 = scmp.eq.s32.totalorder %s82, 1
      %p283 = scmp.ne.s32.totalorder %s278, %s280
      %p284 = scmp.eq.s32.totalorder %s82, 0
      %p285 = por %p283, %p284
      %p286 = scmp.ne.s32.totalorder %s278, %s280
      %p287 = scmp.eq.s32.totalorder %s87, 1
      %p288 = por %p286, %p287
      %p289 = scmp.ne.s32.totalorder %s280, %s281
      %p290 = scmp.eq.s32.totalorder %s87, 0
      %p291 = por %p289, %p290
      %p292 = scmp.ne.s32.totalorder %s280, %s281
      %p293 = scmp.eq.s32.totalorder %s88, 1
      %p294 = por %p292, %p293
      %p296 = scmp.ne.s32.totalorder %s281, %s295
      %p297 = scmp.eq.s32.totalorder %s88, 0
      %p298 = por %p296, %p297
      %s300 = sadd.s32 %s299, 1
      %p303 = scmp.eq.s32.totalorder %s82, 1
      %p304 = scmp.ne.s32.totalorder %s299, %s301
      %p305 = scmp.eq.s32.totalorder %s82, 0
      %p306 = por %p304, %p305
      %p307 = scmp.ne.s32.totalorder %s299, %s301
      %p308 = scmp.eq.s32.totalorder %s87, 1
      %p309 = por %p307, %p308
      %p310 = scmp.ne.s32.totalorder %s301, %s302
      %p311 = scmp.eq.s32.totalorder %s87, 0
      %p312 = por %p310, %p311
      %p313 = scmp.ne.s32.totalorder %s301, %s302
      %p314 = scmp.eq.s32.totalorder %s88, 1
      %p315 = por %p313, %p314
      %p317 = scmp.ne.s32.totalorder %s302, %s316
      %p318 = scmp.eq.s32.totalorder %s88, 0
      %p319 = por %p317, %p318
      %s321 = sadd.s32 %s320, 1
      %p324 = scmp.eq.s32.totalorder %s82, 1
      %p325 = scmp.ne.s32.totalorder %s320, %s322
      %p326 = scmp.eq.s32.totalorder %s82, 0
      %p327 = por %p325, %p326
      %p328 = scmp.ne.s32.totalorder %s320, %s322
      %p329 = scmp.eq.s32.totalorder %s87, 1
      %p330 = por %p328, %p329
      %p331 = scmp.ne.s32.totalorder %s322, %s323
      %p332 = scmp.eq.s32.totalorder %s87, 0
      %p333 = por %p331, %p332
      %p334 = scmp.ne.s32.totalorder %s322, %s323
      %p335 = scmp.eq.s32.totalorder %s88, 1
      %p336 = por %p334, %p335
      %p338 = scmp.ne.s32.totalorder %s323, %s337
      %p339 = scmp.eq.s32.totalorder %s88, 0
      %p340 = por %p338, %p339
      %s342 = sadd.s32 %s341, 1
      %p345 = scmp.eq.s32.totalorder %s82, 1
      %p346 = scmp.ne.s32.totalorder %s341, %s343
      %p347 = scmp.eq.s32.totalorder %s82, 0
      %p348 = por %p346, %p347
      %p349 = scmp.ne.s32.totalorder %s341, %s343
      %p350 = scmp.eq.s32.totalorder %s87, 1
      %p351 = por %p349, %p350
      %p352 = scmp.ne.s32.totalorder %s343, %s344
      %p353 = scmp.eq.s32.totalorder %s87, 0
      %p354 = por %p352, %p353
      %p355 = scmp.ne.s32.totalorder %s343, %s344
      %p356 = scmp.eq.s32.totalorder %s88, 1
      %p357 = por %p355, %p356
      %p359 = scmp.ne.s32.totalorder %s344, %s358
      %p360 = scmp.eq.s32.totalorder %s88, 0
      %p361 = por %p359, %p360
      %s363 = sadd.s32 %s362, 1
      %p366 = scmp.eq.s32.totalorder %s82, 1
      %p367 = scmp.ne.s32.totalorder %s362, %s364
      %p368 = scmp.eq.s32.totalorder %s82, 0
      %p369 = por %p367, %p368
      %p370 = scmp.ne.s32.totalorder %s362, %s364
      %p371 = scmp.eq.s32.totalorder %s87, 1
      %p372 = por %p370, %p371
      %p373 = scmp.ne.s32.totalorder %s364, %s365
      %p374 = scmp.eq.s32.totalorder %s87, 0
      %p375 = por %p373, %p374
      %p376 = scmp.ne.s32.totalorder %s364, %s365
      %p377 = scmp.eq.s32.totalorder %s88, 1
      %p378 = por %p376, %p377
      %p380 = scmp.ne.s32.totalorder %s365, %s379
      %p381 = scmp.eq.s32.totalorder %s88, 0
      %p382 = por %p380, %p381
      %s384 = sadd.s32 %s383, 1
      %p387 = scmp.eq.s32.totalorder %s82, 1
      %p388 = scmp.ne.s32.totalorder %s383, %s385
      %p389 = scmp.eq.s32.totalorder %s82, 0
      %p390 = por %p388, %p389
      %p391 = scmp.ne.s32.totalorder %s383, %s385
      %p392 = scmp.eq.s32.totalorder %s87, 1
      %p393 = por %p391, %p392
      %p394 = scmp.ne.s32.totalorder %s385, %s386
      %p395 = scmp.eq.s32.totalorder %s87, 0
      %p396 = por %p394, %p395
      %p397 = scmp.ne.s32.totalorder %s385, %s386
      %p398 = scmp.eq.s32.totalorder %s88, 1
      %p399 = por %p397, %p398
      %p401 = scmp.ne.s32.totalorder %s386, %s400
      %p402 = scmp.eq.s32.totalorder %s88, 0
      %p403 = por %p401, %p402
      %s405 = sadd.s32 %s404, 1
      %p408 = scmp.eq.s32.totalorder %s82, 1
      %p409 = scmp.ne.s32.totalorder %s404, %s406
      %p410 = scmp.eq.s32.totalorder %s82, 0
      %p411 = por %p409, %p410
      %p412 = scmp.ne.s32.totalorder %s404, %s406
      %p413 = scmp.eq.s32.totalorder %s87, 1
      %p414 = por %p412, %p413
      %p415 = scmp.ne.s32.totalorder %s406, %s407
      %p416 = scmp.eq.s32.totalorder %s87, 0
      %p417 = por %p415, %p416
      %p418 = scmp.ne.s32.totalorder %s406, %s407
      %p419 = scmp.eq.s32.totalorder %s88, 1
      %p420 = por %p418, %p419
      %p422 = scmp.ne.s32.totalorder %s407, %s421
      %p423 = scmp.eq.s32.totalorder %s88, 0
      %p424 = por %p422, %p423
      %s426 = sadd.s32 %s425, 1
      %p429 = scmp.eq.s32.totalorder %s82, 1
      %p430 = scmp.ne.s32.totalorder %s425, %s427
      %p431 = scmp.eq.s32.totalorder %s82, 0
      %p432 = por %p430, %p431
      %p433 = scmp.ne.s32.totalorder %s425, %s427
      %p434 = scmp.eq.s32.totalorder %s87, 1
      %p435 = por %p433, %p434
      %p436 = scmp.ne.s32.totalorder %s427, %s428
      %p437 = scmp.eq.s32.totalorder %s87, 0
      %p438 = por %p436, %p437
      %p439 = scmp.ne.s32.totalorder %s427, %s428
      %p440 = scmp.eq.s32.totalorder %s88, 1
      %p441 = por %p439, %p440
      %p443 = scmp.ne.s32.totalorder %s428, %s442
      %p444 = scmp.eq.s32.totalorder %s88, 0
      %p445 = por %p443, %p444
      %s447 = sadd.s32 %s446, 1
      %p450 = scmp.eq.s32.totalorder %s82, 1
      %p451 = scmp.ne.s32.totalorder %s446, %s448
      %p452 = scmp.eq.s32.totalorder %s82, 0
      %p453 = por %p451, %p452
      %p454 = scmp.ne.s32.totalorder %s446, %s448
      %p455 = scmp.eq.s32.totalorder %s87, 1
      %p456 = por %p454, %p455
      %p457 = scmp.ne.s32.totalorder %s448, %s449
      %p458 = scmp.eq.s32.totalorder %s87, 0
      %p459 = por %p457, %p458
      %p460 = scmp.ne.s32.totalorder %s448, %s449
      %p461 = scmp.eq.s32.totalorder %s88, 1
      %p462 = por %p460, %p461
      %p464 = scmp.ne.s32.totalorder %s449, %s463
      %p465 = scmp.eq.s32.totalorder %s88, 0
      %p466 = por %p464, %p465
      %s468 = sadd.s32 %s467, 1
      %p471 = scmp.eq.s32.totalorder %s82, 1
      %p472 = scmp.ne.s32.totalorder %s467, %s469
      %p473 = scmp.eq.s32.totalorder %s82, 0
      %p474 = por %p472, %p473
      %p475 = scmp.ne.s32.totalorder %s467, %s469
      %p476 = scmp.eq.s32.totalorder %s87, 1
      %p477 = por %p475, %p476
      %p478 = scmp.ne.s32.totalorder %s469, %s470
      %p479 = scmp.eq.s32.totalorder %s87, 0
      %p480 = por %p478, %p479
      %p481 = scmp.ne.s32.totalorder %s469, %s470
      %p482 = scmp.eq.s32.totalorder %s88, 1
      %p483 = por %p481, %p482
      %p485 = scmp.ne.s32.totalorder %s470, %s484
      %p486 = scmp.eq.s32.totalorder %s88, 0
      %p487 = por %p485, %p486
      %s489 = sadd.s32 %s488, 1
      %p492 = scmp.eq.s32.totalorder %s82, 1
      %p493 = scmp.ne.s32.totalorder %s488, %s490
      %p494 = scmp.eq.s32.totalorder %s82, 0
      %p495 = por %p493, %p494
      %p496 = scmp.ne.s32.totalorder %s488, %s490
      %p497 = scmp.eq.s32.totalorder %s87, 1
      %p498 = por %p496, %p497
      %p499 = scmp.ne.s32.totalorder %s490, %s491
      %p500 = scmp.eq.s32.totalorder %s87, 0
      %p501 = por %p499, %p500
      %p502 = scmp.ne.s32.totalorder %s490, %s491
      %p503 = scmp.eq.s32.totalorder %s88, 1
      %p504 = por %p502, %p503
      %p506 = scmp.ne.s32.totalorder %s491, %s505
      %p507 = scmp.eq.s32.totalorder %s88, 0
      %p508 = por %p506, %p507
      %s510 = sadd.s32 %s509, 1
      %p513 = scmp.eq.s32.totalorder %s82, 1
      %p514 = scmp.ne.s32.totalorder %s509, %s511
      %p515 = scmp.eq.s32.totalorder %s82, 0
      %p516 = por %p514, %p515
      %p517 = scmp.ne.s32.totalorder %s509, %s511
      %p518 = scmp.eq.s32.totalorder %s87, 1
      %p519 = por %p517, %p518
      %p520 = scmp.ne.s32.totalorder %s511, %s512
      %p521 = scmp.eq.s32.totalorder %s87, 0
      %p522 = por %p520, %p521
      %p523 = scmp.ne.s32.totalorder %s511, %s512
      %p524 = scmp.eq.s32.totalorder %s88, 1
      %p525 = por %p523, %p524
      %p527 = scmp.ne.s32.totalorder %s512, %s526
      %p528 = scmp.eq.s32.totalorder %s88, 0
      %p529 = por %p527, %p528
      %s531 = sadd.s32 %s530, 1
      %p534 = scmp.eq.s32.totalorder %s82, 1
      %p535 = scmp.ne.s32.totalorder %s530, %s532
      %p536 = scmp.eq.s32.totalorder %s82, 0
      %p537 = por %p535, %p536
      %p538 = scmp.ne.s32.totalorder %s530, %s532
      %p539 = scmp.eq.s32.totalorder %s87, 1
      %p540 = por %p538, %p539
      %p541 = scmp.ne.s32.totalorder %s532, %s533
      %p542 = scmp.eq.s32.totalorder %s87, 0
      %p543 = por %p541, %p542
      %p544 = scmp.ne.s32.totalorder %s532, %s533
      %p545 = scmp.eq.s32.totalorder %s88, 1
      %p546 = por %p544, %p545
      %p548 = scmp.ne.s32.totalorder %s533, %s547
      %p549 = scmp.eq.s32.totalorder %s88, 0
      %p550 = por %p548, %p549
      %s552 = sadd.s32 %s551, 1
      %p555 = scmp.eq.s32.totalorder %s82, 1
      %p556 = scmp.ne.s32.totalorder %s551, %s553
      %p557 = scmp.eq.s32.totalorder %s82, 0
      %p558 = por %p556, %p557
      %p559 = scmp.ne.s32.totalorder %s551, %s553
      %p560 = scmp.eq.s32.totalorder %s87, 1
      %p561 = por %p559, %p560
      %p562 = scmp.ne.s32.totalorder %s553, %s554
      %p563 = scmp.eq.s32.totalorder %s87, 0
      %p564 = por %p562, %p563
      %p565 = scmp.ne.s32.totalorder %s553, %s554
      %p566 = scmp.eq.s32.totalorder %s88, 1
      %p567 = por %p565, %p566
      %p569 = scmp.ne.s32.totalorder %s554, %s568
      %p570 = scmp.eq.s32.totalorder %s88, 0
      %p571 = por %p569, %p570
      %s573 = sadd.s32 %s572, 1
      %p576 = scmp.eq.s32.totalorder %s82, 1
      %p577 = scmp.ne.s32.totalorder %s572, %s574
      %p578 = scmp.eq.s32.totalorder %s82, 0
      %p579 = por %p577, %p578
      %p580 = scmp.ne.s32.totalorder %s572, %s574
      %p581 = scmp.eq.s32.totalorder %s87, 1
      %p582 = por %p580, %p581
      %p583 = scmp.ne.s32.totalorder %s574, %s575
      %p584 = scmp.eq.s32.totalorder %s87, 0
      %p585 = por %p583, %p584
      %p586 = scmp.ne.s32.totalorder %s574, %s575
      %p587 = scmp.eq.s32.totalorder %s88, 1
      %p588 = por %p586, %p587
      %p590 = scmp.ne.s32.totalorder %s575, %s589
      %p591 = scmp.eq.s32.totalorder %s88, 0
      %p592 = por %p590, %p591
      %s594 = sadd.s32 %s593, 1
      %p597 = scmp.eq.s32.totalorder %s82, 1
      %p598 = scmp.ne.s32.totalorder %s593, %s595
      %p599 = scmp.eq.s32.totalorder %s82, 0
      %p600 = por %p598, %p599
      %p601 = scmp.ne.s32.totalorder %s593, %s595
      %p602 = scmp.eq.s32.totalorder %s87, 1
      %p603 = por %p601, %p602
      %p604 = scmp.ne.s32.totalorder %s595, %s596
      %p605 = scmp.eq.s32.totalorder %s87, 0
      %p606 = por %p604, %p605
      %p607 = scmp.ne.s32.totalorder %s595, %s596
      %p608 = scmp.eq.s32.totalorder %s88, 1
      %p609 = por %p607, %p608
      %p611 = scmp.ne.s32.totalorder %s596, %s610
      %p612 = scmp.eq.s32.totalorder %s88, 0
      %p613 = por %p611, %p612
      %s615 = sadd.s32 %s614, 1
      %p618 = scmp.eq.s32.totalorder %s82, 1
      %p619 = scmp.ne.s32.totalorder %s614, %s616
      %p620 = scmp.eq.s32.totalorder %s82, 0
      %p621 = por %p619, %p620
      %p622 = scmp.ne.s32.totalorder %s614, %s616
      %p623 = scmp.eq.s32.totalorder %s87, 1
      %p624 = por %p622, %p623
      %p625 = scmp.ne.s32.totalorder %s616, %s617
      %p626 = scmp.eq.s32.totalorder %s87, 0
      %p627 = por %p625, %p626
      %p628 = scmp.ne.s32.totalorder %s616, %s617
      %p629 = scmp.eq.s32.totalorder %s88, 1
      %p630 = por %p628, %p629
      %p632 = scmp.ne.s32.totalorder %s617, %s631
      %p633 = scmp.eq.s32.totalorder %s88, 0
      %p634 = por %p632, %p633
      %s636 = sadd.s32 %s635, 1
      %p639 = scmp.eq.s32.totalorder %s82, 1
      %p640 = scmp.ne.s32.totalorder %s635, %s637
      %p641 = scmp.eq.s32.totalorder %s82, 0
      %p642 = por %p640, %p641
      %p643 = scmp.ne.s32.totalorder %s635, %s637
      %p644 = scmp.eq.s32.totalorder %s87, 1
      %p645 = por %p643, %p644
      %p646 = scmp.ne.s32.totalorder %s637, %s638
      %p647 = scmp.eq.s32.totalorder %s87, 0
      %p648 = por %p646, %p647
      %p649 = scmp.ne.s32.totalorder %s637, %s638
      %p650 = scmp.eq.s32.totalorder %s88, 1
      %p651 = por %p649, %p650
      %p653 = scmp.ne.s32.totalorder %s638, %s652
      %p654 = scmp.eq.s32.totalorder %s88, 0
      %p655 = por %p653, %p654
      %s657 = sadd.s32 %s656, 1
      %p660 = scmp.eq.s32.totalorder %s82, 1
      %p661 = scmp.ne.s32.totalorder %s656, %s658
      %p662 = scmp.eq.s32.totalorder %s82, 0
      %p663 = por %p661, %p662
      %p664 = scmp.ne.s32.totalorder %s656, %s658
      %p665 = scmp.eq.s32.totalorder %s87, 1
      %p666 = por %p664, %p665
      %p667 = scmp.ne.s32.totalorder %s658, %s659
      %p668 = scmp.eq.s32.totalorder %s87, 0
      %p669 = por %p667, %p668
      %p670 = scmp.ne.s32.totalorder %s658, %s659
      %p671 = scmp.eq.s32.totalorder %s88, 1
      %p672 = por %p670, %p671
      %p674 = scmp.ne.s32.totalorder %s659, %s673
      %p675 = scmp.eq.s32.totalorder %s88, 0
      %p676 = por %p674, %p675
      %s678 = sadd.s32 %s677, 1
      %p681 = scmp.eq.s32.totalorder %s82, 1
      %p682 = scmp.ne.s32.totalorder %s677, %s679
      %p683 = scmp.eq.s32.totalorder %s82, 0
      %p684 = por %p682, %p683
      %p685 = scmp.ne.s32.totalorder %s677, %s679
      %p686 = scmp.eq.s32.totalorder %s87, 1
      %p687 = por %p685, %p686
      %p688 = scmp.ne.s32.totalorder %s679, %s680
      %p689 = scmp.eq.s32.totalorder %s87, 0
      %p690 = por %p688, %p689
      %p691 = scmp.ne.s32.totalorder %s679, %s680
      %p692 = scmp.eq.s32.totalorder %s88, 1
      %p693 = por %p691, %p692
      %p695 = scmp.ne.s32.totalorder %s680, %s694
      %p696 = scmp.eq.s32.totalorder %s88, 0
      %p697 = por %p695, %p696
      %s699 = sadd.s32 %s698, 1
      %p702 = scmp.eq.s32.totalorder %s82, 1
      %p703 = scmp.ne.s32.totalorder %s698, %s700
      %p704 = scmp.eq.s32.totalorder %s82, 0
      %p705 = por %p703, %p704
      %p706 = scmp.ne.s32.totalorder %s698, %s700
      %p707 = scmp.eq.s32.totalorder %s87, 1
      %p708 = por %p706, %p707
      %p709 = scmp.ne.s32.totalorder %s700, %s701
      %p710 = scmp.eq.s32.totalorder %s87, 0
      %p711 = por %p709, %p710
      %p712 = scmp.ne.s32.totalorder %s700, %s701
      %p713 = scmp.eq.s32.totalorder %s88, 1
      %p714 = por %p712, %p713
      %p716 = scmp.ne.s32.totalorder %s701, %s715
      %p717 = scmp.eq.s32.totalorder %s88, 0
      %p718 = por %p716, %p717
      %s720 = sadd.s32 %s719, 1
      %p723 = scmp.eq.s32.totalorder %s82, 1
      %p724 = scmp.ne.s32.totalorder %s719, %s721
      %p725 = scmp.eq.s32.totalorder %s82, 0
      %p726 = por %p724, %p725
      %p727 = scmp.ne.s32.totalorder %s719, %s721
      %p728 = scmp.eq.s32.totalorder %s87, 1
      %p729 = por %p727, %p728
      %p730 = scmp.ne.s32.totalorder %s721, %s722
      %p731 = scmp.eq.s32.totalorder %s87, 0
      %p732 = por %p730, %p731
      %p733 = scmp.ne.s32.totalorder %s721, %s722
      %p734 = scmp.eq.s32.totalorder %s88, 1
      %p735 = por %p733, %p734
      %p737 = scmp.ne.s32.totalorder %s722, %s736
      %p738 = scmp.eq.s32.totalorder %s88, 0
      %p739 = por %p737, %p738
      %s741 = sadd.s32 %s740, 1
      %p744 = scmp.eq.s32.totalorder %s82, 1
      %p745 = scmp.ne.s32.totalorder %s740, %s742
      %p746 = scmp.eq.s32.totalorder %s82, 0
      %p747 = por %p745, %p746
      %p748 = scmp.ne.s32.totalorder %s740, %s742
      %p749 = scmp.eq.s32.totalorder %s87, 1
      %p750 = por %p748, %p749
      %p751 = scmp.ne.s32.totalorder %s742, %s743
      %p752 = scmp.eq.s32.totalorder %s87, 0
      %p753 = por %p751, %p752
      %p754 = scmp.ne.s32.totalorder %s742, %s743
      %p755 = scmp.eq.s32.totalorder %s88, 1
      %p756 = por %p754, %p755
      %p758 = scmp.ne.s32.totalorder %s743, %s757
      %p759 = scmp.eq.s32.totalorder %s88, 0
      %p760 = por %p758, %p759
      %s762 = sadd.s32 %s761, 1
      %p765 = scmp.eq.s32.totalorder %s82, 1
      %p766 = scmp.ne.s32.totalorder %s761, %s763
      %p767 = scmp.eq.s32.totalorder %s82, 0
      %p768 = por %p766, %p767
      %p769 = scmp.ne.s32.totalorder %s761, %s763
      %p770 = scmp.eq.s32.totalorder %s87, 1
      %p771 = por %p769, %p770
      %p772 = scmp.ne.s32.totalorder %s763, %s764
      %p773 = scmp.eq.s32.totalorder %s87, 0
      %p774 = por %p772, %p773
      %p775 = scmp.ne.s32.totalorder %s763, %s764
      %p776 = scmp.eq.s32.totalorder %s88, 1
      %p777 = por %p775, %p776
      %p779 = scmp.ne.s32.totalorder %s764, %s778
      %p780 = scmp.eq.s32.totalorder %s88, 0
      %p781 = por %p779, %p780
      %s783 = sadd.s32 %s782, 1
      %p786 = scmp.eq.s32.totalorder %s82, 1
      %p787 = scmp.ne.s32.totalorder %s782, %s784
      %p788 = scmp.eq.s32.totalorder %s82, 0
      %p789 = por %p787, %p788
      %p790 = scmp.ne.s32.totalorder %s782, %s784
      %p791 = scmp.eq.s32.totalorder %s87, 1
      %p792 = por %p790, %p791
      %p793 = scmp.ne.s32.totalorder %s784, %s785
      %p794 = scmp.eq.s32.totalorder %s87, 0
      %p795 = por %p793, %p794
      %p796 = scmp.ne.s32.totalorder %s784, %s785
      %p797 = scmp.eq.s32.totalorder %s88, 1
      %p798 = por %p796, %p797
      %p800 = scmp.ne.s32.totalorder %s785, %s799
      %p801 = scmp.eq.s32.totalorder %s88, 0
      %p802 = por %p800, %p801
      %s804 = sadd.s32 %s803, 1
      %p807 = scmp.eq.s32.totalorder %s82, 1
      %p808 = scmp.ne.s32.totalorder %s803, %s805
      %p809 = scmp.eq.s32.totalorder %s82, 0
      %p810 = por %p808, %p809
      %p811 = scmp.ne.s32.totalorder %s803, %s805
      %p812 = scmp.eq.s32.totalorder %s87, 1
      %p813 = por %p811, %p812
      %p814 = scmp.ne.s32.totalorder %s805, %s806
      %p815 = scmp.eq.s32.totalorder %s87, 0
      %p816 = por %p814, %p815
      %p817 = scmp.ne.s32.totalorder %s805, %s806
      %p818 = scmp.eq.s32.totalorder %s88, 1
      %p819 = por %p817, %p818
      %p821 = scmp.ne.s32.totalorder %s806, %s820
      %p822 = scmp.eq.s32.totalorder %s88, 0
      %p823 = por %p821, %p822
      %s825 = sadd.s32 %s824, 1
      %p828 = scmp.eq.s32.totalorder %s82, 1
      %p829 = scmp.ne.s32.totalorder %s824, %s826
      %p830 = scmp.eq.s32.totalorder %s82, 0
      %p831 = por %p829, %p830
      %p832 = scmp.ne.s32.totalorder %s824, %s826
      %p833 = scmp.eq.s32.totalorder %s87, 1
      %p834 = por %p832, %p833
      %p835 = scmp.ne.s32.totalorder %s826, %s827
      %p836 = scmp.eq.s32.totalorder %s87, 0
      %p837 = por %p835, %p836
      %p838 = scmp.ne.s32.totalorder %s826, %s827
      %p839 = scmp.eq.s32.totalorder %s88, 1
      %p840 = por %p838, %p839
      %p842 = scmp.ne.s32.totalorder %s827, %s841
      %p843 = scmp.eq.s32.totalorder %s88, 0
      %p844 = por %p842, %p843
      %s846 = sadd.s32 %s845, 1
      %p849 = scmp.eq.s32.totalorder %s82, 1
      %p850 = scmp.ne.s32.totalorder %s845, %s847
      %p851 = scmp.eq.s32.totalorder %s82, 0
      %p852 = por %p850, %p851
      %p853 = scmp.ne.s32.totalorder %s845, %s847
      %p854 = scmp.eq.s32.totalorder %s87, 1
      %p855 = por %p853, %p854
      %p856 = scmp.ne.s32.totalorder %s847, %s848
      %p857 = scmp.eq.s32.totalorder %s87, 0
      %p858 = por %p856, %p857
      %p859 = scmp.ne.s32.totalorder %s847, %s848
      %p860 = scmp.eq.s32.totalorder %s88, 1
      %p861 = por %p859, %p860
      %p863 = scmp.ne.s32.totalorder %s848, %s862
      %p864 = scmp.eq.s32.totalorder %s88, 0
      %p865 = por %p863, %p864
      %s866 = ssub.s32 %s82, %s89
      %p867 = scmp.eq.s32.totalorder %s866, 0
      %s869 = sadd.s32 %s868, 1
      %s870 = scalar_select %p867, %s868, %s869
      %p873 = pneg %p867
      %p874 = scmp.eq.s32.totalorder %s82, 1
      %p875 = por %p873, %p874
      %p876 = scmp.ne.s32.totalorder %s868, %s871
      %p877 = scmp.eq.s32.totalorder %s82, 0
      %p878 = por %p876, %p877
      %p879 = scmp.ne.s32.totalorder %s868, %s871
      %p880 = scmp.eq.s32.totalorder %s87, 1
      %p881 = por %p879, %p880
      %p882 = scmp.ne.s32.totalorder %s871, %s872
      %p883 = scmp.eq.s32.totalorder %s87, 0
      %p884 = por %p882, %p883
      %p885 = scmp.ne.s32.totalorder %s871, %s872
      %p886 = scmp.eq.s32.totalorder %s88, 1
      %p887 = por %p885, %p886
      %p889 = scmp.ne.s32.totalorder %s872, %s888
      %p890 = scmp.eq.s32.totalorder %s88, 0
      %p891 = por %p889, %p890
      %p892 = scmp.le.s32.totalorder 1, %s82
      %p893 = scmp.lt.s32.totalorder %s82, 3
      %p894 = pnand %p892, %p893
      %p895 = pneg %p894
      // Predicated region
      $region9: #{tpu_custom_call.1} parent=5 // pred_check
        _
      $region10: #{tpu_custom_call.1} parent=5 // pred_check_branch
        %897 = sbr.rel (%p894) target = $region12
      $region11: #{tpu_custom_call.1} parent=5 // pred_region
        %s898 = ssub.s32 %s82, 1
        // Predicated region
        $region13: #{tpu_custom_call.1} parent=11 // pred_check
          %p899 = pneg %p207
        $region14: #{tpu_custom_call.1} parent=11 // pred_check_branch
          %901 = sbr.rel (%p899) target = $region16
        $region15: #{tpu_custom_call.1} parent=11 // pred_region
          _
        $region16: #{tpu_custom_call.1} parent=11 // pred_fallthru
          _
        // Predicated region
        $region17: #{tpu_custom_call.1} parent=11 // pred_check
          %p902 = pneg %p228
        $region18: #{tpu_custom_call.1} parent=11 // pred_check_branch
          %904 = sbr.rel (%p902) target = $region20
        $region19: #{tpu_custom_call.1} parent=11 // pred_region
          _
        $region20: #{tpu_custom_call.1} parent=11 // pred_fallthru
          _
        // Predicated region
        $region21: #{tpu_custom_call.1} parent=11 // pred_check
          %p905 = pneg %p249
        $region22: #{tpu_custom_call.1} parent=11 // pred_check_branch
          %907 = sbr.rel (%p905) target = $region24
        $region23: #{tpu_custom_call.1} parent=11 // pred_region
          _
        $region24: #{tpu_custom_call.1} parent=11 // pred_fallthru
          _
        // Predicated region
        $region25: #{tpu_custom_call.1} parent=11 // pred_check
          %p908 = pneg %p270
        $region26: #{tpu_custom_call.1} parent=11 // pred_check_branch
          %910 = sbr.rel (%p908) target = $region28
        $region27: #{tpu_custom_call.1} parent=11 // pred_region
          _
        $region28: #{tpu_custom_call.1} parent=11 // pred_fallthru
          _
        // Predicated region
        $region29: #{tpu_custom_call.1} parent=11 // pred_check
          %p911 = pneg %p291
        $region30: #{tpu_custom_call.1} parent=11 // pred_check_branch
          %913 = sbr.rel (%p911) target = $region32
        $region31: #{tpu_custom_call.1} parent=11 // pred_region
          _
        $region32: #{tpu_custom_call.1} parent=11 // pred_fallthru
          _
        // Predicated region
        $region33: #{tpu_custom_call.1} parent=11 // pred_check
          %p914 = pneg %p312
        $region34: #{tpu_custom_call.1} parent=11 // pred_check_branch
          %916 = sbr.rel (%p914) target = $region36
        $region35: #{tpu_custom_call.1} parent=11 // pred_region
          _
        $region36: #{tpu_custom_call.1} parent=11 // pred_fallthru
          _
        // Predicated region
        $region37: #{tpu_custom_call.1} parent=11 // pred_check
          %p917 = pneg %p333
        $region38: #{tpu_custom_call.1} parent=11 // pred_check_branch
          %919 = sbr.rel (%p917) target = $region40
        $region39: #{tpu_custom_call.1} parent=11 // pred_region
          _
        $region40: #{tpu_custom_call.1} parent=11 // pred_fallthru
          _
        // Predicated region
        $region41: #{tpu_custom_call.1} parent=11 // pred_check
          %p920 = pneg %p354
        $region42: #{tpu_custom_call.1} parent=11 // pred_check_branch
          %922 = sbr.rel (%p920) target = $region44
        $region43: #{tpu_custom_call.1} parent=11 // pred_region
          _
        $region44: #{tpu_custom_call.1} parent=11 // pred_fallthru
          _
        // Predicated region
        $region45: #{tpu_custom_call.1} parent=11 // pred_check
          %p923 = pneg %p375
        $region46: #{tpu_custom_call.1} parent=11 // pred_check_branch
          %925 = sbr.rel (%p923) target = $region48
        $region47: #{tpu_custom_call.1} parent=11 // pred_region
          _
        $region48: #{tpu_custom_call.1} parent=11 // pred_fallthru
          _
        // Predicated region
        $region49: #{tpu_custom_call.1} parent=11 // pred_check
          %p926 = pneg %p396
        $region50: #{tpu_custom_call.1} parent=11 // pred_check_branch
          %928 = sbr.rel (%p926) target = $region52
        $region51: #{tpu_custom_call.1} parent=11 // pred_region
          _
        $region52: #{tpu_custom_call.1} parent=11 // pred_fallthru
          _
        // Predicated region
        $region53: #{tpu_custom_call.1} parent=11 // pred_check
          %p929 = pneg %p417
        $region54: #{tpu_custom_call.1} parent=11 // pred_check_branch
          %931 = sbr.rel (%p929) target = $region56
        $region55: #{tpu_custom_call.1} parent=11 // pred_region
          _
        $region56: #{tpu_custom_call.1} parent=11 // pred_fallthru
          _
        // Predicated region
        $region57: #{tpu_custom_call.1} parent=11 // pred_check
          %p932 = pneg %p438
        $region58: #{tpu_custom_call.1} parent=11 // pred_check_branch
          %934 = sbr.rel (%p932) target = $region60
        $region59: #{tpu_custom_call.1} parent=11 // pred_region
          _
        $region60: #{tpu_custom_call.1} parent=11 // pred_fallthru
          _
        // Predicated region
        $region61: #{tpu_custom_call.1} parent=11 // pred_check
          %p935 = pneg %p459
        $region62: #{tpu_custom_call.1} parent=11 // pred_check_branch
          %937 = sbr.rel (%p935) target = $region64
        $region63: #{tpu_custom_call.1} parent=11 // pred_region
          _
        $region64: #{tpu_custom_call.1} parent=11 // pred_fallthru
          _
        // Predicated region
        $region65: #{tpu_custom_call.1} parent=11 // pred_check
          %p938 = pneg %p480
        $region66: #{tpu_custom_call.1} parent=11 // pred_check_branch
          %940 = sbr.rel (%p938) target = $region68
        $region67: #{tpu_custom_call.1} parent=11 // pred_region
          _
        $region68: #{tpu_custom_call.1} parent=11 // pred_fallthru
          _
        // Predicated region
        $region69: #{tpu_custom_call.1} parent=11 // pred_check
          %p941 = pneg %p501
        $region70: #{tpu_custom_call.1} parent=11 // pred_check_branch
          %943 = sbr.rel (%p941) target = $region72
        $region71: #{tpu_custom_call.1} parent=11 // pred_region
          _
        $region72: #{tpu_custom_call.1} parent=11 // pred_fallthru
          _
        // Predicated region
        $region73: #{tpu_custom_call.1} parent=11 // pred_check
          %p944 = pneg %p522
        $region74: #{tpu_custom_call.1} parent=11 // pred_check_branch
          %946 = sbr.rel (%p944) target = $region76
        $region75: #{tpu_custom_call.1} parent=11 // pred_region
          _
        $region76: #{tpu_custom_call.1} parent=11 // pred_fallthru
          _
        // Predicated region
        $region77: #{tpu_custom_call.1} parent=11 // pred_check
          %p947 = pneg %p543
        $region78: #{tpu_custom_call.1} parent=11 // pred_check_branch
          %949 = sbr.rel (%p947) target = $region80
        $region79: #{tpu_custom_call.1} parent=11 // pred_region
          _
        $region80: #{tpu_custom_call.1} parent=11 // pred_fallthru
          _
        // Predicated region
        $region81: #{tpu_custom_call.1} parent=11 // pred_check
          %p950 = pneg %p564
        $region82: #{tpu_custom_call.1} parent=11 // pred_check_branch
          %952 = sbr.rel (%p950) target = $region84
        $region83: #{tpu_custom_call.1} parent=11 // pred_region
          _
        $region84: #{tpu_custom_call.1} parent=11 // pred_fallthru
          _
        // Predicated region
        $region85: #{tpu_custom_call.1} parent=11 // pred_check
          %p953 = pneg %p585
        $region86: #{tpu_custom_call.1} parent=11 // pred_check_branch
          %955 = sbr.rel (%p953) target = $region88
        $region87: #{tpu_custom_call.1} parent=11 // pred_region
          _
        $region88: #{tpu_custom_call.1} parent=11 // pred_fallthru
          _
        // Predicated region
        $region89: #{tpu_custom_call.1} parent=11 // pred_check
          %p956 = pneg %p606
        $region90: #{tpu_custom_call.1} parent=11 // pred_check_branch
          %958 = sbr.rel (%p956) target = $region92
        $region91: #{tpu_custom_call.1} parent=11 // pred_region
          _
        $region92: #{tpu_custom_call.1} parent=11 // pred_fallthru
          _
        // Predicated region
        $region93: #{tpu_custom_call.1} parent=11 // pred_check
          %p959 = pneg %p627
        $region94: #{tpu_custom_call.1} parent=11 // pred_check_branch
          %961 = sbr.rel (%p959) target = $region96
        $region95: #{tpu_custom_call.1} parent=11 // pred_region
          _
        $region96: #{tpu_custom_call.1} parent=11 // pred_fallthru
          _
        // Predicated region
        $region97: #{tpu_custom_call.1} parent=11 // pred_check
          %p962 = pneg %p648
        $region98: #{tpu_custom_call.1} parent=11 // pred_check_branch
          %964 = sbr.rel (%p962) target = $region100
        $region99: #{tpu_custom_call.1} parent=11 // pred_region
          _
        $region100: #{tpu_custom_call.1} parent=11 // pred_fallthru
          _
        // Predicated region
        $region101: #{tpu_custom_call.1} parent=11 // pred_check
          %p965 = pneg %p669
        $region102: #{tpu_custom_call.1} parent=11 // pred_check_branch
          %967 = sbr.rel (%p965) target = $region104
        $region103: #{tpu_custom_call.1} parent=11 // pred_region
          _
        $region104: #{tpu_custom_call.1} parent=11 // pred_fallthru
          _
        // Predicated region
        $region105: #{tpu_custom_call.1} parent=11 // pred_check
          %p968 = pneg %p690
        $region106: #{tpu_custom_call.1} parent=11 // pred_check_branch
          %970 = sbr.rel (%p968) target = $region108
        $region107: #{tpu_custom_call.1} parent=11 // pred_region
          _
        $region108: #{tpu_custom_call.1} parent=11 // pred_fallthru
          _
        // Predicated region
        $region109: #{tpu_custom_call.1} parent=11 // pred_check
          %p971 = pneg %p711
        $region110: #{tpu_custom_call.1} parent=11 // pred_check_branch
          %973 = sbr.rel (%p971) target = $region112
        $region111: #{tpu_custom_call.1} parent=11 // pred_region
          _
        $region112: #{tpu_custom_call.1} parent=11 // pred_fallthru
          _
        // Predicated region
        $region113: #{tpu_custom_call.1} parent=11 // pred_check
          %p974 = pneg %p732
        $region114: #{tpu_custom_call.1} parent=11 // pred_check_branch
          %976 = sbr.rel (%p974) target = $region116
        $region115: #{tpu_custom_call.1} parent=11 // pred_region
          _
        $region116: #{tpu_custom_call.1} parent=11 // pred_fallthru
          _
        // Predicated region
        $region117: #{tpu_custom_call.1} parent=11 // pred_check
          %p977 = pneg %p753
        $region118: #{tpu_custom_call.1} parent=11 // pred_check_branch
          %979 = sbr.rel (%p977) target = $region120
        $region119: #{tpu_custom_call.1} parent=11 // pred_region
          _
        $region120: #{tpu_custom_call.1} parent=11 // pred_fallthru
          _
        // Predicated region
        $region121: #{tpu_custom_call.1} parent=11 // pred_check
          %p980 = pneg %p774
        $region122: #{tpu_custom_call.1} parent=11 // pred_check_branch
          %982 = sbr.rel (%p980) target = $region124
        $region123: #{tpu_custom_call.1} parent=11 // pred_region
          _
        $region124: #{tpu_custom_call.1} parent=11 // pred_fallthru
          _
        // Predicated region
        $region125: #{tpu_custom_call.1} parent=11 // pred_check
          %p983 = pneg %p795
        $region126: #{tpu_custom_call.1} parent=11 // pred_check_branch
          %985 = sbr.rel (%p983) target = $region128
        $region127: #{tpu_custom_call.1} parent=11 // pred_region
          _
        $region128: #{tpu_custom_call.1} parent=11 // pred_fallthru
          _
        // Predicated region
        $region129: #{tpu_custom_call.1} parent=11 // pred_check
          %p986 = pneg %p816
        $region130: #{tpu_custom_call.1} parent=11 // pred_check_branch
          %988 = sbr.rel (%p986) target = $region132
        $region131: #{tpu_custom_call.1} parent=11 // pred_region
          _
        $region132: #{tpu_custom_call.1} parent=11 // pred_fallthru
          _
        // Predicated region
        $region133: #{tpu_custom_call.1} parent=11 // pred_check
          %p989 = pneg %p837
        $region134: #{tpu_custom_call.1} parent=11 // pred_check_branch
          %991 = sbr.rel (%p989) target = $region136
        $region135: #{tpu_custom_call.1} parent=11 // pred_region
          _
        $region136: #{tpu_custom_call.1} parent=11 // pred_fallthru
          _
        // Predicated region
        $region137: #{tpu_custom_call.1} parent=11 // pred_check
          %p992 = pneg %p858
        $region138: #{tpu_custom_call.1} parent=11 // pred_check_branch
          %994 = sbr.rel (%p992) target = $region140
        $region139: #{tpu_custom_call.1} parent=11 // pred_region
          _
        $region140: #{tpu_custom_call.1} parent=11 // pred_fallthru
          _
      $region12: #{tpu_custom_call.1} parent=5 // pred_fallthru
        _
      %p995 = scmp.lt.s32.totalorder %s82, 2
      // Predicated region
      $region141: #{tpu_custom_call.1} parent=5 // pred_check
        %p996 = pneg %p995
      $region142: #{tpu_custom_call.1} parent=5 // pred_check_branch
        %998 = sbr.rel (%p996) target = $region144
      $region143: #{tpu_custom_call.1} parent=5 // pred_region
        // Predicated region
        $region145: #{tpu_custom_call.1} parent=143 // pred_check
          %p999 = pneg %p102
        $region146: #{tpu_custom_call.1} parent=143 // pred_check_branch
          %1001 = sbr.rel (%p999) target = $region148
        $region147: #{tpu_custom_call.1} parent=143 // pred_region
          %s1002 = smul.u32 2, %s82
          %p1003 = scmp.lt.s32.totalorder %s1002, 3
          %s1004 = scalar_select %p1003, %s1002, 3
          %s1005 = smul.addr %s1004, 2
          %s1006 = smul.addr %s1005, 4
          %s1007 = scalar_lea.vmem %s1, %s1006
          %s1008 = smul.u32 2, %s82
        $region148: #{tpu_custom_call.1} parent=143 // pred_fallthru
          _
        // Predicated region
        $region149: #{tpu_custom_call.1} parent=143 // pred_check
          %p1009 = pneg %p128
        $region150: #{tpu_custom_call.1} parent=143 // pred_check_branch
          %1011 = sbr.rel (%p1009) target = $region152
        $region151: #{tpu_custom_call.1} parent=143 // pred_region
          %s1012 = smul.u32 2, %s82
          %p1013 = scmp.lt.s32.totalorder %s1012, 3
          %s1014 = scalar_select %p1013, %s1012, 3
          %s1015 = smul.addr %s1014, 12
          %s1016 = smul.addr %s1015, 4
          %s1017 = scalar_lea.vmem %s3, %s1016
          %s1018 = smul.u32 2, %s82
        $region152: #{tpu_custom_call.1} parent=143 // pred_fallthru
          _
        // Predicated region
        $region153: #{tpu_custom_call.1} parent=143 // pred_check
          %p1019 = pneg %p154
        $region154: #{tpu_custom_call.1} parent=143 // pred_check_branch
          %1021 = sbr.rel (%p1019) target = $region156
        $region155: #{tpu_custom_call.1} parent=143 // pred_region
          %s1022 = smul.u32 2, %s82
          %p1023 = scmp.lt.s32.totalorder %s1022, 3
          %s1024 = scalar_select %p1023, %s1022, 3
          %s1025 = scalar_lea.vmem %s5, %s1024
          %s1026 = smul.u32 2, %s82
        $region156: #{tpu_custom_call.1} parent=143 // pred_fallthru
          _
        // Predicated region
        $region157: #{tpu_custom_call.1} parent=143 // pred_check
          %p1027 = pneg %p180
        $region158: #{tpu_custom_call.1} parent=143 // pred_check_branch
          %1029 = sbr.rel (%p1027) target = $region160
        $region159: #{tpu_custom_call.1} parent=143 // pred_region
          %s1030 = smul.u32 2, %s82
          %p1031 = scmp.lt.s32.totalorder %s1030, 3
          %s1032 = scalar_select %p1031, %s1030, 3
          %s1033 = scalar_lea.vmem %s7, %s1032
          %s1034 = smul.u32 2, %s82
        $region160: #{tpu_custom_call.1} parent=143 // pred_fallthru
          _
      $region144: #{tpu_custom_call.1} parent=5 // pred_fallthru
        _
      %p1035 = scmp.le.s32.totalorder 1, %s82
      %p1036 = scmp.lt.s32.totalorder %s82, 3
      %p1037 = pnand %p1035, %p1036
      %p1038 = pneg %p1037
      // Predicated region
      $region161: #{tpu_custom_call.1} parent=5 // pred_check
        _
      $region162: #{tpu_custom_call.1} parent=5 // pred_check_branch
        %1040 = sbr.rel (%p1037) target = $region164
      $region163: #{tpu_custom_call.1} parent=5 // pred_region
        %s1041 = ssub.s32 %s82, 1
        %s1042 = smul.u32 2, %s87
        %p1043 = scmp.lt.s32.totalorder %s1042, 3
        %s1044 = scalar_select %p1043, %s1042, 3
        %s1045 = smul.addr %s1044, 2
        %s1046 = smul.addr %s1045, 4
        %s1047 = scalar_lea.vmem %s1, %s1046
        %p1048 = pneg %p108
        %p1049 = pneg %p105
        %s1050 = smul.u32 2, %s87
        %p1051 = scmp.lt.s32.totalorder %s1050, 3
        %s1052 = scalar_select %p1051, %s1050, 3
        %s1053 = smul.addr %s1052, 12
        %s1054 = smul.addr %s1053, 4
        %s1055 = scalar_lea.vmem %s3, %s1054
        %p1056 = pneg %p134
        %p1057 = pneg %p131
        %s1058 = smul.u32 2, %s87
        %p1059 = scmp.lt.s32.totalorder %s1058, 3
        %s1060 = scalar_select %p1059, %s1058, 3
        %s1061 = scalar_lea.vmem %s5, %s1060
        %p1062 = pneg %p160
        %p1063 = pneg %p157
        %s1064 = smul.u32 2, %s87
        %p1065 = scmp.lt.s32.totalorder %s1064, 3
        %s1066 = scalar_select %p1065, %s1064, 3
        %s1067 = scalar_lea.vmem %s7, %s1066
        %p1068 = pneg %p186
        %p1069 = pneg %p183
        %p1070 = pneg %p207
        %p1071 = pneg %p204
        %p1072 = pneg %p228
        %p1073 = pneg %p225
        %p1074 = pneg %p249
        %p1075 = pneg %p246
        %p1076 = pneg %p270
        %p1077 = pneg %p267
        %p1078 = pneg %p291
        %p1079 = pneg %p288
        %p1080 = pneg %p312
        %p1081 = pneg %p309
        %p1082 = pneg %p333
        %p1083 = pneg %p330
        %p1084 = pneg %p354
        %p1085 = pneg %p351
        %p1086 = pneg %p375
        %p1087 = pneg %p372
        %p1088 = pneg %p396
        %p1089 = pneg %p393
        %p1090 = pneg %p417
        %p1091 = pneg %p414
        %p1092 = pneg %p438
        %p1093 = pneg %p435
        %p1094 = pneg %p459
        %p1095 = pneg %p456
        %p1096 = pneg %p480
        %p1097 = pneg %p477
        %p1098 = pneg %p501
        %p1099 = pneg %p498
        %p1100 = pneg %p522
        %p1101 = pneg %p519
        %p1102 = pneg %p543
        %p1103 = pneg %p540
        %p1104 = pneg %p564
        %p1105 = pneg %p561
        %p1106 = pneg %p585
        %p1107 = pneg %p582
        %p1108 = pneg %p606
        %p1109 = pneg %p603
        %p1110 = pneg %p627
        %p1111 = pneg %p624
        %p1112 = pneg %p648
        %p1113 = pneg %p645
        %p1114 = pneg %p669
        %p1115 = pneg %p666
        %p1116 = pneg %p690
        %p1117 = pneg %p687
        %p1118 = pneg %p711
        %p1119 = pneg %p708
        %p1120 = pneg %p732
        %p1121 = pneg %p729
        %p1122 = pneg %p753
        %p1123 = pneg %p750
        %p1124 = pneg %p774
        %p1125 = pneg %p771
        %p1126 = pneg %p795
        %p1127 = pneg %p792
        %p1128 = pneg %p816
        %p1129 = pneg %p813
        %p1130 = pneg %p837
        %p1131 = pneg %p834
        %p1132 = pneg %p858
        %p1133 = pneg %p855
        %p1134 = pneg %p884
        %p1135 = pneg %p881
        %s1136 = sand.u32 %s871, 1
        %s1137 = scalar_lea.sflag [#allocation3], %s1136
        %s1138 = sand.u32 %s871, 1
        %s1139 = smul.addr %s1138, 32
        %s1140 = scalar_lea.vmem [#allocation2], %s1139
        %s1141 = smul.u32 2, %s87
        %p1142 = scmp.lt.s32.totalorder %s1141, 3
        %s1143 = scalar_select %p1142, %s1141, 3
        %s1144 = smul.addr %s1143, 2
        %s1145 = smul.addr %s1144, 4
        %s1146 = scalar_lea.vmem %s1, %s1145
        %s1147 = smul.u32 2, %s87
        %s1148 = smul.u32 2, %s87
        %p1149 = scmp.lt.s32.totalorder %s1148, 3
        %s1150 = scalar_select %p1149, %s1148, 3
        %s1151 = smul.addr %s1150, 12
        %s1152 = smul.addr %s1151, 4
        %s1153 = scalar_lea.vmem %s3, %s1152
        %s1154 = smul.u32 2, %s87
        %s1155 = smul.u32 2, %s87
        %p1156 = scmp.lt.s32.totalorder %s1155, 3
        %s1157 = scalar_select %p1156, %s1155, 3
        %s1158 = scalar_lea.vmem %s5, %s1157
        %s1159 = smul.u32 2, %s87
        %s1160 = smul.u32 2, %s87
        %p1161 = scmp.lt.s32.totalorder %s1160, 3
        %s1162 = scalar_select %p1161, %s1160, 3
        %s1163 = scalar_lea.vmem %s7, %s1162
        %s1164 = smul.u32 2, %s87
        %s1165 = smul.u32 2, %s87
        %v1167 = vld [vmem:[%s1153] sm:$0xff]
        %v1168 = vld [vmem:[%s1153 + $0x8] sm:$0xff]
        %v1169 = vld [vmem:[%s1153 + $0x10] sm:$0xff]
        %v1170 = vld [vmem:[%s1153 + $0x18] sm:$0xff]
        %v1171 = vld [vmem:[%s1153 + $0x20] sm:$0xff]
        %v1172 = vld [vmem:[%s1153 + $0x28] sm:$0xff]
        %v1173 = vld [vmem:[%s1153 + $0x30] sm:$0xff]
        %v1174 = vld [vmem:[%s1153 + $0x38] sm:$0xff]
        %v1175 = vld [vmem:[%s1153 + $0x40] sm:$0xff]
        %v1176 = vld [vmem:[%s1153 + $0x48] sm:$0xff]
        %v1177 = vld [vmem:[%s1153 + $0x50] sm:$0xff]
        %v1178 = vld [vmem:[%s1153 + $0x58] sm:$0xff]
        %v1179 = vld [vmem:[%s11] sm:$0xf]
        %v1180 = vld [vmem:[%s11 + $0x4] sm:$0xf]
        %v1181 = vld [vmem:[%s11 + $0x8] sm:$0xf]
        %v1182 = vld [vmem:[%s11 + $0xc] sm:$0xf]
        %v1183 = vld [vmem:[%s11 + $0x10] sm:$0xf]
        %v1184 = vld [vmem:[%s11 + $0x14] sm:$0xf]
        %v1185 = vld [vmem:[%s11 + $0x18] sm:$0xf]
        %v1186 = vld [vmem:[%s11 + $0x1c] sm:$0xf]
        %v1187 = vld [vmem:[%s11 + $0x20] sm:$0xf]
        %v1188 = vld [vmem:[%s11 + $0x24] sm:$0xf]
        %v1189 = vld [vmem:[%s11 + $0x28] sm:$0xf]
        %v1190 = vld [vmem:[%s11 + $0x2c] sm:$0xf]
        %v1191 = vld [vmem:[%s11 + $0x30] sm:$0xf]
        %v1192 = vld [vmem:[%s11 + $0x34] sm:$0xf]
        %v1193 = vld [vmem:[%s11 + $0x38] sm:$0xf]
        %v1194 = vld [vmem:[%s11 + $0x3c] sm:$0xf]
        %v1195 = vld [vmem:[%s11 + $0x40] sm:$0xf]
        %v1196 = vld [vmem:[%s11 + $0x44] sm:$0xf]
        %v1197 = vld [vmem:[%s11 + $0x48] sm:$0xf]
        %v1198 = vld [vmem:[%s11 + $0x4c] sm:$0xf]
        %v1199 = vld [vmem:[%s11 + $0x50] sm:$0xf]
        %v1200 = vld [vmem:[%s11 + $0x54] sm:$0xf]
        %v1201 = vld [vmem:[%s11 + $0x58] sm:$0xf]
        %v1202 = vld [vmem:[%s11 + $0x5c] sm:$0xf]
        %v1203 = vld [vmem:[%s11 + $0x60] sm:$0xf]
        %v1204 = vld [vmem:[%s11 + $0x64] sm:$0xf]
        %v1205 = vld [vmem:[%s11 + $0x68] sm:$0xf]
        %v1206 = vld [vmem:[%s11 + $0x6c] sm:$0xf]
        %v1207 = vld [vmem:[%s11 + $0x70] sm:$0xf]
        %v1208 = vld [vmem:[%s11 + $0x74] sm:$0xf]
        %v1209 = vld [vmem:[%s11 + $0x78] sm:$0xf]
        %v1210 = vld [vmem:[%s11 + $0x7c] sm:$0xf]
        %v1211 = vld [vmem:[%s11 + $0x80] sm:$0xf]
        %v1212 = vld [vmem:[%s11 + $0x84] sm:$0xf]
        %v1213 = vld [vmem:[%s11 + $0x88] sm:$0xf]
        %v1214 = vld [vmem:[%s11 + $0x8c] sm:$0xf]
        %v1215 = vld [vmem:[%s11 + $0x90] sm:$0xf]
        %v1216 = vld [vmem:[%s11 + $0x94] sm:$0xf]
        %v1217 = vld [vmem:[%s11 + $0x98] sm:$0xf]
        %v1218 = vld [vmem:[%s11 + $0x9c] sm:$0xf]
        %v1219 = vld [vmem:[%s11 + $0xa0] sm:$0xf]
        %v1220 = vld [vmem:[%s11 + $0xa4] sm:$0xf]
        %v1221 = vld [vmem:[%s11 + $0xa8] sm:$0xf]
        %v1222 = vld [vmem:[%s11 + $0xac] sm:$0xf]
        %v1223 = vld [vmem:[%s11 + $0xb0] sm:$0xf]
        %v1224 = vld [vmem:[%s11 + $0xb4] sm:$0xf]
        %v1225 = vld [vmem:[%s11 + $0xb8] sm:$0xf]
        %v1226 = vld [vmem:[%s11 + $0xbc] sm:$0xf]
        %v1227 = vld [vmem:[%s11 + $0xc0] sm:$0xf]
        %v1228 = vld [vmem:[%s11 + $0xc4] sm:$0xf]
        %v1229 = vld [vmem:[%s11 + $0xc8] sm:$0xf]
        %v1230 = vld [vmem:[%s11 + $0xcc] sm:$0xf]
        %v1231 = vld [vmem:[%s11 + $0xd0] sm:$0xf]
        %v1232 = vld [vmem:[%s11 + $0xd4] sm:$0xf]
        %v1233 = vld [vmem:[%s11 + $0xd8] sm:$0xf]
        %v1234 = vld [vmem:[%s11 + $0xdc] sm:$0xf]
        %v1235 = vld [vmem:[%s11 + $0xe0] sm:$0xf]
        %v1236 = vld [vmem:[%s11 + $0xe4] sm:$0xf]
        %v1237 = vld [vmem:[%s11 + $0xe8] sm:$0xf]
        %v1238 = vld [vmem:[%s11 + $0xec] sm:$0xf]
        %v1239 = vld [vmem:[%s11 + $0xf0] sm:$0xf]
        %v1240 = vld [vmem:[%s11 + $0xf4] sm:$0xf]
        %v1241 = vld [vmem:[%s11 + $0xf8] sm:$0xf]
        %v1242 = vld [vmem:[%s11 + $0xfc] sm:$0xf]
        %v1243 = vld [vmem:[%s11 + $0x100] sm:$0xf]
        %v1244 = vld [vmem:[%s11 + $0x104] sm:$0xf]
        %v1245 = vld [vmem:[%s11 + $0x108] sm:$0xf]
        %v1246 = vld [vmem:[%s11 + $0x10c] sm:$0xf]
        %v1247 = vld [vmem:[%s11 + $0x110] sm:$0xf]
        %v1248 = vld [vmem:[%s11 + $0x114] sm:$0xf]
        %v1249 = vld [vmem:[%s11 + $0x118] sm:$0xf]
        %v1250 = vld [vmem:[%s11 + $0x11c] sm:$0xf]
        %v1251 = vld [vmem:[%s11 + $0x120] sm:$0xf]
        %v1252 = vld [vmem:[%s11 + $0x124] sm:$0xf]
        %v1253 = vld [vmem:[%s11 + $0x128] sm:$0xf]
        %v1254 = vld [vmem:[%s11 + $0x12c] sm:$0xf]
        %v1255 = vld [vmem:[%s11 + $0x130] sm:$0xf]
        %v1256 = vld [vmem:[%s11 + $0x134] sm:$0xf]
        %v1257 = vld [vmem:[%s11 + $0x138] sm:$0xf]
        %v1258 = vld [vmem:[%s11 + $0x13c] sm:$0xf]
        %v1259 = vld [vmem:[%s11 + $0x140] sm:$0xf]
        %v1260 = vld [vmem:[%s11 + $0x144] sm:$0xf]
        %v1261 = vld [vmem:[%s11 + $0x148] sm:$0xf]
        %v1262 = vld [vmem:[%s11 + $0x14c] sm:$0xf]
        %v1263 = vld [vmem:[%s11 + $0x150] sm:$0xf]
        %v1264 = vld [vmem:[%s11 + $0x154] sm:$0xf]
        %v1265 = vld [vmem:[%s11 + $0x158] sm:$0xf]
        %v1266 = vld [vmem:[%s11 + $0x15c] sm:$0xf]
        %v1267 = vld [vmem:[%s11 + $0x160] sm:$0xf]
        %v1268 = vld [vmem:[%s11 + $0x164] sm:$0xf]
        %v1269 = vld [vmem:[%s11 + $0x168] sm:$0xf]
        %v1270 = vld [vmem:[%s11 + $0x16c] sm:$0xf]
        %v1271 = vld [vmem:[%s11 + $0x170] sm:$0xf]
        %v1272 = vld [vmem:[%s11 + $0x174] sm:$0xf]
        %v1273 = vld [vmem:[%s11 + $0x178] sm:$0xf]
        %v1274 = vld [vmem:[%s11 + $0x17c] sm:$0xf]
        %v1275 = vld [vmem:[%s1146] sm:$0xf]
        %v1276 = vld [vmem:[%s1146 + $0x4] sm:$0xf]
        %v1277 = vld [vmem:[%s1146 + $0x8] sm:$0xf]
        %v1278 = vld [vmem:[%s1146 + $0xc] sm:$0xf]
        %v1279 = vld [vmem:[%s9] sm:$0xf]
        %v1280 = vld [vmem:[%s9 + $0x4] sm:$0xf]
        %v1281 = vld [vmem:[%s9 + $0x8] sm:$0xf]
        %v1282 = vld [vmem:[%s9 + $0xc] sm:$0xf]
        %v1283 = vld [vmem:[%s9 + $0x10] sm:$0xf]
        %v1284 = vld [vmem:[%s9 + $0x14] sm:$0xf]
        %v1285 = vld [vmem:[%s9 + $0x18] sm:$0xf]
        %v1286 = vld [vmem:[%s9 + $0x1c] sm:$0xf]
        %v1291 = vunpack.c.l.b16 %v1275
        %v1292 = vunpack.c.l.b16 %v1276
        %v1293 = vunpack.c.l.b16 %v1277
        %v1294 = vunpack.c.l.b16 %v1278
        %v1295 = vpack.c.b16 %v1292, %v1291
        %v1296 = vpack.c.b16 %v1294, %v1293
        %v1305 = vunpack.c.l.b16 %v1279
        %v1306 = vunpack.c.l.b16 %v1280
        %v1307 = vunpack.c.l.b16 %v1281
        %v1308 = vunpack.c.l.b16 %v1282
        %v1309 = vunpack.c.l.b16 %v1283
        %v1310 = vunpack.c.l.b16 %v1284
        %v1311 = vunpack.c.l.b16 %v1285
        %v1312 = vunpack.c.l.b16 %v1286
        %v1313 = vpack.c.b16 %v1306, %v1305
        %v1314 = vpack.c.b16 %v1308, %v1307
        %v1315 = vpack.c.b16 %v1310, %v1309
        %v1316 = vpack.c.b16 %v1312, %v1311
        %vm1321 = vcmask 523264
        %v1323 = vsel %vm1321, %v1295, 0
        %v1326 = vsel %vm1321, %v1296, 0
        %1328 = vmatprep.subr.bf16.mxu0 0
        %1329 = vmatpush1.bf16.msra.mxu0 %v1313
        %1330 = vmatprep.subr.bf16.mxu0 0
        %1331 = vmatpush1.bf16.msra.mxu0 %v1314
        %1332 = vmatprep.subr.bf16.mxu0 0
        %1333 = vmatpush1.bf16.msra.mxu0 %v1315
        %1334 = vmatprep.subr.bf16.mxu0 0
        %1335 = vmatpush1.bf16.msra.mxu0 %v1316
        %1336 = vmatprep.subr.bf16.mxu0 0
        %1337 = vmatpush1.bf16.msra.mxu0 0
        %1338 = vmatprep.subr.bf16.mxu0 0
        %1339 = vmatpush1.bf16.msra.mxu0 0
        %1340 = vmatprep.subr.bf16.mxu0 0
        %1341 = vmatpush1.bf16.msra.mxu0 0
        %1342 = vmatprep.subr.bf16.mxu0 0
        %1343 = vmatpush1.bf16.msra.mxu0 0
        %1344 = vmatprep.subr.bf16.mxu0 0
        %1345 = vmatpush1.bf16.msra.mxu0 0
        %1346 = vmatprep.subr.bf16.mxu0 0
        %1347 = vmatpush1.bf16.msra.mxu0 0
        %1348 = vmatprep.subr.bf16.mxu0 0
        %1349 = vmatpush1.bf16.msra.mxu0 0
        %1350 = vmatprep.subr.bf16.mxu0 0
        %1351 = vmatpush1.bf16.msra.mxu0 0
        %1352 = vmatprep.subr.bf16.mxu0 0
        %1353 = vmatpush1.bf16.msra.mxu0 0
        %1354 = vmatprep.subr.bf16.mxu0 0
        %1355 = vmatpush1.bf16.msra.mxu0 0
        %1356 = vmatprep.subr.bf16.mxu0 0
        %1357 = vmatpush1.bf16.msra.mxu0 0
        %1358 = vmatprep.subr.bf16.mxu0 0
        %1359 = vmatpush1.bf16.msra.mxu0 0
        %1360 = vmatprep.mubr.bf16.mxu0 0
        %1361 = vmatmul.mubr.bf16.gmra.mrb[0].mxu0 %v1323
        %v1362 = vpop.f32.mrb[0].mxu0
        %v1363 = vadd.f32 0.0, %v1362
        %v1364 = vpop.f32.mrb[0].mxu0
        %v1365 = vpop.f32.mrb[0].mxu0
        %v1366 = vadd.f32 0.0, %v1365
        %v1367 = vpop.f32.mrb[0].mxu0
        %1368 = vmatprep.mubr.bf16.mxu0 0
        %1369 = vmatmul.mubr.bf16.gmra.mrb[0].mxu0 %v1326
        %v1370 = vpop.f32.mrb[0].mxu0
        %v1371 = vadd.f32 0.0, %v1370
        %v1372 = vpop.f32.mrb[0].mxu0
        %v1373 = vpop.f32.mrb[0].mxu0
        %v1374 = vadd.f32 0.0, %v1373
        %v1375 = vpop.f32.mrb[0].mxu0
        %1376 = vdwg.mxu0
        %v1389 = vunpack.c.l.b16 %v1167
        %v1390 = vunpack.c.h.b16 %v1167
        %v1391 = vunpack.c.l.b16 %v1168
        %v1392 = vunpack.c.h.b16 %v1168
        %v1393 = vunpack.c.l.b16 %v1169
        %v1394 = vunpack.c.h.b16 %v1169
        %v1395 = vunpack.c.l.b16 %v1170
        %v1396 = vunpack.c.h.b16 %v1170
        %v1397 = vunpack.c.l.b16 %v1171
        %v1398 = vunpack.c.h.b16 %v1171
        %v1399 = vunpack.c.l.b16 %v1172
        %v1400 = vunpack.c.h.b16 %v1172
        %v1401 = vunpack.c.l.b16 %v1173
        %v1402 = vunpack.c.h.b16 %v1173
        %v1403 = vunpack.c.l.b16 %v1174
        %v1404 = vunpack.c.h.b16 %v1174
        %v1405 = vunpack.c.l.b16 %v1175
        %v1406 = vunpack.c.h.b16 %v1175
        %v1407 = vunpack.c.l.b16 %v1176
        %v1408 = vunpack.c.h.b16 %v1176
        %v1409 = vunpack.c.l.b16 %v1177
        %v1410 = vunpack.c.h.b16 %v1177
        %v1411 = vunpack.c.l.b16 %v1178
        %v1412 = vunpack.c.h.b16 %v1178
        %v1413 = vpack.c.b16 %v1395, %v1389
        %v1414 = vpack.c.b16 %v1396, %v1390
        %v1415 = vpack.c.b16 %v1397, %v1391
        %v1416 = vpack.c.b16 %v1398, %v1392
        %v1417 = vpack.c.b16 %v1399, %v1393
        %v1418 = vpack.c.b16 %v1400, %v1394
        %v1419 = vpack.c.b16 %v1407, %v1401
        %v1420 = vpack.c.b16 %v1408, %v1402
        %v1421 = vpack.c.b16 %v1409, %v1403
        %v1422 = vpack.c.b16 %v1410, %v1404
        %v1423 = vpack.c.b16 %v1411, %v1405
        %v1424 = vpack.c.b16 %v1412, %v1406
        %v1533 = vunpack.c.l.b16 %v1179
        %v1534 = vunpack.c.l.b16 %v1180
        %v1535 = vunpack.c.l.b16 %v1181
        %v1536 = vunpack.c.l.b16 %v1182
        %v1537 = vunpack.c.l.b16 %v1183
        %v1538 = vunpack.c.l.b16 %v1184
        %v1539 = vunpack.c.l.b16 %v1185
        %v1540 = vunpack.c.l.b16 %v1186
        %v1541 = vunpack.c.l.b16 %v1187
        %v1542 = vunpack.c.l.b16 %v1188
        %v1543 = vunpack.c.l.b16 %v1189
        %v1544 = vunpack.c.l.b16 %v1190
        %v1545 = vunpack.c.l.b16 %v1191
        %v1546 = vunpack.c.l.b16 %v1192
        %v1547 = vunpack.c.l.b16 %v1193
        %v1548 = vunpack.c.l.b16 %v1194
        %v1549 = vunpack.c.l.b16 %v1195
        %v1550 = vunpack.c.l.b16 %v1196
        %v1551 = vunpack.c.l.b16 %v1197
        %v1552 = vunpack.c.l.b16 %v1198
        %v1553 = vunpack.c.l.b16 %v1199
        %v1554 = vunpack.c.l.b16 %v1200
        %v1555 = vunpack.c.l.b16 %v1201
        %v1556 = vunpack.c.l.b16 %v1202
        %v1557 = vunpack.c.l.b16 %v1203
        %v1558 = vunpack.c.l.b16 %v1204
        %v1559 = vunpack.c.l.b16 %v1205
        %v1560 = vunpack.c.l.b16 %v1206
        %v1561 = vunpack.c.l.b16 %v1207
        %v1562 = vunpack.c.l.b16 %v1208
        %v1563 = vunpack.c.l.b16 %v1209
        %v1564 = vunpack.c.l.b16 %v1210
        %v1565 = vunpack.c.l.b16 %v1211
        %v1566 = vunpack.c.l.b16 %v1212
        %v1567 = vunpack.c.l.b16 %v1213
        %v1568 = vunpack.c.l.b16 %v1214
        %v1569 = vunpack.c.l.b16 %v1215
        %v1570 = vunpack.c.l.b16 %v1216
        %v1571 = vunpack.c.l.b16 %v1217
        %v1572 = vunpack.c.l.b16 %v1218
        %v1573 = vunpack.c.l.b16 %v1219
        %v1574 = vunpack.c.l.b16 %v1220
        %v1575 = vunpack.c.l.b16 %v1221
        %v1576 = vunpack.c.l.b16 %v1222
        %v1577 = vunpack.c.l.b16 %v1223
        %v1578 = vunpack.c.l.b16 %v1224
        %v1579 = vunpack.c.l.b16 %v1225
        %v1580 = vunpack.c.l.b16 %v1226
        %v1581 = vunpack.c.l.b16 %v1227
        %v1582 = vunpack.c.l.b16 %v1228
        %v1583 = vunpack.c.l.b16 %v1229
        %v1584 = vunpack.c.l.b16 %v1230
        %v1585 = vunpack.c.l.b16 %v1231
        %v1586 = vunpack.c.l.b16 %v1232
        %v1587 = vunpack.c.l.b16 %v1233
        %v1588 = vunpack.c.l.b16 %v1234
        %v1589 = vunpack.c.l.b16 %v1235
        %v1590 = vunpack.c.l.b16 %v1236
        %v1591 = vunpack.c.l.b16 %v1237
        %v1592 = vunpack.c.l.b16 %v1238
        %v1593 = vunpack.c.l.b16 %v1239
        %v1594 = vunpack.c.l.b16 %v1240
        %v1595 = vunpack.c.l.b16 %v1241
        %v1596 = vunpack.c.l.b16 %v1242
        %v1597 = vunpack.c.l.b16 %v1243
        %v1598 = vunpack.c.l.b16 %v1244
        %v1599 = vunpack.c.l.b16 %v1245
        %v1600 = vunpack.c.l.b16 %v1246
        %v1601 = vunpack.c.l.b16 %v1247
        %v1602 = vunpack.c.l.b16 %v1248
        %v1603 = vunpack.c.l.b16 %v1249
        %v1604 = vunpack.c.l.b16 %v1250
        %v1605 = vunpack.c.l.b16 %v1251
        %v1606 = vunpack.c.l.b16 %v1252
        %v1607 = vunpack.c.l.b16 %v1253
        %v1608 = vunpack.c.l.b16 %v1254
        %v1609 = vunpack.c.l.b16 %v1255
        %v1610 = vunpack.c.l.b16 %v1256
        %v1611 = vunpack.c.l.b16 %v1257
        %v1612 = vunpack.c.l.b16 %v1258
        %v1613 = vunpack.c.l.b16 %v1259
        %v1614 = vunpack.c.l.b16 %v1260
        %v1615 = vunpack.c.l.b16 %v1261
        %v1616 = vunpack.c.l.b16 %v1262
        %v1617 = vunpack.c.l.b16 %v1263
        %v1618 = vunpack.c.l.b16 %v1264
        %v1619 = vunpack.c.l.b16 %v1265
        %v1620 = vunpack.c.l.b16 %v1266
        %v1621 = vunpack.c.l.b16 %v1267
        %v1622 = vunpack.c.l.b16 %v1268
        %v1623 = vunpack.c.l.b16 %v1269
        %v1624 = vunpack.c.l.b16 %v1270
        %v1625 = vunpack.c.l.b16 %v1271
        %v1626 = vunpack.c.l.b16 %v1272
        %v1627 = vunpack.c.l.b16 %v1273
        %v1628 = vunpack.c.l.b16 %v1274
        %v1629 = vpack.c.b16 %v1534, %v1533
        %v1630 = vpack.c.b16 %v1536, %v1535
        %v1631 = vpack.c.b16 %v1538, %v1537
        %v1632 = vpack.c.b16 %v1540, %v1539
        %v1633 = vpack.c.b16 %v1542, %v1541
        %v1634 = vpack.c.b16 %v1544, %v1543
        %v1635 = vpack.c.b16 %v1546, %v1545
        %v1636 = vpack.c.b16 %v1548, %v1547
        %v1637 = vpack.c.b16 %v1550, %v1549
        %v1638 = vpack.c.b16 %v1552, %v1551
        %v1639 = vpack.c.b16 %v1554, %v1553
        %v1640 = vpack.c.b16 %v1556, %v1555
        %v1641 = vpack.c.b16 %v1558, %v1557
        %v1642 = vpack.c.b16 %v1560, %v1559
        %v1643 = vpack.c.b16 %v1562, %v1561
        %v1644 = vpack.c.b16 %v1564, %v1563
        %v1645 = vpack.c.b16 %v1566, %v1565
        %v1646 = vpack.c.b16 %v1568, %v1567
        %v1647 = vpack.c.b16 %v1570, %v1569
        %v1648 = vpack.c.b16 %v1572, %v1571
        %v1649 = vpack.c.b16 %v1574, %v1573
        %v1650 = vpack.c.b16 %v1576, %v1575
        %v1651 = vpack.c.b16 %v1578, %v1577
        %v1652 = vpack.c.b16 %v1580, %v1579
        %v1653 = vpack.c.b16 %v1582, %v1581
        %v1654 = vpack.c.b16 %v1584, %v1583
        %v1655 = vpack.c.b16 %v1586, %v1585
        %v1656 = vpack.c.b16 %v1588, %v1587
        %v1657 = vpack.c.b16 %v1590, %v1589
        %v1658 = vpack.c.b16 %v1592, %v1591
        %v1659 = vpack.c.b16 %v1594, %v1593
        %v1660 = vpack.c.b16 %v1596, %v1595
        %v1661 = vpack.c.b16 %v1598, %v1597
        %v1662 = vpack.c.b16 %v1600, %v1599
        %v1663 = vpack.c.b16 %v1602, %v1601
        %v1664 = vpack.c.b16 %v1604, %v1603
        %v1665 = vpack.c.b16 %v1606, %v1605
        %v1666 = vpack.c.b16 %v1608, %v1607
        %v1667 = vpack.c.b16 %v1610, %v1609
        %v1668 = vpack.c.b16 %v1612, %v1611
        %v1669 = vpack.c.b16 %v1614, %v1613
        %v1670 = vpack.c.b16 %v1616, %v1615
        %v1671 = vpack.c.b16 %v1618, %v1617
        %v1672 = vpack.c.b16 %v1620, %v1619
        %v1673 = vpack.c.b16 %v1622, %v1621
        %v1674 = vpack.c.b16 %v1624, %v1623
        %v1675 = vpack.c.b16 %v1626, %v1625
        %v1676 = vpack.c.b16 %v1628, %v1627
        %1725 = vmatprep.subr.bf16.mxu0 0
        %1726 = vmatpush1.bf16.msra.mxu0 %v1629
        %1727 = vmatprep.subr.bf16.mxu0 0
        %1728 = vmatpush1.bf16.msra.mxu0 %v1630
        %1729 = vmatprep.subr.bf16.mxu0 0
        %1730 = vmatpush1.bf16.msra.mxu0 %v1631
        %1731 = vmatprep.subr.bf16.mxu0 0
        %1732 = vmatpush1.bf16.msra.mxu0 %v1632
        %1733 = vmatprep.subr.bf16.mxu0 0
        %1734 = vmatpush1.bf16.msra.mxu0 %v1633
        %1735 = vmatprep.subr.bf16.mxu0 0
        %1736 = vmatpush1.bf16.msra.mxu0 %v1634
        %1737 = vmatprep.subr.bf16.mxu0 0
        %1738 = vmatpush1.bf16.msra.mxu0 %v1635
        %1739 = vmatprep.subr.bf16.mxu0 0
        %1740 = vmatpush1.bf16.msra.mxu0 %v1636
        %1741 = vmatprep.subr.bf16.mxu0 0
        %1742 = vmatpush1.bf16.msra.mxu0 %v1637
        %1743 = vmatprep.subr.bf16.mxu0 0
        %1744 = vmatpush1.bf16.msra.mxu0 %v1638
        %1745 = vmatprep.subr.bf16.mxu0 0
        %1746 = vmatpush1.bf16.msra.mxu0 %v1639
        %1747 = vmatprep.subr.bf16.mxu0 0
        %1748 = vmatpush1.bf16.msra.mxu0 %v1640
        %1749 = vmatprep.subr.bf16.mxu0 0
        %1750 = vmatpush1.bf16.msra.mxu0 %v1641
        %1751 = vmatprep.subr.bf16.mxu0 0
        %1752 = vmatpush1.bf16.msra.mxu0 %v1642
        %1753 = vmatprep.subr.bf16.mxu0 0
        %1754 = vmatpush1.bf16.msra.mxu0 %v1643
        %1755 = vmatprep.subr.bf16.mxu0 0
        %1756 = vmatpush1.bf16.msra.mxu0 %v1644
        %1757 = vmatprep.mubr.bf16.mxu0 %v1414
        %1758 = vmatmul.mubr.bf16.gmra.mrb[0].mxu0 %v1413
        %v1759 = vpop.f32.mrb[0].mxu0
        %v1760 = vadd.f32 %v1363, %v1759
        %v1761 = vpop.f32.mrb[0].mxu0
        %v1762 = vpop.f32.mrb[0].mxu0
        %v1763 = vadd.f32 %v1366, %v1762
        %v1764 = vpop.f32.mrb[0].mxu0
        %1765 = vmatprep.mubr.bf16.mxu0 %v1420
        %1766 = vmatmul.mubr.bf16.gmra.mrb[0].mxu0 %v1419
        %v1767 = vpop.f32.mrb[0].mxu0
        %v1768 = vadd.f32 %v1371, %v1767
        %v1769 = vpop.f32.mrb[0].mxu0
        %v1770 = vpop.f32.mrb[0].mxu0
        %v1771 = vadd.f32 %v1374, %v1770
        %v1772 = vpop.f32.mrb[0].mxu0
        %1773 = vdwg.mxu0
        %1774 = vmatprep.subr.bf16.mxu0 0
        %1775 = vmatpush1.bf16.msra.mxu0 %v1645
        %1776 = vmatprep.subr.bf16.mxu0 0
        %1777 = vmatpush1.bf16.msra.mxu0 %v1646
        %1778 = vmatprep.subr.bf16.mxu0 0
        %1779 = vmatpush1.bf16.msra.mxu0 %v1647
        %1780 = vmatprep.subr.bf16.mxu0 0
        %1781 = vmatpush1.bf16.msra.mxu0 %v1648
        %1782 = vmatprep.subr.bf16.mxu0 0
        %1783 = vmatpush1.bf16.msra.mxu0 %v1649
        %1784 = vmatprep.subr.bf16.mxu0 0
        %1785 = vmatpush1.bf16.msra.mxu0 %v1650
        %1786 = vmatprep.subr.bf16.mxu0 0
        %1787 = vmatpush1.bf16.msra.mxu0 %v1651
        %1788 = vmatprep.subr.bf16.mxu0 0
        %1789 = vmatpush1.bf16.msra.mxu0 %v1652
        %1790 = vmatprep.subr.bf16.mxu0 0
        %1791 = vmatpush1.bf16.msra.mxu0 %v1653
        %1792 = vmatprep.subr.bf16.mxu0 0
        %1793 = vmatpush1.bf16.msra.mxu0 %v1654
        %1794 = vmatprep.subr.bf16.mxu0 0
        %1795 = vmatpush1.bf16.msra.mxu0 %v1655
        %1796 = vmatprep.subr.bf16.mxu0 0
        %1797 = vmatpush1.bf16.msra.mxu0 %v1656
        %1798 = vmatprep.subr.bf16.mxu0 0
        %1799 = vmatpush1.bf16.msra.mxu0 %v1657
        %1800 = vmatprep.subr.bf16.mxu0 0
        %1801 = vmatpush1.bf16.msra.mxu0 %v1658
        %1802 = vmatprep.subr.bf16.mxu0 0
        %1803 = vmatpush1.bf16.msra.mxu0 %v1659
        %1804 = vmatprep.subr.bf16.mxu0 0
        %1805 = vmatpush1.bf16.msra.mxu0 %v1660
        %1806 = vmatprep.mubr.bf16.mxu0 %v1416
        %1807 = vmatmul.mubr.bf16.gmra.mrb[0].mxu0 %v1415
        %v1808 = vpop.f32.mrb[0].mxu0
        %v1809 = vadd.f32 %v1760, %v1808
        %v1810 = vpop.f32.mrb[0].mxu0
        %v1811 = vpop.f32.mrb[0].mxu0
        %v1812 = vadd.f32 %v1763, %v1811
        %v1813 = vpop.f32.mrb[0].mxu0
        %1814 = vmatprep.mubr.bf16.mxu0 %v1422
        %1815 = vmatmul.mubr.bf16.gmra.mrb[0].mxu0 %v1421
        %v1816 = vpop.f32.mrb[0].mxu0
        %v1817 = vadd.f32 %v1768, %v1816
        %v1818 = vpop.f32.mrb[0].mxu0
        %v1819 = vpop.f32.mrb[0].mxu0
        %v1820 = vadd.f32 %v1771, %v1819
        %v1821 = vpop.f32.mrb[0].mxu0
        %1822 = vdwg.mxu0
        %1823 = vmatprep.subr.bf16.mxu0 0
        %1824 = vmatpush1.bf16.msra.mxu0 %v1661
        %1825 = vmatprep.subr.bf16.mxu0 0
        %1826 = vmatpush1.bf16.msra.mxu0 %v1662
        %1827 = vmatprep.subr.bf16.mxu0 0
        %1828 = vmatpush1.bf16.msra.mxu0 %v1663
        %1829 = vmatprep.subr.bf16.mxu0 0
        %1830 = vmatpush1.bf16.msra.mxu0 %v1664
        %1831 = vmatprep.subr.bf16.mxu0 0
        %1832 = vmatpush1.bf16.msra.mxu0 %v1665
        %1833 = vmatprep.subr.bf16.mxu0 0
        %1834 = vmatpush1.bf16.msra.mxu0 %v1666
        %1835 = vmatprep.subr.bf16.mxu0 0
        %1836 = vmatpush1.bf16.msra.mxu0 %v1667
        %1837 = vmatprep.subr.bf16.mxu0 0
        %1838 = vmatpush1.bf16.msra.mxu0 %v1668
        %1839 = vmatprep.subr.bf16.mxu0 0
        %1840 = vmatpush1.bf16.msra.mxu0 %v1669
        %1841 = vmatprep.subr.bf16.mxu0 0
        %1842 = vmatpush1.bf16.msra.mxu0 %v1670
        %1843 = vmatprep.subr.bf16.mxu0 0
        %1844 = vmatpush1.bf16.msra.mxu0 %v1671
        %1845 = vmatprep.subr.bf16.mxu0 0
        %1846 = vmatpush1.bf16.msra.mxu0 %v1672
        %1847 = vmatprep.subr.bf16.mxu0 0
        %1848 = vmatpush1.bf16.msra.mxu0 %v1673
        %1849 = vmatprep.subr.bf16.mxu0 0
        %1850 = vmatpush1.bf16.msra.mxu0 %v1674
        %1851 = vmatprep.subr.bf16.mxu0 0
        %1852 = vmatpush1.bf16.msra.mxu0 %v1675
        %1853 = vmatprep.subr.bf16.mxu0 0
        %1854 = vmatpush1.bf16.msra.mxu0 %v1676
        %1855 = vmatprep.mubr.bf16.mxu0 %v1418
        %1856 = vmatmul.mubr.bf16.gmra.mrb[0].mxu0 %v1417
        %v1857 = vpop.f32.mrb[0].mxu0
        %v1858 = vadd.f32 %v1809, %v1857
        %v1859 = vpop.f32.mrb[0].mxu0
        %v1860 = vpop.f32.mrb[0].mxu0
        %v1861 = vadd.f32 %v1812, %v1860
        %v1862 = vpop.f32.mrb[0].mxu0
        %1863 = vmatprep.mubr.bf16.mxu0 %v1424
        %1864 = vmatmul.mubr.bf16.gmra.mrb[0].mxu0 %v1423
        %v1865 = vpop.f32.mrb[0].mxu0
        %v1866 = vadd.f32 %v1817, %v1865
        %v1867 = vpop.f32.mrb[0].mxu0
        %v1868 = vpop.f32.mrb[0].mxu0
        %v1869 = vadd.f32 %v1820, %v1868
        %v1870 = vpop.f32.mrb[0].mxu0
        %1871 = vdwg.mxu0
        %v1872 = vld [vmem:[%s1158] sm:$0x1]
        %v1873 = vld [vmem:[%s1158 + $0x1] sm:$0x1]
        %v1876 = vlaneseq
        %v1877 = vshrl.u32 %v1876, 7
        %v1878 = vsub.s32 0, %v1877
        %v1879 = vrot.slane %v1872, %v1878
        %v1880 = vlaneseq
        %v1881 = vshrl.u32 %v1880, 7
        %v1882 = vsub.s32 0, %v1881
        %v1883 = vrot.slane %v1873, %v1882
        %v1886 = vadd.f32 %v1858, %v1879
        %v1887 = vadd.f32 %v1861, %v1879
        %v1888 = vadd.f32 %v1866, %v1883
        %v1889 = vadd.f32 %v1869, %v1883
        %v1890 = vld [vmem:[%s13] sm:$0x1]
        %v1891 = vld [vmem:[%s15] sm:$0x1]
        %v1892 = vsel %vm1321, %v1886, 0.0
        %1893 = vadd.xlane.f32.xlu0 %v1892
        %v1894 = vpop.xlane.xlu0 %1893
        %v1895 = vsel %vm1321, %v1887, 0.0
        %1896 = vadd.xlane.f32.xlu0 %v1895
        %v1897 = vpop.xlane.xlu0 %1896
        %v1898 = vsel %vm1321, %v1888, 0.0
        %1899 = vadd.xlane.f32.xlu0 %v1898
        %v1900 = vpop.xlane.xlu0 %1899
        %v1901 = vsel %vm1321, %v1889, 0.0
        %1902 = vadd.xlane.f32.xlu0 %v1901
        %v1903 = vpop.xlane.xlu0 %1902
        %v1904 = vrcp.pop 64.0
        %v1905 = vmul.f32 %v1894, %v1904
        %v1906 = vmul.f32 %v1897, %v1904
        %v1907 = vmul.f32 %v1900, %v1904
        %v1908 = vmul.f32 %v1903, %v1904
        %v1909 = vsub.f32 %v1886, %v1905
        %v1910 = vsub.f32 %v1887, %v1906
        %v1911 = vsub.f32 %v1888, %v1907
        %v1912 = vsub.f32 %v1889, %v1908
        %v1913 = vmul.f32 %v1909, %v1909
        %v1914 = vmul.f32 %v1910, %v1910
        %v1915 = vmul.f32 %v1911, %v1911
        %v1916 = vmul.f32 %v1912, %v1912
        %v1917 = vsel %vm1321, %v1913, 0.0
        %1918 = vadd.xlane.f32.xlu0 %v1917
        %v1919 = vpop.xlane.xlu0 %1918
        %v1920 = vsel %vm1321, %v1914, 0.0
        %1921 = vadd.xlane.f32.xlu0 %v1920
        %v1922 = vpop.xlane.xlu0 %1921
        %v1923 = vsel %vm1321, %v1915, 0.0
        %1924 = vadd.xlane.f32.xlu0 %v1923
        %v1925 = vpop.xlane.xlu0 %1924
        %v1926 = vsel %vm1321, %v1916, 0.0
        %1927 = vadd.xlane.f32.xlu0 %v1926
        %v1928 = vpop.xlane.xlu0 %1927
        %v1929 = vmul.f32 %v1919, %v1904
        %v1930 = vmul.f32 %v1922, %v1904
        %v1931 = vmul.f32 %v1925, %v1904
        %v1932 = vmul.f32 %v1928, %v1904
        %v1933 = vadd.f32 %v1929, 1e-05
        %v1934 = vadd.f32 %v1930, 1e-05
        %v1935 = vadd.f32 %v1931, 1e-05
        %v1936 = vadd.f32 %v1932, 1e-05
        %v1937 = vrsqrt.pop %v1933
        %v1938 = vrsqrt.pop %v1934
        %v1939 = vrsqrt.pop %v1935
        %v1940 = vrsqrt.pop %v1936
        %v1941 = vmul.f32 %v1909, %v1937
        %v1942 = vmul.f32 %v1910, %v1938
        %v1943 = vmul.f32 %v1911, %v1939
        %v1944 = vmul.f32 %v1912, %v1940
        %v1946 = vlaneseq
        %v1947 = vshrl.u32 %v1946, 7
        %v1948 = vsub.s32 0, %v1947
        %v1949 = vrot.slane %v1890, %v1948
        %v1951 = vmul.f32 %v1941, %v1949
        %v1952 = vmul.f32 %v1942, %v1949
        %v1953 = vmul.f32 %v1943, %v1949
        %v1954 = vmul.f32 %v1944, %v1949
        %v1956 = vlaneseq
        %v1957 = vshrl.u32 %v1956, 7
        %v1958 = vsub.s32 0, %v1957
        %v1959 = vrot.slane %v1891, %v1958
        %v1961 = vadd.f32 %v1951, %v1959
        %v1962 = vadd.f32 %v1952, %v1959
        %v1963 = vadd.f32 %v1953, %v1959
        %v1964 = vadd.f32 %v1954, %v1959
        %v1965 = vpack.c.bf16 %v1962, %v1961
        %v1966 = vpack.c.bf16 %v1964, %v1963
        %v1967 = vld [vmem:[%s17] sm:$0xff]
        %v1968 = vld [vmem:[%s17 + $0x8] sm:$0xff]
        %v1969 = vld [vmem:[%s17 + $0x10] sm:$0xff]
        %v1970 = vld [vmem:[%s17 + $0x18] sm:$0xff]
        %v1971 = vld [vmem:[%s17 + $0x20] sm:$0xff]
        %v1972 = vld [vmem:[%s17 + $0x28] sm:$0xff]
        %v1973 = vld [vmem:[%s17 + $0x30] sm:$0xff]
        %v1974 = vld [vmem:[%s17 + $0x38] sm:$0xff]
        %v1975 = vld [vmem:[%s17 + $0x40] sm:$0xff]
        %v1976 = vld [vmem:[%s17 + $0x48] sm:$0xff]
        %v1977 = vld [vmem:[%s17 + $0x50] sm:$0xff]
        %v1978 = vld [vmem:[%s17 + $0x58] sm:$0xff]
        %v1979 = vld [vmem:[%s17 + $0x60] sm:$0xff]
        %v1980 = vld [vmem:[%s17 + $0x68] sm:$0xff]
        %v1981 = vld [vmem:[%s17 + $0x70] sm:$0xff]
        %v1982 = vld [vmem:[%s17 + $0x78] sm:$0xff]
        %v1983 = vld [vmem:[%s17 + $0x80] sm:$0xff]
        %v1984 = vld [vmem:[%s17 + $0x88] sm:$0xff]
        %v1985 = vld [vmem:[%s17 + $0x90] sm:$0xff]
        %v1986 = vld [vmem:[%s17 + $0x98] sm:$0xff]
        %v1987 = vld [vmem:[%s17 + $0xa0] sm:$0xff]
        %v1988 = vld [vmem:[%s17 + $0xa8] sm:$0xff]
        %v1989 = vld [vmem:[%s17 + $0xb0] sm:$0xff]
        %v1990 = vld [vmem:[%s17 + $0xb8] sm:$0xff]
        %v1991 = vld [vmem:[%s17 + $0xc0] sm:$0xff]
        %v1992 = vld [vmem:[%s17 + $0xc8] sm:$0xff]
        %v1993 = vld [vmem:[%s17 + $0xd0] sm:$0xff]
        %v1994 = vld [vmem:[%s17 + $0xd8] sm:$0xff]
        %v1995 = vld [vmem:[%s17 + $0xe0] sm:$0xff]
        %v1996 = vld [vmem:[%s17 + $0xe8] sm:$0xff]
        %v1997 = vld [vmem:[%s17 + $0xf0] sm:$0xff]
        %v1998 = vld [vmem:[%s17 + $0xf8] sm:$0xff]
        %v1999 = vld [vmem:[%s19] sm:$0xff]
        %v2001 = vlaneseq
        %v2002 = vshrl.u32 %v2001, 7
        %v2003 = vsub.s32 0, %v2002
        %v2004 = vrot.slane %v1999, %v2003
        %v2005 = vlaneseq
        %v2006 = vshrl.u32 %v2005, 7
        %v2007 = vsub.s32 1, %v2006
        %v2008 = vrot.slane %v1999, %v2007
        %v2009 = vlaneseq
        %v2010 = vshrl.u32 %v2009, 7
        %v2011 = vsub.s32 2, %v2010
        %v2012 = vrot.slane %v1999, %v2011
        %v2013 = vlaneseq
        %v2014 = vshrl.u32 %v2013, 7
        %v2015 = vsub.s32 3, %v2014
        %v2016 = vrot.slane %v1999, %v2015
        %v2017 = vlaneseq
        %v2018 = vshrl.u32 %v2017, 7
        %v2019 = vsub.s32 4, %v2018
        %v2020 = vrot.slane %v1999, %v2019
        %v2021 = vlaneseq
        %v2022 = vshrl.u32 %v2021, 7
        %v2023 = vsub.s32 5, %v2022
        %v2024 = vrot.slane %v1999, %v2023
        %v2025 = vlaneseq
        %v2026 = vshrl.u32 %v2025, 7
        %v2027 = vsub.s32 6, %v2026
        %v2028 = vrot.slane %v1999, %v2027
        %v2029 = vlaneseq
        %v2030 = vshrl.u32 %v2029, 7
        %v2031 = vsub.s32 7, %v2030
        %v2032 = vrot.slane %v1999, %v2031
        %v2073 = vunpack.c.l.b16 %v1967
        %v2074 = vunpack.c.h.b16 %v1967
        %v2075 = vunpack.c.l.b16 %v1968
        %v2076 = vunpack.c.h.b16 %v1968
        %v2077 = vunpack.c.l.b16 %v1969
        %v2078 = vunpack.c.h.b16 %v1969
        %v2079 = vunpack.c.l.b16 %v1970
        %v2080 = vunpack.c.h.b16 %v1970
        %v2081 = vunpack.c.l.b16 %v1971
        %v2082 = vunpack.c.h.b16 %v1971
        %v2083 = vunpack.c.l.b16 %v1972
        %v2084 = vunpack.c.h.b16 %v1972
        %v2085 = vunpack.c.l.b16 %v1973
        %v2086 = vunpack.c.h.b16 %v1973
        %v2087 = vunpack.c.l.b16 %v1974
        %v2088 = vunpack.c.h.b16 %v1974
        %v2089 = vunpack.c.l.b16 %v1975
        %v2090 = vunpack.c.h.b16 %v1975
        %v2091 = vunpack.c.l.b16 %v1976
        %v2092 = vunpack.c.h.b16 %v1976
        %v2093 = vunpack.c.l.b16 %v1977
        %v2094 = vunpack.c.h.b16 %v1977
        %v2095 = vunpack.c.l.b16 %v1978
        %v2096 = vunpack.c.h.b16 %v1978
        %v2097 = vunpack.c.l.b16 %v1979
        %v2098 = vunpack.c.h.b16 %v1979
        %v2099 = vunpack.c.l.b16 %v1980
        %v2100 = vunpack.c.h.b16 %v1980
        %v2101 = vunpack.c.l.b16 %v1981
        %v2102 = vunpack.c.h.b16 %v1981
        %v2103 = vunpack.c.l.b16 %v1982
        %v2104 = vunpack.c.h.b16 %v1982
        %v2105 = vunpack.c.l.b16 %v1983
        %v2106 = vunpack.c.h.b16 %v1983
        %v2107 = vunpack.c.l.b16 %v1984
        %v2108 = vunpack.c.h.b16 %v1984
        %v2109 = vunpack.c.l.b16 %v1985
        %v2110 = vunpack.c.h.b16 %v1985
        %v2111 = vunpack.c.l.b16 %v1986
        %v2112 = vunpack.c.h.b16 %v1986
        %v2113 = vunpack.c.l.b16 %v1987
        %v2114 = vunpack.c.h.b16 %v1987
        %v2115 = vunpack.c.l.b16 %v1988
        %v2116 = vunpack.c.h.b16 %v1988
        %v2117 = vunpack.c.l.b16 %v1989
        %v2118 = vunpack.c.h.b16 %v1989
        %v2119 = vunpack.c.l.b16 %v1990
        %v2120 = vunpack.c.h.b16 %v1990
        %v2121 = vunpack.c.l.b16 %v1991
        %v2122 = vunpack.c.h.b16 %v1991
        %v2123 = vunpack.c.l.b16 %v1992
        %v2124 = vunpack.c.h.b16 %v1992
        %v2125 = vunpack.c.l.b16 %v1993
        %v2126 = vunpack.c.h.b16 %v1993
        %v2127 = vunpack.c.l.b16 %v1994
        %v2128 = vunpack.c.h.b16 %v1994
        %v2129 = vunpack.c.l.b16 %v1995
        %v2130 = vunpack.c.h.b16 %v1995
        %v2131 = vunpack.c.l.b16 %v1996
        %v2132 = vunpack.c.h.b16 %v1996
        %v2133 = vunpack.c.l.b16 %v1997
        %v2134 = vunpack.c.h.b16 %v1997
        %v2135 = vunpack.c.l.b16 %v1998
        %v2136 = vunpack.c.h.b16 %v1998
        %v2137 = vpack.c.b16 %v2081, %v2073
        %v2138 = vpack.c.b16 %v2082, %v2074
        %v2139 = vpack.c.b16 %v2083, %v2075
        %v2140 = vpack.c.b16 %v2084, %v2076
        %v2141 = vpack.c.b16 %v2085, %v2077
        %v2142 = vpack.c.b16 %v2086, %v2078
        %v2143 = vpack.c.b16 %v2087, %v2079
        %v2144 = vpack.c.b16 %v2088, %v2080
        %v2145 = vpack.c.b16 %v2097, %v2089
        %v2146 = vpack.c.b16 %v2098, %v2090
        %v2147 = vpack.c.b16 %v2099, %v2091
        %v2148 = vpack.c.b16 %v2100, %v2092
        %v2149 = vpack.c.b16 %v2101, %v2093
        %v2150 = vpack.c.b16 %v2102, %v2094
        %v2151 = vpack.c.b16 %v2103, %v2095
        %v2152 = vpack.c.b16 %v2104, %v2096
        %v2153 = vpack.c.b16 %v2113, %v2105
        %v2154 = vpack.c.b16 %v2114, %v2106
        %v2155 = vpack.c.b16 %v2115, %v2107
        %v2156 = vpack.c.b16 %v2116, %v2108
        %v2157 = vpack.c.b16 %v2117, %v2109
        %v2158 = vpack.c.b16 %v2118, %v2110
        %v2159 = vpack.c.b16 %v2119, %v2111
        %v2160 = vpack.c.b16 %v2120, %v2112
        %v2161 = vpack.c.b16 %v2129, %v2121
        %v2162 = vpack.c.b16 %v2130, %v2122
        %v2163 = vpack.c.b16 %v2131, %v2123
        %v2164 = vpack.c.b16 %v2132, %v2124
        %v2165 = vpack.c.b16 %v2133, %v2125
        %v2166 = vpack.c.b16 %v2134, %v2126
        %v2167 = vpack.c.b16 %v2135, %v2127
        %v2168 = vpack.c.b16 %v2136, %v2128
        %v2202 = vsel %vm1321, %v1965, 0
        %v2205 = vsel %vm1321, %v1966, 0
        %2207 = vmatprep.subr.bf16.mxu0 %v2138
        %2208 = vmatpush1.bf16.msra.mxu0 %v2137
        %2209 = vmatprep.subr.bf16.mxu0 %v2146
        %2210 = vmatpush1.bf16.msra.mxu0 %v2145
        %2211 = vmatprep.subr.bf16.mxu0 %v2154
        %2212 = vmatpush1.bf16.msra.mxu0 %v2153
        %2213 = vmatprep.subr.bf16.mxu0 %v2162
        %2214 = vmatpush1.bf16.msra.mxu0 %v2161
        %2215 = vmatprep.subr.bf16.mxu0 0
        %2216 = vmatpush1.bf16.msra.mxu0 0
        %2217 = vmatprep.subr.bf16.mxu0 0
        %2218 = vmatpush1.bf16.msra.mxu0 0
        %2219 = vmatprep.subr.bf16.mxu0 0
        %2220 = vmatpush1.bf16.msra.mxu0 0
        %2221 = vmatprep.subr.bf16.mxu0 0
        %2222 = vmatpush1.bf16.msra.mxu0 0
        %2223 = vmatprep.subr.bf16.mxu0 0
        %2224 = vmatpush1.bf16.msra.mxu0 0
        %2225 = vmatprep.subr.bf16.mxu0 0
        %2226 = vmatpush1.bf16.msra.mxu0 0
        %2227 = vmatprep.subr.bf16.mxu0 0
        %2228 = vmatpush1.bf16.msra.mxu0 0
        %2229 = vmatprep.subr.bf16.mxu0 0
        %2230 = vmatpush1.bf16.msra.mxu0 0
        %2231 = vmatprep.subr.bf16.mxu0 0
        %2232 = vmatpush1.bf16.msra.mxu0 0
        %2233 = vmatprep.subr.bf16.mxu0 0
        %2234 = vmatpush1.bf16.msra.mxu0 0
        %2235 = vmatprep.subr.bf16.mxu0 0
        %2236 = vmatpush1.bf16.msra.mxu0 0
        %2237 = vmatprep.subr.bf16.mxu0 0
        %2238 = vmatpush1.bf16.msra.mxu0 0
        %2239 = vmatprep.mubr.bf16.mxu0 0
        %2240 = vmatmul.mubr.bf16.gmra.mrb[0].mxu0 %v2202
        %v2241 = vpop.f32.mrb[0].mxu0
        %v2242 = vadd.f32 %v2004, %v2241
        %v2243 = vpop.f32.mrb[0].mxu0
        %v2244 = vadd.f32 %v2008, %v2243
        %v2245 = vpop.f32.mrb[0].mxu0
        %v2246 = vadd.f32 %v2004, %v2245
        %v2247 = vpop.f32.mrb[0].mxu0
        %v2248 = vadd.f32 %v2008, %v2247
        %2249 = vmatprep.mubr.bf16.mxu0 0
        %2250 = vmatmul.mubr.bf16.gmra.mrb[0].mxu0 %v2205
        %v2251 = vpop.f32.mrb[0].mxu0
        %v2252 = vadd.f32 %v2004, %v2251
        %v2253 = vpop.f32.mrb[0].mxu0
        %v2254 = vadd.f32 %v2008, %v2253
        %v2255 = vpop.f32.mrb[0].mxu0
        %v2256 = vadd.f32 %v2004, %v2255
        %v2257 = vpop.f32.mrb[0].mxu0
        %v2258 = vadd.f32 %v2008, %v2257
        %2259 = vdwg.mxu0
        %2260 = vmatprep.subr.bf16.mxu0 %v2140
        %2261 = vmatpush1.bf16.msra.mxu0 %v2139
        %2262 = vmatprep.subr.bf16.mxu0 %v2148
        %2263 = vmatpush1.bf16.msra.mxu0 %v2147
        %2264 = vmatprep.subr.bf16.mxu0 %v2156
        %2265 = vmatpush1.bf16.msra.mxu0 %v2155
        %2266 = vmatprep.subr.bf16.mxu0 %v2164
        %2267 = vmatpush1.bf16.msra.mxu0 %v2163
        %2268 = vmatprep.subr.bf16.mxu0 0
        %2269 = vmatpush1.bf16.msra.mxu0 0
        %2270 = vmatprep.subr.bf16.mxu0 0
        %2271 = vmatpush1.bf16.msra.mxu0 0
        %2272 = vmatprep.subr.bf16.mxu0 0
        %2273 = vmatpush1.bf16.msra.mxu0 0
        %2274 = vmatprep.subr.bf16.mxu0 0
        %2275 = vmatpush1.bf16.msra.mxu0 0
        %2276 = vmatprep.subr.bf16.mxu0 0
        %2277 = vmatpush1.bf16.msra.mxu0 0
        %2278 = vmatprep.subr.bf16.mxu0 0
        %2279 = vmatpush1.bf16.msra.mxu0 0
        %2280 = vmatprep.subr.bf16.mxu0 0
        %2281 = vmatpush1.bf16.msra.mxu0 0
        %2282 = vmatprep.subr.bf16.mxu0 0
        %2283 = vmatpush1.bf16.msra.mxu0 0
        %2284 = vmatprep.subr.bf16.mxu0 0
        %2285 = vmatpush1.bf16.msra.mxu0 0
        %2286 = vmatprep.subr.bf16.mxu0 0
        %2287 = vmatpush1.bf16.msra.mxu0 0
        %2288 = vmatprep.subr.bf16.mxu0 0
        %2289 = vmatpush1.bf16.msra.mxu0 0
        %2290 = vmatprep.subr.bf16.mxu0 0
        %2291 = vmatpush1.bf16.msra.mxu0 0
        %2292 = vmatprep.mubr.bf16.mxu0 0
        %2293 = vmatmul.mubr.bf16.gmra.mrb[0].mxu0 %v2202
        %v2294 = vpop.f32.mrb[0].mxu0
        %v2295 = vadd.f32 %v2012, %v2294
        %v2296 = vpop.f32.mrb[0].mxu0
        %v2297 = vadd.f32 %v2016, %v2296
        %v2298 = vpop.f32.mrb[0].mxu0
        %v2299 = vadd.f32 %v2012, %v2298
        %v2300 = vpop.f32.mrb[0].mxu0
        %v2301 = vadd.f32 %v2016, %v2300
        %2302 = vmatprep.mubr.bf16.mxu0 0
        %2303 = vmatmul.mubr.bf16.gmra.mrb[0].mxu0 %v2205
        %v2304 = vpop.f32.mrb[0].mxu0
        %v2305 = vadd.f32 %v2012, %v2304
        %v2306 = vpop.f32.mrb[0].mxu0
        %v2307 = vadd.f32 %v2016, %v2306
        %v2308 = vpop.f32.mrb[0].mxu0
        %v2309 = vadd.f32 %v2012, %v2308
        %v2310 = vpop.f32.mrb[0].mxu0
        %v2311 = vadd.f32 %v2016, %v2310
        %2312 = vdwg.mxu0
        %2313 = vmatprep.subr.bf16.mxu0 %v2142
        %2314 = vmatpush1.bf16.msra.mxu0 %v2141
        %2315 = vmatprep.subr.bf16.mxu0 %v2150
        %2316 = vmatpush1.bf16.msra.mxu0 %v2149
        %2317 = vmatprep.subr.bf16.mxu0 %v2158
        %2318 = vmatpush1.bf16.msra.mxu0 %v2157
        %2319 = vmatprep.subr.bf16.mxu0 %v2166
        %2320 = vmatpush1.bf16.msra.mxu0 %v2165
        %2321 = vmatprep.subr.bf16.mxu0 0
        %2322 = vmatpush1.bf16.msra.mxu0 0
        %2323 = vmatprep.subr.bf16.mxu0 0
        %2324 = vmatpush1.bf16.msra.mxu0 0
        %2325 = vmatprep.subr.bf16.mxu0 0
        %2326 = vmatpush1.bf16.msra.mxu0 0
        %2327 = vmatprep.subr.bf16.mxu0 0
        %2328 = vmatpush1.bf16.msra.mxu0 0
        %2329 = vmatprep.subr.bf16.mxu0 0
        %2330 = vmatpush1.bf16.msra.mxu0 0
        %2331 = vmatprep.subr.bf16.mxu0 0
        %2332 = vmatpush1.bf16.msra.mxu0 0
        %2333 = vmatprep.subr.bf16.mxu0 0
        %2334 = vmatpush1.bf16.msra.mxu0 0
        %2335 = vmatprep.subr.bf16.mxu0 0
        %2336 = vmatpush1.bf16.msra.mxu0 0
        %2337 = vmatprep.subr.bf16.mxu0 0
        %2338 = vmatpush1.bf16.msra.mxu0 0
        %2339 = vmatprep.subr.bf16.mxu0 0
        %2340 = vmatpush1.bf16.msra.mxu0 0
        %2341 = vmatprep.subr.bf16.mxu0 0
        %2342 = vmatpush1.bf16.msra.mxu0 0
        %2343 = vmatprep.subr.bf16.mxu0 0
        %2344 = vmatpush1.bf16.msra.mxu0 0
        %2345 = vmatprep.mubr.bf16.mxu0 0
        %2346 = vmatmul.mubr.bf16.gmra.mrb[0].mxu0 %v2202
        %v2347 = vpop.f32.mrb[0].mxu0
        %v2348 = vadd.f32 %v2020, %v2347
        %v2349 = vpop.f32.mrb[0].mxu0
        %v2350 = vadd.f32 %v2024, %v2349
        %v2351 = vpop.f32.mrb[0].mxu0
        %v2352 = vadd.f32 %v2020, %v2351
        %v2353 = vpop.f32.mrb[0].mxu0
        %v2354 = vadd.f32 %v2024, %v2353
        %2355 = vmatprep.mubr.bf16.mxu0 0
        %2356 = vmatmul.mubr.bf16.gmra.mrb[0].mxu0 %v2205
        %v2357 = vpop.f32.mrb[0].mxu0
        %v2358 = vadd.f32 %v2020, %v2357
        %v2359 = vpop.f32.mrb[0].mxu0
        %v2360 = vadd.f32 %v2024, %v2359
        %v2361 = vpop.f32.mrb[0].mxu0
        %v2362 = vadd.f32 %v2020, %v2361
        %v2363 = vpop.f32.mrb[0].mxu0
        %v2364 = vadd.f32 %v2024, %v2363
        %2365 = vdwg.mxu0
        %2366 = vmatprep.subr.bf16.mxu0 %v2144
        %2367 = vmatpush1.bf16.msra.mxu0 %v2143
        %2368 = vmatprep.subr.bf16.mxu0 %v2152
        %2369 = vmatpush1.bf16.msra.mxu0 %v2151
        %2370 = vmatprep.subr.bf16.mxu0 %v2160
        %2371 = vmatpush1.bf16.msra.mxu0 %v2159
        %2372 = vmatprep.subr.bf16.mxu0 %v2168
        %2373 = vmatpush1.bf16.msra.mxu0 %v2167
        %2374 = vmatprep.subr.bf16.mxu0 0
        %2375 = vmatpush1.bf16.msra.mxu0 0
        %2376 = vmatprep.subr.bf16.mxu0 0
        %2377 = vmatpush1.bf16.msra.mxu0 0
        %2378 = vmatprep.subr.bf16.mxu0 0
        %2379 = vmatpush1.bf16.msra.mxu0 0
        %2380 = vmatprep.subr.bf16.mxu0 0
        %2381 = vmatpush1.bf16.msra.mxu0 0
        %2382 = vmatprep.subr.bf16.mxu0 0
        %2383 = vmatpush1.bf16.msra.mxu0 0
        %2384 = vmatprep.subr.bf16.mxu0 0
        %2385 = vmatpush1.bf16.msra.mxu0 0
        %2386 = vmatprep.subr.bf16.mxu0 0
        %2387 = vmatpush1.bf16.msra.mxu0 0
        %2388 = vmatprep.subr.bf16.mxu0 0
        %2389 = vmatpush1.bf16.msra.mxu0 0
        %2390 = vmatprep.subr.bf16.mxu0 0
        %2391 = vmatpush1.bf16.msra.mxu0 0
        %2392 = vmatprep.subr.bf16.mxu0 0
        %2393 = vmatpush1.bf16.msra.mxu0 0
        %2394 = vmatprep.subr.bf16.mxu0 0
        %2395 = vmatpush1.bf16.msra.mxu0 0
        %2396 = vmatprep.subr.bf16.mxu0 0
        %2397 = vmatpush1.bf16.msra.mxu0 0
        %2398 = vmatprep.mubr.bf16.mxu0 0
        %2399 = vmatmul.mubr.bf16.gmra.mrb[0].mxu0 %v2202
        %v2400 = vpop.f32.mrb[0].mxu0
        %v2401 = vadd.f32 %v2028, %v2400
        %v2402 = vpop.f32.mrb[0].mxu0
        %v2403 = vadd.f32 %v2032, %v2402
        %v2404 = vpop.f32.mrb[0].mxu0
        %v2405 = vadd.f32 %v2028, %v2404
        %v2406 = vpop.f32.mrb[0].mxu0
        %v2407 = vadd.f32 %v2032, %v2406
        %2408 = vmatprep.mubr.bf16.mxu0 0
        %2409 = vmatmul.mubr.bf16.gmra.mrb[0].mxu0 %v2205
        %v2410 = vpop.f32.mrb[0].mxu0
        %v2411 = vadd.f32 %v2028, %v2410
        %v2412 = vpop.f32.mrb[0].mxu0
        %v2413 = vadd.f32 %v2032, %v2412
        %v2414 = vpop.f32.mrb[0].mxu0
        %v2415 = vadd.f32 %v2028, %v2414
        %v2416 = vpop.f32.mrb[0].mxu0
        %v2417 = vadd.f32 %v2032, %v2416
        %2418 = vdwg.mxu0
        %v2419 = vxor.u32 %v2242, 2147483648
        %v2420 = vxor.u32 %v2244, 2147483648
        %v2421 = vxor.u32 %v2295, 2147483648
        %v2422 = vxor.u32 %v2297, 2147483648
        %v2423 = vxor.u32 %v2348, 2147483648
        %v2424 = vxor.u32 %v2350, 2147483648
        %v2425 = vxor.u32 %v2401, 2147483648
        %v2426 = vxor.u32 %v2403, 2147483648
        %v2427 = vxor.u32 %v2246, 2147483648
        %v2428 = vxor.u32 %v2248, 2147483648
        %v2429 = vxor.u32 %v2299, 2147483648
        %v2430 = vxor.u32 %v2301, 2147483648
        %v2431 = vxor.u32 %v2352, 2147483648
        %v2432 = vxor.u32 %v2354, 2147483648
        %v2433 = vxor.u32 %v2405, 2147483648
        %v2434 = vxor.u32 %v2407, 2147483648
        %v2435 = vxor.u32 %v2252, 2147483648
        %v2436 = vxor.u32 %v2254, 2147483648
        %v2437 = vxor.u32 %v2305, 2147483648
        %v2438 = vxor.u32 %v2307, 2147483648
        %v2439 = vxor.u32 %v2358, 2147483648
        %v2440 = vxor.u32 %v2360, 2147483648
        %v2441 = vxor.u32 %v2411, 2147483648
        %v2442 = vxor.u32 %v2413, 2147483648
        %v2443 = vxor.u32 %v2256, 2147483648
        %v2444 = vxor.u32 %v2258, 2147483648
        %v2445 = vxor.u32 %v2309, 2147483648
        %v2446 = vxor.u32 %v2311, 2147483648
        %v2447 = vxor.u32 %v2362, 2147483648
        %v2448 = vxor.u32 %v2364, 2147483648
        %v2449 = vxor.u32 %v2415, 2147483648
        %v2450 = vxor.u32 %v2417, 2147483648
        %v2451 = vmul.f32 %v2419, 1.442695
        %v2452 = vpow.pop %v2451
        %v2453 = vmul.f32 %v2420, 1.442695
        %v2454 = vpow.pop %v2453
        %v2455 = vmul.f32 %v2421, 1.442695
        %v2456 = vpow.pop %v2455
        %v2457 = vmul.f32 %v2422, 1.442695
        %v2458 = vpow.pop %v2457
        %v2459 = vmul.f32 %v2423, 1.442695
        %v2460 = vpow.pop %v2459
        %v2461 = vmul.f32 %v2424, 1.442695
        %v2462 = vpow.pop %v2461
        %v2463 = vmul.f32 %v2425, 1.442695
        %v2464 = vpow.pop %v2463
        %v2465 = vmul.f32 %v2426, 1.442695
        %v2466 = vpow.pop %v2465
        %v2467 = vmul.f32 %v2427, 1.442695
        %v2468 = vpow.pop %v2467
        %v2469 = vmul.f32 %v2428, 1.442695
        %v2470 = vpow.pop %v2469
        %v2471 = vmul.f32 %v2429, 1.442695
        %v2472 = vpow.pop %v2471
        %v2473 = vmul.f32 %v2430, 1.442695
        %v2474 = vpow.pop %v2473
        %v2475 = vmul.f32 %v2431, 1.442695
        %v2476 = vpow.pop %v2475
        %v2477 = vmul.f32 %v2432, 1.442695
        %v2478 = vpow.pop %v2477
        %v2479 = vmul.f32 %v2433, 1.442695
        %v2480 = vpow.pop %v2479
        %v2481 = vmul.f32 %v2434, 1.442695
        %v2482 = vpow.pop %v2481
        %v2483 = vmul.f32 %v2435, 1.442695
        %v2484 = vpow.pop %v2483
        %v2485 = vmul.f32 %v2436, 1.442695
        %v2486 = vpow.pop %v2485
        %v2487 = vmul.f32 %v2437, 1.442695
        %v2488 = vpow.pop %v2487
        %v2489 = vmul.f32 %v2438, 1.442695
        %v2490 = vpow.pop %v2489
        %v2491 = vmul.f32 %v2439, 1.442695
        %v2492 = vpow.pop %v2491
        %v2493 = vmul.f32 %v2440, 1.442695
        %v2494 = vpow.pop %v2493
        %v2495 = vmul.f32 %v2441, 1.442695
        %v2496 = vpow.pop %v2495
        %v2497 = vmul.f32 %v2442, 1.442695
        %v2498 = vpow.pop %v2497
        %v2499 = vmul.f32 %v2443, 1.442695
        %v2500 = vpow.pop %v2499
        %v2501 = vmul.f32 %v2444, 1.442695
        %v2502 = vpow.pop %v2501
        %v2503 = vmul.f32 %v2445, 1.442695
        %v2504 = vpow.pop %v2503
        %v2505 = vmul.f32 %v2446, 1.442695
        %v2506 = vpow.pop %v2505
        %v2507 = vmul.f32 %v2447, 1.442695
        %v2508 = vpow.pop %v2507
        %v2509 = vmul.f32 %v2448, 1.442695
        %v2510 = vpow.pop %v2509
        %v2511 = vmul.f32 %v2449, 1.442695
        %v2512 = vpow.pop %v2511
        %v2513 = vmul.f32 %v2450, 1.442695
        %v2514 = vpow.pop %v2513
        %v2515 = vadd.f32 %v2452, 1.0
        %v2516 = vadd.f32 %v2454, 1.0
        %v2517 = vadd.f32 %v2456, 1.0
        %v2518 = vadd.f32 %v2458, 1.0
        %v2519 = vadd.f32 %v2460, 1.0
        %v2520 = vadd.f32 %v2462, 1.0
        %v2521 = vadd.f32 %v2464, 1.0
        %v2522 = vadd.f32 %v2466, 1.0
        %v2523 = vadd.f32 %v2468, 1.0
        %v2524 = vadd.f32 %v2470, 1.0
        %v2525 = vadd.f32 %v2472, 1.0
        %v2526 = vadd.f32 %v2474, 1.0
        %v2527 = vadd.f32 %v2476, 1.0
        %v2528 = vadd.f32 %v2478, 1.0
        %v2529 = vadd.f32 %v2480, 1.0
        %v2530 = vadd.f32 %v2482, 1.0
        %v2531 = vadd.f32 %v2484, 1.0
        %v2532 = vadd.f32 %v2486, 1.0
        %v2533 = vadd.f32 %v2488, 1.0
        %v2534 = vadd.f32 %v2490, 1.0
        %v2535 = vadd.f32 %v2492, 1.0
        %v2536 = vadd.f32 %v2494, 1.0
        %v2537 = vadd.f32 %v2496, 1.0
        %v2538 = vadd.f32 %v2498, 1.0
        %v2539 = vadd.f32 %v2500, 1.0
        %v2540 = vadd.f32 %v2502, 1.0
        %v2541 = vadd.f32 %v2504, 1.0
        %v2542 = vadd.f32 %v2506, 1.0
        %v2543 = vadd.f32 %v2508, 1.0
        %v2544 = vadd.f32 %v2510, 1.0
        %v2545 = vadd.f32 %v2512, 1.0
        %v2546 = vadd.f32 %v2514, 1.0
        %v2547 = vrcp.pop %v2515
        %v2548 = vmul.f32 1.0, %v2547
        %v2549 = vrcp.pop %v2516
        %v2550 = vmul.f32 1.0, %v2549
        %v2551 = vrcp.pop %v2517
        %v2552 = vmul.f32 1.0, %v2551
        %v2553 = vrcp.pop %v2518
        %v2554 = vmul.f32 1.0, %v2553
        %v2555 = vrcp.pop %v2519
        %v2556 = vmul.f32 1.0, %v2555
        %v2557 = vrcp.pop %v2520
        %v2558 = vmul.f32 1.0, %v2557
        %v2559 = vrcp.pop %v2521
        %v2560 = vmul.f32 1.0, %v2559
        %v2561 = vrcp.pop %v2522
        %v2562 = vmul.f32 1.0, %v2561
        %v2563 = vrcp.pop %v2523
        %v2564 = vmul.f32 1.0, %v2563
        %v2565 = vrcp.pop %v2524
        %v2566 = vmul.f32 1.0, %v2565
        %v2567 = vrcp.pop %v2525
        %v2568 = vmul.f32 1.0, %v2567
        %v2569 = vrcp.pop %v2526
        %v2570 = vmul.f32 1.0, %v2569
        %v2571 = vrcp.pop %v2527
        %v2572 = vmul.f32 1.0, %v2571
        %v2573 = vrcp.pop %v2528
        %v2574 = vmul.f32 1.0, %v2573
        %v2575 = vrcp.pop %v2529
        %v2576 = vmul.f32 1.0, %v2575
        %v2577 = vrcp.pop %v2530
        %v2578 = vmul.f32 1.0, %v2577
        %v2579 = vrcp.pop %v2531
        %v2580 = vmul.f32 1.0, %v2579
        %v2581 = vrcp.pop %v2532
        %v2582 = vmul.f32 1.0, %v2581
        %v2583 = vrcp.pop %v2533
        %v2584 = vmul.f32 1.0, %v2583
        %v2585 = vrcp.pop %v2534
        %v2586 = vmul.f32 1.0, %v2585
        %v2587 = vrcp.pop %v2535
        %v2588 = vmul.f32 1.0, %v2587
        %v2589 = vrcp.pop %v2536
        %v2590 = vmul.f32 1.0, %v2589
        %v2591 = vrcp.pop %v2537
        %v2592 = vmul.f32 1.0, %v2591
        %v2593 = vrcp.pop %v2538
        %v2594 = vmul.f32 1.0, %v2593
        %v2595 = vrcp.pop %v2539
        %v2596 = vmul.f32 1.0, %v2595
        %v2597 = vrcp.pop %v2540
        %v2598 = vmul.f32 1.0, %v2597
        %v2599 = vrcp.pop %v2541
        %v2600 = vmul.f32 1.0, %v2599
        %v2601 = vrcp.pop %v2542
        %v2602 = vmul.f32 1.0, %v2601
        %v2603 = vrcp.pop %v2543
        %v2604 = vmul.f32 1.0, %v2603
        %v2605 = vrcp.pop %v2544
        %v2606 = vmul.f32 1.0, %v2605
        %v2607 = vrcp.pop %v2545
        %v2608 = vmul.f32 1.0, %v2607
        %v2609 = vrcp.pop %v2546
        %v2610 = vmul.f32 1.0, %v2609
        %v2611 = vmul.f32 %v2242, %v2548
        %v2612 = vmul.f32 %v2244, %v2550
        %v2613 = vmul.f32 %v2295, %v2552
        %v2614 = vmul.f32 %v2297, %v2554
        %v2615 = vmul.f32 %v2348, %v2556
        %v2616 = vmul.f32 %v2350, %v2558
        %v2617 = vmul.f32 %v2401, %v2560
        %v2618 = vmul.f32 %v2403, %v2562
        %v2619 = vmul.f32 %v2246, %v2564
        %v2620 = vmul.f32 %v2248, %v2566
        %v2621 = vmul.f32 %v2299, %v2568
        %v2622 = vmul.f32 %v2301, %v2570
        %v2623 = vmul.f32 %v2352, %v2572
        %v2624 = vmul.f32 %v2354, %v2574
        %v2625 = vmul.f32 %v2405, %v2576
        %v2626 = vmul.f32 %v2407, %v2578
        %v2627 = vmul.f32 %v2252, %v2580
        %v2628 = vmul.f32 %v2254, %v2582
        %v2629 = vmul.f32 %v2305, %v2584
        %v2630 = vmul.f32 %v2307, %v2586
        %v2631 = vmul.f32 %v2358, %v2588
        %v2632 = vmul.f32 %v2360, %v2590
        %v2633 = vmul.f32 %v2411, %v2592
        %v2634 = vmul.f32 %v2413, %v2594
        %v2635 = vmul.f32 %v2256, %v2596
        %v2636 = vmul.f32 %v2258, %v2598
        %v2637 = vmul.f32 %v2309, %v2600
        %v2638 = vmul.f32 %v2311, %v2602
        %v2639 = vmul.f32 %v2362, %v2604
        %v2640 = vmul.f32 %v2364, %v2606
        %v2641 = vmul.f32 %v2415, %v2608
        %v2642 = vmul.f32 %v2417, %v2610
        %v2643 = vpack.c.bf16 %v2619, %v2611
        %v2644 = vpack.c.bf16 %v2620, %v2612
        %v2645 = vpack.c.bf16 %v2621, %v2613
        %v2646 = vpack.c.bf16 %v2622, %v2614
        %v2647 = vpack.c.bf16 %v2623, %v2615
        %v2648 = vpack.c.bf16 %v2624, %v2616
        %v2649 = vpack.c.bf16 %v2625, %v2617
        %v2650 = vpack.c.bf16 %v2626, %v2618
        %v2651 = vpack.c.bf16 %v2635, %v2627
        %v2652 = vpack.c.bf16 %v2636, %v2628
        %v2653 = vpack.c.bf16 %v2637, %v2629
        %v2654 = vpack.c.bf16 %v2638, %v2630
        %v2655 = vpack.c.bf16 %v2639, %v2631
        %v2656 = vpack.c.bf16 %v2640, %v2632
        %v2657 = vpack.c.bf16 %v2641, %v2633
        %v2658 = vpack.c.bf16 %v2642, %v2634
        %v2659 = vld [vmem:[%s21] sm:$0xf]
        %v2660 = vld [vmem:[%s21 + $0x4] sm:$0xf]
        %v2661 = vld [vmem:[%s21 + $0x8] sm:$0xf]
        %v2662 = vld [vmem:[%s21 + $0xc] sm:$0xf]
        %v2663 = vld [vmem:[%s21 + $0x10] sm:$0xf]
        %v2664 = vld [vmem:[%s21 + $0x14] sm:$0xf]
        %v2665 = vld [vmem:[%s21 + $0x18] sm:$0xf]
        %v2666 = vld [vmem:[%s21 + $0x1c] sm:$0xf]
        %v2667 = vld [vmem:[%s21 + $0x20] sm:$0xf]
        %v2668 = vld [vmem:[%s21 + $0x24] sm:$0xf]
        %v2669 = vld [vmem:[%s21 + $0x28] sm:$0xf]
        %v2670 = vld [vmem:[%s21 + $0x2c] sm:$0xf]
        %v2671 = vld [vmem:[%s21 + $0x30] sm:$0xf]
        %v2672 = vld [vmem:[%s21 + $0x34] sm:$0xf]
        %v2673 = vld [vmem:[%s21 + $0x38] sm:$0xf]
        %v2674 = vld [vmem:[%s21 + $0x3c] sm:$0xf]
        %v2675 = vld [vmem:[%s21 + $0x40] sm:$0xf]
        %v2676 = vld [vmem:[%s21 + $0x44] sm:$0xf]
        %v2677 = vld [vmem:[%s21 + $0x48] sm:$0xf]
        %v2678 = vld [vmem:[%s21 + $0x4c] sm:$0xf]
        %v2679 = vld [vmem:[%s21 + $0x50] sm:$0xf]
        %v2680 = vld [vmem:[%s21 + $0x54] sm:$0xf]
        %v2681 = vld [vmem:[%s21 + $0x58] sm:$0xf]
        %v2682 = vld [vmem:[%s21 + $0x5c] sm:$0xf]
        %v2683 = vld [vmem:[%s21 + $0x60] sm:$0xf]
        %v2684 = vld [vmem:[%s21 + $0x64] sm:$0xf]
        %v2685 = vld [vmem:[%s21 + $0x68] sm:$0xf]
        %v2686 = vld [vmem:[%s21 + $0x6c] sm:$0xf]
        %v2687 = vld [vmem:[%s21 + $0x70] sm:$0xf]
        %v2688 = vld [vmem:[%s21 + $0x74] sm:$0xf]
        %v2689 = vld [vmem:[%s21 + $0x78] sm:$0xf]
        %v2690 = vld [vmem:[%s21 + $0x7c] sm:$0xf]
        %v2691 = vld [vmem:[%s21 + $0x80] sm:$0xf]
        %v2692 = vld [vmem:[%s21 + $0x84] sm:$0xf]
        %v2693 = vld [vmem:[%s21 + $0x88] sm:$0xf]
        %v2694 = vld [vmem:[%s21 + $0x8c] sm:$0xf]
        %v2695 = vld [vmem:[%s21 + $0x90] sm:$0xf]
        %v2696 = vld [vmem:[%s21 + $0x94] sm:$0xf]
        %v2697 = vld [vmem:[%s21 + $0x98] sm:$0xf]
        %v2698 = vld [vmem:[%s21 + $0x9c] sm:$0xf]
        %v2699 = vld [vmem:[%s21 + $0xa0] sm:$0xf]
        %v2700 = vld [vmem:[%s21 + $0xa4] sm:$0xf]
        %v2701 = vld [vmem:[%s21 + $0xa8] sm:$0xf]
        %v2702 = vld [vmem:[%s21 + $0xac] sm:$0xf]
        %v2703 = vld [vmem:[%s21 + $0xb0] sm:$0xf]
        %v2704 = vld [vmem:[%s21 + $0xb4] sm:$0xf]
        %v2705 = vld [vmem:[%s21 + $0xb8] sm:$0xf]
        %v2706 = vld [vmem:[%s21 + $0xbc] sm:$0xf]
        %v2707 = vld [vmem:[%s21 + $0xc0] sm:$0xf]
        %v2708 = vld [vmem:[%s21 + $0xc4] sm:$0xf]
        %v2709 = vld [vmem:[%s21 + $0xc8] sm:$0xf]
        %v2710 = vld [vmem:[%s21 + $0xcc] sm:$0xf]
        %v2711 = vld [vmem:[%s21 + $0xd0] sm:$0xf]
        %v2712 = vld [vmem:[%s21 + $0xd4] sm:$0xf]
        %v2713 = vld [vmem:[%s21 + $0xd8] sm:$0xf]
        %v2714 = vld [vmem:[%s21 + $0xdc] sm:$0xf]
        %v2715 = vld [vmem:[%s21 + $0xe0] sm:$0xf]
        %v2716 = vld [vmem:[%s21 + $0xe4] sm:$0xf]
        %v2717 = vld [vmem:[%s21 + $0xe8] sm:$0xf]
        %v2718 = vld [vmem:[%s21 + $0xec] sm:$0xf]
        %v2719 = vld [vmem:[%s21 + $0xf0] sm:$0xf]
        %v2720 = vld [vmem:[%s21 + $0xf4] sm:$0xf]
        %v2721 = vld [vmem:[%s21 + $0xf8] sm:$0xf]
        %v2722 = vld [vmem:[%s21 + $0xfc] sm:$0xf]
        %v2723 = vld [vmem:[%s21 + $0x100] sm:$0xf]
        %v2724 = vld [vmem:[%s21 + $0x104] sm:$0xf]
        %v2725 = vld [vmem:[%s21 + $0x108] sm:$0xf]
        %v2726 = vld [vmem:[%s21 + $0x10c] sm:$0xf]
        %v2727 = vld [vmem:[%s21 + $0x110] sm:$0xf]
        %v2728 = vld [vmem:[%s21 + $0x114] sm:$0xf]
        %v2729 = vld [vmem:[%s21 + $0x118] sm:$0xf]
        %v2730 = vld [vmem:[%s21 + $0x11c] sm:$0xf]
        %v2731 = vld [vmem:[%s21 + $0x120] sm:$0xf]
        %v2732 = vld [vmem:[%s21 + $0x124] sm:$0xf]
        %v2733 = vld [vmem:[%s21 + $0x128] sm:$0xf]
        %v2734 = vld [vmem:[%s21 + $0x12c] sm:$0xf]
        %v2735 = vld [vmem:[%s21 + $0x130] sm:$0xf]
        %v2736 = vld [vmem:[%s21 + $0x134] sm:$0xf]
        %v2737 = vld [vmem:[%s21 + $0x138] sm:$0xf]
        %v2738 = vld [vmem:[%s21 + $0x13c] sm:$0xf]
        %v2739 = vld [vmem:[%s21 + $0x140] sm:$0xf]
        %v2740 = vld [vmem:[%s21 + $0x144] sm:$0xf]
        %v2741 = vld [vmem:[%s21 + $0x148] sm:$0xf]
        %v2742 = vld [vmem:[%s21 + $0x14c] sm:$0xf]
        %v2743 = vld [vmem:[%s21 + $0x150] sm:$0xf]
        %v2744 = vld [vmem:[%s21 + $0x154] sm:$0xf]
        %v2745 = vld [vmem:[%s21 + $0x158] sm:$0xf]
        %v2746 = vld [vmem:[%s21 + $0x15c] sm:$0xf]
        %v2747 = vld [vmem:[%s21 + $0x160] sm:$0xf]
        %v2748 = vld [vmem:[%s21 + $0x164] sm:$0xf]
        %v2749 = vld [vmem:[%s21 + $0x168] sm:$0xf]
        %v2750 = vld [vmem:[%s21 + $0x16c] sm:$0xf]
        %v2751 = vld [vmem:[%s21 + $0x170] sm:$0xf]
        %v2752 = vld [vmem:[%s21 + $0x174] sm:$0xf]
        %v2753 = vld [vmem:[%s21 + $0x178] sm:$0xf]
        %v2754 = vld [vmem:[%s21 + $0x17c] sm:$0xf]
        %v2755 = vld [vmem:[%s21 + $0x180] sm:$0xf]
        %v2756 = vld [vmem:[%s21 + $0x184] sm:$0xf]
        %v2757 = vld [vmem:[%s21 + $0x188] sm:$0xf]
        %v2758 = vld [vmem:[%s21 + $0x18c] sm:$0xf]
        %v2759 = vld [vmem:[%s21 + $0x190] sm:$0xf]
        %v2760 = vld [vmem:[%s21 + $0x194] sm:$0xf]
        %v2761 = vld [vmem:[%s21 + $0x198] sm:$0xf]
        %v2762 = vld [vmem:[%s21 + $0x19c] sm:$0xf]
        %v2763 = vld [vmem:[%s21 + $0x1a0] sm:$0xf]
        %v2764 = vld [vmem:[%s21 + $0x1a4] sm:$0xf]
        %v2765 = vld [vmem:[%s21 + $0x1a8] sm:$0xf]
        %v2766 = vld [vmem:[%s21 + $0x1ac] sm:$0xf]
        %v2767 = vld [vmem:[%s21 + $0x1b0] sm:$0xf]
        %v2768 = vld [vmem:[%s21 + $0x1b4] sm:$0xf]
        %v2769 = vld [vmem:[%s21 + $0x1b8] sm:$0xf]
        %v2770 = vld [vmem:[%s21 + $0x1bc] sm:$0xf]
        %v2771 = vld [vmem:[%s21 + $0x1c0] sm:$0xf]
        %v2772 = vld [vmem:[%s21 + $0x1c4] sm:$0xf]
        %v2773 = vld [vmem:[%s21 + $0x1c8] sm:$0xf]
        %v2774 = vld [vmem:[%s21 + $0x1cc] sm:$0xf]
        %v2775 = vld [vmem:[%s21 + $0x1d0] sm:$0xf]
        %v2776 = vld [vmem:[%s21 + $0x1d4] sm:$0xf]
        %v2777 = vld [vmem:[%s21 + $0x1d8] sm:$0xf]
        %v2778 = vld [vmem:[%s21 + $0x1dc] sm:$0xf]
        %v2779 = vld [vmem:[%s21 + $0x1e0] sm:$0xf]
        %v2780 = vld [vmem:[%s21 + $0x1e4] sm:$0xf]
        %v2781 = vld [vmem:[%s21 + $0x1e8] sm:$0xf]
        %v2782 = vld [vmem:[%s21 + $0x1ec] sm:$0xf]
        %v2783 = vld [vmem:[%s21 + $0x1f0] sm:$0xf]
        %v2784 = vld [vmem:[%s21 + $0x1f4] sm:$0xf]
        %v2785 = vld [vmem:[%s21 + $0x1f8] sm:$0xf]
        %v2786 = vld [vmem:[%s21 + $0x1fc] sm:$0xf]
        %v2787 = vld [vmem:[%s23] sm:$0x1]
        %v2789 = vlaneseq
        %v2790 = vshrl.u32 %v2789, 7
        %v2791 = vsub.s32 0, %v2790
        %v2792 = vrot.slane %v2787, %v2791
        %v2922 = vunpack.c.l.b16 %v2659
        %v2923 = vunpack.c.l.b16 %v2660
        %v2924 = vunpack.c.l.b16 %v2661
        %v2925 = vunpack.c.l.b16 %v2662
        %v2926 = vunpack.c.l.b16 %v2663
        %v2927 = vunpack.c.l.b16 %v2664
        %v2928 = vunpack.c.l.b16 %v2665
        %v2929 = vunpack.c.l.b16 %v2666
        %v2930 = vunpack.c.l.b16 %v2667
        %v2931 = vunpack.c.l.b16 %v2668
        %v2932 = vunpack.c.l.b16 %v2669
        %v2933 = vunpack.c.l.b16 %v2670
        %v2934 = vunpack.c.l.b16 %v2671
        %v2935 = vunpack.c.l.b16 %v2672
        %v2936 = vunpack.c.l.b16 %v2673
        %v2937 = vunpack.c.l.b16 %v2674
        %v2938 = vunpack.c.l.b16 %v2675
        %v2939 = vunpack.c.l.b16 %v2676
        %v2940 = vunpack.c.l.b16 %v2677
        %v2941 = vunpack.c.l.b16 %v2678
        %v2942 = vunpack.c.l.b16 %v2679
        %v2943 = vunpack.c.l.b16 %v2680
        %v2944 = vunpack.c.l.b16 %v2681
        %v2945 = vunpack.c.l.b16 %v2682
        %v2946 = vunpack.c.l.b16 %v2683
        %v2947 = vunpack.c.l.b16 %v2684
        %v2948 = vunpack.c.l.b16 %v2685
        %v2949 = vunpack.c.l.b16 %v2686
        %v2950 = vunpack.c.l.b16 %v2687
        %v2951 = vunpack.c.l.b16 %v2688
        %v2952 = vunpack.c.l.b16 %v2689
        %v2953 = vunpack.c.l.b16 %v2690
        %v2954 = vunpack.c.l.b16 %v2691
        %v2955 = vunpack.c.l.b16 %v2692
        %v2956 = vunpack.c.l.b16 %v2693
        %v2957 = vunpack.c.l.b16 %v2694
        %v2958 = vunpack.c.l.b16 %v2695
        %v2959 = vunpack.c.l.b16 %v2696
        %v2960 = vunpack.c.l.b16 %v2697
        %v2961 = vunpack.c.l.b16 %v2698
        %v2962 = vunpack.c.l.b16 %v2699
        %v2963 = vunpack.c.l.b16 %v2700
        %v2964 = vunpack.c.l.b16 %v2701
        %v2965 = vunpack.c.l.b16 %v2702
        %v2966 = vunpack.c.l.b16 %v2703
        %v2967 = vunpack.c.l.b16 %v2704
        %v2968 = vunpack.c.l.b16 %v2705
        %v2969 = vunpack.c.l.b16 %v2706
        %v2970 = vunpack.c.l.b16 %v2707
        %v2971 = vunpack.c.l.b16 %v2708
        %v2972 = vunpack.c.l.b16 %v2709
        %v2973 = vunpack.c.l.b16 %v2710
        %v2974 = vunpack.c.l.b16 %v2711
        %v2975 = vunpack.c.l.b16 %v2712
        %v2976 = vunpack.c.l.b16 %v2713
        %v2977 = vunpack.c.l.b16 %v2714
        %v2978 = vunpack.c.l.b16 %v2715
        %v2979 = vunpack.c.l.b16 %v2716
        %v2980 = vunpack.c.l.b16 %v2717
        %v2981 = vunpack.c.l.b16 %v2718
        %v2982 = vunpack.c.l.b16 %v2719
        %v2983 = vunpack.c.l.b16 %v2720
        %v2984 = vunpack.c.l.b16 %v2721
        %v2985 = vunpack.c.l.b16 %v2722
        %v2986 = vunpack.c.l.b16 %v2723
        %v2987 = vunpack.c.l.b16 %v2724
        %v2988 = vunpack.c.l.b16 %v2725
        %v2989 = vunpack.c.l.b16 %v2726
        %v2990 = vunpack.c.l.b16 %v2727
        %v2991 = vunpack.c.l.b16 %v2728
        %v2992 = vunpack.c.l.b16 %v2729
        %v2993 = vunpack.c.l.b16 %v2730
        %v2994 = vunpack.c.l.b16 %v2731
        %v2995 = vunpack.c.l.b16 %v2732
        %v2996 = vunpack.c.l.b16 %v2733
        %v2997 = vunpack.c.l.b16 %v2734
        %v2998 = vunpack.c.l.b16 %v2735
        %v2999 = vunpack.c.l.b16 %v2736
        %v3000 = vunpack.c.l.b16 %v2737
        %v3001 = vunpack.c.l.b16 %v2738
        %v3002 = vunpack.c.l.b16 %v2739
        %v3003 = vunpack.c.l.b16 %v2740
        %v3004 = vunpack.c.l.b16 %v2741
        %v3005 = vunpack.c.l.b16 %v2742
        %v3006 = vunpack.c.l.b16 %v2743
        %v3007 = vunpack.c.l.b16 %v2744
        %v3008 = vunpack.c.l.b16 %v2745
        %v3009 = vunpack.c.l.b16 %v2746
        %v3010 = vunpack.c.l.b16 %v2747
        %v3011 = vunpack.c.l.b16 %v2748
        %v3012 = vunpack.c.l.b16 %v2749
        %v3013 = vunpack.c.l.b16 %v2750
        %v3014 = vunpack.c.l.b16 %v2751
        %v3015 = vunpack.c.l.b16 %v2752
        %v3016 = vunpack.c.l.b16 %v2753
        %v3017 = vunpack.c.l.b16 %v2754
        %v3018 = vunpack.c.l.b16 %v2755
        %v3019 = vunpack.c.l.b16 %v2756
        %v3020 = vunpack.c.l.b16 %v2757
        %v3021 = vunpack.c.l.b16 %v2758
        %v3022 = vunpack.c.l.b16 %v2759
        %v3023 = vunpack.c.l.b16 %v2760
        %v3024 = vunpack.c.l.b16 %v2761
        %v3025 = vunpack.c.l.b16 %v2762
        %v3026 = vunpack.c.l.b16 %v2763
        %v3027 = vunpack.c.l.b16 %v2764
        %v3028 = vunpack.c.l.b16 %v2765
        %v3029 = vunpack.c.l.b16 %v2766
        %v3030 = vunpack.c.l.b16 %v2767
        %v3031 = vunpack.c.l.b16 %v2768
        %v3032 = vunpack.c.l.b16 %v2769
        %v3033 = vunpack.c.l.b16 %v2770
        %v3034 = vunpack.c.l.b16 %v2771
        %v3035 = vunpack.c.l.b16 %v2772
        %v3036 = vunpack.c.l.b16 %v2773
        %v3037 = vunpack.c.l.b16 %v2774
        %v3038 = vunpack.c.l.b16 %v2775
        %v3039 = vunpack.c.l.b16 %v2776
        %v3040 = vunpack.c.l.b16 %v2777
        %v3041 = vunpack.c.l.b16 %v2778
        %v3042 = vunpack.c.l.b16 %v2779
        %v3043 = vunpack.c.l.b16 %v2780
        %v3044 = vunpack.c.l.b16 %v2781
        %v3045 = vunpack.c.l.b16 %v2782
        %v3046 = vunpack.c.l.b16 %v2783
        %v3047 = vunpack.c.l.b16 %v2784
        %v3048 = vunpack.c.l.b16 %v2785
        %v3049 = vunpack.c.l.b16 %v2786
        %v3050 = vpack.c.b16 %v2923, %v2922
        %v3051 = vpack.c.b16 %v2925, %v2924
        %v3052 = vpack.c.b16 %v2927, %v2926
        %v3053 = vpack.c.b16 %v2929, %v2928
        %v3054 = vpack.c.b16 %v2931, %v2930
        %v3055 = vpack.c.b16 %v2933, %v2932
        %v3056 = vpack.c.b16 %v2935, %v2934
        %v3057 = vpack.c.b16 %v2937, %v2936
        %v3058 = vpack.c.b16 %v2939, %v2938
        %v3059 = vpack.c.b16 %v2941, %v2940
        %v3060 = vpack.c.b16 %v2943, %v2942
        %v3061 = vpack.c.b16 %v2945, %v2944
        %v3062 = vpack.c.b16 %v2947, %v2946
        %v3063 = vpack.c.b16 %v2949, %v2948
        %v3064 = vpack.c.b16 %v2951, %v2950
        %v3065 = vpack.c.b16 %v2953, %v2952
        %v3066 = vpack.c.b16 %v2955, %v2954
        %v3067 = vpack.c.b16 %v2957, %v2956
        %v3068 = vpack.c.b16 %v2959, %v2958
        %v3069 = vpack.c.b16 %v2961, %v2960
        %v3070 = vpack.c.b16 %v2963, %v2962
        %v3071 = vpack.c.b16 %v2965, %v2964
        %v3072 = vpack.c.b16 %v2967, %v2966
        %v3073 = vpack.c.b16 %v2969, %v2968
        %v3074 = vpack.c.b16 %v2971, %v2970
        %v3075 = vpack.c.b16 %v2973, %v2972
        %v3076 = vpack.c.b16 %v2975, %v2974
        %v3077 = vpack.c.b16 %v2977, %v2976
        %v3078 = vpack.c.b16 %v2979, %v2978
        %v3079 = vpack.c.b16 %v2981, %v2980
        %v3080 = vpack.c.b16 %v2983, %v2982
        %v3081 = vpack.c.b16 %v2985, %v2984
        %v3082 = vpack.c.b16 %v2987, %v2986
        %v3083 = vpack.c.b16 %v2989, %v2988
        %v3084 = vpack.c.b16 %v2991, %v2990
        %v3085 = vpack.c.b16 %v2993, %v2992
        %v3086 = vpack.c.b16 %v2995, %v2994
        %v3087 = vpack.c.b16 %v2997, %v2996
        %v3088 = vpack.c.b16 %v2999, %v2998
        %v3089 = vpack.c.b16 %v3001, %v3000
        %v3090 = vpack.c.b16 %v3003, %v3002
        %v3091 = vpack.c.b16 %v3005, %v3004
        %v3092 = vpack.c.b16 %v3007, %v3006
        %v3093 = vpack.c.b16 %v3009, %v3008
        %v3094 = vpack.c.b16 %v3011, %v3010
        %v3095 = vpack.c.b16 %v3013, %v3012
        %v3096 = vpack.c.b16 %v3015, %v3014
        %v3097 = vpack.c.b16 %v3017, %v3016
        %v3098 = vpack.c.b16 %v3019, %v3018
        %v3099 = vpack.c.b16 %v3021, %v3020
        %v3100 = vpack.c.b16 %v3023, %v3022
        %v3101 = vpack.c.b16 %v3025, %v3024
        %v3102 = vpack.c.b16 %v3027, %v3026
        %v3103 = vpack.c.b16 %v3029, %v3028
        %v3104 = vpack.c.b16 %v3031, %v3030
        %v3105 = vpack.c.b16 %v3033, %v3032
        %v3106 = vpack.c.b16 %v3035, %v3034
        %v3107 = vpack.c.b16 %v3037, %v3036
        %v3108 = vpack.c.b16 %v3039, %v3038
        %v3109 = vpack.c.b16 %v3041, %v3040
        %v3110 = vpack.c.b16 %v3043, %v3042
        %v3111 = vpack.c.b16 %v3045, %v3044
        %v3112 = vpack.c.b16 %v3047, %v3046
        %v3113 = vpack.c.b16 %v3049, %v3048
        %3178 = vmatprep.subr.bf16.mxu0 0
        %3179 = vmatpush1.bf16.msra.mxu0 %v3050
        %3180 = vmatprep.subr.bf16.mxu0 0
        %3181 = vmatpush1.bf16.msra.mxu0 %v3051
        %3182 = vmatprep.subr.bf16.mxu0 0
        %3183 = vmatpush1.bf16.msra.mxu0 %v3052
        %3184 = vmatprep.subr.bf16.mxu0 0
        %3185 = vmatpush1.bf16.msra.mxu0 %v3053
        %3186 = vmatprep.subr.bf16.mxu0 0
        %3187 = vmatpush1.bf16.msra.mxu0 %v3054
        %3188 = vmatprep.subr.bf16.mxu0 0
        %3189 = vmatpush1.bf16.msra.mxu0 %v3055
        %3190 = vmatprep.subr.bf16.mxu0 0
        %3191 = vmatpush1.bf16.msra.mxu0 %v3056
        %3192 = vmatprep.subr.bf16.mxu0 0
        %3193 = vmatpush1.bf16.msra.mxu0 %v3057
        %3194 = vmatprep.subr.bf16.mxu0 0
        %3195 = vmatpush1.bf16.msra.mxu0 %v3058
        %3196 = vmatprep.subr.bf16.mxu0 0
        %3197 = vmatpush1.bf16.msra.mxu0 %v3059
        %3198 = vmatprep.subr.bf16.mxu0 0
        %3199 = vmatpush1.bf16.msra.mxu0 %v3060
        %3200 = vmatprep.subr.bf16.mxu0 0
        %3201 = vmatpush1.bf16.msra.mxu0 %v3061
        %3202 = vmatprep.subr.bf16.mxu0 0
        %3203 = vmatpush1.bf16.msra.mxu0 %v3062
        %3204 = vmatprep.subr.bf16.mxu0 0
        %3205 = vmatpush1.bf16.msra.mxu0 %v3063
        %3206 = vmatprep.subr.bf16.mxu0 0
        %3207 = vmatpush1.bf16.msra.mxu0 %v3064
        %3208 = vmatprep.subr.bf16.mxu0 0
        %3209 = vmatpush1.bf16.msra.mxu0 %v3065
        %3210 = vmatprep.mubr.bf16.mxu0 %v2644
        %3211 = vmatmul.mubr.bf16.gmra.mrb[0].mxu0 %v2643
        %v3212 = vpop.f32.mrb[0].mxu0
        %v3213 = vadd.f32 %v2792, %v3212
        %v3214 = vpop.f32.mrb[0].mxu0
        %v3215 = vpop.f32.mrb[0].mxu0
        %v3216 = vadd.f32 %v2792, %v3215
        %v3217 = vpop.f32.mrb[0].mxu0
        %3218 = vmatprep.mubr.bf16.mxu0 %v2652
        %3219 = vmatmul.mubr.bf16.gmra.mrb[0].mxu0 %v2651
        %v3220 = vpop.f32.mrb[0].mxu0
        %v3221 = vadd.f32 %v2792, %v3220
        %v3222 = vpop.f32.mrb[0].mxu0
        %v3223 = vpop.f32.mrb[0].mxu0
        %v3224 = vadd.f32 %v2792, %v3223
        %v3225 = vpop.f32.mrb[0].mxu0
        %3226 = vdwg.mxu0
        %3227 = vmatprep.subr.bf16.mxu0 0
        %3228 = vmatpush1.bf16.msra.mxu0 %v3066
        %3229 = vmatprep.subr.bf16.mxu0 0
        %3230 = vmatpush1.bf16.msra.mxu0 %v3067
        %3231 = vmatprep.subr.bf16.mxu0 0
        %3232 = vmatpush1.bf16.msra.mxu0 %v3068
        %3233 = vmatprep.subr.bf16.mxu0 0
        %3234 = vmatpush1.bf16.msra.mxu0 %v3069
        %3235 = vmatprep.subr.bf16.mxu0 0
        %3236 = vmatpush1.bf16.msra.mxu0 %v3070
        %3237 = vmatprep.subr.bf16.mxu0 0
        %3238 = vmatpush1.bf16.msra.mxu0 %v3071
        %3239 = vmatprep.subr.bf16.mxu0 0
        %3240 = vmatpush1.bf16.msra.mxu0 %v3072
        %3241 = vmatprep.subr.bf16.mxu0 0
        %3242 = vmatpush1.bf16.msra.mxu0 %v3073
        %3243 = vmatprep.subr.bf16.mxu0 0
        %3244 = vmatpush1.bf16.msra.mxu0 %v3074
        %3245 = vmatprep.subr.bf16.mxu0 0
        %3246 = vmatpush1.bf16.msra.mxu0 %v3075
        %3247 = vmatprep.subr.bf16.mxu0 0
        %3248 = vmatpush1.bf16.msra.mxu0 %v3076
        %3249 = vmatprep.subr.bf16.mxu0 0
        %3250 = vmatpush1.bf16.msra.mxu0 %v3077
        %3251 = vmatprep.subr.bf16.mxu0 0
        %3252 = vmatpush1.bf16.msra.mxu0 %v3078
        %3253 = vmatprep.subr.bf16.mxu0 0
        %3254 = vmatpush1.bf16.msra.mxu0 %v3079
        %3255 = vmatprep.subr.bf16.mxu0 0
        %3256 = vmatpush1.bf16.msra.mxu0 %v3080
        %3257 = vmatprep.subr.bf16.mxu0 0
        %3258 = vmatpush1.bf16.msra.mxu0 %v3081
        %3259 = vmatprep.mubr.bf16.mxu0 %v2646
        %3260 = vmatmul.mubr.bf16.gmra.mrb[0].mxu0 %v2645
        %v3261 = vpop.f32.mrb[0].mxu0
        %v3262 = vadd.f32 %v3213, %v3261
        %v3263 = vpop.f32.mrb[0].mxu0
        %v3264 = vpop.f32.mrb[0].mxu0
        %v3265 = vadd.f32 %v3216, %v3264
        %v3266 = vpop.f32.mrb[0].mxu0
        %3267 = vmatprep.mubr.bf16.mxu0 %v2654
        %3268 = vmatmul.mubr.bf16.gmra.mrb[0].mxu0 %v2653
        %v3269 = vpop.f32.mrb[0].mxu0
        %v3270 = vadd.f32 %v3221, %v3269
        %v3271 = vpop.f32.mrb[0].mxu0
        %v3272 = vpop.f32.mrb[0].mxu0
        %v3273 = vadd.f32 %v3224, %v3272
        %v3274 = vpop.f32.mrb[0].mxu0
        %3275 = vdwg.mxu0
        %3276 = vmatprep.subr.bf16.mxu0 0
        %3277 = vmatpush1.bf16.msra.mxu0 %v3082
        %3278 = vmatprep.subr.bf16.mxu0 0
        %3279 = vmatpush1.bf16.msra.mxu0 %v3083
        %3280 = vmatprep.subr.bf16.mxu0 0
        %3281 = vmatpush1.bf16.msra.mxu0 %v3084
        %3282 = vmatprep.subr.bf16.mxu0 0
        %3283 = vmatpush1.bf16.msra.mxu0 %v3085
        %3284 = vmatprep.subr.bf16.mxu0 0
        %3285 = vmatpush1.bf16.msra.mxu0 %v3086
        %3286 = vmatprep.subr.bf16.mxu0 0
        %3287 = vmatpush1.bf16.msra.mxu0 %v3087
        %3288 = vmatprep.subr.bf16.mxu0 0
        %3289 = vmatpush1.bf16.msra.mxu0 %v3088
        %3290 = vmatprep.subr.bf16.mxu0 0
        %3291 = vmatpush1.bf16.msra.mxu0 %v3089
        %3292 = vmatprep.subr.bf16.mxu0 0
        %3293 = vmatpush1.bf16.msra.mxu0 %v3090
        %3294 = vmatprep.subr.bf16.mxu0 0
        %3295 = vmatpush1.bf16.msra.mxu0 %v3091
        %3296 = vmatprep.subr.bf16.mxu0 0
        %3297 = vmatpush1.bf16.msra.mxu0 %v3092
        %3298 = vmatprep.subr.bf16.mxu0 0
        %3299 = vmatpush1.bf16.msra.mxu0 %v3093
        %3300 = vmatprep.subr.bf16.mxu0 0
        %3301 = vmatpush1.bf16.msra.mxu0 %v3094
        %3302 = vmatprep.subr.bf16.mxu0 0
        %3303 = vmatpush1.bf16.msra.mxu0 %v3095
        %3304 = vmatprep.subr.bf16.mxu0 0
        %3305 = vmatpush1.bf16.msra.mxu0 %v3096
        %3306 = vmatprep.subr.bf16.mxu0 0
        %3307 = vmatpush1.bf16.msra.mxu0 %v3097
        %3308 = vmatprep.mubr.bf16.mxu0 %v2648
        %3309 = vmatmul.mubr.bf16.gmra.mrb[0].mxu0 %v2647
        %v3310 = vpop.f32.mrb[0].mxu0
        %v3311 = vadd.f32 %v3262, %v3310
        %v3312 = vpop.f32.mrb[0].mxu0
        %v3313 = vpop.f32.mrb[0].mxu0
        %v3314 = vadd.f32 %v3265, %v3313
        %v3315 = vpop.f32.mrb[0].mxu0
        %3316 = vmatprep.mubr.bf16.mxu0 %v2656
        %3317 = vmatmul.mubr.bf16.gmra.mrb[0].mxu0 %v2655
        %v3318 = vpop.f32.mrb[0].mxu0
        %v3319 = vadd.f32 %v3270, %v3318
        %v3320 = vpop.f32.mrb[0].mxu0
        %v3321 = vpop.f32.mrb[0].mxu0
        %v3322 = vadd.f32 %v3273, %v3321
        %v3323 = vpop.f32.mrb[0].mxu0
        %3324 = vdwg.mxu0
        %3325 = vmatprep.subr.bf16.mxu0 0
        %3326 = vmatpush1.bf16.msra.mxu0 %v3098
        %3327 = vmatprep.subr.bf16.mxu0 0
        %3328 = vmatpush1.bf16.msra.mxu0 %v3099
        %3329 = vmatprep.subr.bf16.mxu0 0
        %3330 = vmatpush1.bf16.msra.mxu0 %v3100
        %3331 = vmatprep.subr.bf16.mxu0 0
        %3332 = vmatpush1.bf16.msra.mxu0 %v3101
        %3333 = vmatprep.subr.bf16.mxu0 0
        %3334 = vmatpush1.bf16.msra.mxu0 %v3102
        %3335 = vmatprep.subr.bf16.mxu0 0
        %3336 = vmatpush1.bf16.msra.mxu0 %v3103
        %3337 = vmatprep.subr.bf16.mxu0 0
        %3338 = vmatpush1.bf16.msra.mxu0 %v3104
        %3339 = vmatprep.subr.bf16.mxu0 0
        %3340 = vmatpush1.bf16.msra.mxu0 %v3105
        %3341 = vmatprep.subr.bf16.mxu0 0
        %3342 = vmatpush1.bf16.msra.mxu0 %v3106
        %3343 = vmatprep.subr.bf16.mxu0 0
        %3344 = vmatpush1.bf16.msra.mxu0 %v3107
        %3345 = vmatprep.subr.bf16.mxu0 0
        %3346 = vmatpush1.bf16.msra.mxu0 %v3108
        %3347 = vmatprep.subr.bf16.mxu0 0
        %3348 = vmatpush1.bf16.msra.mxu0 %v3109
        %3349 = vmatprep.subr.bf16.mxu0 0
        %3350 = vmatpush1.bf16.msra.mxu0 %v3110
        %3351 = vmatprep.subr.bf16.mxu0 0
        %3352 = vmatpush1.bf16.msra.mxu0 %v3111
        %3353 = vmatprep.subr.bf16.mxu0 0
        %3354 = vmatpush1.bf16.msra.mxu0 %v3112
        %3355 = vmatprep.subr.bf16.mxu0 0
        %3356 = vmatpush1.bf16.msra.mxu0 %v3113
        %3357 = vmatprep.mubr.bf16.mxu0 %v2650
        %3358 = vmatmul.mubr.bf16.gmra.mrb[0].mxu0 %v2649
        %v3359 = vpop.f32.mrb[0].mxu0
        %v3360 = vadd.f32 %v3311, %v3359
        %v3361 = vpop.f32.mrb[0].mxu0
        %v3362 = vpop.f32.mrb[0].mxu0
        %v3363 = vadd.f32 %v3314, %v3362
        %v3364 = vpop.f32.mrb[0].mxu0
        %3365 = vmatprep.mubr.bf16.mxu0 %v2658
        %3366 = vmatmul.mubr.bf16.gmra.mrb[0].mxu0 %v2657
        %v3367 = vpop.f32.mrb[0].mxu0
        %v3368 = vadd.f32 %v3319, %v3367
        %v3369 = vpop.f32.mrb[0].mxu0
        %v3370 = vpop.f32.mrb[0].mxu0
        %v3371 = vadd.f32 %v3322, %v3370
        %v3372 = vpop.f32.mrb[0].mxu0
        %3373 = vdwg.mxu0
        %v3374 = vmul.f32 %v3360, 0.5
        %v3375 = vmul.f32 %v3363, 0.5
        %v3376 = vmul.f32 %v3368, 0.5
        %v3377 = vmul.f32 %v3371, 0.5
        %v3378 = vadd.f32 %v3374, %v1886
        %v3379 = vadd.f32 %v3375, %v1887
        %v3380 = vadd.f32 %v3376, %v1888
        %v3381 = vadd.f32 %v3377, %v1889
        %v3382 = vld [vmem:[%s25] sm:$0x1]
        %v3383 = vld [vmem:[%s27] sm:$0x1]
        %v3384 = vsel %vm1321, %v3378, 0.0
        %3385 = vadd.xlane.f32.xlu0 %v3384
        %v3386 = vpop.xlane.xlu0 %3385
        %v3387 = vsel %vm1321, %v3379, 0.0
        %3388 = vadd.xlane.f32.xlu0 %v3387
        %v3389 = vpop.xlane.xlu0 %3388
        %v3390 = vsel %vm1321, %v3380, 0.0
        %3391 = vadd.xlane.f32.xlu0 %v3390
        %v3392 = vpop.xlane.xlu0 %3391
        %v3393 = vsel %vm1321, %v3381, 0.0
        %3394 = vadd.xlane.f32.xlu0 %v3393
        %v3395 = vpop.xlane.xlu0 %3394
        %v3396 = vmul.f32 %v3386, %v1904
        %v3397 = vmul.f32 %v3389, %v1904
        %v3398 = vmul.f32 %v3392, %v1904
        %v3399 = vmul.f32 %v3395, %v1904
        %v3400 = vsub.f32 %v3378, %v3396
        %v3401 = vsub.f32 %v3379, %v3397
        %v3402 = vsub.f32 %v3380, %v3398
        %v3403 = vsub.f32 %v3381, %v3399
        %v3404 = vmul.f32 %v3400, %v3400
        %v3405 = vmul.f32 %v3401, %v3401
        %v3406 = vmul.f32 %v3402, %v3402
        %v3407 = vmul.f32 %v3403, %v3403
        %v3408 = vsel %vm1321, %v3404, 0.0
        %3409 = vadd.xlane.f32.xlu0 %v3408
        %v3410 = vpop.xlane.xlu0 %3409
        %v3411 = vsel %vm1321, %v3405, 0.0
        %3412 = vadd.xlane.f32.xlu0 %v3411
        %v3413 = vpop.xlane.xlu0 %3412
        %v3414 = vsel %vm1321, %v3406, 0.0
        %3415 = vadd.xlane.f32.xlu0 %v3414
        %v3416 = vpop.xlane.xlu0 %3415
        %v3417 = vsel %vm1321, %v3407, 0.0
        %3418 = vadd.xlane.f32.xlu0 %v3417
        %v3419 = vpop.xlane.xlu0 %3418
        %v3420 = vmul.f32 %v3410, %v1904
        %v3421 = vmul.f32 %v3413, %v1904
        %v3422 = vmul.f32 %v3416, %v1904
        %v3423 = vmul.f32 %v3419, %v1904
        %v3424 = vadd.f32 %v3420, 1e-05
        %v3425 = vadd.f32 %v3421, 1e-05
        %v3426 = vadd.f32 %v3422, 1e-05
        %v3427 = vadd.f32 %v3423, 1e-05
        %v3428 = vrsqrt.pop %v3424
        %v3429 = vrsqrt.pop %v3425
        %v3430 = vrsqrt.pop %v3426
        %v3431 = vrsqrt.pop %v3427
        %v3432 = vmul.f32 %v3400, %v3428
        %v3433 = vmul.f32 %v3401, %v3429
        %v3434 = vmul.f32 %v3402, %v3430
        %v3435 = vmul.f32 %v3403, %v3431
        %v3437 = vlaneseq
        %v3438 = vshrl.u32 %v3437, 7
        %v3439 = vsub.s32 0, %v3438
        %v3440 = vrot.slane %v3382, %v3439
        %v3442 = vmul.f32 %v3432, %v3440
        %v3443 = vmul.f32 %v3433, %v3440
        %v3444 = vmul.f32 %v3434, %v3440
        %v3445 = vmul.f32 %v3435, %v3440
        %v3447 = vlaneseq
        %v3448 = vshrl.u32 %v3447, 7
        %v3449 = vsub.s32 0, %v3448
        %v3450 = vrot.slane %v3383, %v3449
        %v3452 = vadd.f32 %v3442, %v3450
        %v3453 = vadd.f32 %v3443, %v3450
        %v3454 = vadd.f32 %v3444, %v3450
        %v3455 = vadd.f32 %v3445, %v3450
        %v3456 = vpack.c.bf16 %v3453, %v3452
        %v3457 = vpack.c.bf16 %v3455, %v3454
        %v3458 = vld [vmem:[%s29] sm:$0xff]
        %v3459 = vld [vmem:[%s29 + $0x8] sm:$0xff]
        %v3460 = vld [vmem:[%s29 + $0x10] sm:$0xff]
        %v3461 = vld [vmem:[%s29 + $0x18] sm:$0xff]
        %v3462 = vld [vmem:[%s29 + $0x20] sm:$0xff]
        %v3463 = vld [vmem:[%s29 + $0x28] sm:$0xff]
        %v3464 = vld [vmem:[%s29 + $0x30] sm:$0xff]
        %v3465 = vld [vmem:[%s29 + $0x38] sm:$0xff]
        %v3466 = vld [vmem:[%s31] sm:$0x3]
        %v3468 = vlaneseq
        %v3469 = vshrl.u32 %v3468, 7
        %v3470 = vsub.s32 0, %v3469
        %v3471 = vrot.slane %v3466, %v3470
        %v3472 = vlaneseq
        %v3473 = vshrl.u32 %v3472, 7
        %v3474 = vsub.s32 1, %v3473
        %v3475 = vrot.slane %v3466, %v3474
        %v3486 = vunpack.c.l.b16 %v3458
        %v3487 = vunpack.c.h.b16 %v3458
        %v3488 = vunpack.c.l.b16 %v3459
        %v3489 = vunpack.c.h.b16 %v3459
        %v3490 = vunpack.c.l.b16 %v3460
        %v3491 = vunpack.c.h.b16 %v3460
        %v3492 = vunpack.c.l.b16 %v3461
        %v3493 = vunpack.c.h.b16 %v3461
        %v3494 = vunpack.c.l.b16 %v3462
        %v3495 = vunpack.c.h.b16 %v3462
        %v3496 = vunpack.c.l.b16 %v3463
        %v3497 = vunpack.c.h.b16 %v3463
        %v3498 = vunpack.c.l.b16 %v3464
        %v3499 = vunpack.c.h.b16 %v3464
        %v3500 = vunpack.c.l.b16 %v3465
        %v3501 = vunpack.c.h.b16 %v3465
        %v3502 = vpack.c.b16 %v3488, %v3486
        %v3503 = vpack.c.b16 %v3489, %v3487
        %v3504 = vpack.c.b16 %v3492, %v3490
        %v3505 = vpack.c.b16 %v3493, %v3491
        %v3506 = vpack.c.b16 %v3496, %v3494
        %v3507 = vpack.c.b16 %v3497, %v3495
        %v3508 = vpack.c.b16 %v3500, %v3498
        %v3509 = vpack.c.b16 %v3501, %v3499
        %v3519 = vsel %vm1321, %v3456, 0
        %v3522 = vsel %vm1321, %v3457, 0
        %3524 = vmatprep.subr.bf16.mxu0 %v3503
        %3525 = vmatpush1.bf16.msra.mxu0 %v3502
        %3526 = vmatprep.subr.bf16.mxu0 %v3505
        %3527 = vmatpush1.bf16.msra.mxu0 %v3504
        %3528 = vmatprep.subr.bf16.mxu0 %v3507
        %3529 = vmatpush1.bf16.msra.mxu0 %v3506
        %3530 = vmatprep.subr.bf16.mxu0 %v3509
        %3531 = vmatpush1.bf16.msra.mxu0 %v3508
        %3532 = vmatprep.subr.bf16.mxu0 0
        %3533 = vmatpush1.bf16.msra.mxu0 0
        %3534 = vmatprep.subr.bf16.mxu0 0
        %3535 = vmatpush1.bf16.msra.mxu0 0
        %3536 = vmatprep.subr.bf16.mxu0 0
        %3537 = vmatpush1.bf16.msra.mxu0 0
        %3538 = vmatprep.subr.bf16.mxu0 0
        %3539 = vmatpush1.bf16.msra.mxu0 0
        %3540 = vmatprep.subr.bf16.mxu0 0
        %3541 = vmatpush1.bf16.msra.mxu0 0
        %3542 = vmatprep.subr.bf16.mxu0 0
        %3543 = vmatpush1.bf16.msra.mxu0 0
        %3544 = vmatprep.subr.bf16.mxu0 0
        %3545 = vmatpush1.bf16.msra.mxu0 0
        %3546 = vmatprep.subr.bf16.mxu0 0
        %3547 = vmatpush1.bf16.msra.mxu0 0
        %3548 = vmatprep.subr.bf16.mxu0 0
        %3549 = vmatpush1.bf16.msra.mxu0 0
        %3550 = vmatprep.subr.bf16.mxu0 0
        %3551 = vmatpush1.bf16.msra.mxu0 0
        %3552 = vmatprep.subr.bf16.mxu0 0
        %3553 = vmatpush1.bf16.msra.mxu0 0
        %3554 = vmatprep.subr.bf16.mxu0 0
        %3555 = vmatpush1.bf16.msra.mxu0 0
        %3556 = vmatprep.mubr.bf16.mxu0 0
        %3557 = vmatmul.mubr.bf16.gmra.mrb[0].mxu0 %v3519
        %v3558 = vpop.f32.mrb[0].mxu0
        %v3559 = vadd.f32 %v3471, %v3558
        %v3560 = vpop.f32.mrb[0].mxu0
        %v3561 = vadd.f32 %v3475, %v3560
        %v3562 = vpop.f32.mrb[0].mxu0
        %v3563 = vadd.f32 %v3471, %v3562
        %v3564 = vpop.f32.mrb[0].mxu0
        %v3565 = vadd.f32 %v3475, %v3564
        %3566 = vmatprep.mubr.bf16.mxu0 0
        %3567 = vmatmul.mubr.bf16.gmra.mrb[0].mxu0 %v3522
        %v3568 = vpop.f32.mrb[0].mxu0
        %v3569 = vadd.f32 %v3471, %v3568
        %v3570 = vpop.f32.mrb[0].mxu0
        %v3571 = vadd.f32 %v3475, %v3570
        %v3572 = vpop.f32.mrb[0].mxu0
        %v3573 = vadd.f32 %v3471, %v3572
        %v3574 = vpop.f32.mrb[0].mxu0
        %v3575 = vadd.f32 %v3475, %v3574
        %3576 = vdwg.mxu0
        %v3577 = vpack.c.bf16 %v3563, %v3559
        %v3578 = vpack.c.bf16 %v3565, %v3561
        %v3579 = vpack.c.bf16 %v3573, %v3569
        %v3580 = vpack.c.bf16 %v3575, %v3571
        %v3581 = vld [vmem:[%s1163] sm:$0x1]
        %v3582 = vld [vmem:[%s1163 + $0x1] sm:$0x1]
        %3584 = vrot.lane.b32.xlu0 %v3577, 64
        %v3585 = vpop.permute.xlu0 %3584
        %vm3586 = vcmask 64512
        %v3588 = vsel %vm3586, %v3577, 0
        %v3591 = vsel %vm3586, %v3585, 0
        %3593 = vmatprep.subr.bf16.mxu0 0
        %3594 = vmatpush1.bf16.xpose.msra.mxu0 %v3591
        %3595 = vmatprep.subr.bf16.mxu0 0
        %3596 = vmatpush1.bf16.xpose.msra.mxu0 0
        %3597 = vmatprep.subr.bf16.mxu0 0
        %3598 = vmatpush1.bf16.xpose.msra.mxu0 0
        %3599 = vmatprep.subr.bf16.mxu0 0
        %3600 = vmatpush1.bf16.xpose.msra.mxu0 0
        %3601 = vmatprep.subr.bf16.mxu0 0
        %3602 = vmatpush1.bf16.xpose.msra.mxu0 0
        %3603 = vmatprep.subr.bf16.mxu0 0
        %3604 = vmatpush1.bf16.xpose.msra.mxu0 0
        %3605 = vmatprep.subr.bf16.mxu0 0
        %3606 = vmatpush1.bf16.xpose.msra.mxu0 0
        %3607 = vmatprep.subr.bf16.mxu0 0
        %3608 = vmatpush1.bf16.xpose.msra.mxu0 0
        %3609 = vmatprep.subr.bf16.mxu0 0
        %3610 = vmatpush1.bf16.xpose.msra.mxu0 0
        %3611 = vmatprep.subr.bf16.mxu0 0
        %3612 = vmatpush1.bf16.xpose.msra.mxu0 0
        %3613 = vmatprep.subr.bf16.mxu0 0
        %3614 = vmatpush1.bf16.xpose.msra.mxu0 0
        %3615 = vmatprep.subr.bf16.mxu0 0
        %3616 = vmatpush1.bf16.xpose.msra.mxu0 0
        %3617 = vmatprep.subr.bf16.mxu0 0
        %3618 = vmatpush1.bf16.xpose.msra.mxu0 0
        %3619 = vmatprep.subr.bf16.mxu0 0
        %3620 = vmatpush1.bf16.xpose.msra.mxu0 0
        %3621 = vmatprep.subr.bf16.mxu0 0
        %3622 = vmatpush1.bf16.xpose.msra.mxu0 0
        %3623 = vmatprep.subr.bf16.mxu0 0
        %3624 = vmatpush1.bf16.xpose.msra.mxu0 0
        %3625 = vmatprep.mubr.bf16.mxu0 0
        %3626 = vmatmul.mubr.bf16.gmra.mrb[0].mxu0 %v3588
        %v3627 = vpop.f32.mrb[0].mxu0
        %v3628 = vadd.f32 0.0, %v3627
        %v3629 = vpop.f32.mrb[0].mxu0
        %v3630 = vpop.f32.mrb[0].mxu0
        %v3631 = vadd.f32 0.0, %v3630
        %v3632 = vpop.f32.mrb[0].mxu0
        %3633 = vdwg.mxu0
        %3635 = vrot.lane.b32.xlu0 %v3579, 64
        %v3636 = vpop.permute.xlu0 %3635
        %v3638 = vsel %vm3586, %v3579, 0
        %v3641 = vsel %vm3586, %v3636, 0
        %3643 = vmatprep.subr.bf16.mxu0 0
        %3644 = vmatpush1.bf16.xpose.msra.mxu0 %v3641
        %3645 = vmatprep.subr.bf16.mxu0 0
        %3646 = vmatpush1.bf16.xpose.msra.mxu0 0
        %3647 = vmatprep.subr.bf16.mxu0 0
        %3648 = vmatpush1.bf16.xpose.msra.mxu0 0
        %3649 = vmatprep.subr.bf16.mxu0 0
        %3650 = vmatpush1.bf16.xpose.msra.mxu0 0
        %3651 = vmatprep.subr.bf16.mxu0 0
        %3652 = vmatpush1.bf16.xpose.msra.mxu0 0
        %3653 = vmatprep.subr.bf16.mxu0 0
        %3654 = vmatpush1.bf16.xpose.msra.mxu0 0
        %3655 = vmatprep.subr.bf16.mxu0 0
        %3656 = vmatpush1.bf16.xpose.msra.mxu0 0
        %3657 = vmatprep.subr.bf16.mxu0 0
        %3658 = vmatpush1.bf16.xpose.msra.mxu0 0
        %3659 = vmatprep.subr.bf16.mxu0 0
        %3660 = vmatpush1.bf16.xpose.msra.mxu0 0
        %3661 = vmatprep.subr.bf16.mxu0 0
        %3662 = vmatpush1.bf16.xpose.msra.mxu0 0
        %3663 = vmatprep.subr.bf16.mxu0 0
        %3664 = vmatpush1.bf16.xpose.msra.mxu0 0
        %3665 = vmatprep.subr.bf16.mxu0 0
        %3666 = vmatpush1.bf16.xpose.msra.mxu0 0
        %3667 = vmatprep.subr.bf16.mxu0 0
        %3668 = vmatpush1.bf16.xpose.msra.mxu0 0
        %3669 = vmatprep.subr.bf16.mxu0 0
        %3670 = vmatpush1.bf16.xpose.msra.mxu0 0
        %3671 = vmatprep.subr.bf16.mxu0 0
        %3672 = vmatpush1.bf16.xpose.msra.mxu0 0
        %3673 = vmatprep.subr.bf16.mxu0 0
        %3674 = vmatpush1.bf16.xpose.msra.mxu0 0
        %3675 = vmatprep.mubr.bf16.mxu0 0
        %3676 = vmatmul.mubr.bf16.gmra.mrb[0].mxu0 %v3638
        %v3677 = vpop.f32.mrb[0].mxu0
        %v3678 = vadd.f32 0.0, %v3677
        %v3679 = vpop.f32.mrb[0].mxu0
        %v3680 = vpop.f32.mrb[0].mxu0
        %v3681 = vadd.f32 0.0, %v3680
        %v3682 = vpop.f32.mrb[0].mxu0
        %3683 = vdwg.mxu0
        %v3684 = vmul.f32 %v3628, 0.35355338
        %v3685 = vmul.f32 %v3631, 0.35355338
        %v3686 = vmul.f32 %v3678, 0.35355338
        %v3687 = vmul.f32 %v3681, 0.35355338
        %v3690 = vlaneseq
        %v3691 = vshrl.u32 %v3690, 7
        %v3692 = vsub.s32 0, %v3691
        %v3693 = vrot.slane %v3581, %v3692
        %v3694 = vlaneseq
        %v3695 = vshrl.u32 %v3694, 7
        %v3696 = vsub.s32 0, %v3695
        %v3697 = vrot.slane %v3582, %v3696
        %v3700 = vadd.f32 %v3684, %v3693
        %v3701 = vadd.f32 %v3685, %v3693
        %v3702 = vadd.f32 %v3686, %v3697
        %v3703 = vadd.f32 %v3687, %v3697
        %vm3704 = vcmask 130048
        %v3705 = vsel %vm3704, %v3700, -inf
        %3706 = vmax.xlane.f32.xlu0 %v3705
        %v3707 = vpop.xlane.xlu0 %3706
        %v3708 = vsel %vm3704, %v3701, -inf
        %3709 = vmax.xlane.f32.xlu0 %v3708
        %v3710 = vpop.xlane.xlu0 %3709
        %v3711 = vsel %vm3704, %v3702, -inf
        %3712 = vmax.xlane.f32.xlu0 %v3711
        %v3713 = vpop.xlane.xlu0 %3712
        %v3714 = vsel %vm3704, %v3703, -inf
        %3715 = vmax.xlane.f32.xlu0 %v3714
        %v3716 = vpop.xlane.xlu0 %3715
        %v3717 = vsub.f32 %v3700, %v3707
        %v3718 = vsub.f32 %v3701, %v3710
        %v3719 = vsub.f32 %v3702, %v3713
        %v3720 = vsub.f32 %v3703, %v3716
        %v3721 = vmul.f32 %v3717, 1.442695
        %v3722 = vpow.pop %v3721
        %v3723 = vmul.f32 %v3718, 1.442695
        %v3724 = vpow.pop %v3723
        %v3725 = vmul.f32 %v3719, 1.442695
        %v3726 = vpow.pop %v3725
        %v3727 = vmul.f32 %v3720, 1.442695
        %v3728 = vpow.pop %v3727
        %v3729 = vsel %vm3704, %v3722, 0.0
        %3730 = vadd.xlane.f32.xlu0 %v3729
        %v3731 = vpop.xlane.xlu0 %3730
        %v3732 = vsel %vm3704, %v3724, 0.0
        %3733 = vadd.xlane.f32.xlu0 %v3732
        %v3734 = vpop.xlane.xlu0 %3733
        %v3735 = vsel %vm3704, %v3726, 0.0
        %3736 = vadd.xlane.f32.xlu0 %v3735
        %v3737 = vpop.xlane.xlu0 %3736
        %v3738 = vsel %vm3704, %v3728, 0.0
        %3739 = vadd.xlane.f32.xlu0 %v3738
        %v3740 = vpop.xlane.xlu0 %3739
        %v3741 = vrcp.pop %v3731
        %v3742 = vrcp.pop %v3734
        %v3743 = vrcp.pop %v3737
        %v3744 = vrcp.pop %v3740
        %v3745 = vmul.f32 %v3722, %v3741
        %v3746 = vmul.f32 %v3724, %v3742
        %v3747 = vmul.f32 %v3726, %v3743
        %v3748 = vmul.f32 %v3728, %v3744
        %v3749 = vpack.c.bf16 %v3746, %v3745
        %v3750 = vpack.c.bf16 %v3748, %v3747
        %v3752 = vsel %vm3704, %v3749, 0
        %3754 = vmatprep.subr.bf16.mxu0 0
        %3755 = vmatpush1.bf16.msra.mxu0 %v3578
        %3756 = vmatprep.subr.bf16.mxu0 0
        %3757 = vmatpush1.bf16.msra.mxu0 0
        %3758 = vmatprep.subr.bf16.mxu0 0
        %3759 = vmatpush1.bf16.msra.mxu0 0
        %3760 = vmatprep.subr.bf16.mxu0 0
        %3761 = vmatpush1.bf16.msra.mxu0 0
        %3762 = vmatprep.subr.bf16.mxu0 0
        %3763 = vmatpush1.bf16.msra.mxu0 0
        %3764 = vmatprep.subr.bf16.mxu0 0
        %3765 = vmatpush1.bf16.msra.mxu0 0
        %3766 = vmatprep.subr.bf16.mxu0 0
        %3767 = vmatpush1.bf16.msra.mxu0 0
        %3768 = vmatprep.subr.bf16.mxu0 0
        %3769 = vmatpush1.bf16.msra.mxu0 0
        %3770 = vmatprep.subr.bf16.mxu0 0
        %3771 = vmatpush1.bf16.msra.mxu0 0
        %3772 = vmatprep.subr.bf16.mxu0 0
        %3773 = vmatpush1.bf16.msra.mxu0 0
        %3774 = vmatprep.subr.bf16.mxu0 0
        %3775 = vmatpush1.bf16.msra.mxu0 0
        %3776 = vmatprep.subr.bf16.mxu0 0
        %3777 = vmatpush1.bf16.msra.mxu0 0
        %3778 = vmatprep.subr.bf16.mxu0 0
        %3779 = vmatpush1.bf16.msra.mxu0 0
        %3780 = vmatprep.subr.bf16.mxu0 0
        %3781 = vmatpush1.bf16.msra.mxu0 0
        %3782 = vmatprep.subr.bf16.mxu0 0
        %3783 = vmatpush1.bf16.msra.mxu0 0
        %3784 = vmatprep.subr.bf16.mxu0 0
        %3785 = vmatpush1.bf16.msra.mxu0 0
        %3786 = vmatprep.mubr.bf16.mxu0 0
        %3787 = vmatmul.mubr.bf16.gmra.mrb[0].mxu0 %v3752
        %v3788 = vpop.f32.mrb[0].mxu0
        %v3789 = vadd.f32 0.0, %v3788
        %v3790 = vpop.f32.mrb[0].mxu0
        %v3791 = vpop.f32.mrb[0].mxu0
        %v3792 = vadd.f32 0.0, %v3791
        %v3793 = vpop.f32.mrb[0].mxu0
        %3794 = vdwg.mxu0
        %v3796 = vsel %vm3704, %v3750, 0
        %3798 = vmatprep.subr.bf16.mxu0 0
        %3799 = vmatpush1.bf16.msra.mxu0 %v3580
        %3800 = vmatprep.subr.bf16.mxu0 0
        %3801 = vmatpush1.bf16.msra.mxu0 0
        %3802 = vmatprep.subr.bf16.mxu0 0
        %3803 = vmatpush1.bf16.msra.mxu0 0
        %3804 = vmatprep.subr.bf16.mxu0 0
        %3805 = vmatpush1.bf16.msra.mxu0 0
        %3806 = vmatprep.subr.bf16.mxu0 0
        %3807 = vmatpush1.bf16.msra.mxu0 0
        %3808 = vmatprep.subr.bf16.mxu0 0
        %3809 = vmatpush1.bf16.msra.mxu0 0
        %3810 = vmatprep.subr.bf16.mxu0 0
        %3811 = vmatpush1.bf16.msra.mxu0 0
        %3812 = vmatprep.subr.bf16.mxu0 0
        %3813 = vmatpush1.bf16.msra.mxu0 0
        %3814 = vmatprep.subr.bf16.mxu0 0
        %3815 = vmatpush1.bf16.msra.mxu0 0
        %3816 = vmatprep.subr.bf16.mxu0 0
        %3817 = vmatpush1.bf16.msra.mxu0 0
        %3818 = vmatprep.subr.bf16.mxu0 0
        %3819 = vmatpush1.bf16.msra.mxu0 0
        %3820 = vmatprep.subr.bf16.mxu0 0
        %3821 = vmatpush1.bf16.msra.mxu0 0
        %3822 = vmatprep.subr.bf16.mxu0 0
        %3823 = vmatpush1.bf16.msra.mxu0 0
        %3824 = vmatprep.subr.bf16.mxu0 0
        %3825 = vmatpush1.bf16.msra.mxu0 0
        %3826 = vmatprep.subr.bf16.mxu0 0
        %3827 = vmatpush1.bf16.msra.mxu0 0
        %3828 = vmatprep.subr.bf16.mxu0 0
        %3829 = vmatpush1.bf16.msra.mxu0 0
        %3830 = vmatprep.mubr.bf16.mxu0 0
        %3831 = vmatmul.mubr.bf16.gmra.mrb[0].mxu0 %v3796
        %v3832 = vpop.f32.mrb[0].mxu0
        %v3833 = vadd.f32 0.0, %v3832
        %v3834 = vpop.f32.mrb[0].mxu0
        %v3835 = vpop.f32.mrb[0].mxu0
        %v3836 = vadd.f32 0.0, %v3835
        %v3837 = vpop.f32.mrb[0].mxu0
        %3838 = vdwg.mxu0
        %3839 = vrot.lane.b32.xlu0 %v3577, 120
        %v3840 = vpop.permute.xlu0 %3839
        %3841 = vrot.lane.b32.xlu0 %v3577, 56
        %v3842 = vpop.permute.xlu0 %3841
        %v3844 = vsel %vm3586, %v3840, 0
        %v3847 = vsel %vm3586, %v3842, 0
        %3849 = vmatprep.subr.bf16.mxu0 0
        %3850 = vmatpush1.bf16.xpose.msra.mxu0 %v3847
        %3851 = vmatprep.subr.bf16.mxu0 0
        %3852 = vmatpush1.bf16.xpose.msra.mxu0 0
        %3853 = vmatprep.subr.bf16.mxu0 0
        %3854 = vmatpush1.bf16.xpose.msra.mxu0 0
        %3855 = vmatprep.subr.bf16.mxu0 0
        %3856 = vmatpush1.bf16.xpose.msra.mxu0 0
        %3857 = vmatprep.subr.bf16.mxu0 0
        %3858 = vmatpush1.bf16.xpose.msra.mxu0 0
        %3859 = vmatprep.subr.bf16.mxu0 0
        %3860 = vmatpush1.bf16.xpose.msra.mxu0 0
        %3861 = vmatprep.subr.bf16.mxu0 0
        %3862 = vmatpush1.bf16.xpose.msra.mxu0 0
        %3863 = vmatprep.subr.bf16.mxu0 0
        %3864 = vmatpush1.bf16.xpose.msra.mxu0 0
        %3865 = vmatprep.subr.bf16.mxu0 0
        %3866 = vmatpush1.bf16.xpose.msra.mxu0 0
        %3867 = vmatprep.subr.bf16.mxu0 0
        %3868 = vmatpush1.bf16.xpose.msra.mxu0 0
        %3869 = vmatprep.subr.bf16.mxu0 0
        %3870 = vmatpush1.bf16.xpose.msra.mxu0 0
        %3871 = vmatprep.subr.bf16.mxu0 0
        %3872 = vmatpush1.bf16.xpose.msra.mxu0 0
        %3873 = vmatprep.subr.bf16.mxu0 0
        %3874 = vmatpush1.bf16.xpose.msra.mxu0 0
        %3875 = vmatprep.subr.bf16.mxu0 0
        %3876 = vmatpush1.bf16.xpose.msra.mxu0 0
        %3877 = vmatprep.subr.bf16.mxu0 0
        %3878 = vmatpush1.bf16.xpose.msra.mxu0 0
        %3879 = vmatprep.subr.bf16.mxu0 0
        %3880 = vmatpush1.bf16.xpose.msra.mxu0 0
        %3881 = vmatprep.mubr.bf16.mxu0 0
        %3882 = vmatmul.mubr.bf16.gmra.mrb[0].mxu0 %v3844
        %v3883 = vpop.f32.mrb[0].mxu0
        %v3884 = vadd.f32 0.0, %v3883
        %v3885 = vpop.f32.mrb[0].mxu0
        %v3886 = vpop.f32.mrb[0].mxu0
        %v3887 = vadd.f32 0.0, %v3886
        %v3888 = vpop.f32.mrb[0].mxu0
        %3889 = vdwg.mxu0
        %3890 = vrot.lane.b32.xlu0 %v3579, 120
        %v3891 = vpop.permute.xlu0 %3890
        %3892 = vrot.lane.b32.xlu0 %v3579, 56
        %v3893 = vpop.permute.xlu0 %3892
        %v3895 = vsel %vm3586, %v3891, 0
        %v3898 = vsel %vm3586, %v3893, 0
        %3900 = vmatprep.subr.bf16.mxu0 0
        %3901 = vmatpush1.bf16.xpose.msra.mxu0 %v3898
        %3902 = vmatprep.subr.bf16.mxu0 0
        %3903 = vmatpush1.bf16.xpose.msra.mxu0 0
        %3904 = vmatprep.subr.bf16.mxu0 0
        %3905 = vmatpush1.bf16.xpose.msra.mxu0 0
        %3906 = vmatprep.subr.bf16.mxu0 0
        %3907 = vmatpush1.bf16.xpose.msra.mxu0 0
        %3908 = vmatprep.subr.bf16.mxu0 0
        %3909 = vmatpush1.bf16.xpose.msra.mxu0 0
        %3910 = vmatprep.subr.bf16.mxu0 0
        %3911 = vmatpush1.bf16.xpose.msra.mxu0 0
        %3912 = vmatprep.subr.bf16.mxu0 0
        %3913 = vmatpush1.bf16.xpose.msra.mxu0 0
        %3914 = vmatprep.subr.bf16.mxu0 0
        %3915 = vmatpush1.bf16.xpose.msra.mxu0 0
        %3916 = vmatprep.subr.bf16.mxu0 0
        %3917 = vmatpush1.bf16.xpose.msra.mxu0 0
        %3918 = vmatprep.subr.bf16.mxu0 0
        %3919 = vmatpush1.bf16.xpose.msra.mxu0 0
        %3920 = vmatprep.subr.bf16.mxu0 0
        %3921 = vmatpush1.bf16.xpose.msra.mxu0 0
        %3922 = vmatprep.subr.bf16.mxu0 0
        %3923 = vmatpush1.bf16.xpose.msra.mxu0 0
        %3924 = vmatprep.subr.bf16.mxu0 0
        %3925 = vmatpush1.bf16.xpose.msra.mxu0 0
        %3926 = vmatprep.subr.bf16.mxu0 0
        %3927 = vmatpush1.bf16.xpose.msra.mxu0 0
        %3928 = vmatprep.subr.bf16.mxu0 0
        %3929 = vmatpush1.bf16.xpose.msra.mxu0 0
        %3930 = vmatprep.subr.bf16.mxu0 0
        %3931 = vmatpush1.bf16.xpose.msra.mxu0 0
        %3932 = vmatprep.mubr.bf16.mxu0 0
        %3933 = vmatmul.mubr.bf16.gmra.mrb[0].mxu0 %v3895
        %v3934 = vpop.f32.mrb[0].mxu0
        %v3935 = vadd.f32 0.0, %v3934
        %v3936 = vpop.f32.mrb[0].mxu0
        %v3937 = vpop.f32.mrb[0].mxu0
        %v3938 = vadd.f32 0.0, %v3937
        %v3939 = vpop.f32.mrb[0].mxu0
        %3940 = vdwg.mxu0
        %v3941 = vmul.f32 %v3884, 0.35355338
        %v3942 = vmul.f32 %v3887, 0.35355338
        %v3943 = vmul.f32 %v3935, 0.35355338
        %v3944 = vmul.f32 %v3938, 0.35355338
        %v3945 = vadd.f32 %v3941, %v3693
        %v3946 = vadd.f32 %v3942, %v3693
        %v3947 = vadd.f32 %v3943, %v3697
        %v3948 = vadd.f32 %v3944, %v3697
        %v3949 = vsel %vm3704, %v3945, -inf
        %3950 = vmax.xlane.f32.xlu0 %v3949
        %v3951 = vpop.xlane.xlu0 %3950
        %v3952 = vsel %vm3704, %v3946, -inf
        %3953 = vmax.xlane.f32.xlu0 %v3952
        %v3954 = vpop.xlane.xlu0 %3953
        %v3955 = vsel %vm3704, %v3947, -inf
        %3956 = vmax.xlane.f32.xlu0 %v3955
        %v3957 = vpop.xlane.xlu0 %3956
        %v3958 = vsel %vm3704, %v3948, -inf
        %3959 = vmax.xlane.f32.xlu0 %v3958
        %v3960 = vpop.xlane.xlu0 %3959
        %v3961 = vsub.f32 %v3945, %v3951
        %v3962 = vsub.f32 %v3946, %v3954
        %v3963 = vsub.f32 %v3947, %v3957
        %v3964 = vsub.f32 %v3948, %v3960
        %v3965 = vmul.f32 %v3961, 1.442695
        %v3966 = vpow.pop %v3965
        %v3967 = vmul.f32 %v3962, 1.442695
        %v3968 = vpow.pop %v3967
        %v3969 = vmul.f32 %v3963, 1.442695
        %v3970 = vpow.pop %v3969
        %v3971 = vmul.f32 %v3964, 1.442695
        %v3972 = vpow.pop %v3971
        %v3973 = vsel %vm3704, %v3966, 0.0
        %3974 = vadd.xlane.f32.xlu0 %v3973
        %v3975 = vpop.xlane.xlu0 %3974
        %v3976 = vsel %vm3704, %v3968, 0.0
        %3977 = vadd.xlane.f32.xlu0 %v3976
        %v3978 = vpop.xlane.xlu0 %3977
        %v3979 = vsel %vm3704, %v3970, 0.0
        %3980 = vadd.xlane.f32.xlu0 %v3979
        %v3981 = vpop.xlane.xlu0 %3980
        %v3982 = vsel %vm3704, %v3972, 0.0
        %3983 = vadd.xlane.f32.xlu0 %v3982
        %v3984 = vpop.xlane.xlu0 %3983
        %v3985 = vrcp.pop %v3975
        %v3986 = vrcp.pop %v3978
        %v3987 = vrcp.pop %v3981
        %v3988 = vrcp.pop %v3984
        %v3989 = vmul.f32 %v3966, %v3985
        %v3990 = vmul.f32 %v3968, %v3986
        %v3991 = vmul.f32 %v3970, %v3987
        %v3992 = vmul.f32 %v3972, %v3988
        %v3993 = vpack.c.bf16 %v3990, %v3989
        %v3994 = vpack.c.bf16 %v3992, %v3991
        %3996 = vrot.lane.b32.xlu0 %v3578, 120
        %v3997 = vpop.permute.xlu0 %3996
        %v4000 = vsel %vm3704, %v3993, 0
        %4002 = vmatprep.subr.bf16.mxu0 0
        %4003 = vmatpush1.bf16.msra.mxu0 %v3997
        %4004 = vmatprep.subr.bf16.mxu0 0
        %4005 = vmatpush1.bf16.msra.mxu0 0
        %4006 = vmatprep.subr.bf16.mxu0 0
        %4007 = vmatpush1.bf16.msra.mxu0 0
        %4008 = vmatprep.subr.bf16.mxu0 0
        %4009 = vmatpush1.bf16.msra.mxu0 0
        %4010 = vmatprep.subr.bf16.mxu0 0
        %4011 = vmatpush1.bf16.msra.mxu0 0
        %4012 = vmatprep.subr.bf16.mxu0 0
        %4013 = vmatpush1.bf16.msra.mxu0 0
        %4014 = vmatprep.subr.bf16.mxu0 0
        %4015 = vmatpush1.bf16.msra.mxu0 0
        %4016 = vmatprep.subr.bf16.mxu0 0
        %4017 = vmatpush1.bf16.msra.mxu0 0
        %4018 = vmatprep.subr.bf16.mxu0 0
        %4019 = vmatpush1.bf16.msra.mxu0 0
        %4020 = vmatprep.subr.bf16.mxu0 0
        %4021 = vmatpush1.bf16.msra.mxu0 0
        %4022 = vmatprep.subr.bf16.mxu0 0
        %4023 = vmatpush1.bf16.msra.mxu0 0
        %4024 = vmatprep.subr.bf16.mxu0 0
        %4025 = vmatpush1.bf16.msra.mxu0 0
        %4026 = vmatprep.subr.bf16.mxu0 0
        %4027 = vmatpush1.bf16.msra.mxu0 0
        %4028 = vmatprep.subr.bf16.mxu0 0
        %4029 = vmatpush1.bf16.msra.mxu0 0
        %4030 = vmatprep.subr.bf16.mxu0 0
        %4031 = vmatpush1.bf16.msra.mxu0 0
        %4032 = vmatprep.subr.bf16.mxu0 0
        %4033 = vmatpush1.bf16.msra.mxu0 0
        %4034 = vmatprep.mubr.bf16.mxu0 0
        %4035 = vmatmul.mubr.bf16.gmra.mrb[0].mxu0 %v4000
        %v4036 = vpop.f32.mrb[0].mxu0
        %v4037 = vadd.f32 0.0, %v4036
        %v4038 = vpop.f32.mrb[0].mxu0
        %v4039 = vpop.f32.mrb[0].mxu0
        %v4040 = vadd.f32 0.0, %v4039
        %v4041 = vpop.f32.mrb[0].mxu0
        %4042 = vdwg.mxu0
        %4044 = vrot.lane.b32.xlu0 %v3580, 120
        %v4045 = vpop.permute.xlu0 %4044
        %v4048 = vsel %vm3704, %v3994, 0
        %4050 = vmatprep.subr.bf16.mxu0 0
        %4051 = vmatpush1.bf16.msra.mxu0 %v4045
        %4052 = vmatprep.subr.bf16.mxu0 0
        %4053 = vmatpush1.bf16.msra.mxu0 0
        %4054 = vmatprep.subr.bf16.mxu0 0
        %4055 = vmatpush1.bf16.msra.mxu0 0
        %4056 = vmatprep.subr.bf16.mxu0 0
        %4057 = vmatpush1.bf16.msra.mxu0 0
        %4058 = vmatprep.subr.bf16.mxu0 0
        %4059 = vmatpush1.bf16.msra.mxu0 0
        %4060 = vmatprep.subr.bf16.mxu0 0
        %4061 = vmatpush1.bf16.msra.mxu0 0
        %4062 = vmatprep.subr.bf16.mxu0 0
        %4063 = vmatpush1.bf16.msra.mxu0 0
        %4064 = vmatprep.subr.bf16.mxu0 0
        %4065 = vmatpush1.bf16.msra.mxu0 0
        %4066 = vmatprep.subr.bf16.mxu0 0
        %4067 = vmatpush1.bf16.msra.mxu0 0
        %4068 = vmatprep.subr.bf16.mxu0 0
        %4069 = vmatpush1.bf16.msra.mxu0 0
        %4070 = vmatprep.subr.bf16.mxu0 0
        %4071 = vmatpush1.bf16.msra.mxu0 0
        %4072 = vmatprep.subr.bf16.mxu0 0
        %4073 = vmatpush1.bf16.msra.mxu0 0
        %4074 = vmatprep.subr.bf16.mxu0 0
        %4075 = vmatpush1.bf16.msra.mxu0 0
        %4076 = vmatprep.subr.bf16.mxu0 0
        %4077 = vmatpush1.bf16.msra.mxu0 0
        %4078 = vmatprep.subr.bf16.mxu0 0
        %4079 = vmatpush1.bf16.msra.mxu0 0
        %4080 = vmatprep.subr.bf16.mxu0 0
        %4081 = vmatpush1.bf16.msra.mxu0 0
        %4082 = vmatprep.mubr.bf16.mxu0 0
        %4083 = vmatmul.mubr.bf16.gmra.mrb[0].mxu0 %v4048
        %v4084 = vpop.f32.mrb[0].mxu0
        %v4085 = vadd.f32 0.0, %v4084
        %v4086 = vpop.f32.mrb[0].mxu0
        %v4087 = vpop.f32.mrb[0].mxu0
        %v4088 = vadd.f32 0.0, %v4087
        %v4089 = vpop.f32.mrb[0].mxu0
        %4090 = vdwg.mxu0
        %4091 = vrot.lane.b32.xlu0 %v3577, 112
        %v4092 = vpop.permute.xlu0 %4091
        %4093 = vrot.lane.b32.xlu0 %v3577, 48
        %v4094 = vpop.permute.xlu0 %4093
        %v4096 = vsel %vm3586, %v4092, 0
        %v4099 = vsel %vm3586, %v4094, 0
        %4101 = vmatprep.subr.bf16.mxu0 0
        %4102 = vmatpush1.bf16.xpose.msra.mxu0 %v4099
        %4103 = vmatprep.subr.bf16.mxu0 0
        %4104 = vmatpush1.bf16.xpose.msra.mxu0 0
        %4105 = vmatprep.subr.bf16.mxu0 0
        %4106 = vmatpush1.bf16.xpose.msra.mxu0 0
        %4107 = vmatprep.subr.bf16.mxu0 0
        %4108 = vmatpush1.bf16.xpose.msra.mxu0 0
        %4109 = vmatprep.subr.bf16.mxu0 0
        %4110 = vmatpush1.bf16.xpose.msra.mxu0 0
        %4111 = vmatprep.subr.bf16.mxu0 0
        %4112 = vmatpush1.bf16.xpose.msra.mxu0 0
        %4113 = vmatprep.subr.bf16.mxu0 0
        %4114 = vmatpush1.bf16.xpose.msra.mxu0 0
        %4115 = vmatprep.subr.bf16.mxu0 0
        %4116 = vmatpush1.bf16.xpose.msra.mxu0 0
        %4117 = vmatprep.subr.bf16.mxu0 0
        %4118 = vmatpush1.bf16.xpose.msra.mxu0 0
        %4119 = vmatprep.subr.bf16.mxu0 0
        %4120 = vmatpush1.bf16.xpose.msra.mxu0 0
        %4121 = vmatprep.subr.bf16.mxu0 0
        %4122 = vmatpush1.bf16.xpose.msra.mxu0 0
        %4123 = vmatprep.subr.bf16.mxu0 0
        %4124 = vmatpush1.bf16.xpose.msra.mxu0 0
        %4125 = vmatprep.subr.bf16.mxu0 0
        %4126 = vmatpush1.bf16.xpose.msra.mxu0 0
        %4127 = vmatprep.subr.bf16.mxu0 0
        %4128 = vmatpush1.bf16.xpose.msra.mxu0 0
        %4129 = vmatprep.subr.bf16.mxu0 0
        %4130 = vmatpush1.bf16.xpose.msra.mxu0 0
        %4131 = vmatprep.subr.bf16.mxu0 0
        %4132 = vmatpush1.bf16.xpose.msra.mxu0 0
        %4133 = vmatprep.mubr.bf16.mxu0 0
        %4134 = vmatmul.mubr.bf16.gmra.mrb[0].mxu0 %v4096
        %v4135 = vpop.f32.mrb[0].mxu0
        %v4136 = vadd.f32 0.0, %v4135
        %v4137 = vpop.f32.mrb[0].mxu0
        %v4138 = vpop.f32.mrb[0].mxu0
        %v4139 = vadd.f32 0.0, %v4138
        %v4140 = vpop.f32.mrb[0].mxu0
        %4141 = vdwg.mxu0
        %4142 = vrot.lane.b32.xlu0 %v3579, 112
        %v4143 = vpop.permute.xlu0 %4142
        %4144 = vrot.lane.b32.xlu0 %v3579, 48
        %v4145 = vpop.permute.xlu0 %4144
        %v4147 = vsel %vm3586, %v4143, 0
        %v4150 = vsel %vm3586, %v4145, 0
        %4152 = vmatprep.subr.bf16.mxu0 0
        %4153 = vmatpush1.bf16.xpose.msra.mxu0 %v4150
        %4154 = vmatprep.subr.bf16.mxu0 0
        %4155 = vmatpush1.bf16.xpose.msra.mxu0 0
        %4156 = vmatprep.subr.bf16.mxu0 0
        %4157 = vmatpush1.bf16.xpose.msra.mxu0 0
        %4158 = vmatprep.subr.bf16.mxu0 0
        %4159 = vmatpush1.bf16.xpose.msra.mxu0 0
        %4160 = vmatprep.subr.bf16.mxu0 0
        %4161 = vmatpush1.bf16.xpose.msra.mxu0 0
        %4162 = vmatprep.subr.bf16.mxu0 0
        %4163 = vmatpush1.bf16.xpose.msra.mxu0 0
        %4164 = vmatprep.subr.bf16.mxu0 0
        %4165 = vmatpush1.bf16.xpose.msra.mxu0 0
        %4166 = vmatprep.subr.bf16.mxu0 0
        %4167 = vmatpush1.bf16.xpose.msra.mxu0 0
        %4168 = vmatprep.subr.bf16.mxu0 0
        %4169 = vmatpush1.bf16.xpose.msra.mxu0 0
        %4170 = vmatprep.subr.bf16.mxu0 0
        %4171 = vmatpush1.bf16.xpose.msra.mxu0 0
        %4172 = vmatprep.subr.bf16.mxu0 0
        %4173 = vmatpush1.bf16.xpose.msra.mxu0 0
        %4174 = vmatprep.subr.bf16.mxu0 0
        %4175 = vmatpush1.bf16.xpose.msra.mxu0 0
        %4176 = vmatprep.subr.bf16.mxu0 0
        %4177 = vmatpush1.bf16.xpose.msra.mxu0 0
        %4178 = vmatprep.subr.bf16.mxu0 0
        %4179 = vmatpush1.bf16.xpose.msra.mxu0 0
        %4180 = vmatprep.subr.bf16.mxu0 0
        %4181 = vmatpush1.bf16.xpose.msra.mxu0 0
        %4182 = vmatprep.subr.bf16.mxu0 0
        %4183 = vmatpush1.bf16.xpose.msra.mxu0 0
        %4184 = vmatprep.mubr.bf16.mxu0 0
        %4185 = vmatmul.mubr.bf16.gmra.mrb[0].mxu0 %v4147
        %v4186 = vpop.f32.mrb[0].mxu0
        %v4187 = vadd.f32 0.0, %v4186
        %v4188 = vpop.f32.mrb[0].mxu0
        %v4189 = vpop.f32.mrb[0].mxu0
        %v4190 = vadd.f32 0.0, %v4189
        %v4191 = vpop.f32.mrb[0].mxu0
        %4192 = vdwg.mxu0
        %v4193 = vmul.f32 %v4136, 0.35355338
        %v4194 = vmul.f32 %v4139, 0.35355338
        %v4195 = vmul.f32 %v4187, 0.35355338
        %v4196 = vmul.f32 %v4190, 0.35355338
        %v4197 = vadd.f32 %v4193, %v3693
        %v4198 = vadd.f32 %v4194, %v3693
        %v4199 = vadd.f32 %v4195, %v3697
        %v4200 = vadd.f32 %v4196, %v3697
        %v4201 = vsel %vm3704, %v4197, -inf
        %4202 = vmax.xlane.f32.xlu0 %v4201
        %v4203 = vpop.xlane.xlu0 %4202
        %v4204 = vsel %vm3704, %v4198, -inf
        %4205 = vmax.xlane.f32.xlu0 %v4204
        %v4206 = vpop.xlane.xlu0 %4205
        %v4207 = vsel %vm3704, %v4199, -inf
        %4208 = vmax.xlane.f32.xlu0 %v4207
        %v4209 = vpop.xlane.xlu0 %4208
        %v4210 = vsel %vm3704, %v4200, -inf
        %4211 = vmax.xlane.f32.xlu0 %v4210
        %v4212 = vpop.xlane.xlu0 %4211
        %v4213 = vsub.f32 %v4197, %v4203
        %v4214 = vsub.f32 %v4198, %v4206
        %v4215 = vsub.f32 %v4199, %v4209
        %v4216 = vsub.f32 %v4200, %v4212
        %v4217 = vmul.f32 %v4213, 1.442695
        %v4218 = vpow.pop %v4217
        %v4219 = vmul.f32 %v4214, 1.442695
        %v4220 = vpow.pop %v4219
        %v4221 = vmul.f32 %v4215, 1.442695
        %v4222 = vpow.pop %v4221
        %v4223 = vmul.f32 %v4216, 1.442695
        %v4224 = vpow.pop %v4223
        %v4225 = vsel %vm3704, %v4218, 0.0
        %4226 = vadd.xlane.f32.xlu0 %v4225
        %v4227 = vpop.xlane.xlu0 %4226
        %v4228 = vsel %vm3704, %v4220, 0.0
        %4229 = vadd.xlane.f32.xlu0 %v4228
        %v4230 = vpop.xlane.xlu0 %4229
        %v4231 = vsel %vm3704, %v4222, 0.0
        %4232 = vadd.xlane.f32.xlu0 %v4231
        %v4233 = vpop.xlane.xlu0 %4232
        %v4234 = vsel %vm3704, %v4224, 0.0
        %4235 = vadd.xlane.f32.xlu0 %v4234
        %v4236 = vpop.xlane.xlu0 %4235
        %v4237 = vrcp.pop %v4227
        %v4238 = vrcp.pop %v4230
        %v4239 = vrcp.pop %v4233
        %v4240 = vrcp.pop %v4236
        %v4241 = vmul.f32 %v4218, %v4237
        %v4242 = vmul.f32 %v4220, %v4238
        %v4243 = vmul.f32 %v4222, %v4239
        %v4244 = vmul.f32 %v4224, %v4240
        %v4245 = vpack.c.bf16 %v4242, %v4241
        %v4246 = vpack.c.bf16 %v4244, %v4243
        %4247 = vrot.lane.b32.xlu0 %v3578, 112
        %v4248 = vpop.permute.xlu0 %4247
        %v4251 = vsel %vm3704, %v4245, 0
        %4253 = vmatprep.subr.bf16.mxu0 0
        %4254 = vmatpush1.bf16.msra.mxu0 %v4248
        %4255 = vmatprep.subr.bf16.mxu0 0
        %4256 = vmatpush1.bf16.msra.mxu0 0
        %4257 = vmatprep.subr.bf16.mxu0 0
        %4258 = vmatpush1.bf16.msra.mxu0 0
        %4259 = vmatprep.subr.bf16.mxu0 0
        %4260 = vmatpush1.bf16.msra.mxu0 0
        %4261 = vmatprep.subr.bf16.mxu0 0
        %4262 = vmatpush1.bf16.msra.mxu0 0
        %4263 = vmatprep.subr.bf16.mxu0 0
        %4264 = vmatpush1.bf16.msra.mxu0 0
        %4265 = vmatprep.subr.bf16.mxu0 0
        %4266 = vmatpush1.bf16.msra.mxu0 0
        %4267 = vmatprep.subr.bf16.mxu0 0
        %4268 = vmatpush1.bf16.msra.mxu0 0
        %4269 = vmatprep.subr.bf16.mxu0 0
        %4270 = vmatpush1.bf16.msra.mxu0 0
        %4271 = vmatprep.subr.bf16.mxu0 0
        %4272 = vmatpush1.bf16.msra.mxu0 0
        %4273 = vmatprep.subr.bf16.mxu0 0
        %4274 = vmatpush1.bf16.msra.mxu0 0
        %4275 = vmatprep.subr.bf16.mxu0 0
        %4276 = vmatpush1.bf16.msra.mxu0 0
        %4277 = vmatprep.subr.bf16.mxu0 0
        %4278 = vmatpush1.bf16.msra.mxu0 0
        %4279 = vmatprep.subr.bf16.mxu0 0
        %4280 = vmatpush1.bf16.msra.mxu0 0
        %4281 = vmatprep.subr.bf16.mxu0 0
        %4282 = vmatpush1.bf16.msra.mxu0 0
        %4283 = vmatprep.subr.bf16.mxu0 0
        %4284 = vmatpush1.bf16.msra.mxu0 0
        %4285 = vmatprep.mubr.bf16.mxu0 0
        %4286 = vmatmul.mubr.bf16.gmra.mrb[0].mxu0 %v4251
        %v4287 = vpop.f32.mrb[0].mxu0
        %v4288 = vadd.f32 0.0, %v4287
        %v4289 = vpop.f32.mrb[0].mxu0
        %v4290 = vpop.f32.mrb[0].mxu0
        %v4291 = vadd.f32 0.0, %v4290
        %v4292 = vpop.f32.mrb[0].mxu0
        %4293 = vdwg.mxu0
        %4294 = vrot.lane.b32.xlu0 %v3580, 112
        %v4295 = vpop.permute.xlu0 %4294
        %v4298 = vsel %vm3704, %v4246, 0
        %4300 = vmatprep.subr.bf16.mxu0 0
        %4301 = vmatpush1.bf16.msra.mxu0 %v4295
        %4302 = vmatprep.subr.bf16.mxu0 0
        %4303 = vmatpush1.bf16.msra.mxu0 0
        %4304 = vmatprep.subr.bf16.mxu0 0
        %4305 = vmatpush1.bf16.msra.mxu0 0
        %4306 = vmatprep.subr.bf16.mxu0 0
        %4307 = vmatpush1.bf16.msra.mxu0 0
        %4308 = vmatprep.subr.bf16.mxu0 0
        %4309 = vmatpush1.bf16.msra.mxu0 0
        %4310 = vmatprep.subr.bf16.mxu0 0
        %4311 = vmatpush1.bf16.msra.mxu0 0
        %4312 = vmatprep.subr.bf16.mxu0 0
        %4313 = vmatpush1.bf16.msra.mxu0 0
        %4314 = vmatprep.subr.bf16.mxu0 0
        %4315 = vmatpush1.bf16.msra.mxu0 0
        %4316 = vmatprep.subr.bf16.mxu0 0
        %4317 = vmatpush1.bf16.msra.mxu0 0
        %4318 = vmatprep.subr.bf16.mxu0 0
        %4319 = vmatpush1.bf16.msra.mxu0 0
        %4320 = vmatprep.subr.bf16.mxu0 0
        %4321 = vmatpush1.bf16.msra.mxu0 0
        %4322 = vmatprep.subr.bf16.mxu0 0
        %4323 = vmatpush1.bf16.msra.mxu0 0
        %4324 = vmatprep.subr.bf16.mxu0 0
        %4325 = vmatpush1.bf16.msra.mxu0 0
        %4326 = vmatprep.subr.bf16.mxu0 0
        %4327 = vmatpush1.bf16.msra.mxu0 0
        %4328 = vmatprep.subr.bf16.mxu0 0
        %4329 = vmatpush1.bf16.msra.mxu0 0
        %4330 = vmatprep.subr.bf16.mxu0 0
        %4331 = vmatpush1.bf16.msra.mxu0 0
        %4332 = vmatprep.mubr.bf16.mxu0 0
        %4333 = vmatmul.mubr.bf16.gmra.mrb[0].mxu0 %v4298
        %v4334 = vpop.f32.mrb[0].mxu0
        %v4335 = vadd.f32 0.0, %v4334
        %v4336 = vpop.f32.mrb[0].mxu0
        %v4337 = vpop.f32.mrb[0].mxu0
        %v4338 = vadd.f32 0.0, %v4337
        %v4339 = vpop.f32.mrb[0].mxu0
        %4340 = vdwg.mxu0
        %4341 = vrot.lane.b32.xlu0 %v3577, 104
        %v4342 = vpop.permute.xlu0 %4341
        %4343 = vrot.lane.b32.xlu0 %v3577, 40
        %v4344 = vpop.permute.xlu0 %4343
        %v4346 = vsel %vm3586, %v4342, 0
        %v4349 = vsel %vm3586, %v4344, 0
        %4351 = vmatprep.subr.bf16.mxu0 0
        %4352 = vmatpush1.bf16.xpose.msra.mxu0 %v4349
        %4353 = vmatprep.subr.bf16.mxu0 0
        %4354 = vmatpush1.bf16.xpose.msra.mxu0 0
        %4355 = vmatprep.subr.bf16.mxu0 0
        %4356 = vmatpush1.bf16.xpose.msra.mxu0 0
        %4357 = vmatprep.subr.bf16.mxu0 0
        %4358 = vmatpush1.bf16.xpose.msra.mxu0 0
        %4359 = vmatprep.subr.bf16.mxu0 0
        %4360 = vmatpush1.bf16.xpose.msra.mxu0 0
        %4361 = vmatprep.subr.bf16.mxu0 0
        %4362 = vmatpush1.bf16.xpose.msra.mxu0 0
        %4363 = vmatprep.subr.bf16.mxu0 0
        %4364 = vmatpush1.bf16.xpose.msra.mxu0 0
        %4365 = vmatprep.subr.bf16.mxu0 0
        %4366 = vmatpush1.bf16.xpose.msra.mxu0 0
        %4367 = vmatprep.subr.bf16.mxu0 0
        %4368 = vmatpush1.bf16.xpose.msra.mxu0 0
        %4369 = vmatprep.subr.bf16.mxu0 0
        %4370 = vmatpush1.bf16.xpose.msra.mxu0 0
        %4371 = vmatprep.subr.bf16.mxu0 0
        %4372 = vmatpush1.bf16.xpose.msra.mxu0 0
        %4373 = vmatprep.subr.bf16.mxu0 0
        %4374 = vmatpush1.bf16.xpose.msra.mxu0 0
        %4375 = vmatprep.subr.bf16.mxu0 0
        %4376 = vmatpush1.bf16.xpose.msra.mxu0 0
        %4377 = vmatprep.subr.bf16.mxu0 0
        %4378 = vmatpush1.bf16.xpose.msra.mxu0 0
        %4379 = vmatprep.subr.bf16.mxu0 0
        %4380 = vmatpush1.bf16.xpose.msra.mxu0 0
        %4381 = vmatprep.subr.bf16.mxu0 0
        %4382 = vmatpush1.bf16.xpose.msra.mxu0 0
        %4383 = vmatprep.mubr.bf16.mxu0 0
        %4384 = vmatmul.mubr.bf16.gmra.mrb[0].mxu0 %v4346
        %v4385 = vpop.f32.mrb[0].mxu0
        %v4386 = vadd.f32 0.0, %v4385
        %v4387 = vpop.f32.mrb[0].mxu0
        %v4388 = vpop.f32.mrb[0].mxu0
        %v4389 = vadd.f32 0.0, %v4388
        %v4390 = vpop.f32.mrb[0].mxu0
        %4391 = vdwg.mxu0
        %4392 = vrot.lane.b32.xlu0 %v3579, 104
        %v4393 = vpop.permute.xlu0 %4392
        %4394 = vrot.lane.b32.xlu0 %v3579, 40
        %v4395 = vpop.permute.xlu0 %4394
        %v4397 = vsel %vm3586, %v4393, 0
        %v4400 = vsel %vm3586, %v4395, 0
        %4402 = vmatprep.subr.bf16.mxu0 0
        %4403 = vmatpush1.bf16.xpose.msra.mxu0 %v4400
        %4404 = vmatprep.subr.bf16.mxu0 0
        %4405 = vmatpush1.bf16.xpose.msra.mxu0 0
        %4406 = vmatprep.subr.bf16.mxu0 0
        %4407 = vmatpush1.bf16.xpose.msra.mxu0 0
        %4408 = vmatprep.subr.bf16.mxu0 0
        %4409 = vmatpush1.bf16.xpose.msra.mxu0 0
        %4410 = vmatprep.subr.bf16.mxu0 0
        %4411 = vmatpush1.bf16.xpose.msra.mxu0 0
        %4412 = vmatprep.subr.bf16.mxu0 0
        %4413 = vmatpush1.bf16.xpose.msra.mxu0 0
        %4414 = vmatprep.subr.bf16.mxu0 0
        %4415 = vmatpush1.bf16.xpose.msra.mxu0 0
        %4416 = vmatprep.subr.bf16.mxu0 0
        %4417 = vmatpush1.bf16.xpose.msra.mxu0 0
        %4418 = vmatprep.subr.bf16.mxu0 0
        %4419 = vmatpush1.bf16.xpose.msra.mxu0 0
        %4420 = vmatprep.subr.bf16.mxu0 0
        %4421 = vmatpush1.bf16.xpose.msra.mxu0 0
        %4422 = vmatprep.subr.bf16.mxu0 0
        %4423 = vmatpush1.bf16.xpose.msra.mxu0 0
        %4424 = vmatprep.subr.bf16.mxu0 0
        %4425 = vmatpush1.bf16.xpose.msra.mxu0 0
        %4426 = vmatprep.subr.bf16.mxu0 0
        %4427 = vmatpush1.bf16.xpose.msra.mxu0 0
        %4428 = vmatprep.subr.bf16.mxu0 0
        %4429 = vmatpush1.bf16.xpose.msra.mxu0 0
        %4430 = vmatprep.subr.bf16.mxu0 0
        %4431 = vmatpush1.bf16.xpose.msra.mxu0 0
        %4432 = vmatprep.subr.bf16.mxu0 0
        %4433 = vmatpush1.bf16.xpose.msra.mxu0 0
        %4434 = vmatprep.mubr.bf16.mxu0 0
        %4435 = vmatmul.mubr.bf16.gmra.mrb[0].mxu0 %v4397
        %v4436 = vpop.f32.mrb[0].mxu0
        %v4437 = vadd.f32 0.0, %v4436
        %v4438 = vpop.f32.mrb[0].mxu0
        %v4439 = vpop.f32.mrb[0].mxu0
        %v4440 = vadd.f32 0.0, %v4439
        %v4441 = vpop.f32.mrb[0].mxu0
        %4442 = vdwg.mxu0
        %v4443 = vmul.f32 %v4386, 0.35355338
        %v4444 = vmul.f32 %v4389, 0.35355338
        %v4445 = vmul.f32 %v4437, 0.35355338
        %v4446 = vmul.f32 %v4440, 0.35355338
        %v4447 = vadd.f32 %v4443, %v3693
        %v4448 = vadd.f32 %v4444, %v3693
        %v4449 = vadd.f32 %v4445, %v3697
        %v4450 = vadd.f32 %v4446, %v3697
        %v4451 = vsel %vm3704, %v4447, -inf
        %4452 = vmax.xlane.f32.xlu0 %v4451
        %v4453 = vpop.xlane.xlu0 %4452
        %v4454 = vsel %vm3704, %v4448, -inf
        %4455 = vmax.xlane.f32.xlu0 %v4454
        %v4456 = vpop.xlane.xlu0 %4455
        %v4457 = vsel %vm3704, %v4449, -inf
        %4458 = vmax.xlane.f32.xlu0 %v4457
        %v4459 = vpop.xlane.xlu0 %4458
        %v4460 = vsel %vm3704, %v4450, -inf
        %4461 = vmax.xlane.f32.xlu0 %v4460
        %v4462 = vpop.xlane.xlu0 %4461
        %v4463 = vsub.f32 %v4447, %v4453
        %v4464 = vsub.f32 %v4448, %v4456
        %v4465 = vsub.f32 %v4449, %v4459
        %v4466 = vsub.f32 %v4450, %v4462
        %v4467 = vmul.f32 %v4463, 1.442695
        %v4468 = vpow.pop %v4467
        %v4469 = vmul.f32 %v4464, 1.442695
        %v4470 = vpow.pop %v4469
        %v4471 = vmul.f32 %v4465, 1.442695
        %v4472 = vpow.pop %v4471
        %v4473 = vmul.f32 %v4466, 1.442695
        %v4474 = vpow.pop %v4473
        %v4475 = vsel %vm3704, %v4468, 0.0
        %4476 = vadd.xlane.f32.xlu0 %v4475
        %v4477 = vpop.xlane.xlu0 %4476
        %v4478 = vsel %vm3704, %v4470, 0.0
        %4479 = vadd.xlane.f32.xlu0 %v4478
        %v4480 = vpop.xlane.xlu0 %4479
        %v4481 = vsel %vm3704, %v4472, 0.0
        %4482 = vadd.xlane.f32.xlu0 %v4481
        %v4483 = vpop.xlane.xlu0 %4482
        %v4484 = vsel %vm3704, %v4474, 0.0
        %4485 = vadd.xlane.f32.xlu0 %v4484
        %v4486 = vpop.xlane.xlu0 %4485
        %v4487 = vrcp.pop %v4477
        %v4488 = vrcp.pop %v4480
        %v4489 = vrcp.pop %v4483
        %v4490 = vrcp.pop %v4486
        %v4491 = vmul.f32 %v4468, %v4487
        %v4492 = vmul.f32 %v4470, %v4488
        %v4493 = vmul.f32 %v4472, %v4489
        %v4494 = vmul.f32 %v4474, %v4490
        %v4495 = vpack.c.bf16 %v4492, %v4491
        %v4496 = vpack.c.bf16 %v4494, %v4493
        %4497 = vrot.lane.b32.xlu0 %v3578, 104
        %v4498 = vpop.permute.xlu0 %4497
        %v4501 = vsel %vm3704, %v4495, 0
        %4503 = vmatprep.subr.bf16.mxu0 0
        %4504 = vmatpush1.bf16.msra.mxu0 %v4498
        %4505 = vmatprep.subr.bf16.mxu0 0
        %4506 = vmatpush1.bf16.msra.mxu0 0
        %4507 = vmatprep.subr.bf16.mxu0 0
        %4508 = vmatpush1.bf16.msra.mxu0 0
        %4509 = vmatprep.subr.bf16.mxu0 0
        %4510 = vmatpush1.bf16.msra.mxu0 0
        %4511 = vmatprep.subr.bf16.mxu0 0
        %4512 = vmatpush1.bf16.msra.mxu0 0
        %4513 = vmatprep.subr.bf16.mxu0 0
        %4514 = vmatpush1.bf16.msra.mxu0 0
        %4515 = vmatprep.subr.bf16.mxu0 0
        %4516 = vmatpush1.bf16.msra.mxu0 0
        %4517 = vmatprep.subr.bf16.mxu0 0
        %4518 = vmatpush1.bf16.msra.mxu0 0
        %4519 = vmatprep.subr.bf16.mxu0 0
        %4520 = vmatpush1.bf16.msra.mxu0 0
        %4521 = vmatprep.subr.bf16.mxu0 0
        %4522 = vmatpush1.bf16.msra.mxu0 0
        %4523 = vmatprep.subr.bf16.mxu0 0
        %4524 = vmatpush1.bf16.msra.mxu0 0
        %4525 = vmatprep.subr.bf16.mxu0 0
        %4526 = vmatpush1.bf16.msra.mxu0 0
        %4527 = vmatprep.subr.bf16.mxu0 0
        %4528 = vmatpush1.bf16.msra.mxu0 0
        %4529 = vmatprep.subr.bf16.mxu0 0
        %4530 = vmatpush1.bf16.msra.mxu0 0
        %4531 = vmatprep.subr.bf16.mxu0 0
        %4532 = vmatpush1.bf16.msra.mxu0 0
        %4533 = vmatprep.subr.bf16.mxu0 0
        %4534 = vmatpush1.bf16.msra.mxu0 0
        %4535 = vmatprep.mubr.bf16.mxu0 0
        %4536 = vmatmul.mubr.bf16.gmra.mrb[0].mxu0 %v4501
        %v4537 = vpop.f32.mrb[0].mxu0
        %v4538 = vadd.f32 0.0, %v4537
        %v4539 = vpop.f32.mrb[0].mxu0
        %v4540 = vpop.f32.mrb[0].mxu0
        %v4541 = vadd.f32 0.0, %v4540
        %v4542 = vpop.f32.mrb[0].mxu0
        %4543 = vdwg.mxu0
        %4544 = vrot.lane.b32.xlu0 %v3580, 104
        %v4545 = vpop.permute.xlu0 %4544
        %v4548 = vsel %vm3704, %v4496, 0
        %4550 = vmatprep.subr.bf16.mxu0 0
        %4551 = vmatpush1.bf16.msra.mxu0 %v4545
        %4552 = vmatprep.subr.bf16.mxu0 0
        %4553 = vmatpush1.bf16.msra.mxu0 0
        %4554 = vmatprep.subr.bf16.mxu0 0
        %4555 = vmatpush1.bf16.msra.mxu0 0
        %4556 = vmatprep.subr.bf16.mxu0 0
        %4557 = vmatpush1.bf16.msra.mxu0 0
        %4558 = vmatprep.subr.bf16.mxu0 0
        %4559 = vmatpush1.bf16.msra.mxu0 0
        %4560 = vmatprep.subr.bf16.mxu0 0
        %4561 = vmatpush1.bf16.msra.mxu0 0
        %4562 = vmatprep.subr.bf16.mxu0 0
        %4563 = vmatpush1.bf16.msra.mxu0 0
        %4564 = vmatprep.subr.bf16.mxu0 0
        %4565 = vmatpush1.bf16.msra.mxu0 0
        %4566 = vmatprep.subr.bf16.mxu0 0
        %4567 = vmatpush1.bf16.msra.mxu0 0
        %4568 = vmatprep.subr.bf16.mxu0 0
        %4569 = vmatpush1.bf16.msra.mxu0 0
        %4570 = vmatprep.subr.bf16.mxu0 0
        %4571 = vmatpush1.bf16.msra.mxu0 0
        %4572 = vmatprep.subr.bf16.mxu0 0
        %4573 = vmatpush1.bf16.msra.mxu0 0
        %4574 = vmatprep.subr.bf16.mxu0 0
        %4575 = vmatpush1.bf16.msra.mxu0 0
        %4576 = vmatprep.subr.bf16.mxu0 0
        %4577 = vmatpush1.bf16.msra.mxu0 0
        %4578 = vmatprep.subr.bf16.mxu0 0
        %4579 = vmatpush1.bf16.msra.mxu0 0
        %4580 = vmatprep.subr.bf16.mxu0 0
        %4581 = vmatpush1.bf16.msra.mxu0 0
        %4582 = vmatprep.mubr.bf16.mxu0 0
        %4583 = vmatmul.mubr.bf16.gmra.mrb[0].mxu0 %v4548
        %v4584 = vpop.f32.mrb[0].mxu0
        %v4585 = vadd.f32 0.0, %v4584
        %v4586 = vpop.f32.mrb[0].mxu0
        %v4587 = vpop.f32.mrb[0].mxu0
        %v4588 = vadd.f32 0.0, %v4587
        %v4589 = vpop.f32.mrb[0].mxu0
        %4590 = vdwg.mxu0
        %4591 = vrot.lane.b32.xlu0 %v3577, 96
        %v4592 = vpop.permute.xlu0 %4591
        %4593 = vrot.lane.b32.xlu0 %v3577, 32
        %v4594 = vpop.permute.xlu0 %4593
        %v4596 = vsel %vm3586, %v4592, 0
        %v4599 = vsel %vm3586, %v4594, 0
        %4601 = vmatprep.subr.bf16.mxu0 0
        %4602 = vmatpush1.bf16.xpose.msra.mxu0 %v4599
        %4603 = vmatprep.subr.bf16.mxu0 0
        %4604 = vmatpush1.bf16.xpose.msra.mxu0 0
        %4605 = vmatprep.subr.bf16.mxu0 0
        %4606 = vmatpush1.bf16.xpose.msra.mxu0 0
        %4607 = vmatprep.subr.bf16.mxu0 0
        %4608 = vmatpush1.bf16.xpose.msra.mxu0 0
        %4609 = vmatprep.subr.bf16.mxu0 0
        %4610 = vmatpush1.bf16.xpose.msra.mxu0 0
        %4611 = vmatprep.subr.bf16.mxu0 0
        %4612 = vmatpush1.bf16.xpose.msra.mxu0 0
        %4613 = vmatprep.subr.bf16.mxu0 0
        %4614 = vmatpush1.bf16.xpose.msra.mxu0 0
        %4615 = vmatprep.subr.bf16.mxu0 0
        %4616 = vmatpush1.bf16.xpose.msra.mxu0 0
        %4617 = vmatprep.subr.bf16.mxu0 0
        %4618 = vmatpush1.bf16.xpose.msra.mxu0 0
        %4619 = vmatprep.subr.bf16.mxu0 0
        %4620 = vmatpush1.bf16.xpose.msra.mxu0 0
        %4621 = vmatprep.subr.bf16.mxu0 0
        %4622 = vmatpush1.bf16.xpose.msra.mxu0 0
        %4623 = vmatprep.subr.bf16.mxu0 0
        %4624 = vmatpush1.bf16.xpose.msra.mxu0 0
        %4625 = vmatprep.subr.bf16.mxu0 0
        %4626 = vmatpush1.bf16.xpose.msra.mxu0 0
        %4627 = vmatprep.subr.bf16.mxu0 0
        %4628 = vmatpush1.bf16.xpose.msra.mxu0 0
        %4629 = vmatprep.subr.bf16.mxu0 0
        %4630 = vmatpush1.bf16.xpose.msra.mxu0 0
        %4631 = vmatprep.subr.bf16.mxu0 0
        %4632 = vmatpush1.bf16.xpose.msra.mxu0 0
        %4633 = vmatprep.mubr.bf16.mxu0 0
        %4634 = vmatmul.mubr.bf16.gmra.mrb[0].mxu0 %v4596
        %v4635 = vpop.f32.mrb[0].mxu0
        %v4636 = vadd.f32 0.0, %v4635
        %v4637 = vpop.f32.mrb[0].mxu0
        %v4638 = vpop.f32.mrb[0].mxu0
        %v4639 = vadd.f32 0.0, %v4638
        %v4640 = vpop.f32.mrb[0].mxu0
        %4641 = vdwg.mxu0
        %4642 = vrot.lane.b32.xlu0 %v3579, 96
        %v4643 = vpop.permute.xlu0 %4642
        %4644 = vrot.lane.b32.xlu0 %v3579, 32
        %v4645 = vpop.permute.xlu0 %4644
        %v4647 = vsel %vm3586, %v4643, 0
        %v4650 = vsel %vm3586, %v4645, 0
        %4652 = vmatprep.subr.bf16.mxu0 0
        %4653 = vmatpush1.bf16.xpose.msra.mxu0 %v4650
        %4654 = vmatprep.subr.bf16.mxu0 0
        %4655 = vmatpush1.bf16.xpose.msra.mxu0 0
        %4656 = vmatprep.subr.bf16.mxu0 0
        %4657 = vmatpush1.bf16.xpose.msra.mxu0 0
        %4658 = vmatprep.subr.bf16.mxu0 0
        %4659 = vmatpush1.bf16.xpose.msra.mxu0 0
        %4660 = vmatprep.subr.bf16.mxu0 0
        %4661 = vmatpush1.bf16.xpose.msra.mxu0 0
        %4662 = vmatprep.subr.bf16.mxu0 0
        %4663 = vmatpush1.bf16.xpose.msra.mxu0 0
        %4664 = vmatprep.subr.bf16.mxu0 0
        %4665 = vmatpush1.bf16.xpose.msra.mxu0 0
        %4666 = vmatprep.subr.bf16.mxu0 0
        %4667 = vmatpush1.bf16.xpose.msra.mxu0 0
        %4668 = vmatprep.subr.bf16.mxu0 0
        %4669 = vmatpush1.bf16.xpose.msra.mxu0 0
        %4670 = vmatprep.subr.bf16.mxu0 0
        %4671 = vmatpush1.bf16.xpose.msra.mxu0 0
        %4672 = vmatprep.subr.bf16.mxu0 0
        %4673 = vmatpush1.bf16.xpose.msra.mxu0 0
        %4674 = vmatprep.subr.bf16.mxu0 0
        %4675 = vmatpush1.bf16.xpose.msra.mxu0 0
        %4676 = vmatprep.subr.bf16.mxu0 0
        %4677 = vmatpush1.bf16.xpose.msra.mxu0 0
        %4678 = vmatprep.subr.bf16.mxu0 0
        %4679 = vmatpush1.bf16.xpose.msra.mxu0 0
        %4680 = vmatprep.subr.bf16.mxu0 0
        %4681 = vmatpush1.bf16.xpose.msra.mxu0 0
        %4682 = vmatprep.subr.bf16.mxu0 0
        %4683 = vmatpush1.bf16.xpose.msra.mxu0 0
        %4684 = vmatprep.mubr.bf16.mxu0 0
        %4685 = vmatmul.mubr.bf16.gmra.mrb[0].mxu0 %v4647
        %v4686 = vpop.f32.mrb[0].mxu0
        %v4687 = vadd.f32 0.0, %v4686
        %v4688 = vpop.f32.mrb[0].mxu0
        %v4689 = vpop.f32.mrb[0].mxu0
        %v4690 = vadd.f32 0.0, %v4689
        %v4691 = vpop.f32.mrb[0].mxu0
        %4692 = vdwg.mxu0
        %v4693 = vmul.f32 %v4636, 0.35355338
        %v4694 = vmul.f32 %v4639, 0.35355338
        %v4695 = vmul.f32 %v4687, 0.35355338
        %v4696 = vmul.f32 %v4690, 0.35355338
        %v4697 = vadd.f32 %v4693, %v3693
        %v4698 = vadd.f32 %v4694, %v3693
        %v4699 = vadd.f32 %v4695, %v3697
        %v4700 = vadd.f32 %v4696, %v3697
        %v4701 = vsel %vm3704, %v4697, -inf
        %4702 = vmax.xlane.f32.xlu0 %v4701
        %v4703 = vpop.xlane.xlu0 %4702
        %v4704 = vsel %vm3704, %v4698, -inf
        %4705 = vmax.xlane.f32.xlu0 %v4704
        %v4706 = vpop.xlane.xlu0 %4705
        %v4707 = vsel %vm3704, %v4699, -inf
        %4708 = vmax.xlane.f32.xlu0 %v4707
        %v4709 = vpop.xlane.xlu0 %4708
        %v4710 = vsel %vm3704, %v4700, -inf
        %4711 = vmax.xlane.f32.xlu0 %v4710
        %v4712 = vpop.xlane.xlu0 %4711
        %v4713 = vsub.f32 %v4697, %v4703
        %v4714 = vsub.f32 %v4698, %v4706
        %v4715 = vsub.f32 %v4699, %v4709
        %v4716 = vsub.f32 %v4700, %v4712
        %v4717 = vmul.f32 %v4713, 1.442695
        %v4718 = vpow.pop %v4717
        %v4719 = vmul.f32 %v4714, 1.442695
        %v4720 = vpow.pop %v4719
        %v4721 = vmul.f32 %v4715, 1.442695
        %v4722 = vpow.pop %v4721
        %v4723 = vmul.f32 %v4716, 1.442695
        %v4724 = vpow.pop %v4723
        %v4725 = vsel %vm3704, %v4718, 0.0
        %4726 = vadd.xlane.f32.xlu0 %v4725
        %v4727 = vpop.xlane.xlu0 %4726
        %v4728 = vsel %vm3704, %v4720, 0.0
        %4729 = vadd.xlane.f32.xlu0 %v4728
        %v4730 = vpop.xlane.xlu0 %4729
        %v4731 = vsel %vm3704, %v4722, 0.0
        %4732 = vadd.xlane.f32.xlu0 %v4731
        %v4733 = vpop.xlane.xlu0 %4732
        %v4734 = vsel %vm3704, %v4724, 0.0
        %4735 = vadd.xlane.f32.xlu0 %v4734
        %v4736 = vpop.xlane.xlu0 %4735
        %v4737 = vrcp.pop %v4727
        %v4738 = vrcp.pop %v4730
        %v4739 = vrcp.pop %v4733
        %v4740 = vrcp.pop %v4736
        %v4741 = vmul.f32 %v4718, %v4737
        %v4742 = vmul.f32 %v4720, %v4738
        %v4743 = vmul.f32 %v4722, %v4739
        %v4744 = vmul.f32 %v4724, %v4740
        %v4745 = vpack.c.bf16 %v4742, %v4741
        %v4746 = vpack.c.bf16 %v4744, %v4743
        %4747 = vrot.lane.b32.xlu0 %v3578, 96
        %v4748 = vpop.permute.xlu0 %4747
        %v4751 = vsel %vm3704, %v4745, 0
        %4753 = vmatprep.subr.bf16.mxu0 0
        %4754 = vmatpush1.bf16.msra.mxu0 %v4748
        %4755 = vmatprep.subr.bf16.mxu0 0
        %4756 = vmatpush1.bf16.msra.mxu0 0
        %4757 = vmatprep.subr.bf16.mxu0 0
        %4758 = vmatpush1.bf16.msra.mxu0 0
        %4759 = vmatprep.subr.bf16.mxu0 0
        %4760 = vmatpush1.bf16.msra.mxu0 0
        %4761 = vmatprep.subr.bf16.mxu0 0
        %4762 = vmatpush1.bf16.msra.mxu0 0
        %4763 = vmatprep.subr.bf16.mxu0 0
        %4764 = vmatpush1.bf16.msra.mxu0 0
        %4765 = vmatprep.subr.bf16.mxu0 0
        %4766 = vmatpush1.bf16.msra.mxu0 0
        %4767 = vmatprep.subr.bf16.mxu0 0
        %4768 = vmatpush1.bf16.msra.mxu0 0
        %4769 = vmatprep.subr.bf16.mxu0 0
        %4770 = vmatpush1.bf16.msra.mxu0 0
        %4771 = vmatprep.subr.bf16.mxu0 0
        %4772 = vmatpush1.bf16.msra.mxu0 0
        %4773 = vmatprep.subr.bf16.mxu0 0
        %4774 = vmatpush1.bf16.msra.mxu0 0
        %4775 = vmatprep.subr.bf16.mxu0 0
        %4776 = vmatpush1.bf16.msra.mxu0 0
        %4777 = vmatprep.subr.bf16.mxu0 0
        %4778 = vmatpush1.bf16.msra.mxu0 0
        %4779 = vmatprep.subr.bf16.mxu0 0
        %4780 = vmatpush1.bf16.msra.mxu0 0
        %4781 = vmatprep.subr.bf16.mxu0 0
        %4782 = vmatpush1.bf16.msra.mxu0 0
        %4783 = vmatprep.subr.bf16.mxu0 0
        %4784 = vmatpush1.bf16.msra.mxu0 0
        %4785 = vmatprep.mubr.bf16.mxu0 0
        %4786 = vmatmul.mubr.bf16.gmra.mrb[0].mxu0 %v4751
        %v4787 = vpop.f32.mrb[0].mxu0
        %v4788 = vadd.f32 0.0, %v4787
        %v4789 = vpop.f32.mrb[0].mxu0
        %v4790 = vpop.f32.mrb[0].mxu0
        %v4791 = vadd.f32 0.0, %v4790
        %v4792 = vpop.f32.mrb[0].mxu0
        %4793 = vdwg.mxu0
        %4794 = vrot.lane.b32.xlu0 %v3580, 96
        %v4795 = vpop.permute.xlu0 %4794
        %v4798 = vsel %vm3704, %v4746, 0
        %4800 = vmatprep.subr.bf16.mxu0 0
        %4801 = vmatpush1.bf16.msra.mxu0 %v4795
        %4802 = vmatprep.subr.bf16.mxu0 0
        %4803 = vmatpush1.bf16.msra.mxu0 0
        %4804 = vmatprep.subr.bf16.mxu0 0
        %4805 = vmatpush1.bf16.msra.mxu0 0
        %4806 = vmatprep.subr.bf16.mxu0 0
        %4807 = vmatpush1.bf16.msra.mxu0 0
        %4808 = vmatprep.subr.bf16.mxu0 0
        %4809 = vmatpush1.bf16.msra.mxu0 0
        %4810 = vmatprep.subr.bf16.mxu0 0
        %4811 = vmatpush1.bf16.msra.mxu0 0
        %4812 = vmatprep.subr.bf16.mxu0 0
        %4813 = vmatpush1.bf16.msra.mxu0 0
        %4814 = vmatprep.subr.bf16.mxu0 0
        %4815 = vmatpush1.bf16.msra.mxu0 0
        %4816 = vmatprep.subr.bf16.mxu0 0
        %4817 = vmatpush1.bf16.msra.mxu0 0
        %4818 = vmatprep.subr.bf16.mxu0 0
        %4819 = vmatpush1.bf16.msra.mxu0 0
        %4820 = vmatprep.subr.bf16.mxu0 0
        %4821 = vmatpush1.bf16.msra.mxu0 0
        %4822 = vmatprep.subr.bf16.mxu0 0
        %4823 = vmatpush1.bf16.msra.mxu0 0
        %4824 = vmatprep.subr.bf16.mxu0 0
        %4825 = vmatpush1.bf16.msra.mxu0 0
        %4826 = vmatprep.subr.bf16.mxu0 0
        %4827 = vmatpush1.bf16.msra.mxu0 0
        %4828 = vmatprep.subr.bf16.mxu0 0
        %4829 = vmatpush1.bf16.msra.mxu0 0
        %4830 = vmatprep.subr.bf16.mxu0 0
        %4831 = vmatpush1.bf16.msra.mxu0 0
        %4832 = vmatprep.mubr.bf16.mxu0 0
        %4833 = vmatmul.mubr.bf16.gmra.mrb[0].mxu0 %v4798
        %v4834 = vpop.f32.mrb[0].mxu0
        %v4835 = vadd.f32 0.0, %v4834
        %v4836 = vpop.f32.mrb[0].mxu0
        %v4837 = vpop.f32.mrb[0].mxu0
        %v4838 = vadd.f32 0.0, %v4837
        %v4839 = vpop.f32.mrb[0].mxu0
        %4840 = vdwg.mxu0
        %4841 = vrot.lane.b32.xlu0 %v3577, 88
        %v4842 = vpop.permute.xlu0 %4841
        %4843 = vrot.lane.b32.xlu0 %v3577, 24
        %v4844 = vpop.permute.xlu0 %4843
        %v4846 = vsel %vm3586, %v4842, 0
        %v4849 = vsel %vm3586, %v4844, 0
        %4851 = vmatprep.subr.bf16.mxu0 0
        %4852 = vmatpush1.bf16.xpose.msra.mxu0 %v4849
        %4853 = vmatprep.subr.bf16.mxu0 0
        %4854 = vmatpush1.bf16.xpose.msra.mxu0 0
        %4855 = vmatprep.subr.bf16.mxu0 0
        %4856 = vmatpush1.bf16.xpose.msra.mxu0 0
        %4857 = vmatprep.subr.bf16.mxu0 0
        %4858 = vmatpush1.bf16.xpose.msra.mxu0 0
        %4859 = vmatprep.subr.bf16.mxu0 0
        %4860 = vmatpush1.bf16.xpose.msra.mxu0 0
        %4861 = vmatprep.subr.bf16.mxu0 0
        %4862 = vmatpush1.bf16.xpose.msra.mxu0 0
        %4863 = vmatprep.subr.bf16.mxu0 0
        %4864 = vmatpush1.bf16.xpose.msra.mxu0 0
        %4865 = vmatprep.subr.bf16.mxu0 0
        %4866 = vmatpush1.bf16.xpose.msra.mxu0 0
        %4867 = vmatprep.subr.bf16.mxu0 0
        %4868 = vmatpush1.bf16.xpose.msra.mxu0 0
        %4869 = vmatprep.subr.bf16.mxu0 0
        %4870 = vmatpush1.bf16.xpose.msra.mxu0 0
        %4871 = vmatprep.subr.bf16.mxu0 0
        %4872 = vmatpush1.bf16.xpose.msra.mxu0 0
        %4873 = vmatprep.subr.bf16.mxu0 0
        %4874 = vmatpush1.bf16.xpose.msra.mxu0 0
        %4875 = vmatprep.subr.bf16.mxu0 0
        %4876 = vmatpush1.bf16.xpose.msra.mxu0 0
        %4877 = vmatprep.subr.bf16.mxu0 0
        %4878 = vmatpush1.bf16.xpose.msra.mxu0 0
        %4879 = vmatprep.subr.bf16.mxu0 0
        %4880 = vmatpush1.bf16.xpose.msra.mxu0 0
        %4881 = vmatprep.subr.bf16.mxu0 0
        %4882 = vmatpush1.bf16.xpose.msra.mxu0 0
        %4883 = vmatprep.mubr.bf16.mxu0 0
        %4884 = vmatmul.mubr.bf16.gmra.mrb[0].mxu0 %v4846
        %v4885 = vpop.f32.mrb[0].mxu0
        %v4886 = vadd.f32 0.0, %v4885
        %v4887 = vpop.f32.mrb[0].mxu0
        %v4888 = vpop.f32.mrb[0].mxu0
        %v4889 = vadd.f32 0.0, %v4888
        %v4890 = vpop.f32.mrb[0].mxu0
        %4891 = vdwg.mxu0
        %4892 = vrot.lane.b32.xlu0 %v3579, 88
        %v4893 = vpop.permute.xlu0 %4892
        %4894 = vrot.lane.b32.xlu0 %v3579, 24
        %v4895 = vpop.permute.xlu0 %4894
        %v4897 = vsel %vm3586, %v4893, 0
        %v4900 = vsel %vm3586, %v4895, 0
        %4902 = vmatprep.subr.bf16.mxu0 0
        %4903 = vmatpush1.bf16.xpose.msra.mxu0 %v4900
        %4904 = vmatprep.subr.bf16.mxu0 0
        %4905 = vmatpush1.bf16.xpose.msra.mxu0 0
        %4906 = vmatprep.subr.bf16.mxu0 0
        %4907 = vmatpush1.bf16.xpose.msra.mxu0 0
        %4908 = vmatprep.subr.bf16.mxu0 0
        %4909 = vmatpush1.bf16.xpose.msra.mxu0 0
        %4910 = vmatprep.subr.bf16.mxu0 0
        %4911 = vmatpush1.bf16.xpose.msra.mxu0 0
        %4912 = vmatprep.subr.bf16.mxu0 0
        %4913 = vmatpush1.bf16.xpose.msra.mxu0 0
        %4914 = vmatprep.subr.bf16.mxu0 0
        %4915 = vmatpush1.bf16.xpose.msra.mxu0 0
        %4916 = vmatprep.subr.bf16.mxu0 0
        %4917 = vmatpush1.bf16.xpose.msra.mxu0 0
        %4918 = vmatprep.subr.bf16.mxu0 0
        %4919 = vmatpush1.bf16.xpose.msra.mxu0 0
        %4920 = vmatprep.subr.bf16.mxu0 0
        %4921 = vmatpush1.bf16.xpose.msra.mxu0 0
        %4922 = vmatprep.subr.bf16.mxu0 0
        %4923 = vmatpush1.bf16.xpose.msra.mxu0 0
        %4924 = vmatprep.subr.bf16.mxu0 0
        %4925 = vmatpush1.bf16.xpose.msra.mxu0 0
        %4926 = vmatprep.subr.bf16.mxu0 0
        %4927 = vmatpush1.bf16.xpose.msra.mxu0 0
        %4928 = vmatprep.subr.bf16.mxu0 0
        %4929 = vmatpush1.bf16.xpose.msra.mxu0 0
        %4930 = vmatprep.subr.bf16.mxu0 0
        %4931 = vmatpush1.bf16.xpose.msra.mxu0 0
        %4932 = vmatprep.subr.bf16.mxu0 0
        %4933 = vmatpush1.bf16.xpose.msra.mxu0 0
        %4934 = vmatprep.mubr.bf16.mxu0 0
        %4935 = vmatmul.mubr.bf16.gmra.mrb[0].mxu0 %v4897
        %v4936 = vpop.f32.mrb[0].mxu0
        %v4937 = vadd.f32 0.0, %v4936
        %v4938 = vpop.f32.mrb[0].mxu0
        %v4939 = vpop.f32.mrb[0].mxu0
        %v4940 = vadd.f32 0.0, %v4939
        %v4941 = vpop.f32.mrb[0].mxu0
        %4942 = vdwg.mxu0
        %v4943 = vmul.f32 %v4886, 0.35355338
        %v4944 = vmul.f32 %v4889, 0.35355338
        %v4945 = vmul.f32 %v4937, 0.35355338
        %v4946 = vmul.f32 %v4940, 0.35355338
        %v4947 = vadd.f32 %v4943, %v3693
        %v4948 = vadd.f32 %v4944, %v3693
        %v4949 = vadd.f32 %v4945, %v3697
        %v4950 = vadd.f32 %v4946, %v3697
        %v4951 = vsel %vm3704, %v4947, -inf
        %4952 = vmax.xlane.f32.xlu0 %v4951
        %v4953 = vpop.xlane.xlu0 %4952
        %v4954 = vsel %vm3704, %v4948, -inf
        %4955 = vmax.xlane.f32.xlu0 %v4954
        %v4956 = vpop.xlane.xlu0 %4955
        %v4957 = vsel %vm3704, %v4949, -inf
        %4958 = vmax.xlane.f32.xlu0 %v4957
        %v4959 = vpop.xlane.xlu0 %4958
        %v4960 = vsel %vm3704, %v4950, -inf
        %4961 = vmax.xlane.f32.xlu0 %v4960
        %v4962 = vpop.xlane.xlu0 %4961
        %v4963 = vsub.f32 %v4947, %v4953
        %v4964 = vsub.f32 %v4948, %v4956
        %v4965 = vsub.f32 %v4949, %v4959
        %v4966 = vsub.f32 %v4950, %v4962
        %v4967 = vmul.f32 %v4963, 1.442695
        %v4968 = vpow.pop %v4967
        %v4969 = vmul.f32 %v4964, 1.442695
        %v4970 = vpow.pop %v4969
        %v4971 = vmul.f32 %v4965, 1.442695
        %v4972 = vpow.pop %v4971
        %v4973 = vmul.f32 %v4966, 1.442695
        %v4974 = vpow.pop %v4973
        %v4975 = vsel %vm3704, %v4968, 0.0
        %4976 = vadd.xlane.f32.xlu0 %v4975
        %v4977 = vpop.xlane.xlu0 %4976
        %v4978 = vsel %vm3704, %v4970, 0.0
        %4979 = vadd.xlane.f32.xlu0 %v4978
        %v4980 = vpop.xlane.xlu0 %4979
        %v4981 = vsel %vm3704, %v4972, 0.0
        %4982 = vadd.xlane.f32.xlu0 %v4981
        %v4983 = vpop.xlane.xlu0 %4982
        %v4984 = vsel %vm3704, %v4974, 0.0
        %4985 = vadd.xlane.f32.xlu0 %v4984
        %v4986 = vpop.xlane.xlu0 %4985
        %v4987 = vrcp.pop %v4977
        %v4988 = vrcp.pop %v4980
        %v4989 = vrcp.pop %v4983
        %v4990 = vrcp.pop %v4986
        %v4991 = vmul.f32 %v4968, %v4987
        %v4992 = vmul.f32 %v4970, %v4988
        %v4993 = vmul.f32 %v4972, %v4989
        %v4994 = vmul.f32 %v4974, %v4990
        %v4995 = vpack.c.bf16 %v4992, %v4991
        %v4996 = vpack.c.bf16 %v4994, %v4993
        %4997 = vrot.lane.b32.xlu0 %v3578, 88
        %v4998 = vpop.permute.xlu0 %4997
        %v5001 = vsel %vm3704, %v4995, 0
        %5003 = vmatprep.subr.bf16.mxu0 0
        %5004 = vmatpush1.bf16.msra.mxu0 %v4998
        %5005 = vmatprep.subr.bf16.mxu0 0
        %5006 = vmatpush1.bf16.msra.mxu0 0
        %5007 = vmatprep.subr.bf16.mxu0 0
        %5008 = vmatpush1.bf16.msra.mxu0 0
        %5009 = vmatprep.subr.bf16.mxu0 0
        %5010 = vmatpush1.bf16.msra.mxu0 0
        %5011 = vmatprep.subr.bf16.mxu0 0
        %5012 = vmatpush1.bf16.msra.mxu0 0
        %5013 = vmatprep.subr.bf16.mxu0 0
        %5014 = vmatpush1.bf16.msra.mxu0 0
        %5015 = vmatprep.subr.bf16.mxu0 0
        %5016 = vmatpush1.bf16.msra.mxu0 0
        %5017 = vmatprep.subr.bf16.mxu0 0
        %5018 = vmatpush1.bf16.msra.mxu0 0
        %5019 = vmatprep.subr.bf16.mxu0 0
        %5020 = vmatpush1.bf16.msra.mxu0 0
        %5021 = vmatprep.subr.bf16.mxu0 0
        %5022 = vmatpush1.bf16.msra.mxu0 0
        %5023 = vmatprep.subr.bf16.mxu0 0
        %5024 = vmatpush1.bf16.msra.mxu0 0
        %5025 = vmatprep.subr.bf16.mxu0 0
        %5026 = vmatpush1.bf16.msra.mxu0 0
        %5027 = vmatprep.subr.bf16.mxu0 0
        %5028 = vmatpush1.bf16.msra.mxu0 0
        %5029 = vmatprep.subr.bf16.mxu0 0
        %5030 = vmatpush1.bf16.msra.mxu0 0
        %5031 = vmatprep.subr.bf16.mxu0 0
        %5032 = vmatpush1.bf16.msra.mxu0 0
        %5033 = vmatprep.subr.bf16.mxu0 0
        %5034 = vmatpush1.bf16.msra.mxu0 0
        %5035 = vmatprep.mubr.bf16.mxu0 0
        %5036 = vmatmul.mubr.bf16.gmra.mrb[0].mxu0 %v5001
        %v5037 = vpop.f32.mrb[0].mxu0
        %v5038 = vadd.f32 0.0, %v5037
        %v5039 = vpop.f32.mrb[0].mxu0
        %v5040 = vpop.f32.mrb[0].mxu0
        %v5041 = vadd.f32 0.0, %v5040
        %v5042 = vpop.f32.mrb[0].mxu0
        %5043 = vdwg.mxu0
        %5044 = vrot.lane.b32.xlu0 %v3580, 88
        %v5045 = vpop.permute.xlu0 %5044
        %v5048 = vsel %vm3704, %v4996, 0
        %5050 = vmatprep.subr.bf16.mxu0 0
        %5051 = vmatpush1.bf16.msra.mxu0 %v5045
        %5052 = vmatprep.subr.bf16.mxu0 0
        %5053 = vmatpush1.bf16.msra.mxu0 0
        %5054 = vmatprep.subr.bf16.mxu0 0
        %5055 = vmatpush1.bf16.msra.mxu0 0
        %5056 = vmatprep.subr.bf16.mxu0 0
        %5057 = vmatpush1.bf16.msra.mxu0 0
        %5058 = vmatprep.subr.bf16.mxu0 0
        %5059 = vmatpush1.bf16.msra.mxu0 0
        %5060 = vmatprep.subr.bf16.mxu0 0
        %5061 = vmatpush1.bf16.msra.mxu0 0
        %5062 = vmatprep.subr.bf16.mxu0 0
        %5063 = vmatpush1.bf16.msra.mxu0 0
        %5064 = vmatprep.subr.bf16.mxu0 0
        %5065 = vmatpush1.bf16.msra.mxu0 0
        %5066 = vmatprep.subr.bf16.mxu0 0
        %5067 = vmatpush1.bf16.msra.mxu0 0
        %5068 = vmatprep.subr.bf16.mxu0 0
        %5069 = vmatpush1.bf16.msra.mxu0 0
        %5070 = vmatprep.subr.bf16.mxu0 0
        %5071 = vmatpush1.bf16.msra.mxu0 0
        %5072 = vmatprep.subr.bf16.mxu0 0
        %5073 = vmatpush1.bf16.msra.mxu0 0
        %5074 = vmatprep.subr.bf16.mxu0 0
        %5075 = vmatpush1.bf16.msra.mxu0 0
        %5076 = vmatprep.subr.bf16.mxu0 0
        %5077 = vmatpush1.bf16.msra.mxu0 0
        %5078 = vmatprep.subr.bf16.mxu0 0
        %5079 = vmatpush1.bf16.msra.mxu0 0
        %5080 = vmatprep.subr.bf16.mxu0 0
        %5081 = vmatpush1.bf16.msra.mxu0 0
        %5082 = vmatprep.mubr.bf16.mxu0 0
        %5083 = vmatmul.mubr.bf16.gmra.mrb[0].mxu0 %v5048
        %v5084 = vpop.f32.mrb[0].mxu0
        %v5085 = vadd.f32 0.0, %v5084
        %v5086 = vpop.f32.mrb[0].mxu0
        %v5087 = vpop.f32.mrb[0].mxu0
        %v5088 = vadd.f32 0.0, %v5087
        %v5089 = vpop.f32.mrb[0].mxu0
        %5090 = vdwg.mxu0
        %5091 = vrot.lane.b32.xlu0 %v3577, 80
        %v5092 = vpop.permute.xlu0 %5091
        %5093 = vrot.lane.b32.xlu0 %v3577, 16
        %v5094 = vpop.permute.xlu0 %5093
        %v5096 = vsel %vm3586, %v5092, 0
        %v5099 = vsel %vm3586, %v5094, 0
        %5101 = vmatprep.subr.bf16.mxu0 0
        %5102 = vmatpush1.bf16.xpose.msra.mxu0 %v5099
        %5103 = vmatprep.subr.bf16.mxu0 0
        %5104 = vmatpush1.bf16.xpose.msra.mxu0 0
        %5105 = vmatprep.subr.bf16.mxu0 0
        %5106 = vmatpush1.bf16.xpose.msra.mxu0 0
        %5107 = vmatprep.subr.bf16.mxu0 0
        %5108 = vmatpush1.bf16.xpose.msra.mxu0 0
        %5109 = vmatprep.subr.bf16.mxu0 0
        %5110 = vmatpush1.bf16.xpose.msra.mxu0 0
        %5111 = vmatprep.subr.bf16.mxu0 0
        %5112 = vmatpush1.bf16.xpose.msra.mxu0 0
        %5113 = vmatprep.subr.bf16.mxu0 0
        %5114 = vmatpush1.bf16.xpose.msra.mxu0 0
        %5115 = vmatprep.subr.bf16.mxu0 0
        %5116 = vmatpush1.bf16.xpose.msra.mxu0 0
        %5117 = vmatprep.subr.bf16.mxu0 0
        %5118 = vmatpush1.bf16.xpose.msra.mxu0 0
        %5119 = vmatprep.subr.bf16.mxu0 0
        %5120 = vmatpush1.bf16.xpose.msra.mxu0 0
        %5121 = vmatprep.subr.bf16.mxu0 0
        %5122 = vmatpush1.bf16.xpose.msra.mxu0 0
        %5123 = vmatprep.subr.bf16.mxu0 0
        %5124 = vmatpush1.bf16.xpose.msra.mxu0 0
        %5125 = vmatprep.subr.bf16.mxu0 0
        %5126 = vmatpush1.bf16.xpose.msra.mxu0 0
        %5127 = vmatprep.subr.bf16.mxu0 0
        %5128 = vmatpush1.bf16.xpose.msra.mxu0 0
        %5129 = vmatprep.subr.bf16.mxu0 0
        %5130 = vmatpush1.bf16.xpose.msra.mxu0 0
        %5131 = vmatprep.subr.bf16.mxu0 0
        %5132 = vmatpush1.bf16.xpose.msra.mxu0 0
        %5133 = vmatprep.mubr.bf16.mxu0 0
        %5134 = vmatmul.mubr.bf16.gmra.mrb[0].mxu0 %v5096
        %v5135 = vpop.f32.mrb[0].mxu0
        %v5136 = vadd.f32 0.0, %v5135
        %v5137 = vpop.f32.mrb[0].mxu0
        %v5138 = vpop.f32.mrb[0].mxu0
        %v5139 = vadd.f32 0.0, %v5138
        %v5140 = vpop.f32.mrb[0].mxu0
        %5141 = vdwg.mxu0
        %5142 = vrot.lane.b32.xlu0 %v3579, 80
        %v5143 = vpop.permute.xlu0 %5142
        %5144 = vrot.lane.b32.xlu0 %v3579, 16
        %v5145 = vpop.permute.xlu0 %5144
        %v5147 = vsel %vm3586, %v5143, 0
        %v5150 = vsel %vm3586, %v5145, 0
        %5152 = vmatprep.subr.bf16.mxu0 0
        %5153 = vmatpush1.bf16.xpose.msra.mxu0 %v5150
        %5154 = vmatprep.subr.bf16.mxu0 0
        %5155 = vmatpush1.bf16.xpose.msra.mxu0 0
        %5156 = vmatprep.subr.bf16.mxu0 0
        %5157 = vmatpush1.bf16.xpose.msra.mxu0 0
        %5158 = vmatprep.subr.bf16.mxu0 0
        %5159 = vmatpush1.bf16.xpose.msra.mxu0 0
        %5160 = vmatprep.subr.bf16.mxu0 0
        %5161 = vmatpush1.bf16.xpose.msra.mxu0 0
        %5162 = vmatprep.subr.bf16.mxu0 0
        %5163 = vmatpush1.bf16.xpose.msra.mxu0 0
        %5164 = vmatprep.subr.bf16.mxu0 0
        %5165 = vmatpush1.bf16.xpose.msra.mxu0 0
        %5166 = vmatprep.subr.bf16.mxu0 0
        %5167 = vmatpush1.bf16.xpose.msra.mxu0 0
        %5168 = vmatprep.subr.bf16.mxu0 0
        %5169 = vmatpush1.bf16.xpose.msra.mxu0 0
        %5170 = vmatprep.subr.bf16.mxu0 0
        %5171 = vmatpush1.bf16.xpose.msra.mxu0 0
        %5172 = vmatprep.subr.bf16.mxu0 0
        %5173 = vmatpush1.bf16.xpose.msra.mxu0 0
        %5174 = vmatprep.subr.bf16.mxu0 0
        %5175 = vmatpush1.bf16.xpose.msra.mxu0 0
        %5176 = vmatprep.subr.bf16.mxu0 0
        %5177 = vmatpush1.bf16.xpose.msra.mxu0 0
        %5178 = vmatprep.subr.bf16.mxu0 0
        %5179 = vmatpush1.bf16.xpose.msra.mxu0 0
        %5180 = vmatprep.subr.bf16.mxu0 0
        %5181 = vmatpush1.bf16.xpose.msra.mxu0 0
        %5182 = vmatprep.subr.bf16.mxu0 0
        %5183 = vmatpush1.bf16.xpose.msra.mxu0 0
        %5184 = vmatprep.mubr.bf16.mxu0 0
        %5185 = vmatmul.mubr.bf16.gmra.mrb[0].mxu0 %v5147
        %v5186 = vpop.f32.mrb[0].mxu0
        %v5187 = vadd.f32 0.0, %v5186
        %v5188 = vpop.f32.mrb[0].mxu0
        %v5189 = vpop.f32.mrb[0].mxu0
        %v5190 = vadd.f32 0.0, %v5189
        %v5191 = vpop.f32.mrb[0].mxu0
        %5192 = vdwg.mxu0
        %v5193 = vmul.f32 %v5136, 0.35355338
        %v5194 = vmul.f32 %v5139, 0.35355338
        %v5195 = vmul.f32 %v5187, 0.35355338
        %v5196 = vmul.f32 %v5190, 0.35355338
        %v5197 = vadd.f32 %v5193, %v3693
        %v5198 = vadd.f32 %v5194, %v3693
        %v5199 = vadd.f32 %v5195, %v3697
        %v5200 = vadd.f32 %v5196, %v3697
        %v5201 = vsel %vm3704, %v5197, -inf
        %5202 = vmax.xlane.f32.xlu0 %v5201
        %v5203 = vpop.xlane.xlu0 %5202
        %v5204 = vsel %vm3704, %v5198, -inf
        %5205 = vmax.xlane.f32.xlu0 %v5204
        %v5206 = vpop.xlane.xlu0 %5205
        %v5207 = vsel %vm3704, %v5199, -inf
        %5208 = vmax.xlane.f32.xlu0 %v5207
        %v5209 = vpop.xlane.xlu0 %5208
        %v5210 = vsel %vm3704, %v5200, -inf
        %5211 = vmax.xlane.f32.xlu0 %v5210
        %v5212 = vpop.xlane.xlu0 %5211
        %v5213 = vsub.f32 %v5197, %v5203
        %v5214 = vsub.f32 %v5198, %v5206
        %v5215 = vsub.f32 %v5199, %v5209
        %v5216 = vsub.f32 %v5200, %v5212
        %v5217 = vmul.f32 %v5213, 1.442695
        %v5218 = vpow.pop %v5217
        %v5219 = vmul.f32 %v5214, 1.442695
        %v5220 = vpow.pop %v5219
        %v5221 = vmul.f32 %v5215, 1.442695
        %v5222 = vpow.pop %v5221
        %v5223 = vmul.f32 %v5216, 1.442695
        %v5224 = vpow.pop %v5223
        %v5225 = vsel %vm3704, %v5218, 0.0
        %5226 = vadd.xlane.f32.xlu0 %v5225
        %v5227 = vpop.xlane.xlu0 %5226
        %v5228 = vsel %vm3704, %v5220, 0.0
        %5229 = vadd.xlane.f32.xlu0 %v5228
        %v5230 = vpop.xlane.xlu0 %5229
        %v5231 = vsel %vm3704, %v5222, 0.0
        %5232 = vadd.xlane.f32.xlu0 %v5231
        %v5233 = vpop.xlane.xlu0 %5232
        %v5234 = vsel %vm3704, %v5224, 0.0
        %5235 = vadd.xlane.f32.xlu0 %v5234
        %v5236 = vpop.xlane.xlu0 %5235
        %v5237 = vrcp.pop %v5227
        %v5238 = vrcp.pop %v5230
        %v5239 = vrcp.pop %v5233
        %v5240 = vrcp.pop %v5236
        %v5241 = vmul.f32 %v5218, %v5237
        %v5242 = vmul.f32 %v5220, %v5238
        %v5243 = vmul.f32 %v5222, %v5239
        %v5244 = vmul.f32 %v5224, %v5240
        %v5245 = vpack.c.bf16 %v5242, %v5241
        %v5246 = vpack.c.bf16 %v5244, %v5243
        %5247 = vrot.lane.b32.xlu0 %v3578, 80
        %v5248 = vpop.permute.xlu0 %5247
        %v5251 = vsel %vm3704, %v5245, 0
        %5253 = vmatprep.subr.bf16.mxu0 0
        %5254 = vmatpush1.bf16.msra.mxu0 %v5248
        %5255 = vmatprep.subr.bf16.mxu0 0
        %5256 = vmatpush1.bf16.msra.mxu0 0
        %5257 = vmatprep.subr.bf16.mxu0 0
        %5258 = vmatpush1.bf16.msra.mxu0 0
        %5259 = vmatprep.subr.bf16.mxu0 0
        %5260 = vmatpush1.bf16.msra.mxu0 0
        %5261 = vmatprep.subr.bf16.mxu0 0
        %5262 = vmatpush1.bf16.msra.mxu0 0
        %5263 = vmatprep.subr.bf16.mxu0 0
        %5264 = vmatpush1.bf16.msra.mxu0 0
        %5265 = vmatprep.subr.bf16.mxu0 0
        %5266 = vmatpush1.bf16.msra.mxu0 0
        %5267 = vmatprep.subr.bf16.mxu0 0
        %5268 = vmatpush1.bf16.msra.mxu0 0
        %5269 = vmatprep.subr.bf16.mxu0 0
        %5270 = vmatpush1.bf16.msra.mxu0 0
        %5271 = vmatprep.subr.bf16.mxu0 0
        %5272 = vmatpush1.bf16.msra.mxu0 0
        %5273 = vmatprep.subr.bf16.mxu0 0
        %5274 = vmatpush1.bf16.msra.mxu0 0
        %5275 = vmatprep.subr.bf16.mxu0 0
        %5276 = vmatpush1.bf16.msra.mxu0 0
        %5277 = vmatprep.subr.bf16.mxu0 0
        %5278 = vmatpush1.bf16.msra.mxu0 0
        %5279 = vmatprep.subr.bf16.mxu0 0
        %5280 = vmatpush1.bf16.msra.mxu0 0
        %5281 = vmatprep.subr.bf16.mxu0 0
        %5282 = vmatpush1.bf16.msra.mxu0 0
        %5283 = vmatprep.subr.bf16.mxu0 0
        %5284 = vmatpush1.bf16.msra.mxu0 0
        %5285 = vmatprep.mubr.bf16.mxu0 0
        %5286 = vmatmul.mubr.bf16.gmra.mrb[0].mxu0 %v5251
        %v5287 = vpop.f32.mrb[0].mxu0
        %v5288 = vadd.f32 0.0, %v5287
        %v5289 = vpop.f32.mrb[0].mxu0
        %v5290 = vpop.f32.mrb[0].mxu0
        %v5291 = vadd.f32 0.0, %v5290
        %v5292 = vpop.f32.mrb[0].mxu0
        %5293 = vdwg.mxu0
        %5294 = vrot.lane.b32.xlu0 %v3580, 80
        %v5295 = vpop.permute.xlu0 %5294
        %v5298 = vsel %vm3704, %v5246, 0
        %5300 = vmatprep.subr.bf16.mxu0 0
        %5301 = vmatpush1.bf16.msra.mxu0 %v5295
        %5302 = vmatprep.subr.bf16.mxu0 0
        %5303 = vmatpush1.bf16.msra.mxu0 0
        %5304 = vmatprep.subr.bf16.mxu0 0
        %5305 = vmatpush1.bf16.msra.mxu0 0
        %5306 = vmatprep.subr.bf16.mxu0 0
        %5307 = vmatpush1.bf16.msra.mxu0 0
        %5308 = vmatprep.subr.bf16.mxu0 0
        %5309 = vmatpush1.bf16.msra.mxu0 0
        %5310 = vmatprep.subr.bf16.mxu0 0
        %5311 = vmatpush1.bf16.msra.mxu0 0
        %5312 = vmatprep.subr.bf16.mxu0 0
        %5313 = vmatpush1.bf16.msra.mxu0 0
        %5314 = vmatprep.subr.bf16.mxu0 0
        %5315 = vmatpush1.bf16.msra.mxu0 0
        %5316 = vmatprep.subr.bf16.mxu0 0
        %5317 = vmatpush1.bf16.msra.mxu0 0
        %5318 = vmatprep.subr.bf16.mxu0 0
        %5319 = vmatpush1.bf16.msra.mxu0 0
        %5320 = vmatprep.subr.bf16.mxu0 0
        %5321 = vmatpush1.bf16.msra.mxu0 0
        %5322 = vmatprep.subr.bf16.mxu0 0
        %5323 = vmatpush1.bf16.msra.mxu0 0
        %5324 = vmatprep.subr.bf16.mxu0 0
        %5325 = vmatpush1.bf16.msra.mxu0 0
        %5326 = vmatprep.subr.bf16.mxu0 0
        %5327 = vmatpush1.bf16.msra.mxu0 0
        %5328 = vmatprep.subr.bf16.mxu0 0
        %5329 = vmatpush1.bf16.msra.mxu0 0
        %5330 = vmatprep.subr.bf16.mxu0 0
        %5331 = vmatpush1.bf16.msra.mxu0 0
        %5332 = vmatprep.mubr.bf16.mxu0 0
        %5333 = vmatmul.mubr.bf16.gmra.mrb[0].mxu0 %v5298
        %v5334 = vpop.f32.mrb[0].mxu0
        %v5335 = vadd.f32 0.0, %v5334
        %v5336 = vpop.f32.mrb[0].mxu0
        %v5337 = vpop.f32.mrb[0].mxu0
        %v5338 = vadd.f32 0.0, %v5337
        %v5339 = vpop.f32.mrb[0].mxu0
        %5340 = vdwg.mxu0
        %5341 = vrot.lane.b32.xlu0 %v3577, 72
        %v5342 = vpop.permute.xlu0 %5341
        %5343 = vrot.lane.b32.xlu0 %v3577, 8
        %v5344 = vpop.permute.xlu0 %5343
        %v5346 = vsel %vm3586, %v5342, 0
        %v5349 = vsel %vm3586, %v5344, 0
        %5351 = vmatprep.subr.bf16.mxu0 0
        %5352 = vmatpush1.bf16.xpose.msra.mxu0 %v5349
        %5353 = vmatprep.subr.bf16.mxu0 0
        %5354 = vmatpush1.bf16.xpose.msra.mxu0 0
        %5355 = vmatprep.subr.bf16.mxu0 0
        %5356 = vmatpush1.bf16.xpose.msra.mxu0 0
        %5357 = vmatprep.subr.bf16.mxu0 0
        %5358 = vmatpush1.bf16.xpose.msra.mxu0 0
        %5359 = vmatprep.subr.bf16.mxu0 0
        %5360 = vmatpush1.bf16.xpose.msra.mxu0 0
        %5361 = vmatprep.subr.bf16.mxu0 0
        %5362 = vmatpush1.bf16.xpose.msra.mxu0 0
        %5363 = vmatprep.subr.bf16.mxu0 0
        %5364 = vmatpush1.bf16.xpose.msra.mxu0 0
        %5365 = vmatprep.subr.bf16.mxu0 0
        %5366 = vmatpush1.bf16.xpose.msra.mxu0 0
        %5367 = vmatprep.subr.bf16.mxu0 0
        %5368 = vmatpush1.bf16.xpose.msra.mxu0 0
        %5369 = vmatprep.subr.bf16.mxu0 0
        %5370 = vmatpush1.bf16.xpose.msra.mxu0 0
        %5371 = vmatprep.subr.bf16.mxu0 0
        %5372 = vmatpush1.bf16.xpose.msra.mxu0 0
        %5373 = vmatprep.subr.bf16.mxu0 0
        %5374 = vmatpush1.bf16.xpose.msra.mxu0 0
        %5375 = vmatprep.subr.bf16.mxu0 0
        %5376 = vmatpush1.bf16.xpose.msra.mxu0 0
        %5377 = vmatprep.subr.bf16.mxu0 0
        %5378 = vmatpush1.bf16.xpose.msra.mxu0 0
        %5379 = vmatprep.subr.bf16.mxu0 0
        %5380 = vmatpush1.bf16.xpose.msra.mxu0 0
        %5381 = vmatprep.subr.bf16.mxu0 0
        %5382 = vmatpush1.bf16.xpose.msra.mxu0 0
        %5383 = vmatprep.mubr.bf16.mxu0 0
        %5384 = vmatmul.mubr.bf16.gmra.mrb[0].mxu0 %v5346
        %v5385 = vpop.f32.mrb[0].mxu0
        %v5386 = vadd.f32 0.0, %v5385
        %v5387 = vpop.f32.mrb[0].mxu0
        %v5388 = vpop.f32.mrb[0].mxu0
        %v5389 = vadd.f32 0.0, %v5388
        %v5390 = vpop.f32.mrb[0].mxu0
        %5391 = vdwg.mxu0
        %5392 = vrot.lane.b32.xlu0 %v3579, 72
        %v5393 = vpop.permute.xlu0 %5392
        %5394 = vrot.lane.b32.xlu0 %v3579, 8
        %v5395 = vpop.permute.xlu0 %5394
        %v5397 = vsel %vm3586, %v5393, 0
        %v5400 = vsel %vm3586, %v5395, 0
        %5402 = vmatprep.subr.bf16.mxu0 0
        %5403 = vmatpush1.bf16.xpose.msra.mxu0 %v5400
        %5404 = vmatprep.subr.bf16.mxu0 0
        %5405 = vmatpush1.bf16.xpose.msra.mxu0 0
        %5406 = vmatprep.subr.bf16.mxu0 0
        %5407 = vmatpush1.bf16.xpose.msra.mxu0 0
        %5408 = vmatprep.subr.bf16.mxu0 0
        %5409 = vmatpush1.bf16.xpose.msra.mxu0 0
        %5410 = vmatprep.subr.bf16.mxu0 0
        %5411 = vmatpush1.bf16.xpose.msra.mxu0 0
        %5412 = vmatprep.subr.bf16.mxu0 0
        %5413 = vmatpush1.bf16.xpose.msra.mxu0 0
        %5414 = vmatprep.subr.bf16.mxu0 0
        %5415 = vmatpush1.bf16.xpose.msra.mxu0 0
        %5416 = vmatprep.subr.bf16.mxu0 0
        %5417 = vmatpush1.bf16.xpose.msra.mxu0 0
        %5418 = vmatprep.subr.bf16.mxu0 0
        %5419 = vmatpush1.bf16.xpose.msra.mxu0 0
        %5420 = vmatprep.subr.bf16.mxu0 0
        %5421 = vmatpush1.bf16.xpose.msra.mxu0 0
        %5422 = vmatprep.subr.bf16.mxu0 0
        %5423 = vmatpush1.bf16.xpose.msra.mxu0 0
        %5424 = vmatprep.subr.bf16.mxu0 0
        %5425 = vmatpush1.bf16.xpose.msra.mxu0 0
        %5426 = vmatprep.subr.bf16.mxu0 0
        %5427 = vmatpush1.bf16.xpose.msra.mxu0 0
        %5428 = vmatprep.subr.bf16.mxu0 0
        %5429 = vmatpush1.bf16.xpose.msra.mxu0 0
        %5430 = vmatprep.subr.bf16.mxu0 0
        %5431 = vmatpush1.bf16.xpose.msra.mxu0 0
        %5432 = vmatprep.subr.bf16.mxu0 0
        %5433 = vmatpush1.bf16.xpose.msra.mxu0 0
        %5434 = vmatprep.mubr.bf16.mxu0 0
        %5435 = vmatmul.mubr.bf16.gmra.mrb[0].mxu0 %v5397
        %v5436 = vpop.f32.mrb[0].mxu0
        %v5437 = vadd.f32 0.0, %v5436
        %v5438 = vpop.f32.mrb[0].mxu0
        %v5439 = vpop.f32.mrb[0].mxu0
        %v5440 = vadd.f32 0.0, %v5439
        %v5441 = vpop.f32.mrb[0].mxu0
        %5442 = vdwg.mxu0
        %v5443 = vmul.f32 %v5386, 0.35355338
        %v5444 = vmul.f32 %v5389, 0.35355338
        %v5445 = vmul.f32 %v5437, 0.35355338
        %v5446 = vmul.f32 %v5440, 0.35355338
        %v5447 = vadd.f32 %v5443, %v3693
        %v5448 = vadd.f32 %v5444, %v3693
        %v5449 = vadd.f32 %v5445, %v3697
        %v5450 = vadd.f32 %v5446, %v3697
        %v5451 = vsel %vm3704, %v5447, -inf
        %5452 = vmax.xlane.f32.xlu0 %v5451
        %v5453 = vpop.xlane.xlu0 %5452
        %v5454 = vsel %vm3704, %v5448, -inf
        %5455 = vmax.xlane.f32.xlu0 %v5454
        %v5456 = vpop.xlane.xlu0 %5455
        %v5457 = vsel %vm3704, %v5449, -inf
        %5458 = vmax.xlane.f32.xlu0 %v5457
        %v5459 = vpop.xlane.xlu0 %5458
        %v5460 = vsel %vm3704, %v5450, -inf
        %5461 = vmax.xlane.f32.xlu0 %v5460
        %v5462 = vpop.xlane.xlu0 %5461
        %v5463 = vsub.f32 %v5447, %v5453
        %v5464 = vsub.f32 %v5448, %v5456
        %v5465 = vsub.f32 %v5449, %v5459
        %v5466 = vsub.f32 %v5450, %v5462
        %v5467 = vmul.f32 %v5463, 1.442695
        %v5468 = vpow.pop %v5467
        %v5469 = vmul.f32 %v5464, 1.442695
        %v5470 = vpow.pop %v5469
        %v5471 = vmul.f32 %v5465, 1.442695
        %v5472 = vpow.pop %v5471
        %v5473 = vmul.f32 %v5466, 1.442695
        %v5474 = vpow.pop %v5473
        %v5475 = vsel %vm3704, %v5468, 0.0
        %5476 = vadd.xlane.f32.xlu0 %v5475
        %v5477 = vpop.xlane.xlu0 %5476
        %v5478 = vsel %vm3704, %v5470, 0.0
        %5479 = vadd.xlane.f32.xlu0 %v5478
        %v5480 = vpop.xlane.xlu0 %5479
        %v5481 = vsel %vm3704, %v5472, 0.0
        %5482 = vadd.xlane.f32.xlu0 %v5481
        %v5483 = vpop.xlane.xlu0 %5482
        %v5484 = vsel %vm3704, %v5474, 0.0
        %5485 = vadd.xlane.f32.xlu0 %v5484
        %v5486 = vpop.xlane.xlu0 %5485
        %v5487 = vrcp.pop %v5477
        %v5488 = vrcp.pop %v5480
        %v5489 = vrcp.pop %v5483
        %v5490 = vrcp.pop %v5486
        %v5491 = vmul.f32 %v5468, %v5487
        %v5492 = vmul.f32 %v5470, %v5488
        %v5493 = vmul.f32 %v5472, %v5489
        %v5494 = vmul.f32 %v5474, %v5490
        %v5495 = vpack.c.bf16 %v5492, %v5491
        %v5496 = vpack.c.bf16 %v5494, %v5493
        %5497 = vrot.lane.b32.xlu0 %v3578, 72
        %v5498 = vpop.permute.xlu0 %5497
        %v5501 = vsel %vm3704, %v5495, 0
        %5503 = vmatprep.subr.bf16.mxu0 0
        %5504 = vmatpush1.bf16.msra.mxu0 %v5498
        %5505 = vmatprep.subr.bf16.mxu0 0
        %5506 = vmatpush1.bf16.msra.mxu0 0
        %5507 = vmatprep.subr.bf16.mxu0 0
        %5508 = vmatpush1.bf16.msra.mxu0 0
        %5509 = vmatprep.subr.bf16.mxu0 0
        %5510 = vmatpush1.bf16.msra.mxu0 0
        %5511 = vmatprep.subr.bf16.mxu0 0
        %5512 = vmatpush1.bf16.msra.mxu0 0
        %5513 = vmatprep.subr.bf16.mxu0 0
        %5514 = vmatpush1.bf16.msra.mxu0 0
        %5515 = vmatprep.subr.bf16.mxu0 0
        %5516 = vmatpush1.bf16.msra.mxu0 0
        %5517 = vmatprep.subr.bf16.mxu0 0
        %5518 = vmatpush1.bf16.msra.mxu0 0
        %5519 = vmatprep.subr.bf16.mxu0 0
        %5520 = vmatpush1.bf16.msra.mxu0 0
        %5521 = vmatprep.subr.bf16.mxu0 0
        %5522 = vmatpush1.bf16.msra.mxu0 0
        %5523 = vmatprep.subr.bf16.mxu0 0
        %5524 = vmatpush1.bf16.msra.mxu0 0
        %5525 = vmatprep.subr.bf16.mxu0 0
        %5526 = vmatpush1.bf16.msra.mxu0 0
        %5527 = vmatprep.subr.bf16.mxu0 0
        %5528 = vmatpush1.bf16.msra.mxu0 0
        %5529 = vmatprep.subr.bf16.mxu0 0
        %5530 = vmatpush1.bf16.msra.mxu0 0
        %5531 = vmatprep.subr.bf16.mxu0 0
        %5532 = vmatpush1.bf16.msra.mxu0 0
        %5533 = vmatprep.subr.bf16.mxu0 0
        %5534 = vmatpush1.bf16.msra.mxu0 0
        %5535 = vmatprep.mubr.bf16.mxu0 0
        %5536 = vmatmul.mubr.bf16.gmra.mrb[0].mxu0 %v5501
        %v5537 = vpop.f32.mrb[0].mxu0
        %v5538 = vadd.f32 0.0, %v5537
        %v5539 = vpop.f32.mrb[0].mxu0
        %v5540 = vpop.f32.mrb[0].mxu0
        %v5541 = vadd.f32 0.0, %v5540
        %v5542 = vpop.f32.mrb[0].mxu0
        %5543 = vdwg.mxu0
        %5544 = vrot.lane.b32.xlu0 %v3580, 72
        %v5545 = vpop.permute.xlu0 %5544
        %v5548 = vsel %vm3704, %v5496, 0
        %5550 = vmatprep.subr.bf16.mxu0 0
        %5551 = vmatpush1.bf16.msra.mxu0 %v5545
        %5552 = vmatprep.subr.bf16.mxu0 0
        %5553 = vmatpush1.bf16.msra.mxu0 0
        %5554 = vmatprep.subr.bf16.mxu0 0
        %5555 = vmatpush1.bf16.msra.mxu0 0
        %5556 = vmatprep.subr.bf16.mxu0 0
        %5557 = vmatpush1.bf16.msra.mxu0 0
        %5558 = vmatprep.subr.bf16.mxu0 0
        %5559 = vmatpush1.bf16.msra.mxu0 0
        %5560 = vmatprep.subr.bf16.mxu0 0
        %5561 = vmatpush1.bf16.msra.mxu0 0
        %5562 = vmatprep.subr.bf16.mxu0 0
        %5563 = vmatpush1.bf16.msra.mxu0 0
        %5564 = vmatprep.subr.bf16.mxu0 0
        %5565 = vmatpush1.bf16.msra.mxu0 0
        %5566 = vmatprep.subr.bf16.mxu0 0
        %5567 = vmatpush1.bf16.msra.mxu0 0
        %5568 = vmatprep.subr.bf16.mxu0 0
        %5569 = vmatpush1.bf16.msra.mxu0 0
        %5570 = vmatprep.subr.bf16.mxu0 0
        %5571 = vmatpush1.bf16.msra.mxu0 0
        %5572 = vmatprep.subr.bf16.mxu0 0
        %5573 = vmatpush1.bf16.msra.mxu0 0
        %5574 = vmatprep.subr.bf16.mxu0 0
        %5575 = vmatpush1.bf16.msra.mxu0 0
        %5576 = vmatprep.subr.bf16.mxu0 0
        %5577 = vmatpush1.bf16.msra.mxu0 0
        %5578 = vmatprep.subr.bf16.mxu0 0
        %5579 = vmatpush1.bf16.msra.mxu0 0
        %5580 = vmatprep.subr.bf16.mxu0 0
        %5581 = vmatpush1.bf16.msra.mxu0 0
        %5582 = vmatprep.mubr.bf16.mxu0 0
        %5583 = vmatmul.mubr.bf16.gmra.mrb[0].mxu0 %v5548
        %v5584 = vpop.f32.mrb[0].mxu0
        %v5585 = vadd.f32 0.0, %v5584
        %v5586 = vpop.f32.mrb[0].mxu0
        %v5587 = vpop.f32.mrb[0].mxu0
        %v5588 = vadd.f32 0.0, %v5587
        %v5589 = vpop.f32.mrb[0].mxu0
        %5590 = vdwg.mxu0
        %5595 = vrot.lane.b32.xlu0 %v4037, 8
        %v5596 = vpop.permute.xlu0 %5595
        %5597 = vrot.lane.b32.xlu0 %v4040, 8
        %v5598 = vpop.permute.xlu0 %5597
        %5599 = vrot.lane.b32.xlu0 %v4085, 8
        %v5600 = vpop.permute.xlu0 %5599
        %5601 = vrot.lane.b32.xlu0 %v4088, 8
        %v5602 = vpop.permute.xlu0 %5601
        %5611 = vrot.lane.b32.xlu0 %v4288, 16
        %v5612 = vpop.permute.xlu0 %5611
        %5613 = vrot.lane.b32.xlu0 %v4291, 16
        %v5614 = vpop.permute.xlu0 %5613
        %5615 = vrot.lane.b32.xlu0 %v4335, 16
        %v5616 = vpop.permute.xlu0 %5615
        %5617 = vrot.lane.b32.xlu0 %v4338, 16
        %v5618 = vpop.permute.xlu0 %5617
        %5627 = vrot.lane.b32.xlu0 %v4538, 24
        %v5628 = vpop.permute.xlu0 %5627
        %5629 = vrot.lane.b32.xlu0 %v4541, 24
        %v5630 = vpop.permute.xlu0 %5629
        %5631 = vrot.lane.b32.xlu0 %v4585, 24
        %v5632 = vpop.permute.xlu0 %5631
        %5633 = vrot.lane.b32.xlu0 %v4588, 24
        %v5634 = vpop.permute.xlu0 %5633
        %5643 = vrot.lane.b32.xlu0 %v4788, 32
        %v5644 = vpop.permute.xlu0 %5643
        %5645 = vrot.lane.b32.xlu0 %v4791, 32
        %v5646 = vpop.permute.xlu0 %5645
        %5647 = vrot.lane.b32.xlu0 %v4835, 32
        %v5648 = vpop.permute.xlu0 %5647
        %5649 = vrot.lane.b32.xlu0 %v4838, 32
        %v5650 = vpop.permute.xlu0 %5649
        %5659 = vrot.lane.b32.xlu0 %v5038, 40
        %v5660 = vpop.permute.xlu0 %5659
        %5661 = vrot.lane.b32.xlu0 %v5041, 40
        %v5662 = vpop.permute.xlu0 %5661
        %5663 = vrot.lane.b32.xlu0 %v5085, 40
        %v5664 = vpop.permute.xlu0 %5663
        %5665 = vrot.lane.b32.xlu0 %v5088, 40
        %v5666 = vpop.permute.xlu0 %5665
        %5675 = vrot.lane.b32.xlu0 %v5288, 48
        %v5676 = vpop.permute.xlu0 %5675
        %5677 = vrot.lane.b32.xlu0 %v5291, 48
        %v5678 = vpop.permute.xlu0 %5677
        %5679 = vrot.lane.b32.xlu0 %v5335, 48
        %v5680 = vpop.permute.xlu0 %5679
        %5681 = vrot.lane.b32.xlu0 %v5338, 48
        %v5682 = vpop.permute.xlu0 %5681
        %5691 = vrot.lane.b32.xlu0 %v5538, 56
        %v5692 = vpop.permute.xlu0 %5691
        %5693 = vrot.lane.b32.xlu0 %v5541, 56
        %v5694 = vpop.permute.xlu0 %5693
        %5695 = vrot.lane.b32.xlu0 %v5585, 56
        %v5696 = vpop.permute.xlu0 %5695
        %5697 = vrot.lane.b32.xlu0 %v5588, 56
        %v5698 = vpop.permute.xlu0 %5697
        %v5703 = vsel %vm3586, %v3789, %v5596
        %v5704 = vsel %vm3586, %v3792, %v5598
        %v5705 = vsel %vm3586, %v3833, %v5600
        %v5706 = vsel %vm3586, %v3836, %v5602
        %v5707 = vsel %vm3704, %v5703, %v5612
        %v5708 = vsel %vm3704, %v5704, %v5614
        %v5709 = vsel %vm3704, %v5705, %v5616
        %v5710 = vsel %vm3704, %v5706, %v5618
        %vm5711 = vcmask 195584
        %v5712 = vsel %vm5711, %v5707, %v5628
        %v5713 = vsel %vm5711, %v5708, %v5630
        %v5714 = vsel %vm5711, %v5709, %v5632
        %v5715 = vsel %vm5711, %v5710, %v5634
        %vm5716 = vcmask 261120
        %v5717 = vsel %vm5716, %v5712, %v5644
        %v5718 = vsel %vm5716, %v5713, %v5646
        %v5719 = vsel %vm5716, %v5714, %v5648
        %v5720 = vsel %vm5716, %v5715, %v5650
        %vm5721 = vcmask 326656
        %v5722 = vsel %vm5721, %v5717, %v5660
        %v5723 = vsel %vm5721, %v5718, %v5662
        %v5724 = vsel %vm5721, %v5719, %v5664
        %v5725 = vsel %vm5721, %v5720, %v5666
        %vm5726 = vcmask 392192
        %v5727 = vsel %vm5726, %v5722, %v5676
        %v5728 = vsel %vm5726, %v5723, %v5678
        %v5729 = vsel %vm5726, %v5724, %v5680
        %v5730 = vsel %vm5726, %v5725, %v5682
        %vm5731 = vcmask 457728
        %v5732 = vsel %vm5731, %v5727, %v5692
        %v5733 = vsel %vm5731, %v5728, %v5694
        %v5734 = vsel %vm5731, %v5729, %v5696
        %v5735 = vsel %vm5731, %v5730, %v5698
        %v5736 = vpack.c.bf16 %v5733, %v5732
        %v5737 = vpack.c.bf16 %v5735, %v5734
        %v5738 = vld [vmem:[%s33] sm:$0xf]
        %v5739 = vld [vmem:[%s33 + $0x4] sm:$0xf]
        %v5740 = vld [vmem:[%s33 + $0x8] sm:$0xf]
        %v5741 = vld [vmem:[%s33 + $0xc] sm:$0xf]
        %v5742 = vld [vmem:[%s33 + $0x10] sm:$0xf]
        %v5743 = vld [vmem:[%s33 + $0x14] sm:$0xf]
        %v5744 = vld [vmem:[%s33 + $0x18] sm:$0xf]
        %v5745 = vld [vmem:[%s33 + $0x1c] sm:$0xf]
        %v5746 = vld [vmem:[%s35] sm:$0x1]
        %v5748 = vlaneseq
        %v5749 = vshrl.u32 %v5748, 7
        %v5750 = vsub.s32 0, %v5749
        %v5751 = vrot.slane %v5746, %v5750
        %v5761 = vunpack.c.l.b16 %v5738
        %v5762 = vunpack.c.l.b16 %v5739
        %v5763 = vunpack.c.l.b16 %v5740
        %v5764 = vunpack.c.l.b16 %v5741
        %v5765 = vunpack.c.l.b16 %v5742
        %v5766 = vunpack.c.l.b16 %v5743
        %v5767 = vunpack.c.l.b16 %v5744
        %v5768 = vunpack.c.l.b16 %v5745
        %v5769 = vpack.c.b16 %v5762, %v5761
        %v5770 = vpack.c.b16 %v5764, %v5763
        %v5771 = vpack.c.b16 %v5766, %v5765
        %v5772 = vpack.c.b16 %v5768, %v5767
        %v5778 = vsel %vm1321, %v5736, 0
        %v5781 = vsel %vm1321, %v5737, 0
        %5783 = vmatprep.subr.bf16.mxu0 0
        %5784 = vmatpush1.bf16.msra.mxu0 %v5769
        %5785 = vmatprep.subr.bf16.mxu0 0
        %5786 = vmatpush1.bf16.msra.mxu0 %v5770
        %5787 = vmatprep.subr.bf16.mxu0 0
        %5788 = vmatpush1.bf16.msra.mxu0 %v5771
        %5789 = vmatprep.subr.bf16.mxu0 0
        %5790 = vmatpush1.bf16.msra.mxu0 %v5772
        %5791 = vmatprep.subr.bf16.mxu0 0
        %5792 = vmatpush1.bf16.msra.mxu0 0
        %5793 = vmatprep.subr.bf16.mxu0 0
        %5794 = vmatpush1.bf16.msra.mxu0 0
        %5795 = vmatprep.subr.bf16.mxu0 0
        %5796 = vmatpush1.bf16.msra.mxu0 0
        %5797 = vmatprep.subr.bf16.mxu0 0
        %5798 = vmatpush1.bf16.msra.mxu0 0
        %5799 = vmatprep.subr.bf16.mxu0 0
        %5800 = vmatpush1.bf16.msra.mxu0 0
        %5801 = vmatprep.subr.bf16.mxu0 0
        %5802 = vmatpush1.bf16.msra.mxu0 0
        %5803 = vmatprep.subr.bf16.mxu0 0
        %5804 = vmatpush1.bf16.msra.mxu0 0
        %5805 = vmatprep.subr.bf16.mxu0 0
        %5806 = vmatpush1.bf16.msra.mxu0 0
        %5807 = vmatprep.subr.bf16.mxu0 0
        %5808 = vmatpush1.bf16.msra.mxu0 0
        %5809 = vmatprep.subr.bf16.mxu0 0
        %5810 = vmatpush1.bf16.msra.mxu0 0
        %5811 = vmatprep.subr.bf16.mxu0 0
        %5812 = vmatpush1.bf16.msra.mxu0 0
        %5813 = vmatprep.subr.bf16.mxu0 0
        %5814 = vmatpush1.bf16.msra.mxu0 0
        %5815 = vmatprep.mubr.bf16.mxu0 0
        %5816 = vmatmul.mubr.bf16.gmra.mrb[0].mxu0 %v5778
        %v5817 = vpop.f32.mrb[0].mxu0
        %v5818 = vadd.f32 %v5751, %v5817
        %v5819 = vpop.f32.mrb[0].mxu0
        %v5820 = vpop.f32.mrb[0].mxu0
        %v5821 = vadd.f32 %v5751, %v5820
        %v5822 = vpop.f32.mrb[0].mxu0
        %5823 = vmatprep.mubr.bf16.mxu0 0
        %5824 = vmatmul.mubr.bf16.gmra.mrb[0].mxu0 %v5781
        %v5825 = vpop.f32.mrb[0].mxu0
        %v5826 = vadd.f32 %v5751, %v5825
        %v5827 = vpop.f32.mrb[0].mxu0
        %v5828 = vpop.f32.mrb[0].mxu0
        %v5829 = vadd.f32 %v5751, %v5828
        %v5830 = vpop.f32.mrb[0].mxu0
        %5831 = vdwg.mxu0
        %v5832 = vadd.f32 %v5818, %v3378
        %v5833 = vadd.f32 %v5821, %v3379
        %v5834 = vadd.f32 %v5826, %v3380
        %v5835 = vadd.f32 %v5829, %v3381
        %v5836 = vld [vmem:[%s37] sm:$0x1]
        %v5837 = vld [vmem:[%s39] sm:$0x1]
        %v5838 = vsel %vm1321, %v5832, 0.0
        %5839 = vadd.xlane.f32.xlu0 %v5838
        %v5840 = vpop.xlane.xlu0 %5839
        %v5841 = vsel %vm1321, %v5833, 0.0
        %5842 = vadd.xlane.f32.xlu0 %v5841
        %v5843 = vpop.xlane.xlu0 %5842
        %v5844 = vsel %vm1321, %v5834, 0.0
        %5845 = vadd.xlane.f32.xlu0 %v5844
        %v5846 = vpop.xlane.xlu0 %5845
        %v5847 = vsel %vm1321, %v5835, 0.0
        %5848 = vadd.xlane.f32.xlu0 %v5847
        %v5849 = vpop.xlane.xlu0 %5848
        %v5850 = vmul.f32 %v5840, %v1904
        %v5851 = vmul.f32 %v5843, %v1904
        %v5852 = vmul.f32 %v5846, %v1904
        %v5853 = vmul.f32 %v5849, %v1904
        %v5854 = vsub.f32 %v5832, %v5850
        %v5855 = vsub.f32 %v5833, %v5851
        %v5856 = vsub.f32 %v5834, %v5852
        %v5857 = vsub.f32 %v5835, %v5853
        %v5858 = vmul.f32 %v5854, %v5854
        %v5859 = vmul.f32 %v5855, %v5855
        %v5860 = vmul.f32 %v5856, %v5856
        %v5861 = vmul.f32 %v5857, %v5857
        %v5862 = vsel %vm1321, %v5858, 0.0
        %5863 = vadd.xlane.f32.xlu0 %v5862
        %v5864 = vpop.xlane.xlu0 %5863
        %v5865 = vsel %vm1321, %v5859, 0.0
        %5866 = vadd.xlane.f32.xlu0 %v5865
        %v5867 = vpop.xlane.xlu0 %5866
        %v5868 = vsel %vm1321, %v5860, 0.0
        %5869 = vadd.xlane.f32.xlu0 %v5868
        %v5870 = vpop.xlane.xlu0 %5869
        %v5871 = vsel %vm1321, %v5861, 0.0
        %5872 = vadd.xlane.f32.xlu0 %v5871
        %v5873 = vpop.xlane.xlu0 %5872
        %v5874 = vmul.f32 %v5864, %v1904
        %v5875 = vmul.f32 %v5867, %v1904
        %v5876 = vmul.f32 %v5870, %v1904
        %v5877 = vmul.f32 %v5873, %v1904
        %v5878 = vadd.f32 %v5874, 1e-05
        %v5879 = vadd.f32 %v5875, 1e-05
        %v5880 = vadd.f32 %v5876, 1e-05
        %v5881 = vadd.f32 %v5877, 1e-05
        %v5882 = vrsqrt.pop %v5878
        %v5883 = vrsqrt.pop %v5879
        %v5884 = vrsqrt.pop %v5880
        %v5885 = vrsqrt.pop %v5881
        %v5886 = vmul.f32 %v5854, %v5882
        %v5887 = vmul.f32 %v5855, %v5883
        %v5888 = vmul.f32 %v5856, %v5884
        %v5889 = vmul.f32 %v5857, %v5885
        %v5891 = vlaneseq
        %v5892 = vshrl.u32 %v5891, 7
        %v5893 = vsub.s32 0, %v5892
        %v5894 = vrot.slane %v5836, %v5893
        %v5896 = vmul.f32 %v5886, %v5894
        %v5897 = vmul.f32 %v5887, %v5894
        %v5898 = vmul.f32 %v5888, %v5894
        %v5899 = vmul.f32 %v5889, %v5894
        %v5901 = vlaneseq
        %v5902 = vshrl.u32 %v5901, 7
        %v5903 = vsub.s32 0, %v5902
        %v5904 = vrot.slane %v5837, %v5903
        %v5906 = vadd.f32 %v5896, %v5904
        %v5907 = vadd.f32 %v5897, %v5904
        %v5908 = vadd.f32 %v5898, %v5904
        %v5909 = vadd.f32 %v5899, %v5904
        %v5910 = vpack.c.bf16 %v5907, %v5906
        %v5911 = vpack.c.bf16 %v5909, %v5908
        %v5912 = vld [vmem:[%s41] sm:$0xf]
        %v5913 = vld [vmem:[%s41 + $0x4] sm:$0xf]
        %v5914 = vld [vmem:[%s41 + $0x8] sm:$0xf]
        %v5915 = vld [vmem:[%s41 + $0xc] sm:$0xf]
        %v5916 = vld [vmem:[%s41 + $0x10] sm:$0xf]
        %v5917 = vld [vmem:[%s41 + $0x14] sm:$0xf]
        %v5918 = vld [vmem:[%s41 + $0x18] sm:$0xf]
        %v5919 = vld [vmem:[%s41 + $0x1c] sm:$0xf]
        %v5920 = vld [vmem:[%s43] sm:$0x1]
        %v5922 = vlaneseq
        %v5923 = vshrl.u32 %v5922, 7
        %v5924 = vsub.s32 0, %v5923
        %v5925 = vrot.slane %v5920, %v5924
        %v5935 = vunpack.c.l.b16 %v5912
        %v5936 = vunpack.c.l.b16 %v5913
        %v5937 = vunpack.c.l.b16 %v5914
        %v5938 = vunpack.c.l.b16 %v5915
        %v5939 = vunpack.c.l.b16 %v5916
        %v5940 = vunpack.c.l.b16 %v5917
        %v5941 = vunpack.c.l.b16 %v5918
        %v5942 = vunpack.c.l.b16 %v5919
        %v5943 = vpack.c.b16 %v5936, %v5935
        %v5944 = vpack.c.b16 %v5938, %v5937
        %v5945 = vpack.c.b16 %v5940, %v5939
        %v5946 = vpack.c.b16 %v5942, %v5941
        %v5952 = vsel %vm1321, %v5910, 0
        %v5955 = vsel %vm1321, %v5911, 0
        %5957 = vmatprep.subr.bf16.mxu0 0
        %5958 = vmatpush1.bf16.msra.mxu0 %v5943
        %5959 = vmatprep.subr.bf16.mxu0 0
        %5960 = vmatpush1.bf16.msra.mxu0 %v5944
        %5961 = vmatprep.subr.bf16.mxu0 0
        %5962 = vmatpush1.bf16.msra.mxu0 %v5945
        %5963 = vmatprep.subr.bf16.mxu0 0
        %5964 = vmatpush1.bf16.msra.mxu0 %v5946
        %5965 = vmatprep.subr.bf16.mxu0 0
        %5966 = vmatpush1.bf16.msra.mxu0 0
        %5967 = vmatprep.subr.bf16.mxu0 0
        %5968 = vmatpush1.bf16.msra.mxu0 0
        %5969 = vmatprep.subr.bf16.mxu0 0
        %5970 = vmatpush1.bf16.msra.mxu0 0
        %5971 = vmatprep.subr.bf16.mxu0 0
        %5972 = vmatpush1.bf16.msra.mxu0 0
        %5973 = vmatprep.subr.bf16.mxu0 0
        %5974 = vmatpush1.bf16.msra.mxu0 0
        %5975 = vmatprep.subr.bf16.mxu0 0
        %5976 = vmatpush1.bf16.msra.mxu0 0
        %5977 = vmatprep.subr.bf16.mxu0 0
        %5978 = vmatpush1.bf16.msra.mxu0 0
        %5979 = vmatprep.subr.bf16.mxu0 0
        %5980 = vmatpush1.bf16.msra.mxu0 0
        %5981 = vmatprep.subr.bf16.mxu0 0
        %5982 = vmatpush1.bf16.msra.mxu0 0
        %5983 = vmatprep.subr.bf16.mxu0 0
        %5984 = vmatpush1.bf16.msra.mxu0 0
        %5985 = vmatprep.subr.bf16.mxu0 0
        %5986 = vmatpush1.bf16.msra.mxu0 0
        %5987 = vmatprep.subr.bf16.mxu0 0
        %5988 = vmatpush1.bf16.msra.mxu0 0
        %5989 = vmatprep.mubr.bf16.mxu0 0
        %5990 = vmatmul.mubr.bf16.gmra.mrb[0].mxu0 %v5952
        %v5991 = vpop.f32.mrb[0].mxu0
        %v5992 = vadd.f32 %v5925, %v5991
        %v5993 = vpop.f32.mrb[0].mxu0
        %v5994 = vpop.f32.mrb[0].mxu0
        %v5995 = vadd.f32 %v5925, %v5994
        %v5996 = vpop.f32.mrb[0].mxu0
        %5997 = vmatprep.mubr.bf16.mxu0 0
        %5998 = vmatmul.mubr.bf16.gmra.mrb[0].mxu0 %v5955
        %v5999 = vpop.f32.mrb[0].mxu0
        %v6000 = vadd.f32 %v5925, %v5999
        %v6001 = vpop.f32.mrb[0].mxu0
        %v6002 = vpop.f32.mrb[0].mxu0
        %v6003 = vadd.f32 %v5925, %v6002
        %v6004 = vpop.f32.mrb[0].mxu0
        %6005 = vdwg.mxu0
        %v6006 = vxor.u32 %v5992, 2147483648
        %v6007 = vxor.u32 %v5995, 2147483648
        %v6008 = vxor.u32 %v6000, 2147483648
        %v6009 = vxor.u32 %v6003, 2147483648
        %v6010 = vmul.f32 %v6006, 1.442695
        %v6011 = vpow.pop %v6010
        %v6012 = vmul.f32 %v6007, 1.442695
        %v6013 = vpow.pop %v6012
        %v6014 = vmul.f32 %v6008, 1.442695
        %v6015 = vpow.pop %v6014
        %v6016 = vmul.f32 %v6009, 1.442695
        %v6017 = vpow.pop %v6016
        %v6018 = vadd.f32 %v6011, 1.0
        %v6019 = vadd.f32 %v6013, 1.0
        %v6020 = vadd.f32 %v6015, 1.0
        %v6021 = vadd.f32 %v6017, 1.0
        %v6022 = vrcp.pop %v6018
        %v6023 = vmul.f32 1.0, %v6022
        %v6024 = vrcp.pop %v6019
        %v6025 = vmul.f32 1.0, %v6024
        %v6026 = vrcp.pop %v6020
        %v6027 = vmul.f32 1.0, %v6026
        %v6028 = vrcp.pop %v6021
        %v6029 = vmul.f32 1.0, %v6028
        %6034 = vrot.lane.b32.xlu0 %v6023, 64
        %v6035 = vpop.permute.xlu0 %6034
        %6036 = vrot.lane.b32.xlu0 %v6025, 64
        %v6037 = vpop.permute.xlu0 %6036
        %6038 = vrot.lane.b32.xlu0 %v6027, 64
        %v6039 = vpop.permute.xlu0 %6038
        %6040 = vrot.lane.b32.xlu0 %v6029, 64
        %v6041 = vpop.permute.xlu0 %6040
        %v6046 = vmul.f32 %v5992, %v6035
        %v6047 = vmul.f32 %v5995, %v6037
        %v6048 = vmul.f32 %v6000, %v6039
        %v6049 = vmul.f32 %v6003, %v6041
        %v6050 = vlaneseq
        %v6051 = vshrl.u32 %v6050, 7
        %v6052 = vadd.s32 %v6051, 8
        %v6053 = vadd.s32 %v6051, 16
        %v6054 = vadd.s32 %v6051, 24
        %vm6055 = vcmp.lt.s32.totalorder %v6051, 0
        %v6056 = vsub.s32 0, %v6051
        %v6057 = vsel %vm6055, %v6056, %v6051
        %v6058 = vshrl.u32 %v6057, 4
        %v6059 = vand.u32 %v6057, 15
        %v6060 = vsub.s32 0, %v6059
        %v6061 = vsel %vm6055, %v6060, %v6059
        %vm6062 = vcmp.lt.s32.totalorder %v6052, 0
        %v6063 = vsub.s32 0, %v6052
        %v6064 = vsel %vm6062, %v6063, %v6052
        %v6065 = vshrl.u32 %v6064, 4
        %v6066 = vand.u32 %v6064, 15
        %v6067 = vsub.s32 0, %v6066
        %v6068 = vsel %vm6062, %v6067, %v6066
        %vm6069 = vcmp.lt.s32.totalorder %v6053, 0
        %v6070 = vsub.s32 0, %v6053
        %v6071 = vsel %vm6069, %v6070, %v6053
        %v6072 = vshrl.u32 %v6071, 4
        %v6073 = vand.u32 %v6071, 15
        %v6074 = vsub.s32 0, %v6073
        %v6075 = vsel %vm6069, %v6074, %v6073
        %vm6076 = vcmp.lt.s32.totalorder %v6054, 0
        %v6077 = vsub.s32 0, %v6054
        %v6078 = vsel %vm6076, %v6077, %v6054
        %v6079 = vshrl.u32 %v6078, 4
        %v6080 = vand.u32 %v6078, 15
        %v6081 = vsub.s32 0, %v6080
        %v6082 = vsel %vm6076, %v6081, %v6080
        %vm6083 = vcmp.ne.s32.totalorder %v6061, 0
        %vm6084 = vcmp.ne.s32.totalorder %v6068, 0
        %vm6085 = vcmp.ne.s32.totalorder %v6075, 0
        %vm6086 = vcmp.ne.s32.totalorder %v6082, 0
        %vm6087 = vcmp.lt.s32.totalorder %v6061, 0
        %vm6088 = vcmp.lt.s32.totalorder %v6068, 0
        %vm6089 = vcmp.lt.s32.totalorder %v6075, 0
        %vm6090 = vcmp.lt.s32.totalorder %v6082, 0
        %vm6091 = vmand %vm6087, %vm6083
        %vm6092 = vmand %vm6088, %vm6084
        %vm6093 = vmand %vm6089, %vm6085
        %vm6094 = vmand %vm6090, %vm6086
        %v6095 = vadd.s32 %v6061, 16
        %v6096 = vadd.s32 %v6068, 16
        %v6097 = vadd.s32 %v6075, 16
        %v6098 = vadd.s32 %v6082, 16
        %v6099 = vsel %vm6091, %v6095, %v6061
        %v6100 = vsel %vm6092, %v6096, %v6068
        %v6101 = vsel %vm6093, %v6097, %v6075
        %v6102 = vsel %vm6094, %v6098, %v6082
        %v6103 = vld [vmem:[%s45] sm:$0x1f]
        %v6104 = vrot.slane %v6046, 6
        %v6105 = vrot.slane %v6047, 6
        %v6106 = vrot.slane %v6048, 6
        %v6107 = vrot.slane %v6049, 6
        %vm6108 = vcmp.lt.s32.totalorder %v6051, 2
        %v6109 = vsel %vm6108, %v6106, %v6107
        %v6110 = vsel %vm6108, %v6105, %v6106
        %v6111 = vsel %vm6108, %v6104, %v6105
        %v6112 = vsel %vm6108, %v6107, %v6104
        %v6113 = vadd.s32 %v6099, 4294967294
        %v6114 = vadd.s32 %v6100, 4294967294
        %v6115 = vadd.s32 %v6101, 4294967294
        %v6116 = vadd.s32 %v6102, 4294967294
        %vm6117 = vcmp.ge.s32.totalorder %v6113, 0
        %vm6118 = vcmp.ge.s32.totalorder %v6114, 0
        %vm6119 = vcmp.ge.s32.totalorder %v6115, 0
        %vm6120 = vcmp.ge.s32.totalorder %v6116, 0
        %vm6121 = vcmp.lt.s32.totalorder %v6113, 16
        %vm6122 = vcmp.lt.s32.totalorder %v6114, 16
        %vm6123 = vcmp.lt.s32.totalorder %v6115, 16
        %vm6124 = vcmp.lt.s32.totalorder %v6116, 16
        %vm6125 = vmand %vm6117, %vm6121
        %vm6126 = vmand %vm6118, %vm6122
        %vm6127 = vmand %vm6119, %vm6123
        %vm6128 = vmand %vm6120, %vm6124
        %v6129 = vsel %vm6125, 1, 0
        %v6130 = vsel %vm6126, 1, 0
        %v6131 = vsel %vm6127, 1, 0
        %v6132 = vsel %vm6128, 1, 0
        %vm6133 = vcmp.eq.s32.totalorder %v6129, 1
        %vm6134 = vcmp.eq.s32.totalorder %v6130, 1
        %vm6135 = vcmp.eq.s32.totalorder %v6131, 1
        %vm6136 = vcmp.eq.s32.totalorder %v6132, 1
        %v6137 = vsel %vm6133, %v6112, 0.0
        %v6138 = vsel %vm6134, %v6111, 0.0
        %v6139 = vsel %vm6135, %v6110, 0.0
        %v6140 = vsel %vm6136, %v6109, 0.0
        %v6141 = vlaneseq
        %v6142 = vshrl.u32 %v6141, 7
        %v6143 = vsub.s32 0, %v6142
        %v6144 = vrot.slane %v6103, %v6143
        %v6145 = vmul.f32 %v6137, %v6144
        %v6146 = vmul.f32 %v6138, %v6144
        %v6147 = vmul.f32 %v6139, %v6144
        %v6148 = vmul.f32 %v6140, %v6144
        %v6149 = vadd.f32 %v6145, 0.0
        %v6150 = vadd.f32 %v6146, 0.0
        %v6151 = vadd.f32 %v6147, 0.0
        %v6152 = vadd.f32 %v6148, 0.0
        %v6153 = vrot.slane %v6046, 7
        %v6154 = vrot.slane %v6047, 7
        %v6155 = vrot.slane %v6048, 7
        %v6156 = vrot.slane %v6049, 7
        %vm6157 = vcmp.lt.s32.totalorder %v6051, 1
        %v6158 = vsel %vm6157, %v6155, %v6156
        %v6159 = vsel %vm6157, %v6154, %v6155
        %v6160 = vsel %vm6157, %v6153, %v6154
        %v6161 = vsel %vm6157, %v6156, %v6153
        %v6162 = vadd.s32 %v6099, 4294967295
        %v6163 = vadd.s32 %v6100, 4294967295
        %v6164 = vadd.s32 %v6101, 4294967295
        %v6165 = vadd.s32 %v6102, 4294967295
        %vm6166 = vcmp.ge.s32.totalorder %v6162, 0
        %vm6167 = vcmp.ge.s32.totalorder %v6163, 0
        %vm6168 = vcmp.ge.s32.totalorder %v6164, 0
        %vm6169 = vcmp.ge.s32.totalorder %v6165, 0
        %vm6170 = vcmp.lt.s32.totalorder %v6162, 16
        %vm6171 = vcmp.lt.s32.totalorder %v6163, 16
        %vm6172 = vcmp.lt.s32.totalorder %v6164, 16
        %vm6173 = vcmp.lt.s32.totalorder %v6165, 16
        %vm6174 = vmand %vm6166, %vm6170
        %vm6175 = vmand %vm6167, %vm6171
        %vm6176 = vmand %vm6168, %vm6172
        %vm6177 = vmand %vm6169, %vm6173
        %v6178 = vsel %vm6174, 1, 0
        %v6179 = vsel %vm6175, 1, 0
        %v6180 = vsel %vm6176, 1, 0
        %v6181 = vsel %vm6177, 1, 0
        %vm6182 = vcmp.eq.s32.totalorder %v6178, 1
        %vm6183 = vcmp.eq.s32.totalorder %v6179, 1
        %vm6184 = vcmp.eq.s32.totalorder %v6180, 1
        %vm6185 = vcmp.eq.s32.totalorder %v6181, 1
        %v6186 = vsel %vm6182, %v6161, 0.0
        %v6187 = vsel %vm6183, %v6160, 0.0
        %v6188 = vsel %vm6184, %v6159, 0.0
        %v6189 = vsel %vm6185, %v6158, 0.0
        %v6190 = vlaneseq
        %v6191 = vshrl.u32 %v6190, 7
        %v6192 = vsub.s32 1, %v6191
        %v6193 = vrot.slane %v6103, %v6192
        %v6194 = vmul.f32 %v6186, %v6193
        %v6195 = vmul.f32 %v6187, %v6193
        %v6196 = vmul.f32 %v6188, %v6193
        %v6197 = vmul.f32 %v6189, %v6193
        %v6198 = vadd.f32 %v6149, %v6194
        %v6199 = vadd.f32 %v6150, %v6195
        %v6200 = vadd.f32 %v6151, %v6196
        %v6201 = vadd.f32 %v6152, %v6197
        %v6202 = vlaneseq
        %v6203 = vshrl.u32 %v6202, 7
        %v6204 = vsub.s32 2, %v6203
        %v6205 = vrot.slane %v6103, %v6204
        %v6206 = vmul.f32 %v6046, %v6205
        %v6207 = vmul.f32 %v6047, %v6205
        %v6208 = vmul.f32 %v6048, %v6205
        %v6209 = vmul.f32 %v6049, %v6205
        %v6210 = vadd.f32 %v6198, %v6206
        %v6211 = vadd.f32 %v6199, %v6207
        %v6212 = vadd.f32 %v6200, %v6208
        %v6213 = vadd.f32 %v6201, %v6209
        %v6214 = vrot.slane %v6046, 1
        %v6215 = vrot.slane %v6047, 1
        %v6216 = vrot.slane %v6048, 1
        %v6217 = vrot.slane %v6049, 1
        %vm6218 = vcmp.lt.s32.totalorder %v6051, 7
        %v6219 = vsel %vm6218, %v6216, %v6217
        %v6220 = vsel %vm6218, %v6215, %v6216
        %v6221 = vsel %vm6218, %v6214, %v6215
        %v6222 = vsel %vm6218, %v6217, %v6214
        %v6223 = vadd.s32 %v6099, 1
        %v6224 = vadd.s32 %v6100, 1
        %v6225 = vadd.s32 %v6101, 1
        %v6226 = vadd.s32 %v6102, 1
        %vm6227 = vcmp.ge.s32.totalorder %v6223, 0
        %vm6228 = vcmp.ge.s32.totalorder %v6224, 0
        %vm6229 = vcmp.ge.s32.totalorder %v6225, 0
        %vm6230 = vcmp.ge.s32.totalorder %v6226, 0
        %vm6231 = vcmp.lt.s32.totalorder %v6223, 16
        %vm6232 = vcmp.lt.s32.totalorder %v6224, 16
        %vm6233 = vcmp.lt.s32.totalorder %v6225, 16
        %vm6234 = vcmp.lt.s32.totalorder %v6226, 16
        %vm6235 = vmand %vm6227, %vm6231
        %vm6236 = vmand %vm6228, %vm6232
        %vm6237 = vmand %vm6229, %vm6233
        %vm6238 = vmand %vm6230, %vm6234
        %v6239 = vsel %vm6235, 1, 0
        %v6240 = vsel %vm6236, 1, 0
        %v6241 = vsel %vm6237, 1, 0
        %v6242 = vsel %vm6238, 1, 0
        %vm6243 = vcmp.eq.s32.totalorder %v6239, 1
        %vm6244 = vcmp.eq.s32.totalorder %v6240, 1
        %vm6245 = vcmp.eq.s32.totalorder %v6241, 1
        %vm6246 = vcmp.eq.s32.totalorder %v6242, 1
        %v6247 = vsel %vm6243, %v6221, 0.0
        %v6248 = vsel %vm6244, %v6220, 0.0
        %v6249 = vsel %vm6245, %v6219, 0.0
        %v6250 = vsel %vm6246, %v6222, 0.0
        %v6251 = vlaneseq
        %v6252 = vshrl.u32 %v6251, 7
        %v6253 = vsub.s32 3, %v6252
        %v6254 = vrot.slane %v6103, %v6253
        %v6255 = vmul.f32 %v6247, %v6254
        %v6256 = vmul.f32 %v6248, %v6254
        %v6257 = vmul.f32 %v6249, %v6254
        %v6258 = vmul.f32 %v6250, %v6254
        %v6259 = vadd.f32 %v6210, %v6255
        %v6260 = vadd.f32 %v6211, %v6256
        %v6261 = vadd.f32 %v6212, %v6257
        %v6262 = vadd.f32 %v6213, %v6258
        %v6263 = vrot.slane %v6046, 2
        %v6264 = vrot.slane %v6047, 2
        %v6265 = vrot.slane %v6048, 2
        %v6266 = vrot.slane %v6049, 2
        %vm6267 = vcmp.lt.s32.totalorder %v6051, 6
        %v6268 = vsel %vm6267, %v6265, %v6266
        %v6269 = vsel %vm6267, %v6264, %v6265
        %v6270 = vsel %vm6267, %v6263, %v6264
        %v6271 = vsel %vm6267, %v6266, %v6263
        %v6272 = vadd.s32 %v6099, 2
        %v6273 = vadd.s32 %v6100, 2
        %v6274 = vadd.s32 %v6101, 2
        %v6275 = vadd.s32 %v6102, 2
        %vm6276 = vcmp.ge.s32.totalorder %v6272, 0
        %vm6277 = vcmp.ge.s32.totalorder %v6273, 0
        %vm6278 = vcmp.ge.s32.totalorder %v6274, 0
        %vm6279 = vcmp.ge.s32.totalorder %v6275, 0
        %vm6280 = vcmp.lt.s32.totalorder %v6272, 16
        %vm6281 = vcmp.lt.s32.totalorder %v6273, 16
        %vm6282 = vcmp.lt.s32.totalorder %v6274, 16
        %vm6283 = vcmp.lt.s32.totalorder %v6275, 16
        %vm6284 = vmand %vm6276, %vm6280
        %vm6285 = vmand %vm6277, %vm6281
        %vm6286 = vmand %vm6278, %vm6282
        %vm6287 = vmand %vm6279, %vm6283
        %v6288 = vsel %vm6284, 1, 0
        %v6289 = vsel %vm6285, 1, 0
        %v6290 = vsel %vm6286, 1, 0
        %v6291 = vsel %vm6287, 1, 0
        %vm6292 = vcmp.eq.s32.totalorder %v6288, 1
        %vm6293 = vcmp.eq.s32.totalorder %v6289, 1
        %vm6294 = vcmp.eq.s32.totalorder %v6290, 1
        %vm6295 = vcmp.eq.s32.totalorder %v6291, 1
        %v6296 = vsel %vm6292, %v6270, 0.0
        %v6297 = vsel %vm6293, %v6269, 0.0
        %v6298 = vsel %vm6294, %v6268, 0.0
        %v6299 = vsel %vm6295, %v6271, 0.0
        %v6300 = vlaneseq
        %v6301 = vshrl.u32 %v6300, 7
        %v6302 = vsub.s32 4, %v6301
        %v6303 = vrot.slane %v6103, %v6302
        %v6304 = vmul.f32 %v6296, %v6303
        %v6305 = vmul.f32 %v6297, %v6303
        %v6306 = vmul.f32 %v6298, %v6303
        %v6307 = vmul.f32 %v6299, %v6303
        %v6308 = vadd.f32 %v6259, %v6304
        %v6309 = vadd.f32 %v6260, %v6305
        %v6310 = vadd.f32 %v6261, %v6306
        %v6311 = vadd.f32 %v6262, %v6307
        %v6312 = vld [vmem:[%s47] sm:$0x1]
        %v6314 = vlaneseq
        %v6315 = vshrl.u32 %v6314, 7
        %v6316 = vsub.s32 0, %v6315
        %v6317 = vrot.slane %v6312, %v6316
        %v6319 = vadd.f32 %v6308, %v6317
        %v6320 = vadd.f32 %v6309, %v6317
        %v6321 = vadd.f32 %v6310, %v6317
        %v6322 = vadd.f32 %v6311, %v6317
        %v6323 = vsel %vm1321, %v6319, 0.0
        %6324 = vadd.xlane.f32.xlu0 %v6323
        %v6325 = vpop.xlane.xlu0 %6324
        %v6326 = vsel %vm1321, %v6320, 0.0
        %6327 = vadd.xlane.f32.xlu0 %v6326
        %v6328 = vpop.xlane.xlu0 %6327
        %v6329 = vsel %vm1321, %v6321, 0.0
        %6330 = vadd.xlane.f32.xlu0 %v6329
        %v6331 = vpop.xlane.xlu0 %6330
        %v6332 = vsel %vm1321, %v6322, 0.0
        %6333 = vadd.xlane.f32.xlu0 %v6332
        %v6334 = vpop.xlane.xlu0 %6333
        %v6335 = vmul.f32 %v6325, %v1904
        %v6336 = vmul.f32 %v6328, %v1904
        %v6337 = vmul.f32 %v6331, %v1904
        %v6338 = vmul.f32 %v6334, %v1904
        %v6339 = vadd.f32 %v6335, %v6336
        %v6340 = vrot.slane %v6339, 4
        %v6341 = vadd.f32 %v6339, %v6340
        %v6342 = vrot.slane %v6341, 2
        %v6343 = vadd.f32 %v6341, %v6342
        %v6344 = vrot.slane %v6343, 1
        %v6345 = vadd.f32 %v6343, %v6344
        %v6346 = vadd.f32 %v6337, %v6338
        %v6347 = vrot.slane %v6346, 4
        %v6348 = vadd.f32 %v6346, %v6347
        %v6349 = vrot.slane %v6348, 2
        %v6350 = vadd.f32 %v6348, %v6349
        %v6351 = vrot.slane %v6350, 1
        %v6352 = vadd.f32 %v6350, %v6351
        %v6353 = vrcp.pop 16.0
        %v6354 = vmul.f32 %v6345, %v6353
        %v6355 = vmul.f32 %v6352, %v6353
        %v6356 = vsub.f32 %v6319, %v6354
        %v6357 = vsub.f32 %v6320, %v6354
        %v6358 = vsub.f32 %v6321, %v6355
        %v6359 = vsub.f32 %v6322, %v6355
        %v6360 = vmul.f32 %v6356, %v6356
        %v6361 = vmul.f32 %v6357, %v6357
        %v6362 = vmul.f32 %v6358, %v6358
        %v6363 = vmul.f32 %v6359, %v6359
        %v6364 = vsel %vm1321, %v6360, 0.0
        %6365 = vadd.xlane.f32.xlu0 %v6364
        %v6366 = vpop.xlane.xlu0 %6365
        %v6367 = vsel %vm1321, %v6361, 0.0
        %6368 = vadd.xlane.f32.xlu0 %v6367
        %v6369 = vpop.xlane.xlu0 %6368
        %v6370 = vsel %vm1321, %v6362, 0.0
        %6371 = vadd.xlane.f32.xlu0 %v6370
        %v6372 = vpop.xlane.xlu0 %6371
        %v6373 = vsel %vm1321, %v6363, 0.0
        %6374 = vadd.xlane.f32.xlu0 %v6373
        %v6375 = vpop.xlane.xlu0 %6374
        %v6376 = vmul.f32 %v6366, %v1904
        %v6377 = vmul.f32 %v6369, %v1904
        %v6378 = vmul.f32 %v6372, %v1904
        %v6379 = vmul.f32 %v6375, %v1904
        %v6380 = vadd.f32 %v6376, %v6377
        %v6381 = vrot.slane %v6380, 4
        %v6382 = vadd.f32 %v6380, %v6381
        %v6383 = vrot.slane %v6382, 2
        %v6384 = vadd.f32 %v6382, %v6383
        %v6385 = vrot.slane %v6384, 1
        %v6386 = vadd.f32 %v6384, %v6385
        %v6387 = vadd.f32 %v6378, %v6379
        %v6388 = vrot.slane %v6387, 4
        %v6389 = vadd.f32 %v6387, %v6388
        %v6390 = vrot.slane %v6389, 2
        %v6391 = vadd.f32 %v6389, %v6390
        %v6392 = vrot.slane %v6391, 1
        %v6393 = vadd.f32 %v6391, %v6392
        %v6394 = vmul.f32 %v6386, %v6353
        %v6395 = vmul.f32 %v6393, %v6353
        %v6396 = vadd.f32 %v6394, 1e-05
        %v6397 = vadd.f32 %v6395, 1e-05
        %v6398 = vrsqrt.pop %v6396
        %v6399 = vrsqrt.pop %v6397
        %v6400 = vmul.f32 %v6356, %v6398
        %v6401 = vmul.f32 %v6357, %v6398
        %v6402 = vmul.f32 %v6358, %v6399
        %v6403 = vmul.f32 %v6359, %v6399
        %v6404 = vld [vmem:[%s49] sm:$0x1]
        %v6406 = vlaneseq
        %v6407 = vshrl.u32 %v6406, 7
        %v6408 = vsub.s32 0, %v6407
        %v6409 = vrot.slane %v6404, %v6408
        %v6411 = vmul.f32 %v6400, %v6409
        %v6412 = vmul.f32 %v6401, %v6409
        %v6413 = vmul.f32 %v6402, %v6409
        %v6414 = vmul.f32 %v6403, %v6409
        %v6415 = vld [vmem:[%s51] sm:$0x1]
        %v6417 = vlaneseq
        %v6418 = vshrl.u32 %v6417, 7
        %v6419 = vsub.s32 0, %v6418
        %v6420 = vrot.slane %v6415, %v6419
        %v6422 = vadd.f32 %v6411, %v6420
        %v6423 = vadd.f32 %v6412, %v6420
        %v6424 = vadd.f32 %v6413, %v6420
        %v6425 = vadd.f32 %v6414, %v6420
        %v6426 = vxor.u32 %v6422, 2147483648
        %v6427 = vxor.u32 %v6423, 2147483648
        %v6428 = vxor.u32 %v6424, 2147483648
        %v6429 = vxor.u32 %v6425, 2147483648
        %v6430 = vmul.f32 %v6426, 1.442695
        %v6431 = vpow.pop %v6430
        %v6432 = vmul.f32 %v6427, 1.442695
        %v6433 = vpow.pop %v6432
        %v6434 = vmul.f32 %v6428, 1.442695
        %v6435 = vpow.pop %v6434
        %v6436 = vmul.f32 %v6429, 1.442695
        %v6437 = vpow.pop %v6436
        %v6438 = vadd.f32 %v6431, 1.0
        %v6439 = vadd.f32 %v6433, 1.0
        %v6440 = vadd.f32 %v6435, 1.0
        %v6441 = vadd.f32 %v6437, 1.0
        %v6442 = vrcp.pop %v6438
        %v6443 = vmul.f32 1.0, %v6442
        %v6444 = vrcp.pop %v6439
        %v6445 = vmul.f32 1.0, %v6444
        %v6446 = vrcp.pop %v6440
        %v6447 = vmul.f32 1.0, %v6446
        %v6448 = vrcp.pop %v6441
        %v6449 = vmul.f32 1.0, %v6448
        %v6450 = vmul.f32 %v6422, %v6443
        %v6451 = vmul.f32 %v6423, %v6445
        %v6452 = vmul.f32 %v6424, %v6447
        %v6453 = vmul.f32 %v6425, %v6449
        %v6454 = vpack.c.bf16 %v6451, %v6450
        %v6455 = vpack.c.bf16 %v6453, %v6452
        %v6456 = vld [vmem:[%s53] sm:$0xf]
        %v6457 = vld [vmem:[%s53 + $0x4] sm:$0xf]
        %v6458 = vld [vmem:[%s53 + $0x8] sm:$0xf]
        %v6459 = vld [vmem:[%s53 + $0xc] sm:$0xf]
        %v6460 = vld [vmem:[%s53 + $0x10] sm:$0xf]
        %v6461 = vld [vmem:[%s53 + $0x14] sm:$0xf]
        %v6462 = vld [vmem:[%s53 + $0x18] sm:$0xf]
        %v6463 = vld [vmem:[%s53 + $0x1c] sm:$0xf]
        %v6464 = vld [vmem:[%s55] sm:$0x1]
        %v6466 = vlaneseq
        %v6467 = vshrl.u32 %v6466, 7
        %v6468 = vsub.s32 0, %v6467
        %v6469 = vrot.slane %v6464, %v6468
        %v6479 = vunpack.c.l.b16 %v6456
        %v6480 = vunpack.c.l.b16 %v6457
        %v6481 = vunpack.c.l.b16 %v6458
        %v6482 = vunpack.c.l.b16 %v6459
        %v6483 = vunpack.c.l.b16 %v6460
        %v6484 = vunpack.c.l.b16 %v6461
        %v6485 = vunpack.c.l.b16 %v6462
        %v6486 = vunpack.c.l.b16 %v6463
        %v6487 = vpack.c.b16 %v6480, %v6479
        %v6488 = vpack.c.b16 %v6482, %v6481
        %v6489 = vpack.c.b16 %v6484, %v6483
        %v6490 = vpack.c.b16 %v6486, %v6485
        %v6496 = vsel %vm1321, %v6454, 0
        %v6499 = vsel %vm1321, %v6455, 0
        %6501 = vmatprep.subr.bf16.mxu0 0
        %6502 = vmatpush1.bf16.msra.mxu0 %v6487
        %6503 = vmatprep.subr.bf16.mxu0 0
        %6504 = vmatpush1.bf16.msra.mxu0 %v6488
        %6505 = vmatprep.subr.bf16.mxu0 0
        %6506 = vmatpush1.bf16.msra.mxu0 %v6489
        %6507 = vmatprep.subr.bf16.mxu0 0
        %6508 = vmatpush1.bf16.msra.mxu0 %v6490
        %6509 = vmatprep.subr.bf16.mxu0 0
        %6510 = vmatpush1.bf16.msra.mxu0 0
        %6511 = vmatprep.subr.bf16.mxu0 0
        %6512 = vmatpush1.bf16.msra.mxu0 0
        %6513 = vmatprep.subr.bf16.mxu0 0
        %6514 = vmatpush1.bf16.msra.mxu0 0
        %6515 = vmatprep.subr.bf16.mxu0 0
        %6516 = vmatpush1.bf16.msra.mxu0 0
        %6517 = vmatprep.subr.bf16.mxu0 0
        %6518 = vmatpush1.bf16.msra.mxu0 0
        %6519 = vmatprep.subr.bf16.mxu0 0
        %6520 = vmatpush1.bf16.msra.mxu0 0
        %6521 = vmatprep.subr.bf16.mxu0 0
        %6522 = vmatpush1.bf16.msra.mxu0 0
        %6523 = vmatprep.subr.bf16.mxu0 0
        %6524 = vmatpush1.bf16.msra.mxu0 0
        %6525 = vmatprep.subr.bf16.mxu0 0
        %6526 = vmatpush1.bf16.msra.mxu0 0
        %6527 = vmatprep.subr.bf16.mxu0 0
        %6528 = vmatpush1.bf16.msra.mxu0 0
        %6529 = vmatprep.subr.bf16.mxu0 0
        %6530 = vmatpush1.bf16.msra.mxu0 0
        %6531 = vmatprep.subr.bf16.mxu0 0
        %6532 = vmatpush1.bf16.msra.mxu0 0
        %6533 = vmatprep.mubr.bf16.mxu0 0
        %6534 = vmatmul.mubr.bf16.gmra.mrb[0].mxu0 %v6496
        %v6535 = vpop.f32.mrb[0].mxu0
        %v6536 = vadd.f32 %v6469, %v6535
        %v6537 = vpop.f32.mrb[0].mxu0
        %v6538 = vpop.f32.mrb[0].mxu0
        %v6539 = vadd.f32 %v6469, %v6538
        %v6540 = vpop.f32.mrb[0].mxu0
        %6541 = vmatprep.mubr.bf16.mxu0 0
        %6542 = vmatmul.mubr.bf16.gmra.mrb[0].mxu0 %v6499
        %v6543 = vpop.f32.mrb[0].mxu0
        %v6544 = vadd.f32 %v6469, %v6543
        %v6545 = vpop.f32.mrb[0].mxu0
        %v6546 = vpop.f32.mrb[0].mxu0
        %v6547 = vadd.f32 %v6469, %v6546
        %v6548 = vpop.f32.mrb[0].mxu0
        %6549 = vdwg.mxu0
        %v6550 = vadd.f32 %v5832, %v6536
        %v6551 = vadd.f32 %v5833, %v6539
        %v6552 = vadd.f32 %v5834, %v6544
        %v6553 = vadd.f32 %v5835, %v6547
        %v6554 = vld [vmem:[%s57] sm:$0x1]
        %v6555 = vld [vmem:[%s59] sm:$0x1]
        %v6556 = vsel %vm1321, %v6550, 0.0
        %6557 = vadd.xlane.f32.xlu0 %v6556
        %v6558 = vpop.xlane.xlu0 %6557
        %v6559 = vsel %vm1321, %v6551, 0.0
        %6560 = vadd.xlane.f32.xlu0 %v6559
        %v6561 = vpop.xlane.xlu0 %6560
        %v6562 = vsel %vm1321, %v6552, 0.0
        %6563 = vadd.xlane.f32.xlu0 %v6562
        %v6564 = vpop.xlane.xlu0 %6563
        %v6565 = vsel %vm1321, %v6553, 0.0
        %6566 = vadd.xlane.f32.xlu0 %v6565
        %v6567 = vpop.xlane.xlu0 %6566
        %v6568 = vmul.f32 %v6558, %v1904
        %v6569 = vmul.f32 %v6561, %v1904
        %v6570 = vmul.f32 %v6564, %v1904
        %v6571 = vmul.f32 %v6567, %v1904
        %v6572 = vsub.f32 %v6550, %v6568
        %v6573 = vsub.f32 %v6551, %v6569
        %v6574 = vsub.f32 %v6552, %v6570
        %v6575 = vsub.f32 %v6553, %v6571
        %v6576 = vmul.f32 %v6572, %v6572
        %v6577 = vmul.f32 %v6573, %v6573
        %v6578 = vmul.f32 %v6574, %v6574
        %v6579 = vmul.f32 %v6575, %v6575
        %v6580 = vsel %vm1321, %v6576, 0.0
        %6581 = vadd.xlane.f32.xlu0 %v6580
        %v6582 = vpop.xlane.xlu0 %6581
        %v6583 = vsel %vm1321, %v6577, 0.0
        %6584 = vadd.xlane.f32.xlu0 %v6583
        %v6585 = vpop.xlane.xlu0 %6584
        %v6586 = vsel %vm1321, %v6578, 0.0
        %6587 = vadd.xlane.f32.xlu0 %v6586
        %v6588 = vpop.xlane.xlu0 %6587
        %v6589 = vsel %vm1321, %v6579, 0.0
        %6590 = vadd.xlane.f32.xlu0 %v6589
        %v6591 = vpop.xlane.xlu0 %6590
        %v6592 = vmul.f32 %v6582, %v1904
        %v6593 = vmul.f32 %v6585, %v1904
        %v6594 = vmul.f32 %v6588, %v1904
        %v6595 = vmul.f32 %v6591, %v1904
        %v6596 = vadd.f32 %v6592, 1e-05
        %v6597 = vadd.f32 %v6593, 1e-05
        %v6598 = vadd.f32 %v6594, 1e-05
        %v6599 = vadd.f32 %v6595, 1e-05
        %v6600 = vrsqrt.pop %v6596
        %v6601 = vrsqrt.pop %v6597
        %v6602 = vrsqrt.pop %v6598
        %v6603 = vrsqrt.pop %v6599
        %v6604 = vmul.f32 %v6572, %v6600
        %v6605 = vmul.f32 %v6573, %v6601
        %v6606 = vmul.f32 %v6574, %v6602
        %v6607 = vmul.f32 %v6575, %v6603
        %v6609 = vlaneseq
        %v6610 = vshrl.u32 %v6609, 7
        %v6611 = vsub.s32 0, %v6610
        %v6612 = vrot.slane %v6554, %v6611
        %v6614 = vmul.f32 %v6604, %v6612
        %v6615 = vmul.f32 %v6605, %v6612
        %v6616 = vmul.f32 %v6606, %v6612
        %v6617 = vmul.f32 %v6607, %v6612
        %v6619 = vlaneseq
        %v6620 = vshrl.u32 %v6619, 7
        %v6621 = vsub.s32 0, %v6620
        %v6622 = vrot.slane %v6555, %v6621
        %v6624 = vadd.f32 %v6614, %v6622
        %v6625 = vadd.f32 %v6615, %v6622
        %v6626 = vadd.f32 %v6616, %v6622
        %v6627 = vadd.f32 %v6617, %v6622
        %v6628 = vpack.c.bf16 %v6625, %v6624
        %v6629 = vpack.c.bf16 %v6627, %v6626
        %v6630 = vld [vmem:[%s61] sm:$0xff]
        %v6631 = vld [vmem:[%s61 + $0x8] sm:$0xff]
        %v6632 = vld [vmem:[%s61 + $0x10] sm:$0xff]
        %v6633 = vld [vmem:[%s61 + $0x18] sm:$0xff]
        %v6634 = vld [vmem:[%s61 + $0x20] sm:$0xff]
        %v6635 = vld [vmem:[%s61 + $0x28] sm:$0xff]
        %v6636 = vld [vmem:[%s61 + $0x30] sm:$0xff]
        %v6637 = vld [vmem:[%s61 + $0x38] sm:$0xff]
        %v6638 = vld [vmem:[%s61 + $0x40] sm:$0xff]
        %v6639 = vld [vmem:[%s61 + $0x48] sm:$0xff]
        %v6640 = vld [vmem:[%s61 + $0x50] sm:$0xff]
        %v6641 = vld [vmem:[%s61 + $0x58] sm:$0xff]
        %v6642 = vld [vmem:[%s61 + $0x60] sm:$0xff]
        %v6643 = vld [vmem:[%s61 + $0x68] sm:$0xff]
        %v6644 = vld [vmem:[%s61 + $0x70] sm:$0xff]
        %v6645 = vld [vmem:[%s61 + $0x78] sm:$0xff]
        %v6646 = vld [vmem:[%s61 + $0x80] sm:$0xff]
        %v6647 = vld [vmem:[%s61 + $0x88] sm:$0xff]
        %v6648 = vld [vmem:[%s61 + $0x90] sm:$0xff]
        %v6649 = vld [vmem:[%s61 + $0x98] sm:$0xff]
        %v6650 = vld [vmem:[%s61 + $0xa0] sm:$0xff]
        %v6651 = vld [vmem:[%s61 + $0xa8] sm:$0xff]
        %v6652 = vld [vmem:[%s61 + $0xb0] sm:$0xff]
        %v6653 = vld [vmem:[%s61 + $0xb8] sm:$0xff]
        %v6654 = vld [vmem:[%s61 + $0xc0] sm:$0xff]
        %v6655 = vld [vmem:[%s61 + $0xc8] sm:$0xff]
        %v6656 = vld [vmem:[%s61 + $0xd0] sm:$0xff]
        %v6657 = vld [vmem:[%s61 + $0xd8] sm:$0xff]
        %v6658 = vld [vmem:[%s61 + $0xe0] sm:$0xff]
        %v6659 = vld [vmem:[%s61 + $0xe8] sm:$0xff]
        %v6660 = vld [vmem:[%s61 + $0xf0] sm:$0xff]
        %v6661 = vld [vmem:[%s61 + $0xf8] sm:$0xff]
        %v6662 = vld [vmem:[%s63] sm:$0xff]
        %v6664 = vlaneseq
        %v6665 = vshrl.u32 %v6664, 7
        %v6666 = vsub.s32 0, %v6665
        %v6667 = vrot.slane %v6662, %v6666
        %v6668 = vlaneseq
        %v6669 = vshrl.u32 %v6668, 7
        %v6670 = vsub.s32 1, %v6669
        %v6671 = vrot.slane %v6662, %v6670
        %v6672 = vlaneseq
        %v6673 = vshrl.u32 %v6672, 7
        %v6674 = vsub.s32 2, %v6673
        %v6675 = vrot.slane %v6662, %v6674
        %v6676 = vlaneseq
        %v6677 = vshrl.u32 %v6676, 7
        %v6678 = vsub.s32 3, %v6677
        %v6679 = vrot.slane %v6662, %v6678
        %v6680 = vlaneseq
        %v6681 = vshrl.u32 %v6680, 7
        %v6682 = vsub.s32 4, %v6681
        %v6683 = vrot.slane %v6662, %v6682
        %v6684 = vlaneseq
        %v6685 = vshrl.u32 %v6684, 7
        %v6686 = vsub.s32 5, %v6685
        %v6687 = vrot.slane %v6662, %v6686
        %v6688 = vlaneseq
        %v6689 = vshrl.u32 %v6688, 7
        %v6690 = vsub.s32 6, %v6689
        %v6691 = vrot.slane %v6662, %v6690
        %v6692 = vlaneseq
        %v6693 = vshrl.u32 %v6692, 7
        %v6694 = vsub.s32 7, %v6693
        %v6695 = vrot.slane %v6662, %v6694
        %v6736 = vunpack.c.l.b16 %v6630
        %v6737 = vunpack.c.h.b16 %v6630
        %v6738 = vunpack.c.l.b16 %v6631
        %v6739 = vunpack.c.h.b16 %v6631
        %v6740 = vunpack.c.l.b16 %v6632
        %v6741 = vunpack.c.h.b16 %v6632
        %v6742 = vunpack.c.l.b16 %v6633
        %v6743 = vunpack.c.h.b16 %v6633
        %v6744 = vunpack.c.l.b16 %v6634
        %v6745 = vunpack.c.h.b16 %v6634
        %v6746 = vunpack.c.l.b16 %v6635
        %v6747 = vunpack.c.h.b16 %v6635
        %v6748 = vunpack.c.l.b16 %v6636
        %v6749 = vunpack.c.h.b16 %v6636
        %v6750 = vunpack.c.l.b16 %v6637
        %v6751 = vunpack.c.h.b16 %v6637
        %v6752 = vunpack.c.l.b16 %v6638
        %v6753 = vunpack.c.h.b16 %v6638
        %v6754 = vunpack.c.l.b16 %v6639
        %v6755 = vunpack.c.h.b16 %v6639
        %v6756 = vunpack.c.l.b16 %v6640
        %v6757 = vunpack.c.h.b16 %v6640
        %v6758 = vunpack.c.l.b16 %v6641
        %v6759 = vunpack.c.h.b16 %v6641
        %v6760 = vunpack.c.l.b16 %v6642
        %v6761 = vunpack.c.h.b16 %v6642
        %v6762 = vunpack.c.l.b16 %v6643
        %v6763 = vunpack.c.h.b16 %v6643
        %v6764 = vunpack.c.l.b16 %v6644
        %v6765 = vunpack.c.h.b16 %v6644
        %v6766 = vunpack.c.l.b16 %v6645
        %v6767 = vunpack.c.h.b16 %v6645
        %v6768 = vunpack.c.l.b16 %v6646
        %v6769 = vunpack.c.h.b16 %v6646
        %v6770 = vunpack.c.l.b16 %v6647
        %v6771 = vunpack.c.h.b16 %v6647
        %v6772 = vunpack.c.l.b16 %v6648
        %v6773 = vunpack.c.h.b16 %v6648
        %v6774 = vunpack.c.l.b16 %v6649
        %v6775 = vunpack.c.h.b16 %v6649
        %v6776 = vunpack.c.l.b16 %v6650
        %v6777 = vunpack.c.h.b16 %v6650
        %v6778 = vunpack.c.l.b16 %v6651
        %v6779 = vunpack.c.h.b16 %v6651
        %v6780 = vunpack.c.l.b16 %v6652
        %v6781 = vunpack.c.h.b16 %v6652
        %v6782 = vunpack.c.l.b16 %v6653
        %v6783 = vunpack.c.h.b16 %v6653
        %v6784 = vunpack.c.l.b16 %v6654
        %v6785 = vunpack.c.h.b16 %v6654
        %v6786 = vunpack.c.l.b16 %v6655
        %v6787 = vunpack.c.h.b16 %v6655
        %v6788 = vunpack.c.l.b16 %v6656
        %v6789 = vunpack.c.h.b16 %v6656
        %v6790 = vunpack.c.l.b16 %v6657
        %v6791 = vunpack.c.h.b16 %v6657
        %v6792 = vunpack.c.l.b16 %v6658
        %v6793 = vunpack.c.h.b16 %v6658
        %v6794 = vunpack.c.l.b16 %v6659
        %v6795 = vunpack.c.h.b16 %v6659
        %v6796 = vunpack.c.l.b16 %v6660
        %v6797 = vunpack.c.h.b16 %v6660
        %v6798 = vunpack.c.l.b16 %v6661
        %v6799 = vunpack.c.h.b16 %v6661
        %v6800 = vpack.c.b16 %v6744, %v6736
        %v6801 = vpack.c.b16 %v6745, %v6737
        %v6802 = vpack.c.b16 %v6746, %v6738
        %v6803 = vpack.c.b16 %v6747, %v6739
        %v6804 = vpack.c.b16 %v6748, %v6740
        %v6805 = vpack.c.b16 %v6749, %v6741
        %v6806 = vpack.c.b16 %v6750, %v6742
        %v6807 = vpack.c.b16 %v6751, %v6743
        %v6808 = vpack.c.b16 %v6760, %v6752
        %v6809 = vpack.c.b16 %v6761, %v6753
        %v6810 = vpack.c.b16 %v6762, %v6754
        %v6811 = vpack.c.b16 %v6763, %v6755
        %v6812 = vpack.c.b16 %v6764, %v6756
        %v6813 = vpack.c.b16 %v6765, %v6757
        %v6814 = vpack.c.b16 %v6766, %v6758
        %v6815 = vpack.c.b16 %v6767, %v6759
        %v6816 = vpack.c.b16 %v6776, %v6768
        %v6817 = vpack.c.b16 %v6777, %v6769
        %v6818 = vpack.c.b16 %v6778, %v6770
        %v6819 = vpack.c.b16 %v6779, %v6771
        %v6820 = vpack.c.b16 %v6780, %v6772
        %v6821 = vpack.c.b16 %v6781, %v6773
        %v6822 = vpack.c.b16 %v6782, %v6774
        %v6823 = vpack.c.b16 %v6783, %v6775
        %v6824 = vpack.c.b16 %v6792, %v6784
        %v6825 = vpack.c.b16 %v6793, %v6785
        %v6826 = vpack.c.b16 %v6794, %v6786
        %v6827 = vpack.c.b16 %v6795, %v6787
        %v6828 = vpack.c.b16 %v6796, %v6788
        %v6829 = vpack.c.b16 %v6797, %v6789
        %v6830 = vpack.c.b16 %v6798, %v6790
        %v6831 = vpack.c.b16 %v6799, %v6791
        %v6865 = vsel %vm1321, %v6628, 0
        %v6868 = vsel %vm1321, %v6629, 0
        %6870 = vmatprep.subr.bf16.mxu0 %v6801
        %6871 = vmatpush1.bf16.msra.mxu0 %v6800
        %6872 = vmatprep.subr.bf16.mxu0 %v6809
        %6873 = vmatpush1.bf16.msra.mxu0 %v6808
        %6874 = vmatprep.subr.bf16.mxu0 %v6817
        %6875 = vmatpush1.bf16.msra.mxu0 %v6816
        %6876 = vmatprep.subr.bf16.mxu0 %v6825
        %6877 = vmatpush1.bf16.msra.mxu0 %v6824
        %6878 = vmatprep.subr.bf16.mxu0 0
        %6879 = vmatpush1.bf16.msra.mxu0 0
        %6880 = vmatprep.subr.bf16.mxu0 0
        %6881 = vmatpush1.bf16.msra.mxu0 0
        %6882 = vmatprep.subr.bf16.mxu0 0
        %6883 = vmatpush1.bf16.msra.mxu0 0
        %6884 = vmatprep.subr.bf16.mxu0 0
        %6885 = vmatpush1.bf16.msra.mxu0 0
        %6886 = vmatprep.subr.bf16.mxu0 0
        %6887 = vmatpush1.bf16.msra.mxu0 0
        %6888 = vmatprep.subr.bf16.mxu0 0
        %6889 = vmatpush1.bf16.msra.mxu0 0
        %6890 = vmatprep.subr.bf16.mxu0 0
        %6891 = vmatpush1.bf16.msra.mxu0 0
        %6892 = vmatprep.subr.bf16.mxu0 0
        %6893 = vmatpush1.bf16.msra.mxu0 0
        %6894 = vmatprep.subr.bf16.mxu0 0
        %6895 = vmatpush1.bf16.msra.mxu0 0
        %6896 = vmatprep.subr.bf16.mxu0 0
        %6897 = vmatpush1.bf16.msra.mxu0 0
        %6898 = vmatprep.subr.bf16.mxu0 0
        %6899 = vmatpush1.bf16.msra.mxu0 0
        %6900 = vmatprep.subr.bf16.mxu0 0
        %6901 = vmatpush1.bf16.msra.mxu0 0
        %6902 = vmatprep.mubr.bf16.mxu0 0
        %6903 = vmatmul.mubr.bf16.gmra.mrb[0].mxu0 %v6865
        %v6904 = vpop.f32.mrb[0].mxu0
        %v6905 = vadd.f32 %v6667, %v6904
        %v6906 = vpop.f32.mrb[0].mxu0
        %v6907 = vadd.f32 %v6671, %v6906
        %v6908 = vpop.f32.mrb[0].mxu0
        %v6909 = vadd.f32 %v6667, %v6908
        %v6910 = vpop.f32.mrb[0].mxu0
        %v6911 = vadd.f32 %v6671, %v6910
        %6912 = vmatprep.mubr.bf16.mxu0 0
        %6913 = vmatmul.mubr.bf16.gmra.mrb[0].mxu0 %v6868
        %v6914 = vpop.f32.mrb[0].mxu0
        %v6915 = vadd.f32 %v6667, %v6914
        %v6916 = vpop.f32.mrb[0].mxu0
        %v6917 = vadd.f32 %v6671, %v6916
        %v6918 = vpop.f32.mrb[0].mxu0
        %v6919 = vadd.f32 %v6667, %v6918
        %v6920 = vpop.f32.mrb[0].mxu0
        %v6921 = vadd.f32 %v6671, %v6920
        %6922 = vdwg.mxu0
        %6923 = vmatprep.subr.bf16.mxu0 %v6803
        %6924 = vmatpush1.bf16.msra.mxu0 %v6802
        %6925 = vmatprep.subr.bf16.mxu0 %v6811
        %6926 = vmatpush1.bf16.msra.mxu0 %v6810
        %6927 = vmatprep.subr.bf16.mxu0 %v6819
        %6928 = vmatpush1.bf16.msra.mxu0 %v6818
        %6929 = vmatprep.subr.bf16.mxu0 %v6827
        %6930 = vmatpush1.bf16.msra.mxu0 %v6826
        %6931 = vmatprep.subr.bf16.mxu0 0
        %6932 = vmatpush1.bf16.msra.mxu0 0
        %6933 = vmatprep.subr.bf16.mxu0 0
        %6934 = vmatpush1.bf16.msra.mxu0 0
        %6935 = vmatprep.subr.bf16.mxu0 0
        %6936 = vmatpush1.bf16.msra.mxu0 0
        %6937 = vmatprep.subr.bf16.mxu0 0
        %6938 = vmatpush1.bf16.msra.mxu0 0
        %6939 = vmatprep.subr.bf16.mxu0 0
        %6940 = vmatpush1.bf16.msra.mxu0 0
        %6941 = vmatprep.subr.bf16.mxu0 0
        %6942 = vmatpush1.bf16.msra.mxu0 0
        %6943 = vmatprep.subr.bf16.mxu0 0
        %6944 = vmatpush1.bf16.msra.mxu0 0
        %6945 = vmatprep.subr.bf16.mxu0 0
        %6946 = vmatpush1.bf16.msra.mxu0 0
        %6947 = vmatprep.subr.bf16.mxu0 0
        %6948 = vmatpush1.bf16.msra.mxu0 0
        %6949 = vmatprep.subr.bf16.mxu0 0
        %6950 = vmatpush1.bf16.msra.mxu0 0
        %6951 = vmatprep.subr.bf16.mxu0 0
        %6952 = vmatpush1.bf16.msra.mxu0 0
        %6953 = vmatprep.subr.bf16.mxu0 0
        %6954 = vmatpush1.bf16.msra.mxu0 0
        %6955 = vmatprep.mubr.bf16.mxu0 0
        %6956 = vmatmul.mubr.bf16.gmra.mrb[0].mxu0 %v6865
        %v6957 = vpop.f32.mrb[0].mxu0
        %v6958 = vadd.f32 %v6675, %v6957
        %v6959 = vpop.f32.mrb[0].mxu0
        %v6960 = vadd.f32 %v6679, %v6959
        %v6961 = vpop.f32.mrb[0].mxu0
        %v6962 = vadd.f32 %v6675, %v6961
        %v6963 = vpop.f32.mrb[0].mxu0
        %v6964 = vadd.f32 %v6679, %v6963
        %6965 = vmatprep.mubr.bf16.mxu0 0
        %6966 = vmatmul.mubr.bf16.gmra.mrb[0].mxu0 %v6868
        %v6967 = vpop.f32.mrb[0].mxu0
        %v6968 = vadd.f32 %v6675, %v6967
        %v6969 = vpop.f32.mrb[0].mxu0
        %v6970 = vadd.f32 %v6679, %v6969
        %v6971 = vpop.f32.mrb[0].mxu0
        %v6972 = vadd.f32 %v6675, %v6971
        %v6973 = vpop.f32.mrb[0].mxu0
        %v6974 = vadd.f32 %v6679, %v6973
        %6975 = vdwg.mxu0
        %6976 = vmatprep.subr.bf16.mxu0 %v6805
        %6977 = vmatpush1.bf16.msra.mxu0 %v6804
        %6978 = vmatprep.subr.bf16.mxu0 %v6813
        %6979 = vmatpush1.bf16.msra.mxu0 %v6812
        %6980 = vmatprep.subr.bf16.mxu0 %v6821
        %6981 = vmatpush1.bf16.msra.mxu0 %v6820
        %6982 = vmatprep.subr.bf16.mxu0 %v6829
        %6983 = vmatpush1.bf16.msra.mxu0 %v6828
        %6984 = vmatprep.subr.bf16.mxu0 0
        %6985 = vmatpush1.bf16.msra.mxu0 0
        %6986 = vmatprep.subr.bf16.mxu0 0
        %6987 = vmatpush1.bf16.msra.mxu0 0
        %6988 = vmatprep.subr.bf16.mxu0 0
        %6989 = vmatpush1.bf16.msra.mxu0 0
        %6990 = vmatprep.subr.bf16.mxu0 0
        %6991 = vmatpush1.bf16.msra.mxu0 0
        %6992 = vmatprep.subr.bf16.mxu0 0
        %6993 = vmatpush1.bf16.msra.mxu0 0
        %6994 = vmatprep.subr.bf16.mxu0 0
        %6995 = vmatpush1.bf16.msra.mxu0 0
        %6996 = vmatprep.subr.bf16.mxu0 0
        %6997 = vmatpush1.bf16.msra.mxu0 0
        %6998 = vmatprep.subr.bf16.mxu0 0
        %6999 = vmatpush1.bf16.msra.mxu0 0
        %7000 = vmatprep.subr.bf16.mxu0 0
        %7001 = vmatpush1.bf16.msra.mxu0 0
        %7002 = vmatprep.subr.bf16.mxu0 0
        %7003 = vmatpush1.bf16.msra.mxu0 0
        %7004 = vmatprep.subr.bf16.mxu0 0
        %7005 = vmatpush1.bf16.msra.mxu0 0
        %7006 = vmatprep.subr.bf16.mxu0 0
        %7007 = vmatpush1.bf16.msra.mxu0 0
        %7008 = vmatprep.mubr.bf16.mxu0 0
        %7009 = vmatmul.mubr.bf16.gmra.mrb[0].mxu0 %v6865
        %v7010 = vpop.f32.mrb[0].mxu0
        %v7011 = vadd.f32 %v6683, %v7010
        %v7012 = vpop.f32.mrb[0].mxu0
        %v7013 = vadd.f32 %v6687, %v7012
        %v7014 = vpop.f32.mrb[0].mxu0
        %v7015 = vadd.f32 %v6683, %v7014
        %v7016 = vpop.f32.mrb[0].mxu0
        %v7017 = vadd.f32 %v6687, %v7016
        %7018 = vmatprep.mubr.bf16.mxu0 0
        %7019 = vmatmul.mubr.bf16.gmra.mrb[0].mxu0 %v6868
        %v7020 = vpop.f32.mrb[0].mxu0
        %v7021 = vadd.f32 %v6683, %v7020
        %v7022 = vpop.f32.mrb[0].mxu0
        %v7023 = vadd.f32 %v6687, %v7022
        %v7024 = vpop.f32.mrb[0].mxu0
        %v7025 = vadd.f32 %v6683, %v7024
        %v7026 = vpop.f32.mrb[0].mxu0
        %v7027 = vadd.f32 %v6687, %v7026
        %7028 = vdwg.mxu0
        %7029 = vmatprep.subr.bf16.mxu0 %v6807
        %7030 = vmatpush1.bf16.msra.mxu0 %v6806
        %7031 = vmatprep.subr.bf16.mxu0 %v6815
        %7032 = vmatpush1.bf16.msra.mxu0 %v6814
        %7033 = vmatprep.subr.bf16.mxu0 %v6823
        %7034 = vmatpush1.bf16.msra.mxu0 %v6822
        %7035 = vmatprep.subr.bf16.mxu0 %v6831
        %7036 = vmatpush1.bf16.msra.mxu0 %v6830
        %7037 = vmatprep.subr.bf16.mxu0 0
        %7038 = vmatpush1.bf16.msra.mxu0 0
        %7039 = vmatprep.subr.bf16.mxu0 0
        %7040 = vmatpush1.bf16.msra.mxu0 0
        %7041 = vmatprep.subr.bf16.mxu0 0
        %7042 = vmatpush1.bf16.msra.mxu0 0
        %7043 = vmatprep.subr.bf16.mxu0 0
        %7044 = vmatpush1.bf16.msra.mxu0 0
        %7045 = vmatprep.subr.bf16.mxu0 0
        %7046 = vmatpush1.bf16.msra.mxu0 0
        %7047 = vmatprep.subr.bf16.mxu0 0
        %7048 = vmatpush1.bf16.msra.mxu0 0
        %7049 = vmatprep.subr.bf16.mxu0 0
        %7050 = vmatpush1.bf16.msra.mxu0 0
        %7051 = vmatprep.subr.bf16.mxu0 0
        %7052 = vmatpush1.bf16.msra.mxu0 0
        %7053 = vmatprep.subr.bf16.mxu0 0
        %7054 = vmatpush1.bf16.msra.mxu0 0
        %7055 = vmatprep.subr.bf16.mxu0 0
        %7056 = vmatpush1.bf16.msra.mxu0 0
        %7057 = vmatprep.subr.bf16.mxu0 0
        %7058 = vmatpush1.bf16.msra.mxu0 0
        %7059 = vmatprep.subr.bf16.mxu0 0
        %7060 = vmatpush1.bf16.msra.mxu0 0
        %7061 = vmatprep.mubr.bf16.mxu0 0
        %7062 = vmatmul.mubr.bf16.gmra.mrb[0].mxu0 %v6865
        %v7063 = vpop.f32.mrb[0].mxu0
        %v7064 = vadd.f32 %v6691, %v7063
        %v7065 = vpop.f32.mrb[0].mxu0
        %v7066 = vadd.f32 %v6695, %v7065
        %v7067 = vpop.f32.mrb[0].mxu0
        %v7068 = vadd.f32 %v6691, %v7067
        %v7069 = vpop.f32.mrb[0].mxu0
        %v7070 = vadd.f32 %v6695, %v7069
        %7071 = vmatprep.mubr.bf16.mxu0 0
        %7072 = vmatmul.mubr.bf16.gmra.mrb[0].mxu0 %v6868
        %v7073 = vpop.f32.mrb[0].mxu0
        %v7074 = vadd.f32 %v6691, %v7073
        %v7075 = vpop.f32.mrb[0].mxu0
        %v7076 = vadd.f32 %v6695, %v7075
        %v7077 = vpop.f32.mrb[0].mxu0
        %v7078 = vadd.f32 %v6691, %v7077
        %v7079 = vpop.f32.mrb[0].mxu0
        %v7080 = vadd.f32 %v6695, %v7079
        %7081 = vdwg.mxu0
        %v7082 = vxor.u32 %v6905, 2147483648
        %v7083 = vxor.u32 %v6907, 2147483648
        %v7084 = vxor.u32 %v6958, 2147483648
        %v7085 = vxor.u32 %v6960, 2147483648
        %v7086 = vxor.u32 %v7011, 2147483648
        %v7087 = vxor.u32 %v7013, 2147483648
        %v7088 = vxor.u32 %v7064, 2147483648
        %v7089 = vxor.u32 %v7066, 2147483648
        %v7090 = vxor.u32 %v6909, 2147483648
        %v7091 = vxor.u32 %v6911, 2147483648
        %v7092 = vxor.u32 %v6962, 2147483648
        %v7093 = vxor.u32 %v6964, 2147483648
        %v7094 = vxor.u32 %v7015, 2147483648
        %v7095 = vxor.u32 %v7017, 2147483648
        %v7096 = vxor.u32 %v7068, 2147483648
        %v7097 = vxor.u32 %v7070, 2147483648
        %v7098 = vxor.u32 %v6915, 2147483648
        %v7099 = vxor.u32 %v6917, 2147483648
        %v7100 = vxor.u32 %v6968, 2147483648
        %v7101 = vxor.u32 %v6970, 2147483648
        %v7102 = vxor.u32 %v7021, 2147483648
        %v7103 = vxor.u32 %v7023, 2147483648
        %v7104 = vxor.u32 %v7074, 2147483648
        %v7105 = vxor.u32 %v7076, 2147483648
        %v7106 = vxor.u32 %v6919, 2147483648
        %v7107 = vxor.u32 %v6921, 2147483648
        %v7108 = vxor.u32 %v6972, 2147483648
        %v7109 = vxor.u32 %v6974, 2147483648
        %v7110 = vxor.u32 %v7025, 2147483648
        %v7111 = vxor.u32 %v7027, 2147483648
        %v7112 = vxor.u32 %v7078, 2147483648
        %v7113 = vxor.u32 %v7080, 2147483648
        %v7114 = vmul.f32 %v7082, 1.442695
        %v7115 = vpow.pop %v7114
        %v7116 = vmul.f32 %v7083, 1.442695
        %v7117 = vpow.pop %v7116
        %v7118 = vmul.f32 %v7084, 1.442695
        %v7119 = vpow.pop %v7118
        %v7120 = vmul.f32 %v7085, 1.442695
        %v7121 = vpow.pop %v7120
        %v7122 = vmul.f32 %v7086, 1.442695
        %v7123 = vpow.pop %v7122
        %v7124 = vmul.f32 %v7087, 1.442695
        %v7125 = vpow.pop %v7124
        %v7126 = vmul.f32 %v7088, 1.442695
        %v7127 = vpow.pop %v7126
        %v7128 = vmul.f32 %v7089, 1.442695
        %v7129 = vpow.pop %v7128
        %v7130 = vmul.f32 %v7090, 1.442695
        %v7131 = vpow.pop %v7130
        %v7132 = vmul.f32 %v7091, 1.442695
        %v7133 = vpow.pop %v7132
        %v7134 = vmul.f32 %v7092, 1.442695
        %v7135 = vpow.pop %v7134
        %v7136 = vmul.f32 %v7093, 1.442695
        %v7137 = vpow.pop %v7136
        %v7138 = vmul.f32 %v7094, 1.442695
        %v7139 = vpow.pop %v7138
        %v7140 = vmul.f32 %v7095, 1.442695
        %v7141 = vpow.pop %v7140
        %v7142 = vmul.f32 %v7096, 1.442695
        %v7143 = vpow.pop %v7142
        %v7144 = vmul.f32 %v7097, 1.442695
        %v7145 = vpow.pop %v7144
        %v7146 = vmul.f32 %v7098, 1.442695
        %v7147 = vpow.pop %v7146
        %v7148 = vmul.f32 %v7099, 1.442695
        %v7149 = vpow.pop %v7148
        %v7150 = vmul.f32 %v7100, 1.442695
        %v7151 = vpow.pop %v7150
        %v7152 = vmul.f32 %v7101, 1.442695
        %v7153 = vpow.pop %v7152
        %v7154 = vmul.f32 %v7102, 1.442695
        %v7155 = vpow.pop %v7154
        %v7156 = vmul.f32 %v7103, 1.442695
        %v7157 = vpow.pop %v7156
        %v7158 = vmul.f32 %v7104, 1.442695
        %v7159 = vpow.pop %v7158
        %v7160 = vmul.f32 %v7105, 1.442695
        %v7161 = vpow.pop %v7160
        %v7162 = vmul.f32 %v7106, 1.442695
        %v7163 = vpow.pop %v7162
        %v7164 = vmul.f32 %v7107, 1.442695
        %v7165 = vpow.pop %v7164
        %v7166 = vmul.f32 %v7108, 1.442695
        %v7167 = vpow.pop %v7166
        %v7168 = vmul.f32 %v7109, 1.442695
        %v7169 = vpow.pop %v7168
        %v7170 = vmul.f32 %v7110, 1.442695
        %v7171 = vpow.pop %v7170
        %v7172 = vmul.f32 %v7111, 1.442695
        %v7173 = vpow.pop %v7172
        %v7174 = vmul.f32 %v7112, 1.442695
        %v7175 = vpow.pop %v7174
        %v7176 = vmul.f32 %v7113, 1.442695
        %v7177 = vpow.pop %v7176
        %v7178 = vadd.f32 %v7115, 1.0
        %v7179 = vadd.f32 %v7117, 1.0
        %v7180 = vadd.f32 %v7119, 1.0
        %v7181 = vadd.f32 %v7121, 1.0
        %v7182 = vadd.f32 %v7123, 1.0
        %v7183 = vadd.f32 %v7125, 1.0
        %v7184 = vadd.f32 %v7127, 1.0
        %v7185 = vadd.f32 %v7129, 1.0
        %v7186 = vadd.f32 %v7131, 1.0
        %v7187 = vadd.f32 %v7133, 1.0
        %v7188 = vadd.f32 %v7135, 1.0
        %v7189 = vadd.f32 %v7137, 1.0
        %v7190 = vadd.f32 %v7139, 1.0
        %v7191 = vadd.f32 %v7141, 1.0
        %v7192 = vadd.f32 %v7143, 1.0
        %v7193 = vadd.f32 %v7145, 1.0
        %v7194 = vadd.f32 %v7147, 1.0
        %v7195 = vadd.f32 %v7149, 1.0
        %v7196 = vadd.f32 %v7151, 1.0
        %v7197 = vadd.f32 %v7153, 1.0
        %v7198 = vadd.f32 %v7155, 1.0
        %v7199 = vadd.f32 %v7157, 1.0
        %v7200 = vadd.f32 %v7159, 1.0
        %v7201 = vadd.f32 %v7161, 1.0
        %v7202 = vadd.f32 %v7163, 1.0
        %v7203 = vadd.f32 %v7165, 1.0
        %v7204 = vadd.f32 %v7167, 1.0
        %v7205 = vadd.f32 %v7169, 1.0
        %v7206 = vadd.f32 %v7171, 1.0
        %v7207 = vadd.f32 %v7173, 1.0
        %v7208 = vadd.f32 %v7175, 1.0
        %v7209 = vadd.f32 %v7177, 1.0
        %v7210 = vrcp.pop %v7178
        %v7211 = vmul.f32 1.0, %v7210
        %v7212 = vrcp.pop %v7179
        %v7213 = vmul.f32 1.0, %v7212
        %v7214 = vrcp.pop %v7180
        %v7215 = vmul.f32 1.0, %v7214
        %v7216 = vrcp.pop %v7181
        %v7217 = vmul.f32 1.0, %v7216
        %v7218 = vrcp.pop %v7182
        %v7219 = vmul.f32 1.0, %v7218
        %v7220 = vrcp.pop %v7183
        %v7221 = vmul.f32 1.0, %v7220
        %v7222 = vrcp.pop %v7184
        %v7223 = vmul.f32 1.0, %v7222
        %v7224 = vrcp.pop %v7185
        %v7225 = vmul.f32 1.0, %v7224
        %v7226 = vrcp.pop %v7186
        %v7227 = vmul.f32 1.0, %v7226
        %v7228 = vrcp.pop %v7187
        %v7229 = vmul.f32 1.0, %v7228
        %v7230 = vrcp.pop %v7188
        %v7231 = vmul.f32 1.0, %v7230
        %v7232 = vrcp.pop %v7189
        %v7233 = vmul.f32 1.0, %v7232
        %v7234 = vrcp.pop %v7190
        %v7235 = vmul.f32 1.0, %v7234
        %v7236 = vrcp.pop %v7191
        %v7237 = vmul.f32 1.0, %v7236
        %v7238 = vrcp.pop %v7192
        %v7239 = vmul.f32 1.0, %v7238
        %v7240 = vrcp.pop %v7193
        %v7241 = vmul.f32 1.0, %v7240
        %v7242 = vrcp.pop %v7194
        %v7243 = vmul.f32 1.0, %v7242
        %v7244 = vrcp.pop %v7195
        %v7245 = vmul.f32 1.0, %v7244
        %v7246 = vrcp.pop %v7196
        %v7247 = vmul.f32 1.0, %v7246
        %v7248 = vrcp.pop %v7197
        %v7249 = vmul.f32 1.0, %v7248
        %v7250 = vrcp.pop %v7198
        %v7251 = vmul.f32 1.0, %v7250
        %v7252 = vrcp.pop %v7199
        %v7253 = vmul.f32 1.0, %v7252
        %v7254 = vrcp.pop %v7200
        %v7255 = vmul.f32 1.0, %v7254
        %v7256 = vrcp.pop %v7201
        %v7257 = vmul.f32 1.0, %v7256
        %v7258 = vrcp.pop %v7202
        %v7259 = vmul.f32 1.0, %v7258
        %v7260 = vrcp.pop %v7203
        %v7261 = vmul.f32 1.0, %v7260
        %v7262 = vrcp.pop %v7204
        %v7263 = vmul.f32 1.0, %v7262
        %v7264 = vrcp.pop %v7205
        %v7265 = vmul.f32 1.0, %v7264
        %v7266 = vrcp.pop %v7206
        %v7267 = vmul.f32 1.0, %v7266
        %v7268 = vrcp.pop %v7207
        %v7269 = vmul.f32 1.0, %v7268
        %v7270 = vrcp.pop %v7208
        %v7271 = vmul.f32 1.0, %v7270
        %v7272 = vrcp.pop %v7209
        %v7273 = vmul.f32 1.0, %v7272
        %v7274 = vmul.f32 %v6905, %v7211
        %v7275 = vmul.f32 %v6907, %v7213
        %v7276 = vmul.f32 %v6958, %v7215
        %v7277 = vmul.f32 %v6960, %v7217
        %v7278 = vmul.f32 %v7011, %v7219
        %v7279 = vmul.f32 %v7013, %v7221
        %v7280 = vmul.f32 %v7064, %v7223
        %v7281 = vmul.f32 %v7066, %v7225
        %v7282 = vmul.f32 %v6909, %v7227
        %v7283 = vmul.f32 %v6911, %v7229
        %v7284 = vmul.f32 %v6962, %v7231
        %v7285 = vmul.f32 %v6964, %v7233
        %v7286 = vmul.f32 %v7015, %v7235
        %v7287 = vmul.f32 %v7017, %v7237
        %v7288 = vmul.f32 %v7068, %v7239
        %v7289 = vmul.f32 %v7070, %v7241
        %v7290 = vmul.f32 %v6915, %v7243
        %v7291 = vmul.f32 %v6917, %v7245
        %v7292 = vmul.f32 %v6968, %v7247
        %v7293 = vmul.f32 %v6970, %v7249
        %v7294 = vmul.f32 %v7021, %v7251
        %v7295 = vmul.f32 %v7023, %v7253
        %v7296 = vmul.f32 %v7074, %v7255
        %v7297 = vmul.f32 %v7076, %v7257
        %v7298 = vmul.f32 %v6919, %v7259
        %v7299 = vmul.f32 %v6921, %v7261
        %v7300 = vmul.f32 %v6972, %v7263
        %v7301 = vmul.f32 %v6974, %v7265
        %v7302 = vmul.f32 %v7025, %v7267
        %v7303 = vmul.f32 %v7027, %v7269
        %v7304 = vmul.f32 %v7078, %v7271
        %v7305 = vmul.f32 %v7080, %v7273
        %v7306 = vpack.c.bf16 %v7282, %v7274
        %v7307 = vpack.c.bf16 %v7283, %v7275
        %v7308 = vpack.c.bf16 %v7284, %v7276
        %v7309 = vpack.c.bf16 %v7285, %v7277
        %v7310 = vpack.c.bf16 %v7286, %v7278
        %v7311 = vpack.c.bf16 %v7287, %v7279
        %v7312 = vpack.c.bf16 %v7288, %v7280
        %v7313 = vpack.c.bf16 %v7289, %v7281
        %v7314 = vpack.c.bf16 %v7298, %v7290
        %v7315 = vpack.c.bf16 %v7299, %v7291
        %v7316 = vpack.c.bf16 %v7300, %v7292
        %v7317 = vpack.c.bf16 %v7301, %v7293
        %v7318 = vpack.c.bf16 %v7302, %v7294
        %v7319 = vpack.c.bf16 %v7303, %v7295
        %v7320 = vpack.c.bf16 %v7304, %v7296
        %v7321 = vpack.c.bf16 %v7305, %v7297
        %v7322 = vld [vmem:[%s65] sm:$0xf]
        %v7323 = vld [vmem:[%s65 + $0x4] sm:$0xf]
        %v7324 = vld [vmem:[%s65 + $0x8] sm:$0xf]
        %v7325 = vld [vmem:[%s65 + $0xc] sm:$0xf]
        %v7326 = vld [vmem:[%s65 + $0x10] sm:$0xf]
        %v7327 = vld [vmem:[%s65 + $0x14] sm:$0xf]
        %v7328 = vld [vmem:[%s65 + $0x18] sm:$0xf]
        %v7329 = vld [vmem:[%s65 + $0x1c] sm:$0xf]
        %v7330 = vld [vmem:[%s65 + $0x20] sm:$0xf]
        %v7331 = vld [vmem:[%s65 + $0x24] sm:$0xf]
        %v7332 = vld [vmem:[%s65 + $0x28] sm:$0xf]
        %v7333 = vld [vmem:[%s65 + $0x2c] sm:$0xf]
        %v7334 = vld [vmem:[%s65 + $0x30] sm:$0xf]
        %v7335 = vld [vmem:[%s65 + $0x34] sm:$0xf]
        %v7336 = vld [vmem:[%s65 + $0x38] sm:$0xf]
        %v7337 = vld [vmem:[%s65 + $0x3c] sm:$0xf]
        %v7338 = vld [vmem:[%s65 + $0x40] sm:$0xf]
        %v7339 = vld [vmem:[%s65 + $0x44] sm:$0xf]
        %v7340 = vld [vmem:[%s65 + $0x48] sm:$0xf]
        %v7341 = vld [vmem:[%s65 + $0x4c] sm:$0xf]
        %v7342 = vld [vmem:[%s65 + $0x50] sm:$0xf]
        %v7343 = vld [vmem:[%s65 + $0x54] sm:$0xf]
        %v7344 = vld [vmem:[%s65 + $0x58] sm:$0xf]
        %v7345 = vld [vmem:[%s65 + $0x5c] sm:$0xf]
        %v7346 = vld [vmem:[%s65 + $0x60] sm:$0xf]
        %v7347 = vld [vmem:[%s65 + $0x64] sm:$0xf]
        %v7348 = vld [vmem:[%s65 + $0x68] sm:$0xf]
        %v7349 = vld [vmem:[%s65 + $0x6c] sm:$0xf]
        %v7350 = vld [vmem:[%s65 + $0x70] sm:$0xf]
        %v7351 = vld [vmem:[%s65 + $0x74] sm:$0xf]
        %v7352 = vld [vmem:[%s65 + $0x78] sm:$0xf]
        %v7353 = vld [vmem:[%s65 + $0x7c] sm:$0xf]
        %v7354 = vld [vmem:[%s65 + $0x80] sm:$0xf]
        %v7355 = vld [vmem:[%s65 + $0x84] sm:$0xf]
        %v7356 = vld [vmem:[%s65 + $0x88] sm:$0xf]
        %v7357 = vld [vmem:[%s65 + $0x8c] sm:$0xf]
        %v7358 = vld [vmem:[%s65 + $0x90] sm:$0xf]
        %v7359 = vld [vmem:[%s65 + $0x94] sm:$0xf]
        %v7360 = vld [vmem:[%s65 + $0x98] sm:$0xf]
        %v7361 = vld [vmem:[%s65 + $0x9c] sm:$0xf]
        %v7362 = vld [vmem:[%s65 + $0xa0] sm:$0xf]
        %v7363 = vld [vmem:[%s65 + $0xa4] sm:$0xf]
        %v7364 = vld [vmem:[%s65 + $0xa8] sm:$0xf]
        %v7365 = vld [vmem:[%s65 + $0xac] sm:$0xf]
        %v7366 = vld [vmem:[%s65 + $0xb0] sm:$0xf]
        %v7367 = vld [vmem:[%s65 + $0xb4] sm:$0xf]
        %v7368 = vld [vmem:[%s65 + $0xb8] sm:$0xf]
        %v7369 = vld [vmem:[%s65 + $0xbc] sm:$0xf]
        %v7370 = vld [vmem:[%s65 + $0xc0] sm:$0xf]
        %v7371 = vld [vmem:[%s65 + $0xc4] sm:$0xf]
        %v7372 = vld [vmem:[%s65 + $0xc8] sm:$0xf]
        %v7373 = vld [vmem:[%s65 + $0xcc] sm:$0xf]
        %v7374 = vld [vmem:[%s65 + $0xd0] sm:$0xf]
        %v7375 = vld [vmem:[%s65 + $0xd4] sm:$0xf]
        %v7376 = vld [vmem:[%s65 + $0xd8] sm:$0xf]
        %v7377 = vld [vmem:[%s65 + $0xdc] sm:$0xf]
        %v7378 = vld [vmem:[%s65 + $0xe0] sm:$0xf]
        %v7379 = vld [vmem:[%s65 + $0xe4] sm:$0xf]
        %v7380 = vld [vmem:[%s65 + $0xe8] sm:$0xf]
        %v7381 = vld [vmem:[%s65 + $0xec] sm:$0xf]
        %v7382 = vld [vmem:[%s65 + $0xf0] sm:$0xf]
        %v7383 = vld [vmem:[%s65 + $0xf4] sm:$0xf]
        %v7384 = vld [vmem:[%s65 + $0xf8] sm:$0xf]
        %v7385 = vld [vmem:[%s65 + $0xfc] sm:$0xf]
        %v7386 = vld [vmem:[%s65 + $0x100] sm:$0xf]
        %v7387 = vld [vmem:[%s65 + $0x104] sm:$0xf]
        %v7388 = vld [vmem:[%s65 + $0x108] sm:$0xf]
        %v7389 = vld [vmem:[%s65 + $0x10c] sm:$0xf]
        %v7390 = vld [vmem:[%s65 + $0x110] sm:$0xf]
        %v7391 = vld [vmem:[%s65 + $0x114] sm:$0xf]
        %v7392 = vld [vmem:[%s65 + $0x118] sm:$0xf]
        %v7393 = vld [vmem:[%s65 + $0x11c] sm:$0xf]
        %v7394 = vld [vmem:[%s65 + $0x120] sm:$0xf]
        %v7395 = vld [vmem:[%s65 + $0x124] sm:$0xf]
        %v7396 = vld [vmem:[%s65 + $0x128] sm:$0xf]
        %v7397 = vld [vmem:[%s65 + $0x12c] sm:$0xf]
        %v7398 = vld [vmem:[%s65 + $0x130] sm:$0xf]
        %v7399 = vld [vmem:[%s65 + $0x134] sm:$0xf]
        %v7400 = vld [vmem:[%s65 + $0x138] sm:$0xf]
        %v7401 = vld [vmem:[%s65 + $0x13c] sm:$0xf]
        %v7402 = vld [vmem:[%s65 + $0x140] sm:$0xf]
        %v7403 = vld [vmem:[%s65 + $0x144] sm:$0xf]
        %v7404 = vld [vmem:[%s65 + $0x148] sm:$0xf]
        %v7405 = vld [vmem:[%s65 + $0x14c] sm:$0xf]
        %v7406 = vld [vmem:[%s65 + $0x150] sm:$0xf]
        %v7407 = vld [vmem:[%s65 + $0x154] sm:$0xf]
        %v7408 = vld [vmem:[%s65 + $0x158] sm:$0xf]
        %v7409 = vld [vmem:[%s65 + $0x15c] sm:$0xf]
        %v7410 = vld [vmem:[%s65 + $0x160] sm:$0xf]
        %v7411 = vld [vmem:[%s65 + $0x164] sm:$0xf]
        %v7412 = vld [vmem:[%s65 + $0x168] sm:$0xf]
        %v7413 = vld [vmem:[%s65 + $0x16c] sm:$0xf]
        %v7414 = vld [vmem:[%s65 + $0x170] sm:$0xf]
        %v7415 = vld [vmem:[%s65 + $0x174] sm:$0xf]
        %v7416 = vld [vmem:[%s65 + $0x178] sm:$0xf]
        %v7417 = vld [vmem:[%s65 + $0x17c] sm:$0xf]
        %v7418 = vld [vmem:[%s65 + $0x180] sm:$0xf]
        %v7419 = vld [vmem:[%s65 + $0x184] sm:$0xf]
        %v7420 = vld [vmem:[%s65 + $0x188] sm:$0xf]
        %v7421 = vld [vmem:[%s65 + $0x18c] sm:$0xf]
        %v7422 = vld [vmem:[%s65 + $0x190] sm:$0xf]
        %v7423 = vld [vmem:[%s65 + $0x194] sm:$0xf]
        %v7424 = vld [vmem:[%s65 + $0x198] sm:$0xf]
        %v7425 = vld [vmem:[%s65 + $0x19c] sm:$0xf]
        %v7426 = vld [vmem:[%s65 + $0x1a0] sm:$0xf]
        %v7427 = vld [vmem:[%s65 + $0x1a4] sm:$0xf]
        %v7428 = vld [vmem:[%s65 + $0x1a8] sm:$0xf]
        %v7429 = vld [vmem:[%s65 + $0x1ac] sm:$0xf]
        %v7430 = vld [vmem:[%s65 + $0x1b0] sm:$0xf]
        %v7431 = vld [vmem:[%s65 + $0x1b4] sm:$0xf]
        %v7432 = vld [vmem:[%s65 + $0x1b8] sm:$0xf]
        %v7433 = vld [vmem:[%s65 + $0x1bc] sm:$0xf]
        %v7434 = vld [vmem:[%s65 + $0x1c0] sm:$0xf]
        %v7435 = vld [vmem:[%s65 + $0x1c4] sm:$0xf]
        %v7436 = vld [vmem:[%s65 + $0x1c8] sm:$0xf]
        %v7437 = vld [vmem:[%s65 + $0x1cc] sm:$0xf]
        %v7438 = vld [vmem:[%s65 + $0x1d0] sm:$0xf]
        %v7439 = vld [vmem:[%s65 + $0x1d4] sm:$0xf]
        %v7440 = vld [vmem:[%s65 + $0x1d8] sm:$0xf]
        %v7441 = vld [vmem:[%s65 + $0x1dc] sm:$0xf]
        %v7442 = vld [vmem:[%s65 + $0x1e0] sm:$0xf]
        %v7443 = vld [vmem:[%s65 + $0x1e4] sm:$0xf]
        %v7444 = vld [vmem:[%s65 + $0x1e8] sm:$0xf]
        %v7445 = vld [vmem:[%s65 + $0x1ec] sm:$0xf]
        %v7446 = vld [vmem:[%s65 + $0x1f0] sm:$0xf]
        %v7447 = vld [vmem:[%s65 + $0x1f4] sm:$0xf]
        %v7448 = vld [vmem:[%s65 + $0x1f8] sm:$0xf]
        %v7449 = vld [vmem:[%s65 + $0x1fc] sm:$0xf]
        %v7450 = vld [vmem:[%s67] sm:$0x1]
        %v7452 = vlaneseq
        %v7453 = vshrl.u32 %v7452, 7
        %v7454 = vsub.s32 0, %v7453
        %v7455 = vrot.slane %v7450, %v7454
        %v7585 = vunpack.c.l.b16 %v7322
        %v7586 = vunpack.c.l.b16 %v7323
        %v7587 = vunpack.c.l.b16 %v7324
        %v7588 = vunpack.c.l.b16 %v7325
        %v7589 = vunpack.c.l.b16 %v7326
        %v7590 = vunpack.c.l.b16 %v7327
        %v7591 = vunpack.c.l.b16 %v7328
        %v7592 = vunpack.c.l.b16 %v7329
        %v7593 = vunpack.c.l.b16 %v7330
        %v7594 = vunpack.c.l.b16 %v7331
        %v7595 = vunpack.c.l.b16 %v7332
        %v7596 = vunpack.c.l.b16 %v7333
        %v7597 = vunpack.c.l.b16 %v7334
        %v7598 = vunpack.c.l.b16 %v7335
        %v7599 = vunpack.c.l.b16 %v7336
        %v7600 = vunpack.c.l.b16 %v7337
        %v7601 = vunpack.c.l.b16 %v7338
        %v7602 = vunpack.c.l.b16 %v7339
        %v7603 = vunpack.c.l.b16 %v7340
        %v7604 = vunpack.c.l.b16 %v7341
        %v7605 = vunpack.c.l.b16 %v7342
        %v7606 = vunpack.c.l.b16 %v7343
        %v7607 = vunpack.c.l.b16 %v7344
        %v7608 = vunpack.c.l.b16 %v7345
        %v7609 = vunpack.c.l.b16 %v7346
        %v7610 = vunpack.c.l.b16 %v7347
        %v7611 = vunpack.c.l.b16 %v7348
        %v7612 = vunpack.c.l.b16 %v7349
        %v7613 = vunpack.c.l.b16 %v7350
        %v7614 = vunpack.c.l.b16 %v7351
        %v7615 = vunpack.c.l.b16 %v7352
        %v7616 = vunpack.c.l.b16 %v7353
        %v7617 = vunpack.c.l.b16 %v7354
        %v7618 = vunpack.c.l.b16 %v7355
        %v7619 = vunpack.c.l.b16 %v7356
        %v7620 = vunpack.c.l.b16 %v7357
        %v7621 = vunpack.c.l.b16 %v7358
        %v7622 = vunpack.c.l.b16 %v7359
        %v7623 = vunpack.c.l.b16 %v7360
        %v7624 = vunpack.c.l.b16 %v7361
        %v7625 = vunpack.c.l.b16 %v7362
        %v7626 = vunpack.c.l.b16 %v7363
        %v7627 = vunpack.c.l.b16 %v7364
        %v7628 = vunpack.c.l.b16 %v7365
        %v7629 = vunpack.c.l.b16 %v7366
        %v7630 = vunpack.c.l.b16 %v7367
        %v7631 = vunpack.c.l.b16 %v7368
        %v7632 = vunpack.c.l.b16 %v7369
        %v7633 = vunpack.c.l.b16 %v7370
        %v7634 = vunpack.c.l.b16 %v7371
        %v7635 = vunpack.c.l.b16 %v7372
        %v7636 = vunpack.c.l.b16 %v7373
        %v7637 = vunpack.c.l.b16 %v7374
        %v7638 = vunpack.c.l.b16 %v7375
        %v7639 = vunpack.c.l.b16 %v7376
        %v7640 = vunpack.c.l.b16 %v7377
        %v7641 = vunpack.c.l.b16 %v7378
        %v7642 = vunpack.c.l.b16 %v7379
        %v7643 = vunpack.c.l.b16 %v7380
        %v7644 = vunpack.c.l.b16 %v7381
        %v7645 = vunpack.c.l.b16 %v7382
        %v7646 = vunpack.c.l.b16 %v7383
        %v7647 = vunpack.c.l.b16 %v7384
        %v7648 = vunpack.c.l.b16 %v7385
        %v7649 = vunpack.c.l.b16 %v7386
        %v7650 = vunpack.c.l.b16 %v7387
        %v7651 = vunpack.c.l.b16 %v7388
        %v7652 = vunpack.c.l.b16 %v7389
        %v7653 = vunpack.c.l.b16 %v7390
        %v7654 = vunpack.c.l.b16 %v7391
        %v7655 = vunpack.c.l.b16 %v7392
        %v7656 = vunpack.c.l.b16 %v7393
        %v7657 = vunpack.c.l.b16 %v7394
        %v7658 = vunpack.c.l.b16 %v7395
        %v7659 = vunpack.c.l.b16 %v7396
        %v7660 = vunpack.c.l.b16 %v7397
        %v7661 = vunpack.c.l.b16 %v7398
        %v7662 = vunpack.c.l.b16 %v7399
        %v7663 = vunpack.c.l.b16 %v7400
        %v7664 = vunpack.c.l.b16 %v7401
        %v7665 = vunpack.c.l.b16 %v7402
        %v7666 = vunpack.c.l.b16 %v7403
        %v7667 = vunpack.c.l.b16 %v7404
        %v7668 = vunpack.c.l.b16 %v7405
        %v7669 = vunpack.c.l.b16 %v7406
        %v7670 = vunpack.c.l.b16 %v7407
        %v7671 = vunpack.c.l.b16 %v7408
        %v7672 = vunpack.c.l.b16 %v7409
        %v7673 = vunpack.c.l.b16 %v7410
        %v7674 = vunpack.c.l.b16 %v7411
        %v7675 = vunpack.c.l.b16 %v7412
        %v7676 = vunpack.c.l.b16 %v7413
        %v7677 = vunpack.c.l.b16 %v7414
        %v7678 = vunpack.c.l.b16 %v7415
        %v7679 = vunpack.c.l.b16 %v7416
        %v7680 = vunpack.c.l.b16 %v7417
        %v7681 = vunpack.c.l.b16 %v7418
        %v7682 = vunpack.c.l.b16 %v7419
        %v7683 = vunpack.c.l.b16 %v7420
        %v7684 = vunpack.c.l.b16 %v7421
        %v7685 = vunpack.c.l.b16 %v7422
        %v7686 = vunpack.c.l.b16 %v7423
        %v7687 = vunpack.c.l.b16 %v7424
        %v7688 = vunpack.c.l.b16 %v7425
        %v7689 = vunpack.c.l.b16 %v7426
        %v7690 = vunpack.c.l.b16 %v7427
        %v7691 = vunpack.c.l.b16 %v7428
        %v7692 = vunpack.c.l.b16 %v7429
        %v7693 = vunpack.c.l.b16 %v7430
        %v7694 = vunpack.c.l.b16 %v7431
        %v7695 = vunpack.c.l.b16 %v7432
        %v7696 = vunpack.c.l.b16 %v7433
        %v7697 = vunpack.c.l.b16 %v7434
        %v7698 = vunpack.c.l.b16 %v7435
        %v7699 = vunpack.c.l.b16 %v7436
        %v7700 = vunpack.c.l.b16 %v7437
        %v7701 = vunpack.c.l.b16 %v7438
        %v7702 = vunpack.c.l.b16 %v7439
        %v7703 = vunpack.c.l.b16 %v7440
        %v7704 = vunpack.c.l.b16 %v7441
        %v7705 = vunpack.c.l.b16 %v7442
        %v7706 = vunpack.c.l.b16 %v7443
        %v7707 = vunpack.c.l.b16 %v7444
        %v7708 = vunpack.c.l.b16 %v7445
        %v7709 = vunpack.c.l.b16 %v7446
        %v7710 = vunpack.c.l.b16 %v7447
        %v7711 = vunpack.c.l.b16 %v7448
        %v7712 = vunpack.c.l.b16 %v7449
        %v7713 = vpack.c.b16 %v7586, %v7585
        %v7714 = vpack.c.b16 %v7588, %v7587
        %v7715 = vpack.c.b16 %v7590, %v7589
        %v7716 = vpack.c.b16 %v7592, %v7591
        %v7717 = vpack.c.b16 %v7594, %v7593
        %v7718 = vpack.c.b16 %v7596, %v7595
        %v7719 = vpack.c.b16 %v7598, %v7597
        %v7720 = vpack.c.b16 %v7600, %v7599
        %v7721 = vpack.c.b16 %v7602, %v7601
        %v7722 = vpack.c.b16 %v7604, %v7603
        %v7723 = vpack.c.b16 %v7606, %v7605
        %v7724 = vpack.c.b16 %v7608, %v7607
        %v7725 = vpack.c.b16 %v7610, %v7609
        %v7726 = vpack.c.b16 %v7612, %v7611
        %v7727 = vpack.c.b16 %v7614, %v7613
        %v7728 = vpack.c.b16 %v7616, %v7615
        %v7729 = vpack.c.b16 %v7618, %v7617
        %v7730 = vpack.c.b16 %v7620, %v7619
        %v7731 = vpack.c.b16 %v7622, %v7621
        %v7732 = vpack.c.b16 %v7624, %v7623
        %v7733 = vpack.c.b16 %v7626, %v7625
        %v7734 = vpack.c.b16 %v7628, %v7627
        %v7735 = vpack.c.b16 %v7630, %v7629
        %v7736 = vpack.c.b16 %v7632, %v7631
        %v7737 = vpack.c.b16 %v7634, %v7633
        %v7738 = vpack.c.b16 %v7636, %v7635
        %v7739 = vpack.c.b16 %v7638, %v7637
        %v7740 = vpack.c.b16 %v7640, %v7639
        %v7741 = vpack.c.b16 %v7642, %v7641
        %v7742 = vpack.c.b16 %v7644, %v7643
        %v7743 = vpack.c.b16 %v7646, %v7645
        %v7744 = vpack.c.b16 %v7648, %v7647
        %v7745 = vpack.c.b16 %v7650, %v7649
        %v7746 = vpack.c.b16 %v7652, %v7651
        %v7747 = vpack.c.b16 %v7654, %v7653
        %v7748 = vpack.c.b16 %v7656, %v7655
        %v7749 = vpack.c.b16 %v7658, %v7657
        %v7750 = vpack.c.b16 %v7660, %v7659
        %v7751 = vpack.c.b16 %v7662, %v7661
        %v7752 = vpack.c.b16 %v7664, %v7663
        %v7753 = vpack.c.b16 %v7666, %v7665
        %v7754 = vpack.c.b16 %v7668, %v7667
        %v7755 = vpack.c.b16 %v7670, %v7669
        %v7756 = vpack.c.b16 %v7672, %v7671
        %v7757 = vpack.c.b16 %v7674, %v7673
        %v7758 = vpack.c.b16 %v7676, %v7675
        %v7759 = vpack.c.b16 %v7678, %v7677
        %v7760 = vpack.c.b16 %v7680, %v7679
        %v7761 = vpack.c.b16 %v7682, %v7681
        %v7762 = vpack.c.b16 %v7684, %v7683
        %v7763 = vpack.c.b16 %v7686, %v7685
        %v7764 = vpack.c.b16 %v7688, %v7687
        %v7765 = vpack.c.b16 %v7690, %v7689
        %v7766 = vpack.c.b16 %v7692, %v7691
        %v7767 = vpack.c.b16 %v7694, %v7693
        %v7768 = vpack.c.b16 %v7696, %v7695
        %v7769 = vpack.c.b16 %v7698, %v7697
        %v7770 = vpack.c.b16 %v7700, %v7699
        %v7771 = vpack.c.b16 %v7702, %v7701
        %v7772 = vpack.c.b16 %v7704, %v7703
        %v7773 = vpack.c.b16 %v7706, %v7705
        %v7774 = vpack.c.b16 %v7708, %v7707
        %v7775 = vpack.c.b16 %v7710, %v7709
        %v7776 = vpack.c.b16 %v7712, %v7711
        %7841 = vmatprep.subr.bf16.mxu0 0
        %7842 = vmatpush1.bf16.msra.mxu0 %v7713
        %7843 = vmatprep.subr.bf16.mxu0 0
        %7844 = vmatpush1.bf16.msra.mxu0 %v7714
        %7845 = vmatprep.subr.bf16.mxu0 0
        %7846 = vmatpush1.bf16.msra.mxu0 %v7715
        %7847 = vmatprep.subr.bf16.mxu0 0
        %7848 = vmatpush1.bf16.msra.mxu0 %v7716
        %7849 = vmatprep.subr.bf16.mxu0 0
        %7850 = vmatpush1.bf16.msra.mxu0 %v7717
        %7851 = vmatprep.subr.bf16.mxu0 0
        %7852 = vmatpush1.bf16.msra.mxu0 %v7718
        %7853 = vmatprep.subr.bf16.mxu0 0
        %7854 = vmatpush1.bf16.msra.mxu0 %v7719
        %7855 = vmatprep.subr.bf16.mxu0 0
        %7856 = vmatpush1.bf16.msra.mxu0 %v7720
        %7857 = vmatprep.subr.bf16.mxu0 0
        %7858 = vmatpush1.bf16.msra.mxu0 %v7721
        %7859 = vmatprep.subr.bf16.mxu0 0
        %7860 = vmatpush1.bf16.msra.mxu0 %v7722
        %7861 = vmatprep.subr.bf16.mxu0 0
        %7862 = vmatpush1.bf16.msra.mxu0 %v7723
        %7863 = vmatprep.subr.bf16.mxu0 0
        %7864 = vmatpush1.bf16.msra.mxu0 %v7724
        %7865 = vmatprep.subr.bf16.mxu0 0
        %7866 = vmatpush1.bf16.msra.mxu0 %v7725
        %7867 = vmatprep.subr.bf16.mxu0 0
        %7868 = vmatpush1.bf16.msra.mxu0 %v7726
        %7869 = vmatprep.subr.bf16.mxu0 0
        %7870 = vmatpush1.bf16.msra.mxu0 %v7727
        %7871 = vmatprep.subr.bf16.mxu0 0
        %7872 = vmatpush1.bf16.msra.mxu0 %v7728
        %7873 = vmatprep.mubr.bf16.mxu0 %v7307
        %7874 = vmatmul.mubr.bf16.gmra.mrb[0].mxu0 %v7306
        %v7875 = vpop.f32.mrb[0].mxu0
        %v7876 = vadd.f32 %v7455, %v7875
        %v7877 = vpop.f32.mrb[0].mxu0
        %v7878 = vpop.f32.mrb[0].mxu0
        %v7879 = vadd.f32 %v7455, %v7878
        %v7880 = vpop.f32.mrb[0].mxu0
        %7881 = vmatprep.mubr.bf16.mxu0 %v7315
        %7882 = vmatmul.mubr.bf16.gmra.mrb[0].mxu0 %v7314
        %v7883 = vpop.f32.mrb[0].mxu0
        %v7884 = vadd.f32 %v7455, %v7883
        %v7885 = vpop.f32.mrb[0].mxu0
        %v7886 = vpop.f32.mrb[0].mxu0
        %v7887 = vadd.f32 %v7455, %v7886
        %v7888 = vpop.f32.mrb[0].mxu0
        %7889 = vdwg.mxu0
        %7890 = vmatprep.subr.bf16.mxu0 0
        %7891 = vmatpush1.bf16.msra.mxu0 %v7729
        %7892 = vmatprep.subr.bf16.mxu0 0
        %7893 = vmatpush1.bf16.msra.mxu0 %v7730
        %7894 = vmatprep.subr.bf16.mxu0 0
        %7895 = vmatpush1.bf16.msra.mxu0 %v7731
        %7896 = vmatprep.subr.bf16.mxu0 0
        %7897 = vmatpush1.bf16.msra.mxu0 %v7732
        %7898 = vmatprep.subr.bf16.mxu0 0
        %7899 = vmatpush1.bf16.msra.mxu0 %v7733
        %7900 = vmatprep.subr.bf16.mxu0 0
        %7901 = vmatpush1.bf16.msra.mxu0 %v7734
        %7902 = vmatprep.subr.bf16.mxu0 0
        %7903 = vmatpush1.bf16.msra.mxu0 %v7735
        %7904 = vmatprep.subr.bf16.mxu0 0
        %7905 = vmatpush1.bf16.msra.mxu0 %v7736
        %7906 = vmatprep.subr.bf16.mxu0 0
        %7907 = vmatpush1.bf16.msra.mxu0 %v7737
        %7908 = vmatprep.subr.bf16.mxu0 0
        %7909 = vmatpush1.bf16.msra.mxu0 %v7738
        %7910 = vmatprep.subr.bf16.mxu0 0
        %7911 = vmatpush1.bf16.msra.mxu0 %v7739
        %7912 = vmatprep.subr.bf16.mxu0 0
        %7913 = vmatpush1.bf16.msra.mxu0 %v7740
        %7914 = vmatprep.subr.bf16.mxu0 0
        %7915 = vmatpush1.bf16.msra.mxu0 %v7741
        %7916 = vmatprep.subr.bf16.mxu0 0
        %7917 = vmatpush1.bf16.msra.mxu0 %v7742
        %7918 = vmatprep.subr.bf16.mxu0 0
        %7919 = vmatpush1.bf16.msra.mxu0 %v7743
        %7920 = vmatprep.subr.bf16.mxu0 0
        %7921 = vmatpush1.bf16.msra.mxu0 %v7744
        %7922 = vmatprep.mubr.bf16.mxu0 %v7309
        %7923 = vmatmul.mubr.bf16.gmra.mrb[0].mxu0 %v7308
        %v7924 = vpop.f32.mrb[0].mxu0
        %v7925 = vadd.f32 %v7876, %v7924
        %v7926 = vpop.f32.mrb[0].mxu0
        %v7927 = vpop.f32.mrb[0].mxu0
        %v7928 = vadd.f32 %v7879, %v7927
        %v7929 = vpop.f32.mrb[0].mxu0
        %7930 = vmatprep.mubr.bf16.mxu0 %v7317
        %7931 = vmatmul.mubr.bf16.gmra.mrb[0].mxu0 %v7316
        %v7932 = vpop.f32.mrb[0].mxu0
        %v7933 = vadd.f32 %v7884, %v7932
        %v7934 = vpop.f32.mrb[0].mxu0
        %v7935 = vpop.f32.mrb[0].mxu0
        %v7936 = vadd.f32 %v7887, %v7935
        %v7937 = vpop.f32.mrb[0].mxu0
        %7938 = vdwg.mxu0
        %7939 = vmatprep.subr.bf16.mxu0 0
        %7940 = vmatpush1.bf16.msra.mxu0 %v7745
        %7941 = vmatprep.subr.bf16.mxu0 0
        %7942 = vmatpush1.bf16.msra.mxu0 %v7746
        %7943 = vmatprep.subr.bf16.mxu0 0
        %7944 = vmatpush1.bf16.msra.mxu0 %v7747
        %7945 = vmatprep.subr.bf16.mxu0 0
        %7946 = vmatpush1.bf16.msra.mxu0 %v7748
        %7947 = vmatprep.subr.bf16.mxu0 0
        %7948 = vmatpush1.bf16.msra.mxu0 %v7749
        %7949 = vmatprep.subr.bf16.mxu0 0
        %7950 = vmatpush1.bf16.msra.mxu0 %v7750
        %7951 = vmatprep.subr.bf16.mxu0 0
        %7952 = vmatpush1.bf16.msra.mxu0 %v7751
        %7953 = vmatprep.subr.bf16.mxu0 0
        %7954 = vmatpush1.bf16.msra.mxu0 %v7752
        %7955 = vmatprep.subr.bf16.mxu0 0
        %7956 = vmatpush1.bf16.msra.mxu0 %v7753
        %7957 = vmatprep.subr.bf16.mxu0 0
        %7958 = vmatpush1.bf16.msra.mxu0 %v7754
        %7959 = vmatprep.subr.bf16.mxu0 0
        %7960 = vmatpush1.bf16.msra.mxu0 %v7755
        %7961 = vmatprep.subr.bf16.mxu0 0
        %7962 = vmatpush1.bf16.msra.mxu0 %v7756
        %7963 = vmatprep.subr.bf16.mxu0 0
        %7964 = vmatpush1.bf16.msra.mxu0 %v7757
        %7965 = vmatprep.subr.bf16.mxu0 0
        %7966 = vmatpush1.bf16.msra.mxu0 %v7758
        %7967 = vmatprep.subr.bf16.mxu0 0
        %7968 = vmatpush1.bf16.msra.mxu0 %v7759
        %7969 = vmatprep.subr.bf16.mxu0 0
        %7970 = vmatpush1.bf16.msra.mxu0 %v7760
        %7971 = vmatprep.mubr.bf16.mxu0 %v7311
        %7972 = vmatmul.mubr.bf16.gmra.mrb[0].mxu0 %v7310
        %v7973 = vpop.f32.mrb[0].mxu0
        %v7974 = vadd.f32 %v7925, %v7973
        %v7975 = vpop.f32.mrb[0].mxu0
        %v7976 = vpop.f32.mrb[0].mxu0
        %v7977 = vadd.f32 %v7928, %v7976
        %v7978 = vpop.f32.mrb[0].mxu0
        %7979 = vmatprep.mubr.bf16.mxu0 %v7319
        %7980 = vmatmul.mubr.bf16.gmra.mrb[0].mxu0 %v7318
        %v7981 = vpop.f32.mrb[0].mxu0
        %v7982 = vadd.f32 %v7933, %v7981
        %v7983 = vpop.f32.mrb[0].mxu0
        %v7984 = vpop.f32.mrb[0].mxu0
        %v7985 = vadd.f32 %v7936, %v7984
        %v7986 = vpop.f32.mrb[0].mxu0
        %7987 = vdwg.mxu0
        %7988 = vmatprep.subr.bf16.mxu0 0
        %7989 = vmatpush1.bf16.msra.mxu0 %v7761
        %7990 = vmatprep.subr.bf16.mxu0 0
        %7991 = vmatpush1.bf16.msra.mxu0 %v7762
        %7992 = vmatprep.subr.bf16.mxu0 0
        %7993 = vmatpush1.bf16.msra.mxu0 %v7763
        %7994 = vmatprep.subr.bf16.mxu0 0
        %7995 = vmatpush1.bf16.msra.mxu0 %v7764
        %7996 = vmatprep.subr.bf16.mxu0 0
        %7997 = vmatpush1.bf16.msra.mxu0 %v7765
        %7998 = vmatprep.subr.bf16.mxu0 0
        %7999 = vmatpush1.bf16.msra.mxu0 %v7766
        %8000 = vmatprep.subr.bf16.mxu0 0
        %8001 = vmatpush1.bf16.msra.mxu0 %v7767
        %8002 = vmatprep.subr.bf16.mxu0 0
        %8003 = vmatpush1.bf16.msra.mxu0 %v7768
        %8004 = vmatprep.subr.bf16.mxu0 0
        %8005 = vmatpush1.bf16.msra.mxu0 %v7769
        %8006 = vmatprep.subr.bf16.mxu0 0
        %8007 = vmatpush1.bf16.msra.mxu0 %v7770
        %8008 = vmatprep.subr.bf16.mxu0 0
        %8009 = vmatpush1.bf16.msra.mxu0 %v7771
        %8010 = vmatprep.subr.bf16.mxu0 0
        %8011 = vmatpush1.bf16.msra.mxu0 %v7772
        %8012 = vmatprep.subr.bf16.mxu0 0
        %8013 = vmatpush1.bf16.msra.mxu0 %v7773
        %8014 = vmatprep.subr.bf16.mxu0 0
        %8015 = vmatpush1.bf16.msra.mxu0 %v7774
        %8016 = vmatprep.subr.bf16.mxu0 0
        %8017 = vmatpush1.bf16.msra.mxu0 %v7775
        %8018 = vmatprep.subr.bf16.mxu0 0
        %8019 = vmatpush1.bf16.msra.mxu0 %v7776
        %8020 = vmatprep.mubr.bf16.mxu0 %v7313
        %8021 = vmatmul.mubr.bf16.gmra.mrb[0].mxu0 %v7312
        %v8022 = vpop.f32.mrb[0].mxu0
        %v8023 = vadd.f32 %v7974, %v8022
        %v8024 = vpop.f32.mrb[0].mxu0
        %v8025 = vpop.f32.mrb[0].mxu0
        %v8026 = vadd.f32 %v7977, %v8025
        %v8027 = vpop.f32.mrb[0].mxu0
        %8028 = vmatprep.mubr.bf16.mxu0 %v7321
        %8029 = vmatmul.mubr.bf16.gmra.mrb[0].mxu0 %v7320
        %v8030 = vpop.f32.mrb[0].mxu0
        %v8031 = vadd.f32 %v7982, %v8030
        %v8032 = vpop.f32.mrb[0].mxu0
        %v8033 = vpop.f32.mrb[0].mxu0
        %v8034 = vadd.f32 %v7985, %v8033
        %v8035 = vpop.f32.mrb[0].mxu0
        %8036 = vdwg.mxu0
        %v8037 = vmul.f32 %v8023, 0.5
        %v8038 = vmul.f32 %v8026, 0.5
        %v8039 = vmul.f32 %v8031, 0.5
        %v8040 = vmul.f32 %v8034, 0.5
        %v8041 = vadd.f32 %v8037, %v6550
        %v8042 = vadd.f32 %v8038, %v6551
        %v8043 = vadd.f32 %v8039, %v6552
        %v8044 = vadd.f32 %v8040, %v6553
        %v8045 = vld [vmem:[%s69] sm:$0x1]
        %v8046 = vld [vmem:[%s71] sm:$0x1]
        %v8047 = vsel %vm1321, %v8041, 0.0
        %8048 = vadd.xlane.f32.xlu0 %v8047
        %v8049 = vpop.xlane.xlu0 %8048
        %v8050 = vsel %vm1321, %v8042, 0.0
        %8051 = vadd.xlane.f32.xlu0 %v8050
        %v8052 = vpop.xlane.xlu0 %8051
        %v8053 = vsel %vm1321, %v8043, 0.0
        %8054 = vadd.xlane.f32.xlu0 %v8053
        %v8055 = vpop.xlane.xlu0 %8054
        %v8056 = vsel %vm1321, %v8044, 0.0
        %8057 = vadd.xlane.f32.xlu0 %v8056
        %v8058 = vpop.xlane.xlu0 %8057
        %v8059 = vmul.f32 %v8049, %v1904
        %v8060 = vmul.f32 %v8052, %v1904
        %v8061 = vmul.f32 %v8055, %v1904
        %v8062 = vmul.f32 %v8058, %v1904
        %v8063 = vsub.f32 %v8041, %v8059
        %v8064 = vsub.f32 %v8042, %v8060
        %v8065 = vsub.f32 %v8043, %v8061
        %v8066 = vsub.f32 %v8044, %v8062
        %v8067 = vmul.f32 %v8063, %v8063
        %v8068 = vmul.f32 %v8064, %v8064
        %v8069 = vmul.f32 %v8065, %v8065
        %v8070 = vmul.f32 %v8066, %v8066
        %v8071 = vsel %vm1321, %v8067, 0.0
        %8072 = vadd.xlane.f32.xlu0 %v8071
        %v8073 = vpop.xlane.xlu0 %8072
        %v8074 = vsel %vm1321, %v8068, 0.0
        %8075 = vadd.xlane.f32.xlu0 %v8074
        %v8076 = vpop.xlane.xlu0 %8075
        %v8077 = vsel %vm1321, %v8069, 0.0
        %8078 = vadd.xlane.f32.xlu0 %v8077
        %v8079 = vpop.xlane.xlu0 %8078
        %v8080 = vsel %vm1321, %v8070, 0.0
        %8081 = vadd.xlane.f32.xlu0 %v8080
        %v8082 = vpop.xlane.xlu0 %8081
        %v8083 = vmul.f32 %v8073, %v1904
        %v8084 = vmul.f32 %v8076, %v1904
        %v8085 = vmul.f32 %v8079, %v1904
        %v8086 = vmul.f32 %v8082, %v1904
        %v8087 = vadd.f32 %v8083, 1e-05
        %v8088 = vadd.f32 %v8084, 1e-05
        %v8089 = vadd.f32 %v8085, 1e-05
        %v8090 = vadd.f32 %v8086, 1e-05
        %v8091 = vrsqrt.pop %v8087
        %v8092 = vrsqrt.pop %v8088
        %v8093 = vrsqrt.pop %v8089
        %v8094 = vrsqrt.pop %v8090
        %v8095 = vmul.f32 %v8063, %v8091
        %v8096 = vmul.f32 %v8064, %v8092
        %v8097 = vmul.f32 %v8065, %v8093
        %v8098 = vmul.f32 %v8066, %v8094
        %v8100 = vlaneseq
        %v8101 = vshrl.u32 %v8100, 7
        %v8102 = vsub.s32 0, %v8101
        %v8103 = vrot.slane %v8045, %v8102
        %v8105 = vmul.f32 %v8095, %v8103
        %v8106 = vmul.f32 %v8096, %v8103
        %v8107 = vmul.f32 %v8097, %v8103
        %v8108 = vmul.f32 %v8098, %v8103
        %v8110 = vlaneseq
        %v8111 = vshrl.u32 %v8110, 7
        %v8112 = vsub.s32 0, %v8111
        %v8113 = vrot.slane %v8046, %v8112
        %v8115 = vadd.f32 %v8105, %v8113
        %v8116 = vadd.f32 %v8106, %v8113
        %v8117 = vadd.f32 %v8107, %v8113
        %v8118 = vadd.f32 %v8108, %v8113
        %8119 = vst.msk [vmem:[%s1140] sm:$0xff] %vm1321, %v8115
        %8120 = vst.msk [vmem:[%s1140 + $0x8] sm:$0xff] %vm1321, %v8116
        %8121 = vst.msk [vmem:[%s1140 + $0x10] sm:$0xff] %vm1321, %v8117
        %8122 = vst.msk [vmem:[%s1140 + $0x18] sm:$0xff] %vm1321, %v8118
        %s8123 = sand.u32 %s871, 1
        %s8124 = scalar_lea.sflag [#allocation3], %s8123
        %s8125 = sand.u32 %s871, 1
        %s8126 = smul.addr %s8125, 32
        %s8127 = scalar_lea.vmem [#allocation2], %s8126
        // Predicated region
        $region165: #{tpu_custom_call.1} parent=163 // pred_check
          %p8128 = pneg %p881
        $region166: #{tpu_custom_call.1} parent=163 // pred_check_branch
          %8130 = sbr.rel (%p8128) target = $region168
        $region167: #{tpu_custom_call.1} parent=163 // pred_region
          %s8131 = smul.u32 2, %s87
          %s8133 = ssub.s32 512, 512
          %8134 = vsyncadd %s8124, %s8133
          %s8135 = smul.addr %s8131, 2
          %s8136 = smul.addr %s8135, 128
          %s8137 = scalar_lea.hbm %s73, %s8136
          %s8138 = sshll.u32 %s8127, 4
          %s8139 = int_to_ptr.vmem [resolvable:$true] %s8138
          %8144 = dma.vmem_to_hbm [thread:$0]  %s8139, 512, %s8137, %s8124, 128, 128, 8
        $region168: #{tpu_custom_call.1} parent=163 // pred_fallthru
          _
      $region164: #{tpu_custom_call.1} parent=5 // pred_fallthru
        _
      %p8145 = scmp.le.s32.totalorder 2, %s82
      // Predicated region
      $region169: #{tpu_custom_call.1} parent=5 // pred_check
        %p8146 = pneg %p8145
      $region170: #{tpu_custom_call.1} parent=5 // pred_check_branch
        %8148 = sbr.rel (%p8146) target = $region172
      $region171: #{tpu_custom_call.1} parent=5 // pred_region
        %s8149 = ssub.s32 %s82, 2
        // Predicated region
        $region173: #{tpu_custom_call.1} parent=171 // pred_check
          %p8150 = pneg %p887
        $region174: #{tpu_custom_call.1} parent=171 // pred_check_branch
          %8152 = sbr.rel (%p8150) target = $region176
        $region175: #{tpu_custom_call.1} parent=171 // pred_region
          %s8153 = sand.u32 %s872, 1
          %s8154 = scalar_lea.sflag [#allocation3], %s8153
          %s8155 = sand.u32 %s872, 1
          %s8156 = smul.addr %s8155, 32
          %s8157 = scalar_lea.vmem [#allocation2], %s8156
          %8158 = dma.done %s8154, 512
        $region176: #{tpu_custom_call.1} parent=171 // pred_fallthru
          _
      $region172: #{tpu_custom_call.1} parent=5 // pred_fallthru
        _
    $region6: #{tpu_custom_call.1} parent=1 // loop_footer
      %s86 = sadd.s32 1, %s82
    $region7: #{tpu_custom_call.1} parent=1 // loop_footer_branch
      %81 = sbr.rel target = $region3
    $region8: #{tpu_custom_call.1} parent=1 // loop_exit
      _
    %8159 = vsyncpa [#allocation3], 1
    %s8160 = scalar_lea.sflag [#allocation3], 1
    %8161 = vsyncpa %s8160, 1

</llo_original>
